<compile_context>
chip_gen: v7x
topology: tpu7x:2x2x1
jax: 0.10.0
libtpu: 0.0.40
codegen_flags: <defaults>
</compile_context>

<pallas_src>
import jax
import jax.numpy as jnp
from jax.experimental import pallas as pl
from jax.experimental.pallas import tpu as pltpu

EPS = 1e-5
CLASS_NUM = 35
FC2_PAD = 128      # fc2 output width padded 35 -> 128 (lane-dense stores)
C1 = 128           # conv1 out channels padded 64 -> 128
C2 = 128           # conv2 out channels
C3 = 256           # conv3 out channels
K1_PAD = 256       # conv1 im2col K: 7*7*3 = 147 -> 256


# --------------------------- in-kernel helpers --------------------------------

def _bn_relu_rows(x, gamma, beta):
    """Train-mode BatchNorm over rows (single-pass biased variance) + ReLU.
    x:(M,C), gamma/beta:(1,C)."""
    mean = jnp.mean(x, axis=0, keepdims=True)
    var = jnp.maximum(jnp.mean(x * x, axis=0, keepdims=True) - mean * mean, 0.0)
    scale = gamma * jax.lax.rsqrt(var + EPS)          # EUP rsqrt; gamma*inv_std folded
    shift = beta - mean * scale
    return jnp.maximum(x * scale + shift, 0.0)


# --------------------------- the fused kernel ----------------------------------

def _fused_forward_kernel(a1_ref, w1_ref, g1_ref, be1_ref,
                          w2_ref, g2_ref, be2_ref,
                          w3_ref, b3_ref, g3_ref, be3_ref,
                          wfc1_ref, g4_ref, be4_ref, wfc2_ref, bfc2_ref,
                          last_ref, logits_ref,
                          pad1_ref, y2s_ref, pad2_ref):
    n = last_ref.shape[0]          # batch size (static)
    f32 = jnp.float32

    # ---- conv1 (im2col GEMM) + bn1 + relu + 2x2 max-pool -----------------------
    # a1 rows are ordered (pool_di, pool_dj, i, j, batch): 4 phase blocks of 16n rows.
    y1 = jnp.dot(a1_ref[...], w1_ref[...], preferred_element_type=f32)     # (64n, C1)
    y1 = _bn_relu_rows(y1, g1_ref[...], be1_ref[...])
    q = 16 * n
    p1 = jnp.maximum(jnp.maximum(y1[0:q], y1[q:2 * q]),
                     jnp.maximum(y1[2 * q:3 * q], y1[3 * q:4 * q]))        # (16n, C1) rows (i,j,b)

    # ---- scatter pooled conv1 output into zero-padded conv2 input --------------
    # pad1 rows ordered (h, w, batch) with 6x6 padded spatial (4x4 interior).
    pad1_ref[...] = jnp.zeros(pad1_ref.shape, f32)
    for i in range(4):
        dst = (1 + i) * 6 * n + n                                          # (h=1+i, w=1)
        pad1_ref[pl.ds(dst, 4 * n), :] = p1[i * 4 * n:(i + 1) * 4 * n]

    # ---- conv2: 9 shifted-tap GEMMs per output-row block, then bn2 + relu ------
    for i in range(4):                                                     # output h
        acc = None
        for t in range(9):
            dy, dx = t // 3, t % 3
            src = (dy + i) * 6 * n + dx * n
            patch = pad1_ref[pl.ds(src, 4 * n), :]                         # (4n, C1) rows (j,b)
            d = jnp.dot(patch, w2_ref[t], preferred_element_type=f32)
            acc = d if acc is None else acc + d
        y2s_ref[pl.ds(i * 4 * n, 4 * n), :] = acc
    y2 = _bn_relu_rows(y2s_ref[...], g2_ref[...], be2_ref[...])            # (16n, C2) rows (i,j,b)

    # ---- 2x2 max-pool -> zero-padded conv3 input (4x4 padded, 2x2 interior) ----
    pad2_ref[...] = jnp.zeros(pad2_ref.shape, f32)
    for a in range(2):
        for b in range(2):
            m = None
            for di in range(2):
                start = (2 * a + di) * 4 * n + 2 * b * n
                blk = y2[start:start + 2 * n]                              # rows (dj, batch)
                v = jnp.maximum(blk[0:n], blk[n:2 * n])
                m = v if m is None else jnp.maximum(m, v)
            pad2_ref[pl.ds((1 + a) * 4 * n + (1 + b) * n, n), :] = m

    # ---- conv3 (9 shifted-tap GEMMs) + bias + global adaptive max-pool ---------
    gap = None
    for a in range(2):                                                     # output h
        acc = None
        for t in range(9):
            dy, dx = t // 3, t % 3
            src = (dy + a) * 4 * n + dx * n
            patch = pad2_ref[pl.ds(src, 2 * n), :]                         # (2n, C2) rows (b,batch)
            d = jnp.dot(patch, w3_ref[t], preferred_element_type=f32)
            acc = d if acc is None else acc + d
        acc = acc + b3_ref[...]                                            # (2n, C3)
        m = jnp.maximum(acc[0:n], acc[n:2 * n])                            # max over w
        gap = m if gap is None else jnp.maximum(gap, m)                    # max over h
    last_ref[...] = gap                                                    # last_layer (n, 256)

    # ---- head: bn3 -> relu -> fc1 -> bn4 -> relu -> fc2 (+bias) ---------------
    h = _bn_relu_rows(gap, g3_ref[...], be3_ref[...])
    h = jnp.dot(h, wfc1_ref[...], preferred_element_type=f32)              # fc1 (bias folded into bn4)
    h = _bn_relu_rows(h, g4_ref[...], be4_ref[...])
    logits_ref[...] = jnp.dot(h, wfc2_ref[...],
                              preferred_element_type=f32) + bfc2_ref[...]  # (n, FC2_PAD)


def _full_spec(shape):
    nd = len(shape)
    return pl.BlockSpec(shape, lambda i, _nd=nd: (0,) * _nd)


def fused_forward(a1, n, p):
    inputs = (a1,
              p["w1"], p["g1"].reshape(1, C1), p["be1"].reshape(1, C1),
              p["w2"], p["g2"].reshape(1, C2), p["be2"].reshape(1, C2),
              p["w3"], p["b3"].reshape(1, C3), p["g3"].reshape(1, C3), p["be3"].reshape(1, C3),
              p["wfc1"], p["g4"].reshape(1, 64), p["be4"].reshape(1, 64),
              p["wfc2"], p["bfc2"].reshape(1, FC2_PAD))
    flops = 2 * (a1.shape[0] * K1_PAD * C1          # conv1
                 + 16 * n * 9 * C1 * C2             # conv2
                 + 4 * n * 9 * C2 * C3              # conv3
                 + n * C3 * 64 + n * 64 * FC2_PAD)  # fc1 + fc2
    bytes_acc = 4 * (sum(int(x.size) for x in inputs) + n * (C3 + FC2_PAD))
    return pl.pallas_call(
        _fused_forward_kernel,
        out_shape=(jax.ShapeDtypeStruct((n, C3), jnp.float32),
                   jax.ShapeDtypeStruct((n, FC2_PAD), jnp.float32)),
        grid=(1,),
        in_specs=[_full_spec(x.shape) for x in inputs],
        out_specs=[_full_spec((n, C3)), _full_spec((n, FC2_PAD))],
        scratch_shapes=[pltpu.VMEM((36 * n, C1), jnp.float32),   # pad1: 6x6 padded conv2 input
                        pltpu.VMEM((16 * n, C2), jnp.float32),   # y2s : conv2 pre-BN output
                        pltpu.VMEM((16 * n, C2), jnp.float32)],  # pad2: 4x4 padded conv3 input
        compiler_params=pltpu.CompilerParams(dimension_semantics=("arbitrary",)),
        cost_estimate=pl.CostEstimate(flops=flops, transcendentals=C1 + C2 + C3 + 64,
                                      bytes_accessed=bytes_acc),
    )(*inputs)


# --------------------------- host-side layout glue (conv1 im2col only) ---------

def _conv1_patches(x_nhwc):
    """im2col for conv1 (7x7, stride 2, pad 3) with rows ordered
    (pool_di, pool_dj, i, j, batch); K zero-padded 147 -> 256."""
    n = x_nhwc.shape[0]
    xp = jnp.pad(x_nhwc, ((0, 0), (3, 3), (3, 3), (0, 0)))            # (N, 22, 22, 3)
    taps = [xp[:, dy:dy + 16:2, dx:dx + 16:2, :]
            for dy in range(7) for dx in range(7)]
    p = jnp.stack(taps, axis=3).reshape(n, 8, 8, 147)                 # (N, 8, 8, 147)
    p = (p.reshape(n, 4, 2, 4, 2, 147)                                # (n, i, di, j, dj, k)
          .transpose(2, 4, 1, 3, 0, 5)                                # (di, dj, i, j, n, k)
          .reshape(64 * n, 147))
    return jnp.pad(p, ((0, 0), (0, K1_PAD - 147)))                    # (64n, 256)


# --------------------------- parameters ----------------------------------------

def init_params(key):
    ks = jax.random.split(key, 16)
    f32 = jnp.float32

    def w(k, shape, scale=0.05):
        return (scale * jax.random.normal(k, shape)).astype(f32)

    p = {}
    # conv1: (KH,KW,Cin,Cout) -> GEMM (147, 64), K padded to 256 and Cout padded to 128.
    w1 = w(ks[0], (7, 7, 3, 64)).reshape(147, 64)
    p["w1"] = jnp.pad(w1, ((0, K1_PAD - 147), (0, C1 - 64)))
    p["g1"] = jnp.concatenate([1.0 + w(ks[4], (64,), 0.1), jnp.ones((64,), f32)])
    p["be1"] = jnp.concatenate([w(ks[5], (64,), 0.1), jnp.zeros((64,), f32)])
    # conv2: per-tap (Cin_pad=128, Cout=128) matrices; padded input channels get zero weight.
    w2 = w(ks[1], (3, 3, 64, C2))
    p["w2"] = jnp.pad(w2, ((0, 0), (0, 0), (0, C1 - 64), (0, 0))).reshape(9, C1, C2)
    p["g2"], p["be2"] = 1.0 + w(ks[6], (C2,), 0.1), w(ks[7], (C2,), 0.1)
    # conv3: per-tap (128, 256) matrices; bias kept (feeds last_layer through the GAP max).
    p["w3"] = w(ks[2], (3, 3, C2, C3)).reshape(9, C2, C3)
    p["b3"] = w(ks[3], (C3,), 0.01)
    p["g3"], p["be3"] = 1.0 + w(ks[8], (C3,), 0.1), w(ks[9], (C3,), 0.1)
    # NOTE: conv1/conv2/fc1 biases omitted: a per-channel constant added right before
    # a train-mode BatchNorm is removed exactly by its mean subtraction.
    p["wfc1"] = w(ks[12], (C3, 64))
    p["g4"], p["be4"] = 1.0 + w(ks[10], (64,), 0.1), w(ks[11], (64,), 0.1)
    wfc2 = w(ks[13], (64, CLASS_NUM))
    bfc2 = w(ks[14], (CLASS_NUM,), 0.01)
    p["wfc2"] = jnp.pad(wfc2, ((0, 0), (0, FC2_PAD - CLASS_NUM)))
    p["bfc2"] = jnp.pad(bfc2, ((0, FC2_PAD - CLASS_NUM),))
    return p


# --------------------------- forward --------------------------------------------

def base_model_forward(x_nchw, p):
    n = x_nchw.shape[0]
    assert x_nchw.shape[1:] == (3, 16, 16), "fused kernel is specialized for (N,3,16,16) input"
    x = jnp.transpose(x_nchw, (0, 2, 3, 1)).astype(jnp.float32)        # NCHW -> NHWC
    a1 = _conv1_patches(x)                                             # only remaining host glue
    last_layer, logits_padded = fused_forward(a1, n, p)
    logits = logits_padded[:, :CLASS_NUM]
    return logits, last_layer

    # TODO(synk): BatchNorm running-stat updates (training-mode side effect on module
    # buffers) are not modeled; they do not affect the forward outputs.


# --------------------------- main ------------------------------------------------

if __name__ == "__main__":
    key = jax.random.PRNGKey(0)
    k_params, k_x = jax.random.split(key)
    params = init_params(k_params)

    x = jax.random.normal(k_x, (2, 3, 16, 16), dtype=jnp.float32)      # NCHW like PyTorch

    logits, last_layer = jax.jit(base_model_forward)(x, params)
    jax.block_until_ready((logits, last_layer))

    assert logits.shape == (2, CLASS_NUM) and logits.dtype == jnp.float32
    assert last_layer.shape == (2, 256) and last_layer.dtype == jnp.float32
    assert bool(jnp.all(jnp.isfinite(logits))) and bool(jnp.all(jnp.isfinite(last_layer)))
    print("KERNEL_OK")
</pallas_src>

<mosaic_0001>
module attributes {stable_mosaic.version = 11 : i64} {
  func.func @_fused_forward_kernel(%arg0: i32, %arg1: memref<128x256xf32, #tpu.memory_space<vmem>>, %arg2: memref<256x128xf32, #tpu.memory_space<vmem>>, %arg3: memref<1x128xf32, #tpu.memory_space<vmem>>, %arg4: memref<1x128xf32, #tpu.memory_space<vmem>>, %arg5: memref<9x128x128xf32, #tpu.memory_space<vmem>>, %arg6: memref<1x128xf32, #tpu.memory_space<vmem>>, %arg7: memref<1x128xf32, #tpu.memory_space<vmem>>, %arg8: memref<9x128x256xf32, #tpu.memory_space<vmem>>, %arg9: memref<1x256xf32, #tpu.memory_space<vmem>>, %arg10: memref<1x256xf32, #tpu.memory_space<vmem>>, %arg11: memref<1x256xf32, #tpu.memory_space<vmem>>, %arg12: memref<256x64xf32, #tpu.memory_space<vmem>>, %arg13: memref<1x64xf32, #tpu.memory_space<vmem>>, %arg14: memref<1x64xf32, #tpu.memory_space<vmem>>, %arg15: memref<64x128xf32, #tpu.memory_space<vmem>>, %arg16: memref<1x128xf32, #tpu.memory_space<vmem>>, %arg17: memref<2x256xf32, #tpu.memory_space<vmem>>, %arg18: memref<2x128xf32, #tpu.memory_space<vmem>>, %arg19: memref<72x128xf32, #tpu.memory_space<vmem>>, %arg20: memref<32x128xf32, #tpu.memory_space<vmem>>, %arg21: memref<32x128xf32, #tpu.memory_space<vmem>>) attributes {dimension_semantics = [#tpu.dimension_semantics<arbitrary>], iteration_bounds = array<i64: 1>, scalar_prefetch = 0 : i64, scratch_operands = 3 : i64, tpu.core_type = #tpu.core_type<tc>, window_params = [{pipeline_mode = #tpu.pipeline_mode<synchronous>, transform_indices = @transform_0, window_bounds = array<i64: 128, 256>}, {pipeline_mode = #tpu.pipeline_mode<synchronous>, transform_indices = @transform_1, window_bounds = array<i64: 256, 128>}, {pipeline_mode = #tpu.pipeline_mode<synchronous>, transform_indices = @transform_2, window_bounds = array<i64: 1, 128>}, {pipeline_mode = #tpu.pipeline_mode<synchronous>, transform_indices = @transform_3, window_bounds = array<i64: 1, 128>}, {pipeline_mode = #tpu.pipeline_mode<synchronous>, transform_indices = @transform_4, window_bounds = array<i64: 9, 128, 128>}, {pipeline_mode = #tpu.pipeline_mode<synchronous>, transform_indices = @transform_5, window_bounds = array<i64: 1, 128>}, {pipeline_mode = #tpu.pipeline_mode<synchronous>, transform_indices = @transform_6, window_bounds = array<i64: 1, 128>}, {pipeline_mode = #tpu.pipeline_mode<synchronous>, transform_indices = @transform_7, window_bounds = array<i64: 9, 128, 256>}, {pipeline_mode = #tpu.pipeline_mode<synchronous>, transform_indices = @transform_8, window_bounds = array<i64: 1, 256>}, {pipeline_mode = #tpu.pipeline_mode<synchronous>, transform_indices = @transform_9, window_bounds = array<i64: 1, 256>}, {pipeline_mode = #tpu.pipeline_mode<synchronous>, transform_indices = @transform_10, window_bounds = array<i64: 1, 256>}, {pipeline_mode = #tpu.pipeline_mode<synchronous>, transform_indices = @transform_11, window_bounds = array<i64: 256, 64>}, {pipeline_mode = #tpu.pipeline_mode<synchronous>, transform_indices = @transform_12, window_bounds = array<i64: 1, 64>}, {pipeline_mode = #tpu.pipeline_mode<synchronous>, transform_indices = @transform_13, window_bounds = array<i64: 1, 64>}, {pipeline_mode = #tpu.pipeline_mode<synchronous>, transform_indices = @transform_14, window_bounds = array<i64: 64, 128>}, {pipeline_mode = #tpu.pipeline_mode<synchronous>, transform_indices = @transform_15, window_bounds = array<i64: 1, 128>}, {pipeline_mode = #tpu.pipeline_mode<synchronous>, transform_indices = @transform_16, window_bounds = array<i64: 2, 256>}, {pipeline_mode = #tpu.pipeline_mode<synchronous>, transform_indices = @transform_17, window_bounds = array<i64: 2, 128>}]} {
    %c0 = arith.constant 0 : index
    %c0_0 = arith.constant 0 : index
    %0 = vector.load %arg1[%c0, %c0_0] : memref<128x256xf32, #tpu.memory_space<vmem>>, vector<128x256xf32>
    %c0_1 = arith.constant 0 : index
    %c0_2 = arith.constant 0 : index
    %1 = vector.load %arg2[%c0_1, %c0_2] : memref<256x128xf32, #tpu.memory_space<vmem>>, vector<256x128xf32>
    %cst = arith.constant dense<0.000000e+00> : vector<128x128xf32>
    %2 = tpu.matmul %0, %1, %cst {dimension_numbers = #tpu.dot_dimension_numbers<[1], [0], [0], [1], [0, 0, 1, 1], [], []>} : vector<128x256xf32>, vector<256x128xf32>, vector<128x128xf32> -> vector<128x128xf32>
    %c0_3 = arith.constant 0 : index
    %c0_4 = arith.constant 0 : index
    %3 = vector.load %arg3[%c0_3, %c0_4] : memref<1x128xf32, #tpu.memory_space<vmem>>, vector<1x128xf32>
    %c0_5 = arith.constant 0 : index
    %c0_6 = arith.constant 0 : index
    %4 = vector.load %arg4[%c0_5, %c0_6] : memref<1x128xf32, #tpu.memory_space<vmem>>, vector<1x128xf32>
    %cst_7 = arith.constant dense<0.000000e+00> : vector<128xf32>
    %5 = vector.multi_reduction <add>, %2, %cst_7 [0] : vector<128x128xf32> to vector<128xf32>
    %6 = vector.shape_cast %5 : vector<128xf32> to vector<1x128xf32>
    %cst_8 = arith.constant 1.280000e+02 : f32
    %7 = vector.broadcast %cst_8 : f32 to vector<1x128xf32>
    %8 = arith.divf %6, %7 : vector<1x128xf32>
    %9 = arith.mulf %2, %2 : vector<128x128xf32>
    %cst_9 = arith.constant dense<0.000000e+00> : vector<128xf32>
    %10 = vector.multi_reduction <add>, %9, %cst_9 [0] : vector<128x128xf32> to vector<128xf32>
    %11 = vector.shape_cast %10 : vector<128xf32> to vector<1x128xf32>
    %cst_10 = arith.constant 1.280000e+02 : f32
    %12 = vector.broadcast %cst_10 : f32 to vector<1x128xf32>
    %13 = arith.divf %11, %12 : vector<1x128xf32>
    %14 = arith.mulf %8, %8 : vector<1x128xf32>
    %15 = arith.subf %13, %14 : vector<1x128xf32>
    %cst_11 = arith.constant 0.000000e+00 : f32
    %16 = vector.broadcast %cst_11 : f32 to vector<1x128xf32>
    %17 = arith.maximumf %15, %16 : vector<1x128xf32>
    %cst_12 = arith.constant 9.99999974E-6 : f32
    %18 = vector.broadcast %cst_12 : f32 to vector<1x128xf32>
    %19 = arith.addf %17, %18 : vector<1x128xf32>
    %20 = math.rsqrt %19 : vector<1x128xf32>
    %21 = arith.mulf %3, %20 : vector<1x128xf32>
    %22 = arith.mulf %8, %21 : vector<1x128xf32>
    %23 = arith.subf %4, %22 : vector<1x128xf32>
    %24 = vector.broadcast %21 : vector<1x128xf32> to vector<128x128xf32>
    %25 = arith.mulf %2, %24 : vector<128x128xf32>
    %26 = vector.broadcast %23 : vector<1x128xf32> to vector<128x128xf32>
    %27 = arith.addf %25, %26 : vector<128x128xf32>
    %cst_13 = arith.constant 0.000000e+00 : f32
    %28 = vector.broadcast %cst_13 : f32 to vector<128x128xf32>
    %29 = arith.maximumf %27, %28 : vector<128x128xf32>
    %30 = vector.extract_strided_slice %29 {offsets = [0, 0], sizes = [32, 128], strides = [1, 1]} : vector<128x128xf32> to vector<32x128xf32>
    %31 = vector.extract_strided_slice %29 {offsets = [32, 0], sizes = [32, 128], strides = [1, 1]} : vector<128x128xf32> to vector<32x128xf32>
    %32 = arith.maximumf %30, %31 : vector<32x128xf32>
    %33 = vector.extract_strided_slice %29 {offsets = [64, 0], sizes = [32, 128], strides = [1, 1]} : vector<128x128xf32> to vector<32x128xf32>
    %34 = vector.extract_strided_slice %29 {offsets = [96, 0], sizes = [32, 128], strides = [1, 1]} : vector<128x128xf32> to vector<32x128xf32>
    %35 = arith.maximumf %33, %34 : vector<32x128xf32>
    %36 = arith.maximumf %32, %35 : vector<32x128xf32>
    %cst_14 = arith.constant 0.000000e+00 : f32
    %37 = vector.broadcast %cst_14 : f32 to vector<72x128xf32>
    %c0_15 = arith.constant 0 : index
    %c0_16 = arith.constant 0 : index
    %38 = vector.load %arg19[%c0_15, %c0_16] : memref<72x128xf32, #tpu.memory_space<vmem>>, vector<72x128xf32>
    tpu.vector_store %arg19[%c0_15, %c0_16], %37 {strides = array<i32>} : memref<72x128xf32, #tpu.memory_space<vmem>>, vector<72x128xf32>,
    %39 = vector.extract_strided_slice %36 {offsets = [0, 0], sizes = [8, 128], strides = [1, 1]} : vector<32x128xf32> to vector<8x128xf32>
    %c14 = arith.constant 14 : index
    %c0_17 = arith.constant 0 : index
    %40 = vector.load %arg19[%c14, %c0_17] : memref<72x128xf32, #tpu.memory_space<vmem>>, vector<8x128xf32>
    tpu.vector_store %arg19[%c14, %c0_17], %39 {strides = array<i32>} : memref<72x128xf32, #tpu.memory_space<vmem>>, vector<8x128xf32>,
    %41 = vector.extract_strided_slice %36 {offsets = [8, 0], sizes = [8, 128], strides = [1, 1]} : vector<32x128xf32> to vector<8x128xf32>
    %c26 = arith.constant 26 : index
    %c0_18 = arith.constant 0 : index
    %42 = vector.load %arg19[%c26, %c0_18] : memref<72x128xf32, #tpu.memory_space<vmem>>, vector<8x128xf32>
    tpu.vector_store %arg19[%c26, %c0_18], %41 {strides = array<i32>} : memref<72x128xf32, #tpu.memory_space<vmem>>, vector<8x128xf32>,
    %43 = vector.extract_strided_slice %36 {offsets = [16, 0], sizes = [8, 128], strides = [1, 1]} : vector<32x128xf32> to vector<8x128xf32>
    %c38 = arith.constant 38 : index
    %c0_19 = arith.constant 0 : index
    %44 = vector.load %arg19[%c38, %c0_19] : memref<72x128xf32, #tpu.memory_space<vmem>>, vector<8x128xf32>
    tpu.vector_store %arg19[%c38, %c0_19], %43 {strides = array<i32>} : memref<72x128xf32, #tpu.memory_space<vmem>>, vector<8x128xf32>,
    %45 = vector.extract_strided_slice %36 {offsets = [24, 0], sizes = [8, 128], strides = [1, 1]} : vector<32x128xf32> to vector<8x128xf32>
    %c50 = arith.constant 50 : index
    %c0_20 = arith.constant 0 : index
    %46 = vector.load %arg19[%c50, %c0_20] : memref<72x128xf32, #tpu.memory_space<vmem>>, vector<8x128xf32>
    tpu.vector_store %arg19[%c50, %c0_20], %45 {strides = array<i32>} : memref<72x128xf32, #tpu.memory_space<vmem>>, vector<8x128xf32>,
    %c0_21 = arith.constant 0 : index
    %c0_22 = arith.constant 0 : index
    %47 = vector.load %arg19[%c0_21, %c0_22] : memref<72x128xf32, #tpu.memory_space<vmem>>, vector<8x128xf32>
    %c0_23 = arith.constant 0 : index
    %c0_24 = arith.constant 0 : index
    %c0_25 = arith.constant 0 : index
    %48 = vector.load %arg5[%c0_23, %c0_24, %c0_25] : memref<9x128x128xf32, #tpu.memory_space<vmem>>, vector<1x128x128xf32>
    %49 = vector.shape_cast %48 : vector<1x128x128xf32> to vector<128x128xf32>
    %cst_26 = arith.constant dense<0.000000e+00> : vector<8x128xf32>
    %50 = tpu.matmul %47, %49, %cst_26 {dimension_numbers = #tpu.dot_dimension_numbers<[1], [0], [0], [1], [0, 0, 1, 1], [], []>} : vector<8x128xf32>, vector<128x128xf32>, vector<8x128xf32> -> vector<8x128xf32>
    %c2 = arith.constant 2 : index
    %c0_27 = arith.constant 0 : index
    %51 = vector.load %arg19[%c2, %c0_27] : memref<72x128xf32, #tpu.memory_space<vmem>>, vector<8x128xf32>
    %c1 = arith.constant 1 : index
    %c0_28 = arith.constant 0 : index
    %c0_29 = arith.constant 0 : index
    %52 = vector.load %arg5[%c1, %c0_28, %c0_29] : memref<9x128x128xf32, #tpu.memory_space<vmem>>, vector<1x128x128xf32>
    %53 = vector.shape_cast %52 : vector<1x128x128xf32> to vector<128x128xf32>
    %cst_30 = arith.constant dense<0.000000e+00> : vector<8x128xf32>
    %54 = tpu.matmul %51, %53, %cst_30 {dimension_numbers = #tpu.dot_dimension_numbers<[1], [0], [0], [1], [0, 0, 1, 1], [], []>} : vector<8x128xf32>, vector<128x128xf32>, vector<8x128xf32> -> vector<8x128xf32>
    %55 = arith.addf %50, %54 : vector<8x128xf32>
    %c4 = arith.constant 4 : index
    %c0_31 = arith.constant 0 : index
    %56 = vector.load %arg19[%c4, %c0_31] : memref<72x128xf32, #tpu.memory_space<vmem>>, vector<8x128xf32>
    %c2_32 = arith.constant 2 : index
    %c0_33 = arith.constant 0 : index
    %c0_34 = arith.constant 0 : index
    %57 = vector.load %arg5[%c2_32, %c0_33, %c0_34] : memref<9x128x128xf32, #tpu.memory_space<vmem>>, vector<1x128x128xf32>
    %58 = vector.shape_cast %57 : vector<1x128x128xf32> to vector<128x128xf32>
    %cst_35 = arith.constant dense<0.000000e+00> : vector<8x128xf32>
    %59 = tpu.matmul %56, %58, %cst_35 {dimension_numbers = #tpu.dot_dimension_numbers<[1], [0], [0], [1], [0, 0, 1, 1], [], []>} : vector<8x128xf32>, vector<128x128xf32>, vector<8x128xf32> -> vector<8x128xf32>
    %60 = arith.addf %55, %59 : vector<8x128xf32>
    %c12 = arith.constant 12 : index
    %c0_36 = arith.constant 0 : index
    %61 = vector.load %arg19[%c12, %c0_36] : memref<72x128xf32, #tpu.memory_space<vmem>>, vector<8x128xf32>
    %c3 = arith.constant 3 : index
    %c0_37 = arith.constant 0 : index
    %c0_38 = arith.constant 0 : index
    %62 = vector.load %arg5[%c3, %c0_37, %c0_38] : memref<9x128x128xf32, #tpu.memory_space<vmem>>, vector<1x128x128xf32>
    %63 = vector.shape_cast %62 : vector<1x128x128xf32> to vector<128x128xf32>
    %cst_39 = arith.constant dense<0.000000e+00> : vector<8x128xf32>
    %64 = tpu.matmul %61, %63, %cst_39 {dimension_numbers = #tpu.dot_dimension_numbers<[1], [0], [0], [1], [0, 0, 1, 1], [], []>} : vector<8x128xf32>, vector<128x128xf32>, vector<8x128xf32> -> vector<8x128xf32>
    %65 = arith.addf %60, %64 : vector<8x128xf32>
    %c14_40 = arith.constant 14 : index
    %c0_41 = arith.constant 0 : index
    %66 = vector.load %arg19[%c14_40, %c0_41] : memref<72x128xf32, #tpu.memory_space<vmem>>, vector<8x128xf32>
    %c4_42 = arith.constant 4 : index
    %c0_43 = arith.constant 0 : index
    %c0_44 = arith.constant 0 : index
    %67 = vector.load %arg5[%c4_42, %c0_43, %c0_44] : memref<9x128x128xf32, #tpu.memory_space<vmem>>, vector<1x128x128xf32>
    %68 = vector.shape_cast %67 : vector<1x128x128xf32> to vector<128x128xf32>
    %cst_45 = arith.constant dense<0.000000e+00> : vector<8x128xf32>
    %69 = tpu.matmul %66, %68, %cst_45 {dimension_numbers = #tpu.dot_dimension_numbers<[1], [0], [0], [1], [0, 0, 1, 1], [], []>} : vector<8x128xf32>, vector<128x128xf32>, vector<8x128xf32> -> vector<8x128xf32>
    %70 = arith.addf %65, %69 : vector<8x128xf32>
    %c16 = arith.constant 16 : index
    %c0_46 = arith.constant 0 : index
    %71 = vector.load %arg19[%c16, %c0_46] : memref<72x128xf32, #tpu.memory_space<vmem>>, vector<8x128xf32>
    %c5 = arith.constant 5 : index
    %c0_47 = arith.constant 0 : index
    %c0_48 = arith.constant 0 : index
    %72 = vector.load %arg5[%c5, %c0_47, %c0_48] : memref<9x128x128xf32, #tpu.memory_space<vmem>>, vector<1x128x128xf32>
    %73 = vector.shape_cast %72 : vector<1x128x128xf32> to vector<128x128xf32>
    %cst_49 = arith.constant dense<0.000000e+00> : vector<8x128xf32>
    %74 = tpu.matmul %71, %73, %cst_49 {dimension_numbers = #tpu.dot_dimension_numbers<[1], [0], [0], [1], [0, 0, 1, 1], [], []>} : vector<8x128xf32>, vector<128x128xf32>, vector<8x128xf32> -> vector<8x128xf32>
    %75 = arith.addf %70, %74 : vector<8x128xf32>
    %c24 = arith.constant 24 : index
    %c0_50 = arith.constant 0 : index
    %76 = vector.load %arg19[%c24, %c0_50] : memref<72x128xf32, #tpu.memory_space<vmem>>, vector<8x128xf32>
    %c6 = arith.constant 6 : index
    %c0_51 = arith.constant 0 : index
    %c0_52 = arith.constant 0 : index
    %77 = vector.load %arg5[%c6, %c0_51, %c0_52] : memref<9x128x128xf32, #tpu.memory_space<vmem>>, vector<1x128x128xf32>
    %78 = vector.shape_cast %77 : vector<1x128x128xf32> to vector<128x128xf32>
    %cst_53 = arith.constant dense<0.000000e+00> : vector<8x128xf32>
    %79 = tpu.matmul %76, %78, %cst_53 {dimension_numbers = #tpu.dot_dimension_numbers<[1], [0], [0], [1], [0, 0, 1, 1], [], []>} : vector<8x128xf32>, vector<128x128xf32>, vector<8x128xf32> -> vector<8x128xf32>
    %80 = arith.addf %75, %79 : vector<8x128xf32>
    %c26_54 = arith.constant 26 : index
    %c0_55 = arith.constant 0 : index
    %81 = vector.load %arg19[%c26_54, %c0_55] : memref<72x128xf32, #tpu.memory_space<vmem>>, vector<8x128xf32>
    %c7 = arith.constant 7 : index
    %c0_56 = arith.constant 0 : index
    %c0_57 = arith.constant 0 : index
    %82 = vector.load %arg5[%c7, %c0_56, %c0_57] : memref<9x128x128xf32, #tpu.memory_space<vmem>>, vector<1x128x128xf32>
    %83 = vector.shape_cast %82 : vector<1x128x128xf32> to vector<128x128xf32>
    %cst_58 = arith.constant dense<0.000000e+00> : vector<8x128xf32>
    %84 = tpu.matmul %81, %83, %cst_58 {dimension_numbers = #tpu.dot_dimension_numbers<[1], [0], [0], [1], [0, 0, 1, 1], [], []>} : vector<8x128xf32>, vector<128x128xf32>, vector<8x128xf32> -> vector<8x128xf32>
    %85 = arith.addf %80, %84 : vector<8x128xf32>
    %c28 = arith.constant 28 : index
    %c0_59 = arith.constant 0 : index
    %86 = vector.load %arg19[%c28, %c0_59] : memref<72x128xf32, #tpu.memory_space<vmem>>, vector<8x128xf32>
    %c8 = arith.constant 8 : index
    %c0_60 = arith.constant 0 : index
    %c0_61 = arith.constant 0 : index
    %87 = vector.load %arg5[%c8, %c0_60, %c0_61] : memref<9x128x128xf32, #tpu.memory_space<vmem>>, vector<1x128x128xf32>
    %88 = vector.shape_cast %87 : vector<1x128x128xf32> to vector<128x128xf32>
    %cst_62 = arith.constant dense<0.000000e+00> : vector<8x128xf32>
    %89 = tpu.matmul %86, %88, %cst_62 {dimension_numbers = #tpu.dot_dimension_numbers<[1], [0], [0], [1], [0, 0, 1, 1], [], []>} : vector<8x128xf32>, vector<128x128xf32>, vector<8x128xf32> -> vector<8x128xf32>
    %90 = arith.addf %85, %89 : vector<8x128xf32>
    %c0_63 = arith.constant 0 : index
    %c0_64 = arith.constant 0 : index
    %91 = vector.load %arg20[%c0_63, %c0_64] : memref<32x128xf32, #tpu.memory_space<vmem>>, vector<8x128xf32>
    tpu.vector_store %arg20[%c0_63, %c0_64], %90 {strides = array<i32>} : memref<32x128xf32, #tpu.memory_space<vmem>>, vector<8x128xf32>,
    %c12_65 = arith.constant 12 : index
    %c0_66 = arith.constant 0 : index
    %92 = vector.load %arg19[%c12_65, %c0_66] : memref<72x128xf32, #tpu.memory_space<vmem>>, vector<8x128xf32>
    %c0_67 = arith.constant 0 : index
    %c0_68 = arith.constant 0 : index
    %c0_69 = arith.constant 0 : index
    %93 = vector.load %arg5[%c0_67, %c0_68, %c0_69] : memref<9x128x128xf32, #tpu.memory_space<vmem>>, vector<1x128x128xf32>
    %94 = vector.shape_cast %93 : vector<1x128x128xf32> to vector<128x128xf32>
    %cst_70 = arith.constant dense<0.000000e+00> : vector<8x128xf32>
    %95 = tpu.matmul %92, %94, %cst_70 {dimension_numbers = #tpu.dot_dimension_numbers<[1], [0], [0], [1], [0, 0, 1, 1], [], []>} : vector<8x128xf32>, vector<128x128xf32>, vector<8x128xf32> -> vector<8x128xf32>
    %c14_71 = arith.constant 14 : index
    %c0_72 = arith.constant 0 : index
    %96 = vector.load %arg19[%c14_71, %c0_72] : memref<72x128xf32, #tpu.memory_space<vmem>>, vector<8x128xf32>
    %c1_73 = arith.constant 1 : index
    %c0_74 = arith.constant 0 : index
    %c0_75 = arith.constant 0 : index
    %97 = vector.load %arg5[%c1_73, %c0_74, %c0_75] : memref<9x128x128xf32, #tpu.memory_space<vmem>>, vector<1x128x128xf32>
    %98 = vector.shape_cast %97 : vector<1x128x128xf32> to vector<128x128xf32>
    %cst_76 = arith.constant dense<0.000000e+00> : vector<8x128xf32>
    %99 = tpu.matmul %96, %98, %cst_76 {dimension_numbers = #tpu.dot_dimension_numbers<[1], [0], [0], [1], [0, 0, 1, 1], [], []>} : vector<8x128xf32>, vector<128x128xf32>, vector<8x128xf32> -> vector<8x128xf32>
    %100 = arith.addf %95, %99 : vector<8x128xf32>
    %c16_77 = arith.constant 16 : index
    %c0_78 = arith.constant 0 : index
    %101 = vector.load %arg19[%c16_77, %c0_78] : memref<72x128xf32, #tpu.memory_space<vmem>>, vector<8x128xf32>
    %c2_79 = arith.constant 2 : index
    %c0_80 = arith.constant 0 : index
    %c0_81 = arith.constant 0 : index
    %102 = vector.load %arg5[%c2_79, %c0_80, %c0_81] : memref<9x128x128xf32, #tpu.memory_space<vmem>>, vector<1x128x128xf32>
    %103 = vector.shape_cast %102 : vector<1x128x128xf32> to vector<128x128xf32>
    %cst_82 = arith.constant dense<0.000000e+00> : vector<8x128xf32>
    %104 = tpu.matmul %101, %103, %cst_82 {dimension_numbers = #tpu.dot_dimension_numbers<[1], [0], [0], [1], [0, 0, 1, 1], [], []>} : vector<8x128xf32>, vector<128x128xf32>, vector<8x128xf32> -> vector<8x128xf32>
    %105 = arith.addf %100, %104 : vector<8x128xf32>
    %c24_83 = arith.constant 24 : index
    %c0_84 = arith.constant 0 : index
    %106 = vector.load %arg19[%c24_83, %c0_84] : memref<72x128xf32, #tpu.memory_space<vmem>>, vector<8x128xf32>
    %c3_85 = arith.constant 3 : index
    %c0_86 = arith.constant 0 : index
    %c0_87 = arith.constant 0 : index
    %107 = vector.load %arg5[%c3_85, %c0_86, %c0_87] : memref<9x128x128xf32, #tpu.memory_space<vmem>>, vector<1x128x128xf32>
    %108 = vector.shape_cast %107 : vector<1x128x128xf32> to vector<128x128xf32>
    %cst_88 = arith.constant dense<0.000000e+00> : vector<8x128xf32>
    %109 = tpu.matmul %106, %108, %cst_88 {dimension_numbers = #tpu.dot_dimension_numbers<[1], [0], [0], [1], [0, 0, 1, 1], [], []>} : vector<8x128xf32>, vector<128x128xf32>, vector<8x128xf32> -> vector<8x128xf32>
    %110 = arith.addf %105, %109 : vector<8x128xf32>
    %c26_89 = arith.constant 26 : index
    %c0_90 = arith.constant 0 : index
    %111 = vector.load %arg19[%c26_89, %c0_90] : memref<72x128xf32, #tpu.memory_space<vmem>>, vector<8x128xf32>
    %c4_91 = arith.constant 4 : index
    %c0_92 = arith.constant 0 : index
    %c0_93 = arith.constant 0 : index
    %112 = vector.load %arg5[%c4_91, %c0_92, %c0_93] : memref<9x128x128xf32, #tpu.memory_space<vmem>>, vector<1x128x128xf32>
    %113 = vector.shape_cast %112 : vector<1x128x128xf32> to vector<128x128xf32>
    %cst_94 = arith.constant dense<0.000000e+00> : vector<8x128xf32>
    %114 = tpu.matmul %111, %113, %cst_94 {dimension_numbers = #tpu.dot_dimension_numbers<[1], [0], [0], [1], [0, 0, 1, 1], [], []>} : vector<8x128xf32>, vector<128x128xf32>, vector<8x128xf32> -> vector<8x128xf32>
    %115 = arith.addf %110, %114 : vector<8x128xf32>
    %c28_95 = arith.constant 28 : index
    %c0_96 = arith.constant 0 : index
    %116 = vector.load %arg19[%c28_95, %c0_96] : memref<72x128xf32, #tpu.memory_space<vmem>>, vector<8x128xf32>
    %c5_97 = arith.constant 5 : index
    %c0_98 = arith.constant 0 : index
    %c0_99 = arith.constant 0 : index
    %117 = vector.load %arg5[%c5_97, %c0_98, %c0_99] : memref<9x128x128xf32, #tpu.memory_space<vmem>>, vector<1x128x128xf32>
    %118 = vector.shape_cast %117 : vector<1x128x128xf32> to vector<128x128xf32>
    %cst_100 = arith.constant dense<0.000000e+00> : vector<8x128xf32>
    %119 = tpu.matmul %116, %118, %cst_100 {dimension_numbers = #tpu.dot_dimension_numbers<[1], [0], [0], [1], [0, 0, 1, 1], [], []>} : vector<8x128xf32>, vector<128x128xf32>, vector<8x128xf32> -> vector<8x128xf32>
    %120 = arith.addf %115, %119 : vector<8x128xf32>
    %c36 = arith.constant 36 : index
    %c0_101 = arith.constant 0 : index
    %121 = vector.load %arg19[%c36, %c0_101] : memref<72x128xf32, #tpu.memory_space<vmem>>, vector<8x128xf32>
    %c6_102 = arith.constant 6 : index
    %c0_103 = arith.constant 0 : index
    %c0_104 = arith.constant 0 : index
    %122 = vector.load %arg5[%c6_102, %c0_103, %c0_104] : memref<9x128x128xf32, #tpu.memory_space<vmem>>, vector<1x128x128xf32>
    %123 = vector.shape_cast %122 : vector<1x128x128xf32> to vector<128x128xf32>
    %cst_105 = arith.constant dense<0.000000e+00> : vector<8x128xf32>
    %124 = tpu.matmul %121, %123, %cst_105 {dimension_numbers = #tpu.dot_dimension_numbers<[1], [0], [0], [1], [0, 0, 1, 1], [], []>} : vector<8x128xf32>, vector<128x128xf32>, vector<8x128xf32> -> vector<8x128xf32>
    %125 = arith.addf %120, %124 : vector<8x128xf32>
    %c38_106 = arith.constant 38 : index
    %c0_107 = arith.constant 0 : index
    %126 = vector.load %arg19[%c38_106, %c0_107] : memref<72x128xf32, #tpu.memory_space<vmem>>, vector<8x128xf32>
    %c7_108 = arith.constant 7 : index
    %c0_109 = arith.constant 0 : index
    %c0_110 = arith.constant 0 : index
    %127 = vector.load %arg5[%c7_108, %c0_109, %c0_110] : memref<9x128x128xf32, #tpu.memory_space<vmem>>, vector<1x128x128xf32>
    %128 = vector.shape_cast %127 : vector<1x128x128xf32> to vector<128x128xf32>
    %cst_111 = arith.constant dense<0.000000e+00> : vector<8x128xf32>
    %129 = tpu.matmul %126, %128, %cst_111 {dimension_numbers = #tpu.dot_dimension_numbers<[1], [0], [0], [1], [0, 0, 1, 1], [], []>} : vector<8x128xf32>, vector<128x128xf32>, vector<8x128xf32> -> vector<8x128xf32>
    %130 = arith.addf %125, %129 : vector<8x128xf32>
    %c40 = arith.constant 40 : index
    %c0_112 = arith.constant 0 : index
    %131 = vector.load %arg19[%c40, %c0_112] : memref<72x128xf32, #tpu.memory_space<vmem>>, vector<8x128xf32>
    %c8_113 = arith.constant 8 : index
    %c0_114 = arith.constant 0 : index
    %c0_115 = arith.constant 0 : index
    %132 = vector.load %arg5[%c8_113, %c0_114, %c0_115] : memref<9x128x128xf32, #tpu.memory_space<vmem>>, vector<1x128x128xf32>
    %133 = vector.shape_cast %132 : vector<1x128x128xf32> to vector<128x128xf32>
    %cst_116 = arith.constant dense<0.000000e+00> : vector<8x128xf32>
    %134 = tpu.matmul %131, %133, %cst_116 {dimension_numbers = #tpu.dot_dimension_numbers<[1], [0], [0], [1], [0, 0, 1, 1], [], []>} : vector<8x128xf32>, vector<128x128xf32>, vector<8x128xf32> -> vector<8x128xf32>
    %135 = arith.addf %130, %134 : vector<8x128xf32>
    %c8_117 = arith.constant 8 : index
    %c0_118 = arith.constant 0 : index
    %136 = vector.load %arg20[%c8_117, %c0_118] : memref<32x128xf32, #tpu.memory_space<vmem>>, vector<8x128xf32>
    tpu.vector_store %arg20[%c8_117, %c0_118], %135 {strides = array<i32>} : memref<32x128xf32, #tpu.memory_space<vmem>>, vector<8x128xf32>,
    %c24_119 = arith.constant 24 : index
    %c0_120 = arith.constant 0 : index
    %137 = vector.load %arg19[%c24_119, %c0_120] : memref<72x128xf32, #tpu.memory_space<vmem>>, vector<8x128xf32>
    %c0_121 = arith.constant 0 : index
    %c0_122 = arith.constant 0 : index
    %c0_123 = arith.constant 0 : index
    %138 = vector.load %arg5[%c0_121, %c0_122, %c0_123] : memref<9x128x128xf32, #tpu.memory_space<vmem>>, vector<1x128x128xf32>
    %139 = vector.shape_cast %138 : vector<1x128x128xf32> to vector<128x128xf32>
    %cst_124 = arith.constant dense<0.000000e+00> : vector<8x128xf32>
    %140 = tpu.matmul %137, %139, %cst_124 {dimension_numbers = #tpu.dot_dimension_numbers<[1], [0], [0], [1], [0, 0, 1, 1], [], []>} : vector<8x128xf32>, vector<128x128xf32>, vector<8x128xf32> -> vector<8x128xf32>
    %c26_125 = arith.constant 26 : index
    %c0_126 = arith.constant 0 : index
    %141 = vector.load %arg19[%c26_125, %c0_126] : memref<72x128xf32, #tpu.memory_space<vmem>>, vector<8x128xf32>
    %c1_127 = arith.constant 1 : index
    %c0_128 = arith.constant 0 : index
    %c0_129 = arith.constant 0 : index
    %142 = vector.load %arg5[%c1_127, %c0_128, %c0_129] : memref<9x128x128xf32, #tpu.memory_space<vmem>>, vector<1x128x128xf32>
    %143 = vector.shape_cast %142 : vector<1x128x128xf32> to vector<128x128xf32>
    %cst_130 = arith.constant dense<0.000000e+00> : vector<8x128xf32>
    %144 = tpu.matmul %141, %143, %cst_130 {dimension_numbers = #tpu.dot_dimension_numbers<[1], [0], [0], [1], [0, 0, 1, 1], [], []>} : vector<8x128xf32>, vector<128x128xf32>, vector<8x128xf32> -> vector<8x128xf32>
    %145 = arith.addf %140, %144 : vector<8x128xf32>
    %c28_131 = arith.constant 28 : index
    %c0_132 = arith.constant 0 : index
    %146 = vector.load %arg19[%c28_131, %c0_132] : memref<72x128xf32, #tpu.memory_space<vmem>>, vector<8x128xf32>
    %c2_133 = arith.constant 2 : index
    %c0_134 = arith.constant 0 : index
    %c0_135 = arith.constant 0 : index
    %147 = vector.load %arg5[%c2_133, %c0_134, %c0_135] : memref<9x128x128xf32, #tpu.memory_space<vmem>>, vector<1x128x128xf32>
    %148 = vector.shape_cast %147 : vector<1x128x128xf32> to vector<128x128xf32>
    %cst_136 = arith.constant dense<0.000000e+00> : vector<8x128xf32>
    %149 = tpu.matmul %146, %148, %cst_136 {dimension_numbers = #tpu.dot_dimension_numbers<[1], [0], [0], [1], [0, 0, 1, 1], [], []>} : vector<8x128xf32>, vector<128x128xf32>, vector<8x128xf32> -> vector<8x128xf32>
    %150 = arith.addf %145, %149 : vector<8x128xf32>
    %c36_137 = arith.constant 36 : index
    %c0_138 = arith.constant 0 : index
    %151 = vector.load %arg19[%c36_137, %c0_138] : memref<72x128xf32, #tpu.memory_space<vmem>>, vector<8x128xf32>
    %c3_139 = arith.constant 3 : index
    %c0_140 = arith.constant 0 : index
    %c0_141 = arith.constant 0 : index
    %152 = vector.load %arg5[%c3_139, %c0_140, %c0_141] : memref<9x128x128xf32, #tpu.memory_space<vmem>>, vector<1x128x128xf32>
    %153 = vector.shape_cast %152 : vector<1x128x128xf32> to vector<128x128xf32>
    %cst_142 = arith.constant dense<0.000000e+00> : vector<8x128xf32>
    %154 = tpu.matmul %151, %153, %cst_142 {dimension_numbers = #tpu.dot_dimension_numbers<[1], [0], [0], [1], [0, 0, 1, 1], [], []>} : vector<8x128xf32>, vector<128x128xf32>, vector<8x128xf32> -> vector<8x128xf32>
    %155 = arith.addf %150, %154 : vector<8x128xf32>
    %c38_143 = arith.constant 38 : index
    %c0_144 = arith.constant 0 : index
    %156 = vector.load %arg19[%c38_143, %c0_144] : memref<72x128xf32, #tpu.memory_space<vmem>>, vector<8x128xf32>
    %c4_145 = arith.constant 4 : index
    %c0_146 = arith.constant 0 : index
    %c0_147 = arith.constant 0 : index
    %157 = vector.load %arg5[%c4_145, %c0_146, %c0_147] : memref<9x128x128xf32, #tpu.memory_space<vmem>>, vector<1x128x128xf32>
    %158 = vector.shape_cast %157 : vector<1x128x128xf32> to vector<128x128xf32>
    %cst_148 = arith.constant dense<0.000000e+00> : vector<8x128xf32>
    %159 = tpu.matmul %156, %158, %cst_148 {dimension_numbers = #tpu.dot_dimension_numbers<[1], [0], [0], [1], [0, 0, 1, 1], [], []>} : vector<8x128xf32>, vector<128x128xf32>, vector<8x128xf32> -> vector<8x128xf32>
    %160 = arith.addf %155, %159 : vector<8x128xf32>
    %c40_149 = arith.constant 40 : index
    %c0_150 = arith.constant 0 : index
    %161 = vector.load %arg19[%c40_149, %c0_150] : memref<72x128xf32, #tpu.memory_space<vmem>>, vector<8x128xf32>
    %c5_151 = arith.constant 5 : index
    %c0_152 = arith.constant 0 : index
    %c0_153 = arith.constant 0 : index
    %162 = vector.load %arg5[%c5_151, %c0_152, %c0_153] : memref<9x128x128xf32, #tpu.memory_space<vmem>>, vector<1x128x128xf32>
    %163 = vector.shape_cast %162 : vector<1x128x128xf32> to vector<128x128xf32>
    %cst_154 = arith.constant dense<0.000000e+00> : vector<8x128xf32>
    %164 = tpu.matmul %161, %163, %cst_154 {dimension_numbers = #tpu.dot_dimension_numbers<[1], [0], [0], [1], [0, 0, 1, 1], [], []>} : vector<8x128xf32>, vector<128x128xf32>, vector<8x128xf32> -> vector<8x128xf32>
    %165 = arith.addf %160, %164 : vector<8x128xf32>
    %c48 = arith.constant 48 : index
    %c0_155 = arith.constant 0 : index
    %166 = vector.load %arg19[%c48, %c0_155] : memref<72x128xf32, #tpu.memory_space<vmem>>, vector<8x128xf32>
    %c6_156 = arith.constant 6 : index
    %c0_157 = arith.constant 0 : index
    %c0_158 = arith.constant 0 : index
    %167 = vector.load %arg5[%c6_156, %c0_157, %c0_158] : memref<9x128x128xf32, #tpu.memory_space<vmem>>, vector<1x128x128xf32>
    %168 = vector.shape_cast %167 : vector<1x128x128xf32> to vector<128x128xf32>
    %cst_159 = arith.constant dense<0.000000e+00> : vector<8x128xf32>
    %169 = tpu.matmul %166, %168, %cst_159 {dimension_numbers = #tpu.dot_dimension_numbers<[1], [0], [0], [1], [0, 0, 1, 1], [], []>} : vector<8x128xf32>, vector<128x128xf32>, vector<8x128xf32> -> vector<8x128xf32>
    %170 = arith.addf %165, %169 : vector<8x128xf32>
    %c50_160 = arith.constant 50 : index
    %c0_161 = arith.constant 0 : index
    %171 = vector.load %arg19[%c50_160, %c0_161] : memref<72x128xf32, #tpu.memory_space<vmem>>, vector<8x128xf32>
    %c7_162 = arith.constant 7 : index
    %c0_163 = arith.constant 0 : index
    %c0_164 = arith.constant 0 : index
    %172 = vector.load %arg5[%c7_162, %c0_163, %c0_164] : memref<9x128x128xf32, #tpu.memory_space<vmem>>, vector<1x128x128xf32>
    %173 = vector.shape_cast %172 : vector<1x128x128xf32> to vector<128x128xf32>
    %cst_165 = arith.constant dense<0.000000e+00> : vector<8x128xf32>
    %174 = tpu.matmul %171, %173, %cst_165 {dimension_numbers = #tpu.dot_dimension_numbers<[1], [0], [0], [1], [0, 0, 1, 1], [], []>} : vector<8x128xf32>, vector<128x128xf32>, vector<8x128xf32> -> vector<8x128xf32>
    %175 = arith.addf %170, %174 : vector<8x128xf32>
    %c52 = arith.constant 52 : index
    %c0_166 = arith.constant 0 : index
    %176 = vector.load %arg19[%c52, %c0_166] : memref<72x128xf32, #tpu.memory_space<vmem>>, vector<8x128xf32>
    %c8_167 = arith.constant 8 : index
    %c0_168 = arith.constant 0 : index
    %c0_169 = arith.constant 0 : index
    %177 = vector.load %arg5[%c8_167, %c0_168, %c0_169] : memref<9x128x128xf32, #tpu.memory_space<vmem>>, vector<1x128x128xf32>
    %178 = vector.shape_cast %177 : vector<1x128x128xf32> to vector<128x128xf32>
    %cst_170 = arith.constant dense<0.000000e+00> : vector<8x128xf32>
    %179 = tpu.matmul %176, %178, %cst_170 {dimension_numbers = #tpu.dot_dimension_numbers<[1], [0], [0], [1], [0, 0, 1, 1], [], []>} : vector<8x128xf32>, vector<128x128xf32>, vector<8x128xf32> -> vector<8x128xf32>
    %180 = arith.addf %175, %179 : vector<8x128xf32>
    %c16_171 = arith.constant 16 : index
    %c0_172 = arith.constant 0 : index
    %181 = vector.load %arg20[%c16_171, %c0_172] : memref<32x128xf32, #tpu.memory_space<vmem>>, vector<8x128xf32>
    tpu.vector_store %arg20[%c16_171, %c0_172], %180 {strides = array<i32>} : memref<32x128xf32, #tpu.memory_space<vmem>>, vector<8x128xf32>,
    %c36_173 = arith.constant 36 : index
    %c0_174 = arith.constant 0 : index
    %182 = vector.load %arg19[%c36_173, %c0_174] : memref<72x128xf32, #tpu.memory_space<vmem>>, vector<8x128xf32>
    %c0_175 = arith.constant 0 : index
    %c0_176 = arith.constant 0 : index
    %c0_177 = arith.constant 0 : index
    %183 = vector.load %arg5[%c0_175, %c0_176, %c0_177] : memref<9x128x128xf32, #tpu.memory_space<vmem>>, vector<1x128x128xf32>
    %184 = vector.shape_cast %183 : vector<1x128x128xf32> to vector<128x128xf32>
    %cst_178 = arith.constant dense<0.000000e+00> : vector<8x128xf32>
    %185 = tpu.matmul %182, %184, %cst_178 {dimension_numbers = #tpu.dot_dimension_numbers<[1], [0], [0], [1], [0, 0, 1, 1], [], []>} : vector<8x128xf32>, vector<128x128xf32>, vector<8x128xf32> -> vector<8x128xf32>
    %c38_179 = arith.constant 38 : index
    %c0_180 = arith.constant 0 : index
    %186 = vector.load %arg19[%c38_179, %c0_180] : memref<72x128xf32, #tpu.memory_space<vmem>>, vector<8x128xf32>
    %c1_181 = arith.constant 1 : index
    %c0_182 = arith.constant 0 : index
    %c0_183 = arith.constant 0 : index
    %187 = vector.load %arg5[%c1_181, %c0_182, %c0_183] : memref<9x128x128xf32, #tpu.memory_space<vmem>>, vector<1x128x128xf32>
    %188 = vector.shape_cast %187 : vector<1x128x128xf32> to vector<128x128xf32>
    %cst_184 = arith.constant dense<0.000000e+00> : vector<8x128xf32>
    %189 = tpu.matmul %186, %188, %cst_184 {dimension_numbers = #tpu.dot_dimension_numbers<[1], [0], [0], [1], [0, 0, 1, 1], [], []>} : vector<8x128xf32>, vector<128x128xf32>, vector<8x128xf32> -> vector<8x128xf32>
    %190 = arith.addf %185, %189 : vector<8x128xf32>
    %c40_185 = arith.constant 40 : index
    %c0_186 = arith.constant 0 : index
    %191 = vector.load %arg19[%c40_185, %c0_186] : memref<72x128xf32, #tpu.memory_space<vmem>>, vector<8x128xf32>
    %c2_187 = arith.constant 2 : index
    %c0_188 = arith.constant 0 : index
    %c0_189 = arith.constant 0 : index
    %192 = vector.load %arg5[%c2_187, %c0_188, %c0_189] : memref<9x128x128xf32, #tpu.memory_space<vmem>>, vector<1x128x128xf32>
    %193 = vector.shape_cast %192 : vector<1x128x128xf32> to vector<128x128xf32>
    %cst_190 = arith.constant dense<0.000000e+00> : vector<8x128xf32>
    %194 = tpu.matmul %191, %193, %cst_190 {dimension_numbers = #tpu.dot_dimension_numbers<[1], [0], [0], [1], [0, 0, 1, 1], [], []>} : vector<8x128xf32>, vector<128x128xf32>, vector<8x128xf32> -> vector<8x128xf32>
    %195 = arith.addf %190, %194 : vector<8x128xf32>
    %c48_191 = arith.constant 48 : index
    %c0_192 = arith.constant 0 : index
    %196 = vector.load %arg19[%c48_191, %c0_192] : memref<72x128xf32, #tpu.memory_space<vmem>>, vector<8x128xf32>
    %c3_193 = arith.constant 3 : index
    %c0_194 = arith.constant 0 : index
    %c0_195 = arith.constant 0 : index
    %197 = vector.load %arg5[%c3_193, %c0_194, %c0_195] : memref<9x128x128xf32, #tpu.memory_space<vmem>>, vector<1x128x128xf32>
    %198 = vector.shape_cast %197 : vector<1x128x128xf32> to vector<128x128xf32>
    %cst_196 = arith.constant dense<0.000000e+00> : vector<8x128xf32>
    %199 = tpu.matmul %196, %198, %cst_196 {dimension_numbers = #tpu.dot_dimension_numbers<[1], [0], [0], [1], [0, 0, 1, 1], [], []>} : vector<8x128xf32>, vector<128x128xf32>, vector<8x128xf32> -> vector<8x128xf32>
    %200 = arith.addf %195, %199 : vector<8x128xf32>
    %c50_197 = arith.constant 50 : index
    %c0_198 = arith.constant 0 : index
    %201 = vector.load %arg19[%c50_197, %c0_198] : memref<72x128xf32, #tpu.memory_space<vmem>>, vector<8x128xf32>
    %c4_199 = arith.constant 4 : index
    %c0_200 = arith.constant 0 : index
    %c0_201 = arith.constant 0 : index
    %202 = vector.load %arg5[%c4_199, %c0_200, %c0_201] : memref<9x128x128xf32, #tpu.memory_space<vmem>>, vector<1x128x128xf32>
    %203 = vector.shape_cast %202 : vector<1x128x128xf32> to vector<128x128xf32>
    %cst_202 = arith.constant dense<0.000000e+00> : vector<8x128xf32>
    %204 = tpu.matmul %201, %203, %cst_202 {dimension_numbers = #tpu.dot_dimension_numbers<[1], [0], [0], [1], [0, 0, 1, 1], [], []>} : vector<8x128xf32>, vector<128x128xf32>, vector<8x128xf32> -> vector<8x128xf32>
    %205 = arith.addf %200, %204 : vector<8x128xf32>
    %c52_203 = arith.constant 52 : index
    %c0_204 = arith.constant 0 : index
    %206 = vector.load %arg19[%c52_203, %c0_204] : memref<72x128xf32, #tpu.memory_space<vmem>>, vector<8x128xf32>
    %c5_205 = arith.constant 5 : index
    %c0_206 = arith.constant 0 : index
    %c0_207 = arith.constant 0 : index
    %207 = vector.load %arg5[%c5_205, %c0_206, %c0_207] : memref<9x128x128xf32, #tpu.memory_space<vmem>>, vector<1x128x128xf32>
    %208 = vector.shape_cast %207 : vector<1x128x128xf32> to vector<128x128xf32>
    %cst_208 = arith.constant dense<0.000000e+00> : vector<8x128xf32>
    %209 = tpu.matmul %206, %208, %cst_208 {dimension_numbers = #tpu.dot_dimension_numbers<[1], [0], [0], [1], [0, 0, 1, 1], [], []>} : vector<8x128xf32>, vector<128x128xf32>, vector<8x128xf32> -> vector<8x128xf32>
    %210 = arith.addf %205, %209 : vector<8x128xf32>
    %c60 = arith.constant 60 : index
    %c0_209 = arith.constant 0 : index
    %211 = vector.load %arg19[%c60, %c0_209] : memref<72x128xf32, #tpu.memory_space<vmem>>, vector<8x128xf32>
    %c6_210 = arith.constant 6 : index
    %c0_211 = arith.constant 0 : index
    %c0_212 = arith.constant 0 : index
    %212 = vector.load %arg5[%c6_210, %c0_211, %c0_212] : memref<9x128x128xf32, #tpu.memory_space<vmem>>, vector<1x128x128xf32>
    %213 = vector.shape_cast %212 : vector<1x128x128xf32> to vector<128x128xf32>
    %cst_213 = arith.constant dense<0.000000e+00> : vector<8x128xf32>
    %214 = tpu.matmul %211, %213, %cst_213 {dimension_numbers = #tpu.dot_dimension_numbers<[1], [0], [0], [1], [0, 0, 1, 1], [], []>} : vector<8x128xf32>, vector<128x128xf32>, vector<8x128xf32> -> vector<8x128xf32>
    %215 = arith.addf %210, %214 : vector<8x128xf32>
    %c62 = arith.constant 62 : index
    %c0_214 = arith.constant 0 : index
    %216 = vector.load %arg19[%c62, %c0_214] : memref<72x128xf32, #tpu.memory_space<vmem>>, vector<8x128xf32>
    %c7_215 = arith.constant 7 : index
    %c0_216 = arith.constant 0 : index
    %c0_217 = arith.constant 0 : index
    %217 = vector.load %arg5[%c7_215, %c0_216, %c0_217] : memref<9x128x128xf32, #tpu.memory_space<vmem>>, vector<1x128x128xf32>
    %218 = vector.shape_cast %217 : vector<1x128x128xf32> to vector<128x128xf32>
    %cst_218 = arith.constant dense<0.000000e+00> : vector<8x128xf32>
    %219 = tpu.matmul %216, %218, %cst_218 {dimension_numbers = #tpu.dot_dimension_numbers<[1], [0], [0], [1], [0, 0, 1, 1], [], []>} : vector<8x128xf32>, vector<128x128xf32>, vector<8x128xf32> -> vector<8x128xf32>
    %220 = arith.addf %215, %219 : vector<8x128xf32>
    %c64 = arith.constant 64 : index
    %c0_219 = arith.constant 0 : index
    %221 = vector.load %arg19[%c64, %c0_219] : memref<72x128xf32, #tpu.memory_space<vmem>>, vector<8x128xf32>
    %c8_220 = arith.constant 8 : index
    %c0_221 = arith.constant 0 : index
    %c0_222 = arith.constant 0 : index
    %222 = vector.load %arg5[%c8_220, %c0_221, %c0_222] : memref<9x128x128xf32, #tpu.memory_space<vmem>>, vector<1x128x128xf32>
    %223 = vector.shape_cast %222 : vector<1x128x128xf32> to vector<128x128xf32>
    %cst_223 = arith.constant dense<0.000000e+00> : vector<8x128xf32>
    %224 = tpu.matmul %221, %223, %cst_223 {dimension_numbers = #tpu.dot_dimension_numbers<[1], [0], [0], [1], [0, 0, 1, 1], [], []>} : vector<8x128xf32>, vector<128x128xf32>, vector<8x128xf32> -> vector<8x128xf32>
    %225 = arith.addf %220, %224 : vector<8x128xf32>
    %c24_224 = arith.constant 24 : index
    %c0_225 = arith.constant 0 : index
    %226 = vector.load %arg20[%c24_224, %c0_225] : memref<32x128xf32, #tpu.memory_space<vmem>>, vector<8x128xf32>
    tpu.vector_store %arg20[%c24_224, %c0_225], %225 {strides = array<i32>} : memref<32x128xf32, #tpu.memory_space<vmem>>, vector<8x128xf32>,
    %c0_226 = arith.constant 0 : index
    %c0_227 = arith.constant 0 : index
    %227 = vector.load %arg20[%c0_226, %c0_227] : memref<32x128xf32, #tpu.memory_space<vmem>>, vector<32x128xf32>
    %c0_228 = arith.constant 0 : index
    %c0_229 = arith.constant 0 : index
    %228 = vector.load %arg6[%c0_228, %c0_229] : memref<1x128xf32, #tpu.memory_space<vmem>>, vector<1x128xf32>
    %c0_230 = arith.constant 0 : index
    %c0_231 = arith.constant 0 : index
    %229 = vector.load %arg7[%c0_230, %c0_231] : memref<1x128xf32, #tpu.memory_space<vmem>>, vector<1x128xf32>
    %cst_232 = arith.constant dense<0.000000e+00> : vector<128xf32>
    %230 = vector.multi_reduction <add>, %227, %cst_232 [0] : vector<32x128xf32> to vector<128xf32>
    %231 = vector.shape_cast %230 : vector<128xf32> to vector<1x128xf32>
    %cst_233 = arith.constant 3.200000e+01 : f32
    %232 = vector.broadcast %cst_233 : f32 to vector<1x128xf32>
    %233 = arith.divf %231, %232 : vector<1x128xf32>
    %234 = arith.mulf %227, %227 : vector<32x128xf32>
    %cst_234 = arith.constant dense<0.000000e+00> : vector<128xf32>
    %235 = vector.multi_reduction <add>, %234, %cst_234 [0] : vector<32x128xf32> to vector<128xf32>
    %236 = vector.shape_cast %235 : vector<128xf32> to vector<1x128xf32>
    %cst_235 = arith.constant 3.200000e+01 : f32
    %237 = vector.broadcast %cst_235 : f32 to vector<1x128xf32>
    %238 = arith.divf %236, %237 : vector<1x128xf32>
    %239 = arith.mulf %233, %233 : vector<1x128xf32>
    %240 = arith.subf %238, %239 : vector<1x128xf32>
    %cst_236 = arith.constant 0.000000e+00 : f32
    %241 = vector.broadcast %cst_236 : f32 to vector<1x128xf32>
    %242 = arith.maximumf %240, %241 : vector<1x128xf32>
    %cst_237 = arith.constant 9.99999974E-6 : f32
    %243 = vector.broadcast %cst_237 : f32 to vector<1x128xf32>
    %244 = arith.addf %242, %243 : vector<1x128xf32>
    %245 = math.rsqrt %244 : vector<1x128xf32>
    %246 = arith.mulf %228, %245 : vector<1x128xf32>
    %247 = arith.mulf %233, %246 : vector<1x128xf32>
    %248 = arith.subf %229, %247 : vector<1x128xf32>
    %249 = vector.broadcast %246 : vector<1x128xf32> to vector<32x128xf32>
    %250 = arith.mulf %227, %249 : vector<32x128xf32>
    %251 = vector.broadcast %248 : vector<1x128xf32> to vector<32x128xf32>
    %252 = arith.addf %250, %251 : vector<32x128xf32>
    %cst_238 = arith.constant 0.000000e+00 : f32
    %253 = vector.broadcast %cst_238 : f32 to vector<32x128xf32>
    %254 = arith.maximumf %252, %253 : vector<32x128xf32>
    %cst_239 = arith.constant 0.000000e+00 : f32
    %255 = vector.broadcast %cst_239 : f32 to vector<32x128xf32>
    %c0_240 = arith.constant 0 : index
    %c0_241 = arith.constant 0 : index
    %256 = vector.load %arg21[%c0_240, %c0_241] : memref<32x128xf32, #tpu.memory_space<vmem>>, vector<32x128xf32>
    tpu.vector_store %arg21[%c0_240, %c0_241], %255 {strides = array<i32>} : memref<32x128xf32, #tpu.memory_space<vmem>>, vector<32x128xf32>,
    %257 = vector.extract_strided_slice %254 {offsets = [0, 0], sizes = [4, 128], strides = [1, 1]} : vector<32x128xf32> to vector<4x128xf32>
    %258 = vector.extract_strided_slice %257 {offsets = [0, 0], sizes = [2, 128], strides = [1, 1]} : vector<4x128xf32> to vector<2x128xf32>
    %259 = vector.extract_strided_slice %257 {offsets = [2, 0], sizes = [2, 128], strides = [1, 1]} : vector<4x128xf32> to vector<2x128xf32>
    %260 = arith.maximumf %258, %259 : vector<2x128xf32>
    %261 = vector.extract_strided_slice %254 {offsets = [8, 0], sizes = [4, 128], strides = [1, 1]} : vector<32x128xf32> to vector<4x128xf32>
    %262 = vector.extract_strided_slice %261 {offsets = [0, 0], sizes = [2, 128], strides = [1, 1]} : vector<4x128xf32> to vector<2x128xf32>
    %263 = vector.extract_strided_slice %261 {offsets = [2, 0], sizes = [2, 128], strides = [1, 1]} : vector<4x128xf32> to vector<2x128xf32>
    %264 = arith.maximumf %262, %263 : vector<2x128xf32>
    %265 = arith.maximumf %260, %264 : vector<2x128xf32>
    %c10 = arith.constant 10 : index
    %c0_242 = arith.constant 0 : index
    %266 = vector.load %arg21[%c10, %c0_242] : memref<32x128xf32, #tpu.memory_space<vmem>>, vector<2x128xf32>
    tpu.vector_store %arg21[%c10, %c0_242], %265 {strides = array<i32>} : memref<32x128xf32, #tpu.memory_space<vmem>>, vector<2x128xf32>,
    %267 = vector.extract_strided_slice %254 {offsets = [4, 0], sizes = [4, 128], strides = [1, 1]} : vector<32x128xf32> to vector<4x128xf32>
    %268 = vector.extract_strided_slice %267 {offsets = [0, 0], sizes = [2, 128], strides = [1, 1]} : vector<4x128xf32> to vector<2x128xf32>
    %269 = vector.extract_strided_slice %267 {offsets = [2, 0], sizes = [2, 128], strides = [1, 1]} : vector<4x128xf32> to vector<2x128xf32>
    %270 = arith.maximumf %268, %269 : vector<2x128xf32>
    %271 = vector.extract_strided_slice %254 {offsets = [12, 0], sizes = [4, 128], strides = [1, 1]} : vector<32x128xf32> to vector<4x128xf32>
    %272 = vector.extract_strided_slice %271 {offsets = [0, 0], sizes = [2, 128], strides = [1, 1]} : vector<4x128xf32> to vector<2x128xf32>
    %273 = vector.extract_strided_slice %271 {offsets = [2, 0], sizes = [2, 128], strides = [1, 1]} : vector<4x128xf32> to vector<2x128xf32>
    %274 = arith.maximumf %272, %273 : vector<2x128xf32>
    %275 = arith.maximumf %270, %274 : vector<2x128xf32>
    %c12_243 = arith.constant 12 : index
    %c0_244 = arith.constant 0 : index
    %276 = vector.load %arg21[%c12_243, %c0_244] : memref<32x128xf32, #tpu.memory_space<vmem>>, vector<2x128xf32>
    tpu.vector_store %arg21[%c12_243, %c0_244], %275 {strides = array<i32>} : memref<32x128xf32, #tpu.memory_space<vmem>>, vector<2x128xf32>,
    %277 = vector.extract_strided_slice %254 {offsets = [16, 0], sizes = [4, 128], strides = [1, 1]} : vector<32x128xf32> to vector<4x128xf32>
    %278 = vector.extract_strided_slice %277 {offsets = [0, 0], sizes = [2, 128], strides = [1, 1]} : vector<4x128xf32> to vector<2x128xf32>
    %279 = vector.extract_strided_slice %277 {offsets = [2, 0], sizes = [2, 128], strides = [1, 1]} : vector<4x128xf32> to vector<2x128xf32>
    %280 = arith.maximumf %278, %279 : vector<2x128xf32>
    %281 = vector.extract_strided_slice %254 {offsets = [24, 0], sizes = [4, 128], strides = [1, 1]} : vector<32x128xf32> to vector<4x128xf32>
    %282 = vector.extract_strided_slice %281 {offsets = [0, 0], sizes = [2, 128], strides = [1, 1]} : vector<4x128xf32> to vector<2x128xf32>
    %283 = vector.extract_strided_slice %281 {offsets = [2, 0], sizes = [2, 128], strides = [1, 1]} : vector<4x128xf32> to vector<2x128xf32>
    %284 = arith.maximumf %282, %283 : vector<2x128xf32>
    %285 = arith.maximumf %280, %284 : vector<2x128xf32>
    %c18 = arith.constant 18 : index
    %c0_245 = arith.constant 0 : index
    %286 = vector.load %arg21[%c18, %c0_245] : memref<32x128xf32, #tpu.memory_space<vmem>>, vector<2x128xf32>
    tpu.vector_store %arg21[%c18, %c0_245], %285 {strides = array<i32>} : memref<32x128xf32, #tpu.memory_space<vmem>>, vector<2x128xf32>,
    %287 = vector.extract_strided_slice %254 {offsets = [20, 0], sizes = [4, 128], strides = [1, 1]} : vector<32x128xf32> to vector<4x128xf32>
    %288 = vector.extract_strided_slice %287 {offsets = [0, 0], sizes = [2, 128], strides = [1, 1]} : vector<4x128xf32> to vector<2x128xf32>
    %289 = vector.extract_strided_slice %287 {offsets = [2, 0], sizes = [2, 128], strides = [1, 1]} : vector<4x128xf32> to vector<2x128xf32>
    %290 = arith.maximumf %288, %289 : vector<2x128xf32>
    %291 = vector.extract_strided_slice %254 {offsets = [28, 0], sizes = [4, 128], strides = [1, 1]} : vector<32x128xf32> to vector<4x128xf32>
    %292 = vector.extract_strided_slice %291 {offsets = [0, 0], sizes = [2, 128], strides = [1, 1]} : vector<4x128xf32> to vector<2x128xf32>
    %293 = vector.extract_strided_slice %291 {offsets = [2, 0], sizes = [2, 128], strides = [1, 1]} : vector<4x128xf32> to vector<2x128xf32>
    %294 = arith.maximumf %292, %293 : vector<2x128xf32>
    %295 = arith.maximumf %290, %294 : vector<2x128xf32>
    %c20 = arith.constant 20 : index
    %c0_246 = arith.constant 0 : index
    %296 = vector.load %arg21[%c20, %c0_246] : memref<32x128xf32, #tpu.memory_space<vmem>>, vector<2x128xf32>
    tpu.vector_store %arg21[%c20, %c0_246], %295 {strides = array<i32>} : memref<32x128xf32, #tpu.memory_space<vmem>>, vector<2x128xf32>,
    %c0_247 = arith.constant 0 : index
    %c0_248 = arith.constant 0 : index
    %297 = vector.load %arg21[%c0_247, %c0_248] : memref<32x128xf32, #tpu.memory_space<vmem>>, vector<4x128xf32>
    %c0_249 = arith.constant 0 : index
    %c0_250 = arith.constant 0 : index
    %c0_251 = arith.constant 0 : index
    %298 = vector.load %arg8[%c0_249, %c0_250, %c0_251] : memref<9x128x256xf32, #tpu.memory_space<vmem>>, vector<1x128x256xf32>
    %299 = vector.shape_cast %298 : vector<1x128x256xf32> to vector<128x256xf32>
    %cst_252 = arith.constant dense<0.000000e+00> : vector<4x256xf32>
    %300 = tpu.matmul %297, %299, %cst_252 {dimension_numbers = #tpu.dot_dimension_numbers<[1], [0], [0], [1], [0, 0, 1, 1], [], []>} : vector<4x128xf32>, vector<128x256xf32>, vector<4x256xf32> -> vector<4x256xf32>
    %c2_253 = arith.constant 2 : index
    %c0_254 = arith.constant 0 : index
    %301 = vector.load %arg21[%c2_253, %c0_254] : memref<32x128xf32, #tpu.memory_space<vmem>>, vector<4x128xf32>
    %c1_255 = arith.constant 1 : index
    %c0_256 = arith.constant 0 : index
    %c0_257 = arith.constant 0 : index
    %302 = vector.load %arg8[%c1_255, %c0_256, %c0_257] : memref<9x128x256xf32, #tpu.memory_space<vmem>>, vector<1x128x256xf32>
    %303 = vector.shape_cast %302 : vector<1x128x256xf32> to vector<128x256xf32>
    %cst_258 = arith.constant dense<0.000000e+00> : vector<4x256xf32>
    %304 = tpu.matmul %301, %303, %cst_258 {dimension_numbers = #tpu.dot_dimension_numbers<[1], [0], [0], [1], [0, 0, 1, 1], [], []>} : vector<4x128xf32>, vector<128x256xf32>, vector<4x256xf32> -> vector<4x256xf32>
    %305 = arith.addf %300, %304 : vector<4x256xf32>
    %c4_259 = arith.constant 4 : index
    %c0_260 = arith.constant 0 : index
    %306 = vector.load %arg21[%c4_259, %c0_260] : memref<32x128xf32, #tpu.memory_space<vmem>>, vector<4x128xf32>
    %c2_261 = arith.constant 2 : index
    %c0_262 = arith.constant 0 : index
    %c0_263 = arith.constant 0 : index
    %307 = vector.load %arg8[%c2_261, %c0_262, %c0_263] : memref<9x128x256xf32, #tpu.memory_space<vmem>>, vector<1x128x256xf32>
    %308 = vector.shape_cast %307 : vector<1x128x256xf32> to vector<128x256xf32>
    %cst_264 = arith.constant dense<0.000000e+00> : vector<4x256xf32>
    %309 = tpu.matmul %306, %308, %cst_264 {dimension_numbers = #tpu.dot_dimension_numbers<[1], [0], [0], [1], [0, 0, 1, 1], [], []>} : vector<4x128xf32>, vector<128x256xf32>, vector<4x256xf32> -> vector<4x256xf32>
    %310 = arith.addf %305, %309 : vector<4x256xf32>
    %c8_265 = arith.constant 8 : index
    %c0_266 = arith.constant 0 : index
    %311 = vector.load %arg21[%c8_265, %c0_266] : memref<32x128xf32, #tpu.memory_space<vmem>>, vector<4x128xf32>
    %c3_267 = arith.constant 3 : index
    %c0_268 = arith.constant 0 : index
    %c0_269 = arith.constant 0 : index
    %312 = vector.load %arg8[%c3_267, %c0_268, %c0_269] : memref<9x128x256xf32, #tpu.memory_space<vmem>>, vector<1x128x256xf32>
    %313 = vector.shape_cast %312 : vector<1x128x256xf32> to vector<128x256xf32>
    %cst_270 = arith.constant dense<0.000000e+00> : vector<4x256xf32>
    %314 = tpu.matmul %311, %313, %cst_270 {dimension_numbers = #tpu.dot_dimension_numbers<[1], [0], [0], [1], [0, 0, 1, 1], [], []>} : vector<4x128xf32>, vector<128x256xf32>, vector<4x256xf32> -> vector<4x256xf32>
    %315 = arith.addf %310, %314 : vector<4x256xf32>
    %c10_271 = arith.constant 10 : index
    %c0_272 = arith.constant 0 : index
    %316 = vector.load %arg21[%c10_271, %c0_272] : memref<32x128xf32, #tpu.memory_space<vmem>>, vector<4x128xf32>
    %c4_273 = arith.constant 4 : index
    %c0_274 = arith.constant 0 : index
    %c0_275 = arith.constant 0 : index
    %317 = vector.load %arg8[%c4_273, %c0_274, %c0_275] : memref<9x128x256xf32, #tpu.memory_space<vmem>>, vector<1x128x256xf32>
    %318 = vector.shape_cast %317 : vector<1x128x256xf32> to vector<128x256xf32>
    %cst_276 = arith.constant dense<0.000000e+00> : vector<4x256xf32>
    %319 = tpu.matmul %316, %318, %cst_276 {dimension_numbers = #tpu.dot_dimension_numbers<[1], [0], [0], [1], [0, 0, 1, 1], [], []>} : vector<4x128xf32>, vector<128x256xf32>, vector<4x256xf32> -> vector<4x256xf32>
    %320 = arith.addf %315, %319 : vector<4x256xf32>
    %c12_277 = arith.constant 12 : index
    %c0_278 = arith.constant 0 : index
    %321 = vector.load %arg21[%c12_277, %c0_278] : memref<32x128xf32, #tpu.memory_space<vmem>>, vector<4x128xf32>
    %c5_279 = arith.constant 5 : index
    %c0_280 = arith.constant 0 : index
    %c0_281 = arith.constant 0 : index
    %322 = vector.load %arg8[%c5_279, %c0_280, %c0_281] : memref<9x128x256xf32, #tpu.memory_space<vmem>>, vector<1x128x256xf32>
    %323 = vector.shape_cast %322 : vector<1x128x256xf32> to vector<128x256xf32>
    %cst_282 = arith.constant dense<0.000000e+00> : vector<4x256xf32>
    %324 = tpu.matmul %321, %323, %cst_282 {dimension_numbers = #tpu.dot_dimension_numbers<[1], [0], [0], [1], [0, 0, 1, 1], [], []>} : vector<4x128xf32>, vector<128x256xf32>, vector<4x256xf32> -> vector<4x256xf32>
    %325 = arith.addf %320, %324 : vector<4x256xf32>
    %c16_283 = arith.constant 16 : index
    %c0_284 = arith.constant 0 : index
    %326 = vector.load %arg21[%c16_283, %c0_284] : memref<32x128xf32, #tpu.memory_space<vmem>>, vector<4x128xf32>
    %c6_285 = arith.constant 6 : index
    %c0_286 = arith.constant 0 : index
    %c0_287 = arith.constant 0 : index
    %327 = vector.load %arg8[%c6_285, %c0_286, %c0_287] : memref<9x128x256xf32, #tpu.memory_space<vmem>>, vector<1x128x256xf32>
    %328 = vector.shape_cast %327 : vector<1x128x256xf32> to vector<128x256xf32>
    %cst_288 = arith.constant dense<0.000000e+00> : vector<4x256xf32>
    %329 = tpu.matmul %326, %328, %cst_288 {dimension_numbers = #tpu.dot_dimension_numbers<[1], [0], [0], [1], [0, 0, 1, 1], [], []>} : vector<4x128xf32>, vector<128x256xf32>, vector<4x256xf32> -> vector<4x256xf32>
    %330 = arith.addf %325, %329 : vector<4x256xf32>
    %c18_289 = arith.constant 18 : index
    %c0_290 = arith.constant 0 : index
    %331 = vector.load %arg21[%c18_289, %c0_290] : memref<32x128xf32, #tpu.memory_space<vmem>>, vector<4x128xf32>
    %c7_291 = arith.constant 7 : index
    %c0_292 = arith.constant 0 : index
    %c0_293 = arith.constant 0 : index
    %332 = vector.load %arg8[%c7_291, %c0_292, %c0_293] : memref<9x128x256xf32, #tpu.memory_space<vmem>>, vector<1x128x256xf32>
    %333 = vector.shape_cast %332 : vector<1x128x256xf32> to vector<128x256xf32>
    %cst_294 = arith.constant dense<0.000000e+00> : vector<4x256xf32>
    %334 = tpu.matmul %331, %333, %cst_294 {dimension_numbers = #tpu.dot_dimension_numbers<[1], [0], [0], [1], [0, 0, 1, 1], [], []>} : vector<4x128xf32>, vector<128x256xf32>, vector<4x256xf32> -> vector<4x256xf32>
    %335 = arith.addf %330, %334 : vector<4x256xf32>
    %c20_295 = arith.constant 20 : index
    %c0_296 = arith.constant 0 : index
    %336 = vector.load %arg21[%c20_295, %c0_296] : memref<32x128xf32, #tpu.memory_space<vmem>>, vector<4x128xf32>
    %c8_297 = arith.constant 8 : index
    %c0_298 = arith.constant 0 : index
    %c0_299 = arith.constant 0 : index
    %337 = vector.load %arg8[%c8_297, %c0_298, %c0_299] : memref<9x128x256xf32, #tpu.memory_space<vmem>>, vector<1x128x256xf32>
    %338 = vector.shape_cast %337 : vector<1x128x256xf32> to vector<128x256xf32>
    %cst_300 = arith.constant dense<0.000000e+00> : vector<4x256xf32>
    %339 = tpu.matmul %336, %338, %cst_300 {dimension_numbers = #tpu.dot_dimension_numbers<[1], [0], [0], [1], [0, 0, 1, 1], [], []>} : vector<4x128xf32>, vector<128x256xf32>, vector<4x256xf32> -> vector<4x256xf32>
    %340 = arith.addf %335, %339 : vector<4x256xf32>
    %c0_301 = arith.constant 0 : index
    %c0_302 = arith.constant 0 : index
    %341 = vector.load %arg9[%c0_301, %c0_302] : memref<1x256xf32, #tpu.memory_space<vmem>>, vector<1x256xf32>
    %342 = vector.broadcast %341 : vector<1x256xf32> to vector<4x256xf32>
    %343 = arith.addf %340, %342 : vector<4x256xf32>
    %344 = vector.extract_strided_slice %343 {offsets = [0, 0], sizes = [2, 256], strides = [1, 1]} : vector<4x256xf32> to vector<2x256xf32>
    %345 = vector.extract_strided_slice %343 {offsets = [2, 0], sizes = [2, 256], strides = [1, 1]} : vector<4x256xf32> to vector<2x256xf32>
    %346 = arith.maximumf %344, %345 : vector<2x256xf32>
    %c8_303 = arith.constant 8 : index
    %c0_304 = arith.constant 0 : index
    %347 = vector.load %arg21[%c8_303, %c0_304] : memref<32x128xf32, #tpu.memory_space<vmem>>, vector<4x128xf32>
    %c0_305 = arith.constant 0 : index
    %c0_306 = arith.constant 0 : index
    %c0_307 = arith.constant 0 : index
    %348 = vector.load %arg8[%c0_305, %c0_306, %c0_307] : memref<9x128x256xf32, #tpu.memory_space<vmem>>, vector<1x128x256xf32>
    %349 = vector.shape_cast %348 : vector<1x128x256xf32> to vector<128x256xf32>
    %cst_308 = arith.constant dense<0.000000e+00> : vector<4x256xf32>
    %350 = tpu.matmul %347, %349, %cst_308 {dimension_numbers = #tpu.dot_dimension_numbers<[1], [0], [0], [1], [0, 0, 1, 1], [], []>} : vector<4x128xf32>, vector<128x256xf32>, vector<4x256xf32> -> vector<4x256xf32>
    %c10_309 = arith.constant 10 : index
    %c0_310 = arith.constant 0 : index
    %351 = vector.load %arg21[%c10_309, %c0_310] : memref<32x128xf32, #tpu.memory_space<vmem>>, vector<4x128xf32>
    %c1_311 = arith.constant 1 : index
    %c0_312 = arith.constant 0 : index
    %c0_313 = arith.constant 0 : index
    %352 = vector.load %arg8[%c1_311, %c0_312, %c0_313] : memref<9x128x256xf32, #tpu.memory_space<vmem>>, vector<1x128x256xf32>
    %353 = vector.shape_cast %352 : vector<1x128x256xf32> to vector<128x256xf32>
    %cst_314 = arith.constant dense<0.000000e+00> : vector<4x256xf32>
    %354 = tpu.matmul %351, %353, %cst_314 {dimension_numbers = #tpu.dot_dimension_numbers<[1], [0], [0], [1], [0, 0, 1, 1], [], []>} : vector<4x128xf32>, vector<128x256xf32>, vector<4x256xf32> -> vector<4x256xf32>
    %355 = arith.addf %350, %354 : vector<4x256xf32>
    %c12_315 = arith.constant 12 : index
    %c0_316 = arith.constant 0 : index
    %356 = vector.load %arg21[%c12_315, %c0_316] : memref<32x128xf32, #tpu.memory_space<vmem>>, vector<4x128xf32>
    %c2_317 = arith.constant 2 : index
    %c0_318 = arith.constant 0 : index
    %c0_319 = arith.constant 0 : index
    %357 = vector.load %arg8[%c2_317, %c0_318, %c0_319] : memref<9x128x256xf32, #tpu.memory_space<vmem>>, vector<1x128x256xf32>
    %358 = vector.shape_cast %357 : vector<1x128x256xf32> to vector<128x256xf32>
    %cst_320 = arith.constant dense<0.000000e+00> : vector<4x256xf32>
    %359 = tpu.matmul %356, %358, %cst_320 {dimension_numbers = #tpu.dot_dimension_numbers<[1], [0], [0], [1], [0, 0, 1, 1], [], []>} : vector<4x128xf32>, vector<128x256xf32>, vector<4x256xf32> -> vector<4x256xf32>
    %360 = arith.addf %355, %359 : vector<4x256xf32>
    %c16_321 = arith.constant 16 : index
    %c0_322 = arith.constant 0 : index
    %361 = vector.load %arg21[%c16_321, %c0_322] : memref<32x128xf32, #tpu.memory_space<vmem>>, vector<4x128xf32>
    %c3_323 = arith.constant 3 : index
    %c0_324 = arith.constant 0 : index
    %c0_325 = arith.constant 0 : index
    %362 = vector.load %arg8[%c3_323, %c0_324, %c0_325] : memref<9x128x256xf32, #tpu.memory_space<vmem>>, vector<1x128x256xf32>
    %363 = vector.shape_cast %362 : vector<1x128x256xf32> to vector<128x256xf32>
    %cst_326 = arith.constant dense<0.000000e+00> : vector<4x256xf32>
    %364 = tpu.matmul %361, %363, %cst_326 {dimension_numbers = #tpu.dot_dimension_numbers<[1], [0], [0], [1], [0, 0, 1, 1], [], []>} : vector<4x128xf32>, vector<128x256xf32>, vector<4x256xf32> -> vector<4x256xf32>
    %365 = arith.addf %360, %364 : vector<4x256xf32>
    %c18_327 = arith.constant 18 : index
    %c0_328 = arith.constant 0 : index
    %366 = vector.load %arg21[%c18_327, %c0_328] : memref<32x128xf32, #tpu.memory_space<vmem>>, vector<4x128xf32>
    %c4_329 = arith.constant 4 : index
    %c0_330 = arith.constant 0 : index
    %c0_331 = arith.constant 0 : index
    %367 = vector.load %arg8[%c4_329, %c0_330, %c0_331] : memref<9x128x256xf32, #tpu.memory_space<vmem>>, vector<1x128x256xf32>
    %368 = vector.shape_cast %367 : vector<1x128x256xf32> to vector<128x256xf32>
    %cst_332 = arith.constant dense<0.000000e+00> : vector<4x256xf32>
    %369 = tpu.matmul %366, %368, %cst_332 {dimension_numbers = #tpu.dot_dimension_numbers<[1], [0], [0], [1], [0, 0, 1, 1], [], []>} : vector<4x128xf32>, vector<128x256xf32>, vector<4x256xf32> -> vector<4x256xf32>
    %370 = arith.addf %365, %369 : vector<4x256xf32>
    %c20_333 = arith.constant 20 : index
    %c0_334 = arith.constant 0 : index
    %371 = vector.load %arg21[%c20_333, %c0_334] : memref<32x128xf32, #tpu.memory_space<vmem>>, vector<4x128xf32>
    %c5_335 = arith.constant 5 : index
    %c0_336 = arith.constant 0 : index
    %c0_337 = arith.constant 0 : index
    %372 = vector.load %arg8[%c5_335, %c0_336, %c0_337] : memref<9x128x256xf32, #tpu.memory_space<vmem>>, vector<1x128x256xf32>
    %373 = vector.shape_cast %372 : vector<1x128x256xf32> to vector<128x256xf32>
    %cst_338 = arith.constant dense<0.000000e+00> : vector<4x256xf32>
    %374 = tpu.matmul %371, %373, %cst_338 {dimension_numbers = #tpu.dot_dimension_numbers<[1], [0], [0], [1], [0, 0, 1, 1], [], []>} : vector<4x128xf32>, vector<128x256xf32>, vector<4x256xf32> -> vector<4x256xf32>
    %375 = arith.addf %370, %374 : vector<4x256xf32>
    %c24_339 = arith.constant 24 : index
    %c0_340 = arith.constant 0 : index
    %376 = vector.load %arg21[%c24_339, %c0_340] : memref<32x128xf32, #tpu.memory_space<vmem>>, vector<4x128xf32>
    %c6_341 = arith.constant 6 : index
    %c0_342 = arith.constant 0 : index
    %c0_343 = arith.constant 0 : index
    %377 = vector.load %arg8[%c6_341, %c0_342, %c0_343] : memref<9x128x256xf32, #tpu.memory_space<vmem>>, vector<1x128x256xf32>
    %378 = vector.shape_cast %377 : vector<1x128x256xf32> to vector<128x256xf32>
    %cst_344 = arith.constant dense<0.000000e+00> : vector<4x256xf32>
    %379 = tpu.matmul %376, %378, %cst_344 {dimension_numbers = #tpu.dot_dimension_numbers<[1], [0], [0], [1], [0, 0, 1, 1], [], []>} : vector<4x128xf32>, vector<128x256xf32>, vector<4x256xf32> -> vector<4x256xf32>
    %380 = arith.addf %375, %379 : vector<4x256xf32>
    %c26_345 = arith.constant 26 : index
    %c0_346 = arith.constant 0 : index
    %381 = vector.load %arg21[%c26_345, %c0_346] : memref<32x128xf32, #tpu.memory_space<vmem>>, vector<4x128xf32>
    %c7_347 = arith.constant 7 : index
    %c0_348 = arith.constant 0 : index
    %c0_349 = arith.constant 0 : index
    %382 = vector.load %arg8[%c7_347, %c0_348, %c0_349] : memref<9x128x256xf32, #tpu.memory_space<vmem>>, vector<1x128x256xf32>
    %383 = vector.shape_cast %382 : vector<1x128x256xf32> to vector<128x256xf32>
    %cst_350 = arith.constant dense<0.000000e+00> : vector<4x256xf32>
    %384 = tpu.matmul %381, %383, %cst_350 {dimension_numbers = #tpu.dot_dimension_numbers<[1], [0], [0], [1], [0, 0, 1, 1], [], []>} : vector<4x128xf32>, vector<128x256xf32>, vector<4x256xf32> -> vector<4x256xf32>
    %385 = arith.addf %380, %384 : vector<4x256xf32>
    %c28_351 = arith.constant 28 : index
    %c0_352 = arith.constant 0 : index
    %386 = vector.load %arg21[%c28_351, %c0_352] : memref<32x128xf32, #tpu.memory_space<vmem>>, vector<4x128xf32>
    %c8_353 = arith.constant 8 : index
    %c0_354 = arith.constant 0 : index
    %c0_355 = arith.constant 0 : index
    %387 = vector.load %arg8[%c8_353, %c0_354, %c0_355] : memref<9x128x256xf32, #tpu.memory_space<vmem>>, vector<1x128x256xf32>
    %388 = vector.shape_cast %387 : vector<1x128x256xf32> to vector<128x256xf32>
    %cst_356 = arith.constant dense<0.000000e+00> : vector<4x256xf32>
    %389 = tpu.matmul %386, %388, %cst_356 {dimension_numbers = #tpu.dot_dimension_numbers<[1], [0], [0], [1], [0, 0, 1, 1], [], []>} : vector<4x128xf32>, vector<128x256xf32>, vector<4x256xf32> -> vector<4x256xf32>
    %390 = arith.addf %385, %389 : vector<4x256xf32>
    %c0_357 = arith.constant 0 : index
    %c0_358 = arith.constant 0 : index
    %391 = vector.load %arg9[%c0_357, %c0_358] : memref<1x256xf32, #tpu.memory_space<vmem>>, vector<1x256xf32>
    %392 = vector.broadcast %391 : vector<1x256xf32> to vector<4x256xf32>
    %393 = arith.addf %390, %392 : vector<4x256xf32>
    %394 = vector.extract_strided_slice %393 {offsets = [0, 0], sizes = [2, 256], strides = [1, 1]} : vector<4x256xf32> to vector<2x256xf32>
    %395 = vector.extract_strided_slice %393 {offsets = [2, 0], sizes = [2, 256], strides = [1, 1]} : vector<4x256xf32> to vector<2x256xf32>
    %396 = arith.maximumf %394, %395 : vector<2x256xf32>
    %397 = arith.maximumf %346, %396 : vector<2x256xf32>
    %c0_359 = arith.constant 0 : index
    %c0_360 = arith.constant 0 : index
    %398 = vector.load %arg17[%c0_359, %c0_360] : memref<2x256xf32, #tpu.memory_space<vmem>>, vector<2x256xf32>
    tpu.vector_store %arg17[%c0_359, %c0_360], %397 {strides = array<i32>} : memref<2x256xf32, #tpu.memory_space<vmem>>, vector<2x256xf32>,
    %c0_361 = arith.constant 0 : index
    %c0_362 = arith.constant 0 : index
    %399 = vector.load %arg10[%c0_361, %c0_362] : memref<1x256xf32, #tpu.memory_space<vmem>>, vector<1x256xf32>
    %c0_363 = arith.constant 0 : index
    %c0_364 = arith.constant 0 : index
    %400 = vector.load %arg11[%c0_363, %c0_364] : memref<1x256xf32, #tpu.memory_space<vmem>>, vector<1x256xf32>
    %cst_365 = arith.constant dense<0.000000e+00> : vector<256xf32>
    %401 = vector.multi_reduction <add>, %397, %cst_365 [0] : vector<2x256xf32> to vector<256xf32>
    %402 = vector.shape_cast %401 : vector<256xf32> to vector<1x256xf32>
    %cst_366 = arith.constant 2.000000e+00 : f32
    %403 = vector.broadcast %cst_366 : f32 to vector<1x256xf32>
    %404 = arith.divf %402, %403 : vector<1x256xf32>
    %405 = arith.mulf %397, %397 : vector<2x256xf32>
    %cst_367 = arith.constant dense<0.000000e+00> : vector<256xf32>
    %406 = vector.multi_reduction <add>, %405, %cst_367 [0] : vector<2x256xf32> to vector<256xf32>
    %407 = vector.shape_cast %406 : vector<256xf32> to vector<1x256xf32>
    %cst_368 = arith.constant 2.000000e+00 : f32
    %408 = vector.broadcast %cst_368 : f32 to vector<1x256xf32>
    %409 = arith.divf %407, %408 : vector<1x256xf32>
    %410 = arith.mulf %404, %404 : vector<1x256xf32>
    %411 = arith.subf %409, %410 : vector<1x256xf32>
    %cst_369 = arith.constant 0.000000e+00 : f32
    %412 = vector.broadcast %cst_369 : f32 to vector<1x256xf32>
    %413 = arith.maximumf %411, %412 : vector<1x256xf32>
    %cst_370 = arith.constant 9.99999974E-6 : f32
    %414 = vector.broadcast %cst_370 : f32 to vector<1x256xf32>
    %415 = arith.addf %413, %414 : vector<1x256xf32>
    %416 = math.rsqrt %415 : vector<1x256xf32>
    %417 = arith.mulf %399, %416 : vector<1x256xf32>
    %418 = arith.mulf %404, %417 : vector<1x256xf32>
    %419 = arith.subf %400, %418 : vector<1x256xf32>
    %420 = vector.broadcast %417 : vector<1x256xf32> to vector<2x256xf32>
    %421 = arith.mulf %397, %420 : vector<2x256xf32>
    %422 = vector.broadcast %419 : vector<1x256xf32> to vector<2x256xf32>
    %423 = arith.addf %421, %422 : vector<2x256xf32>
    %cst_371 = arith.constant 0.000000e+00 : f32
    %424 = vector.broadcast %cst_371 : f32 to vector<2x256xf32>
    %425 = arith.maximumf %423, %424 : vector<2x256xf32>
    %c0_372 = arith.constant 0 : index
    %c0_373 = arith.constant 0 : index
    %426 = vector.load %arg12[%c0_372, %c0_373] : memref<256x64xf32, #tpu.memory_space<vmem>>, vector<256x64xf32>
    %cst_374 = arith.constant dense<0.000000e+00> : vector<2x64xf32>
    %427 = tpu.matmul %425, %426, %cst_374 {dimension_numbers = #tpu.dot_dimension_numbers<[1], [0], [0], [1], [0, 0, 1, 1], [], []>} : vector<2x256xf32>, vector<256x64xf32>, vector<2x64xf32> -> vector<2x64xf32>
    %c0_375 = arith.constant 0 : index
    %c0_376 = arith.constant 0 : index
    %428 = vector.load %arg13[%c0_375, %c0_376] : memref<1x64xf32, #tpu.memory_space<vmem>>, vector<1x64xf32>
    %c0_377 = arith.constant 0 : index
    %c0_378 = arith.constant 0 : index
    %429 = vector.load %arg14[%c0_377, %c0_378] : memref<1x64xf32, #tpu.memory_space<vmem>>, vector<1x64xf32>
    %cst_379 = arith.constant dense<0.000000e+00> : vector<64xf32>
    %430 = vector.multi_reduction <add>, %427, %cst_379 [0] : vector<2x64xf32> to vector<64xf32>
    %431 = vector.shape_cast %430 : vector<64xf32> to vector<1x64xf32>
    %cst_380 = arith.constant 2.000000e+00 : f32
    %432 = vector.broadcast %cst_380 : f32 to vector<1x64xf32>
    %433 = arith.divf %431, %432 : vector<1x64xf32>
    %434 = arith.mulf %427, %427 : vector<2x64xf32>
    %cst_381 = arith.constant dense<0.000000e+00> : vector<64xf32>
    %435 = vector.multi_reduction <add>, %434, %cst_381 [0] : vector<2x64xf32> to vector<64xf32>
    %436 = vector.shape_cast %435 : vector<64xf32> to vector<1x64xf32>
    %cst_382 = arith.constant 2.000000e+00 : f32
    %437 = vector.broadcast %cst_382 : f32 to vector<1x64xf32>
    %438 = arith.divf %436, %437 : vector<1x64xf32>
    %439 = arith.mulf %433, %433 : vector<1x64xf32>
    %440 = arith.subf %438, %439 : vector<1x64xf32>
    %cst_383 = arith.constant 0.000000e+00 : f32
    %441 = vector.broadcast %cst_383 : f32 to vector<1x64xf32>
    %442 = arith.maximumf %440, %441 : vector<1x64xf32>
    %cst_384 = arith.constant 9.99999974E-6 : f32
    %443 = vector.broadcast %cst_384 : f32 to vector<1x64xf32>
    %444 = arith.addf %442, %443 : vector<1x64xf32>
    %445 = math.rsqrt %444 : vector<1x64xf32>
    %446 = arith.mulf %428, %445 : vector<1x64xf32>
    %447 = arith.mulf %433, %446 : vector<1x64xf32>
    %448 = arith.subf %429, %447 : vector<1x64xf32>
    %449 = vector.broadcast %446 : vector<1x64xf32> to vector<2x64xf32>
    %450 = arith.mulf %427, %449 : vector<2x64xf32>
    %451 = vector.broadcast %448 : vector<1x64xf32> to vector<2x64xf32>
    %452 = arith.addf %450, %451 : vector<2x64xf32>
    %cst_385 = arith.constant 0.000000e+00 : f32
    %453 = vector.broadcast %cst_385 : f32 to vector<2x64xf32>
    %454 = arith.maximumf %452, %453 : vector<2x64xf32>
    %c0_386 = arith.constant 0 : index
    %c0_387 = arith.constant 0 : index
    %455 = vector.load %arg15[%c0_386, %c0_387] : memref<64x128xf32, #tpu.memory_space<vmem>>, vector<64x128xf32>
    %cst_388 = arith.constant dense<0.000000e+00> : vector<2x128xf32>
    %456 = tpu.matmul %454, %455, %cst_388 {dimension_numbers = #tpu.dot_dimension_numbers<[1], [0], [0], [1], [0, 0, 1, 1], [], []>} : vector<2x64xf32>, vector<64x128xf32>, vector<2x128xf32> -> vector<2x128xf32>
    %c0_389 = arith.constant 0 : index
    %c0_390 = arith.constant 0 : index
    %457 = vector.load %arg16[%c0_389, %c0_390] : memref<1x128xf32, #tpu.memory_space<vmem>>, vector<1x128xf32>
    %458 = vector.broadcast %457 : vector<1x128xf32> to vector<2x128xf32>
    %459 = arith.addf %456, %458 : vector<2x128xf32>
    %c0_391 = arith.constant 0 : index
    %c0_392 = arith.constant 0 : index
    %460 = vector.load %arg18[%c0_391, %c0_392] : memref<2x128xf32, #tpu.memory_space<vmem>>, vector<2x128xf32>
    tpu.vector_store %arg18[%c0_391, %c0_392], %459 {strides = array<i32>} : memref<2x128xf32, #tpu.memory_space<vmem>>, vector<2x128xf32>,
    return
  }
  func.func @transform_0(%arg0: i32) -> (i32, i32) {
    %c0_i32 = arith.constant 0 : i32
    %c0_i32_0 = arith.constant 0 : i32
    %c0_i32_1 = arith.constant 0 : i32
    return %c0_i32, %c0_i32_0 : i32, i32
  }
  func.func @transform_1(%arg0: i32) -> (i32, i32) {
    %c0_i32 = arith.constant 0 : i32
    %c0_i32_0 = arith.constant 0 : i32
    %c0_i32_1 = arith.constant 0 : i32
    return %c0_i32, %c0_i32_0 : i32, i32
  }
  func.func @transform_2(%arg0: i32) -> (i32, i32) {
    %c0_i32 = arith.constant 0 : i32
    %c0_i32_0 = arith.constant 0 : i32
    %c0_i32_1 = arith.constant 0 : i32
    return %c0_i32, %c0_i32_0 : i32, i32
  }
  func.func @transform_3(%arg0: i32) -> (i32, i32) {
    %c0_i32 = arith.constant 0 : i32
    %c0_i32_0 = arith.constant 0 : i32
    %c0_i32_1 = arith.constant 0 : i32
    return %c0_i32, %c0_i32_0 : i32, i32
  }
  func.func @transform_4(%arg0: i32) -> (i32, i32, i32) {
    %c0_i32 = arith.constant 0 : i32
    %c0_i32_0 = arith.constant 0 : i32
    %c0_i32_1 = arith.constant 0 : i32
    %c0_i32_2 = arith.constant 0 : i32
    return %c0_i32, %c0_i32_0, %c0_i32_1 : i32, i32, i32
  }
  func.func @transform_5(%arg0: i32) -> (i32, i32) {
    %c0_i32 = arith.constant 0 : i32
    %c0_i32_0 = arith.constant 0 : i32
    %c0_i32_1 = arith.constant 0 : i32
    return %c0_i32, %c0_i32_0 : i32, i32
  }
  func.func @transform_6(%arg0: i32) -> (i32, i32) {
    %c0_i32 = arith.constant 0 : i32
    %c0_i32_0 = arith.constant 0 : i32
    %c0_i32_1 = arith.constant 0 : i32
    return %c0_i32, %c0_i32_0 : i32, i32
  }
  func.func @transform_7(%arg0: i32) -> (i32, i32, i32) {
    %c0_i32 = arith.constant 0 : i32
    %c0_i32_0 = arith.constant 0 : i32
    %c0_i32_1 = arith.constant 0 : i32
    %c0_i32_2 = arith.constant 0 : i32
    return %c0_i32, %c0_i32_0, %c0_i32_1 : i32, i32, i32
  }
  func.func @transform_8(%arg0: i32) -> (i32, i32) {
    %c0_i32 = arith.constant 0 : i32
    %c0_i32_0 = arith.constant 0 : i32
    %c0_i32_1 = arith.constant 0 : i32
    return %c0_i32, %c0_i32_0 : i32, i32
  }
  func.func @transform_9(%arg0: i32) -> (i32, i32) {
    %c0_i32 = arith.constant 0 : i32
    %c0_i32_0 = arith.constant 0 : i32
    %c0_i32_1 = arith.constant 0 : i32
    return %c0_i32, %c0_i32_0 : i32, i32
  }
  func.func @transform_10(%arg0: i32) -> (i32, i32) {
    %c0_i32 = arith.constant 0 : i32
    %c0_i32_0 = arith.constant 0 : i32
    %c0_i32_1 = arith.constant 0 : i32
    return %c0_i32, %c0_i32_0 : i32, i32
  }
  func.func @transform_11(%arg0: i32) -> (i32, i32) {
    %c0_i32 = arith.constant 0 : i32
    %c0_i32_0 = arith.constant 0 : i32
    %c0_i32_1 = arith.constant 0 : i32
    return %c0_i32, %c0_i32_0 : i32, i32
  }
  func.func @transform_12(%arg0: i32) -> (i32, i32) {
    %c0_i32 = arith.constant 0 : i32
    %c0_i32_0 = arith.constant 0 : i32
    %c0_i32_1 = arith.constant 0 : i32
    return %c0_i32, %c0_i32_0 : i32, i32
  }
  func.func @transform_13(%arg0: i32) -> (i32, i32) {
    %c0_i32 = arith.constant 0 : i32
    %c0_i32_0 = arith.constant 0 : i32
    %c0_i32_1 = arith.constant 0 : i32
    return %c0_i32, %c0_i32_0 : i32, i32
  }
  func.func @transform_14(%arg0: i32) -> (i32, i32) {
    %c0_i32 = arith.constant 0 : i32
    %c0_i32_0 = arith.constant 0 : i32
    %c0_i32_1 = arith.constant 0 : i32
    return %c0_i32, %c0_i32_0 : i32, i32
  }
  func.func @transform_15(%arg0: i32) -> (i32, i32) {
    %c0_i32 = arith.constant 0 : i32
    %c0_i32_0 = arith.constant 0 : i32
    %c0_i32_1 = arith.constant 0 : i32
    return %c0_i32, %c0_i32_0 : i32, i32
  }
  func.func @transform_16(%arg0: i32) -> (i32, i32) {
    %c0_i32 = arith.constant 0 : i32
    %c0_i32_0 = arith.constant 0 : i32
    %c0_i32_1 = arith.constant 0 : i32
    return %c0_i32, %c0_i32_0 : i32, i32
  }
  func.func @transform_17(%arg0: i32) -> (i32, i32) {
    %c0_i32 = arith.constant 0 : i32
    %c0_i32_0 = arith.constant 0 : i32
    %c0_i32_1 = arith.constant 0 : i32
    return %c0_i32, %c0_i32_0 : i32, i32
  }
}

</mosaic_0001>

<llo_original>
// kernel: base_model_forward.1
$region0: #{base_model_forward.1}
  #allocation0 [shape = 'u32[]', space=smem, size = 0x4, offset = 0x4, fixed_abs, tag = 'smem constant byte address 0x4 - core index']
  #allocation1 [shape = 'u32[144,128]{1,0:T(1,128)}', space=vmem, size = 0x12000, scoped, tag = 'internal scratch']
  #allocation2 [shape = 'f32[72,128]{1,0:T(8,128)}', space=vmem, size = 0x9000, scoped, tag = 'scratch operand']
  #allocation3 [shape = 'f32[32,128]{1,0:T(8,128)}', space=vmem, size = 0x4000, scoped, tag = 'scratch operand']
  #allocation4 [shape = 'f32[32,128]{1,0:T(8,128)}', space=vmem, size = 0x4000, scoped, tag = 'scratch operand']
  %s0 = inlined_call_operand.vmem [shape: f32[128,256], index: 0, kind: input, shape index: {}]
  %s1 = inlined_call_operand.vmem [shape: f32[256,128], index: 1, kind: input, shape index: {}]
  %s2 = inlined_call_operand.vmem [shape: f32[1,128], index: 2, kind: input, shape index: {}]
  %s3 = inlined_call_operand.vmem [shape: f32[1,128], index: 3, kind: input, shape index: {}]
  %s4 = inlined_call_operand.vmem [shape: f32[9,128,128], index: 4, kind: input, shape index: {}]
  %s5 = inlined_call_operand.vmem [shape: f32[1,128], index: 5, kind: input, shape index: {}]
  %s6 = inlined_call_operand.vmem [shape: f32[1,128], index: 6, kind: input, shape index: {}]
  %s7 = inlined_call_operand.vmem [shape: f32[9,128,256], index: 7, kind: input, shape index: {}]
  %s8 = inlined_call_operand.vmem [shape: f32[1,256], index: 8, kind: input, shape index: {}]
  %s9 = inlined_call_operand.vmem [shape: f32[1,256], index: 9, kind: input, shape index: {}]
  %s10 = inlined_call_operand.vmem [shape: f32[1,256], index: 10, kind: input, shape index: {}]
  %s11 = inlined_call_operand.vmem [shape: f32[256,64], index: 11, kind: input, shape index: {}]
  %s12 = inlined_call_operand.vmem [shape: f32[1,64], index: 12, kind: input, shape index: {}]
  %s13 = inlined_call_operand.vmem [shape: f32[1,64], index: 13, kind: input, shape index: {}]
  %s14 = inlined_call_operand.vmem [shape: f32[64,128], index: 14, kind: input, shape index: {}]
  %s15 = inlined_call_operand.vmem [shape: f32[1,128], index: 15, kind: input, shape index: {}]
  %s16 = inlined_call_operand.hbm [shape: f32[2,256], index: 16, kind: output, shape index: {0}]
  %s17 = inlined_call_operand.hbm [shape: f32[2,128], index: 17, kind: output, shape index: {1}]
  %18 = xla_tuple %s16, %s17
  %s19 = sld [smem:[#allocation0]]
  $region82: #{base_model_forward.1} parent=0
    _
  %s21 = ssub.s32 1, %s19
  %s22 = scalar_select 0, %s21, %s19
  $region1: #{base_model_forward.1} parent=0
    #allocation5 [shape = 'u8[2048]{0}', space=vmem, size = 0x800, scoped, tag = 'output window, operand 0, single buffered']
    #allocation6 [shape = 's32[1]{0}', space=sflag, size = 0x4, scoped, tag = 'scoped memory for base_model_forward.1']
    #allocation7 [shape = 'u8[1024]{0}', space=vmem, size = 0x400, scoped, tag = 'output window, operand 1, single buffered']
    #allocation8 [shape = 's32[1]{0}', space=sflag, size = 0x4, scoped, tag = 'scoped memory for base_model_forward.1']
    %23 = vsyncpa [#allocation6], 0
    %24 = vsyncpa [#allocation8], 0
    // Predicated region
    $region2: #{base_model_forward.1} parent=1 // pred_check
      _
    $region3: #{base_model_forward.1} parent=1 // pred_check_branch
      %26 = sbr.rel (0) target = $region5
    $region4: #{base_model_forward.1} parent=1 // pred_region
      _
    $region5: #{base_model_forward.1} parent=1 // pred_fallthru
      _
    // Predicated region
    $region6: #{base_model_forward.1} parent=1 // pred_check
      _
    $region7: #{base_model_forward.1} parent=1 // pred_check_branch
      %28 = sbr.rel (0) target = $region9
    $region8: #{base_model_forward.1} parent=1 // pred_region
      _
    $region9: #{base_model_forward.1} parent=1 // pred_fallthru
      _
    // Predicated region
    $region10: #{base_model_forward.1} parent=1 // pred_check
      _
    $region11: #{base_model_forward.1} parent=1 // pred_check_branch
      %30 = sbr.rel (0) target = $region13
    $region12: #{base_model_forward.1} parent=1 // pred_region
      _
    $region13: #{base_model_forward.1} parent=1 // pred_fallthru
      _
    // Predicated region
    $region14: #{base_model_forward.1} parent=1 // pred_check
      _
    $region15: #{base_model_forward.1} parent=1 // pred_check_branch
      %32 = sbr.rel (0) target = $region17
    $region16: #{base_model_forward.1} parent=1 // pred_region
      _
    $region17: #{base_model_forward.1} parent=1 // pred_fallthru
      _
    // Predicated region
    $region18: #{base_model_forward.1} parent=1 // pred_check
      _
    $region19: #{base_model_forward.1} parent=1 // pred_check_branch
      %34 = sbr.rel (0) target = $region21
    $region20: #{base_model_forward.1} parent=1 // pred_region
      _
    $region21: #{base_model_forward.1} parent=1 // pred_fallthru
      _
    // Predicated region
    $region22: #{base_model_forward.1} parent=1 // pred_check
      _
    $region23: #{base_model_forward.1} parent=1 // pred_check_branch
      %36 = sbr.rel (0) target = $region25
    $region24: #{base_model_forward.1} parent=1 // pred_region
      _
    $region25: #{base_model_forward.1} parent=1 // pred_fallthru
      _
    // Predicated region
    $region26: #{base_model_forward.1} parent=1 // pred_check
      _
    $region27: #{base_model_forward.1} parent=1 // pred_check_branch
      %38 = sbr.rel (0) target = $region29
    $region28: #{base_model_forward.1} parent=1 // pred_region
      _
    $region29: #{base_model_forward.1} parent=1 // pred_fallthru
      _
    // Predicated region
    $region30: #{base_model_forward.1} parent=1 // pred_check
      _
    $region31: #{base_model_forward.1} parent=1 // pred_check_branch
      %40 = sbr.rel (0) target = $region33
    $region32: #{base_model_forward.1} parent=1 // pred_region
      _
    $region33: #{base_model_forward.1} parent=1 // pred_fallthru
      _
    // Predicated region
    $region34: #{base_model_forward.1} parent=1 // pred_check
      _
    $region35: #{base_model_forward.1} parent=1 // pred_check_branch
      %42 = sbr.rel (0) target = $region37
    $region36: #{base_model_forward.1} parent=1 // pred_region
      _
    $region37: #{base_model_forward.1} parent=1 // pred_fallthru
      _
    // Predicated region
    $region38: #{base_model_forward.1} parent=1 // pred_check
      _
    $region39: #{base_model_forward.1} parent=1 // pred_check_branch
      %44 = sbr.rel (0) target = $region41
    $region40: #{base_model_forward.1} parent=1 // pred_region
      _
    $region41: #{base_model_forward.1} parent=1 // pred_fallthru
      _
    // Predicated region
    $region42: #{base_model_forward.1} parent=1 // pred_check
      _
    $region43: #{base_model_forward.1} parent=1 // pred_check_branch
      %46 = sbr.rel (0) target = $region45
    $region44: #{base_model_forward.1} parent=1 // pred_region
      _
    $region45: #{base_model_forward.1} parent=1 // pred_fallthru
      _
    // Predicated region
    $region46: #{base_model_forward.1} parent=1 // pred_check
      _
    $region47: #{base_model_forward.1} parent=1 // pred_check_branch
      %48 = sbr.rel (0) target = $region49
    $region48: #{base_model_forward.1} parent=1 // pred_region
      _
    $region49: #{base_model_forward.1} parent=1 // pred_fallthru
      _
    // Predicated region
    $region50: #{base_model_forward.1} parent=1 // pred_check
      _
    $region51: #{base_model_forward.1} parent=1 // pred_check_branch
      %50 = sbr.rel (0) target = $region53
    $region52: #{base_model_forward.1} parent=1 // pred_region
      _
    $region53: #{base_model_forward.1} parent=1 // pred_fallthru
      _
    // Predicated region
    $region54: #{base_model_forward.1} parent=1 // pred_check
      _
    $region55: #{base_model_forward.1} parent=1 // pred_check_branch
      %52 = sbr.rel (0) target = $region57
    $region56: #{base_model_forward.1} parent=1 // pred_region
      _
    $region57: #{base_model_forward.1} parent=1 // pred_fallthru
      _
    // Predicated region
    $region58: #{base_model_forward.1} parent=1 // pred_check
      _
    $region59: #{base_model_forward.1} parent=1 // pred_check_branch
      %54 = sbr.rel (0) target = $region61
    $region60: #{base_model_forward.1} parent=1 // pred_region
      _
    $region61: #{base_model_forward.1} parent=1 // pred_fallthru
      _
    // Predicated region
    $region62: #{base_model_forward.1} parent=1 // pred_check
      _
    $region63: #{base_model_forward.1} parent=1 // pred_check_branch
      %56 = sbr.rel (0) target = $region65
    $region64: #{base_model_forward.1} parent=1 // pred_region
      _
    $region65: #{base_model_forward.1} parent=1 // pred_fallthru
      _
    %v57 = vld [vmem:[%s0] sm:$0xff]
    %v58 = vld [vmem:[%s0 + $0x8] sm:$0xff]
    %v59 = vld [vmem:[%s0 + $0x10] sm:$0xff]
    %v60 = vld [vmem:[%s0 + $0x18] sm:$0xff]
    %v61 = vld [vmem:[%s0 + $0x20] sm:$0xff]
    %v62 = vld [vmem:[%s0 + $0x28] sm:$0xff]
    %v63 = vld [vmem:[%s0 + $0x30] sm:$0xff]
    %v64 = vld [vmem:[%s0 + $0x38] sm:$0xff]
    %v65 = vld [vmem:[%s0 + $0x40] sm:$0xff]
    %v66 = vld [vmem:[%s0 + $0x48] sm:$0xff]
    %v67 = vld [vmem:[%s0 + $0x50] sm:$0xff]
    %v68 = vld [vmem:[%s0 + $0x58] sm:$0xff]
    %v69 = vld [vmem:[%s0 + $0x60] sm:$0xff]
    %v70 = vld [vmem:[%s0 + $0x68] sm:$0xff]
    %v71 = vld [vmem:[%s0 + $0x70] sm:$0xff]
    %v72 = vld [vmem:[%s0 + $0x78] sm:$0xff]
    %v73 = vld [vmem:[%s0 + $0x80] sm:$0xff]
    %v74 = vld [vmem:[%s0 + $0x88] sm:$0xff]
    %v75 = vld [vmem:[%s0 + $0x90] sm:$0xff]
    %v76 = vld [vmem:[%s0 + $0x98] sm:$0xff]
    %v77 = vld [vmem:[%s0 + $0xa0] sm:$0xff]
    %v78 = vld [vmem:[%s0 + $0xa8] sm:$0xff]
    %v79 = vld [vmem:[%s0 + $0xb0] sm:$0xff]
    %v80 = vld [vmem:[%s0 + $0xb8] sm:$0xff]
    %v81 = vld [vmem:[%s0 + $0xc0] sm:$0xff]
    %v82 = vld [vmem:[%s0 + $0xc8] sm:$0xff]
    %v83 = vld [vmem:[%s0 + $0xd0] sm:$0xff]
    %v84 = vld [vmem:[%s0 + $0xd8] sm:$0xff]
    %v85 = vld [vmem:[%s0 + $0xe0] sm:$0xff]
    %v86 = vld [vmem:[%s0 + $0xe8] sm:$0xff]
    %v87 = vld [vmem:[%s0 + $0xf0] sm:$0xff]
    %v88 = vld [vmem:[%s0 + $0xf8] sm:$0xff]
    %v89 = vld [vmem:[%s1] sm:$0xff]
    %v90 = vld [vmem:[%s1 + $0x8] sm:$0xff]
    %v91 = vld [vmem:[%s1 + $0x10] sm:$0xff]
    %v92 = vld [vmem:[%s1 + $0x18] sm:$0xff]
    %v93 = vld [vmem:[%s1 + $0x20] sm:$0xff]
    %v94 = vld [vmem:[%s1 + $0x28] sm:$0xff]
    %v95 = vld [vmem:[%s1 + $0x30] sm:$0xff]
    %v96 = vld [vmem:[%s1 + $0x38] sm:$0xff]
    %v97 = vld [vmem:[%s1 + $0x40] sm:$0xff]
    %v98 = vld [vmem:[%s1 + $0x48] sm:$0xff]
    %v99 = vld [vmem:[%s1 + $0x50] sm:$0xff]
    %v100 = vld [vmem:[%s1 + $0x58] sm:$0xff]
    %v101 = vld [vmem:[%s1 + $0x60] sm:$0xff]
    %v102 = vld [vmem:[%s1 + $0x68] sm:$0xff]
    %v103 = vld [vmem:[%s1 + $0x70] sm:$0xff]
    %v104 = vld [vmem:[%s1 + $0x78] sm:$0xff]
    %v105 = vld [vmem:[%s1 + $0x80] sm:$0xff]
    %v106 = vld [vmem:[%s1 + $0x88] sm:$0xff]
    %v107 = vld [vmem:[%s1 + $0x90] sm:$0xff]
    %v108 = vld [vmem:[%s1 + $0x98] sm:$0xff]
    %v109 = vld [vmem:[%s1 + $0xa0] sm:$0xff]
    %v110 = vld [vmem:[%s1 + $0xa8] sm:$0xff]
    %v111 = vld [vmem:[%s1 + $0xb0] sm:$0xff]
    %v112 = vld [vmem:[%s1 + $0xb8] sm:$0xff]
    %v113 = vld [vmem:[%s1 + $0xc0] sm:$0xff]
    %v114 = vld [vmem:[%s1 + $0xc8] sm:$0xff]
    %v115 = vld [vmem:[%s1 + $0xd0] sm:$0xff]
    %v116 = vld [vmem:[%s1 + $0xd8] sm:$0xff]
    %v117 = vld [vmem:[%s1 + $0xe0] sm:$0xff]
    %v118 = vld [vmem:[%s1 + $0xe8] sm:$0xff]
    %v119 = vld [vmem:[%s1 + $0xf0] sm:$0xff]
    %v120 = vld [vmem:[%s1 + $0xf8] sm:$0xff]
    %121 = vmatprep.subr.mxu0 0.0
    %122 = vmatpush1.msra.mxu0 %v89
    %123 = vmatprep.subr.mxu0 0.0
    %124 = vmatpush1.msra.mxu0 %v90
    %125 = vmatprep.subr.mxu0 0.0
    %126 = vmatpush1.msra.mxu0 %v91
    %127 = vmatprep.subr.mxu0 0.0
    %128 = vmatpush1.msra.mxu0 %v92
    %129 = vmatprep.subr.mxu0 0.0
    %130 = vmatpush1.msra.mxu0 %v93
    %131 = vmatprep.subr.mxu0 0.0
    %132 = vmatpush1.msra.mxu0 %v94
    %133 = vmatprep.subr.mxu0 0.0
    %134 = vmatpush1.msra.mxu0 %v95
    %135 = vmatprep.subr.mxu0 0.0
    %136 = vmatpush1.msra.mxu0 %v96
    %137 = vmatprep.subr.mxu0 0.0
    %138 = vmatpush1.msra.mxu0 %v97
    %139 = vmatprep.subr.mxu0 0.0
    %140 = vmatpush1.msra.mxu0 %v98
    %141 = vmatprep.subr.mxu0 0.0
    %142 = vmatpush1.msra.mxu0 %v99
    %143 = vmatprep.subr.mxu0 0.0
    %144 = vmatpush1.msra.mxu0 %v100
    %145 = vmatprep.subr.mxu0 0.0
    %146 = vmatpush1.msra.mxu0 %v101
    %147 = vmatprep.subr.mxu0 0.0
    %148 = vmatpush1.msra.mxu0 %v102
    %149 = vmatprep.subr.mxu0 0.0
    %150 = vmatpush1.msra.mxu0 %v103
    %151 = vmatprep.subr.mxu0 0.0
    %152 = vmatpush1.msra.mxu0 %v104
    %153 = vmatprep.subr.mxu0 0.0
    %154 = vmatpush1.msra.mxu0 %v105
    %155 = vmatprep.subr.mxu0 0.0
    %156 = vmatpush1.msra.mxu0 %v106
    %157 = vmatprep.subr.mxu0 0.0
    %158 = vmatpush1.msra.mxu0 %v107
    %159 = vmatprep.subr.mxu0 0.0
    %160 = vmatpush1.msra.mxu0 %v108
    %161 = vmatprep.subr.mxu0 0.0
    %162 = vmatpush1.msra.mxu0 %v109
    %163 = vmatprep.subr.mxu0 0.0
    %164 = vmatpush1.msra.mxu0 %v110
    %165 = vmatprep.subr.mxu0 0.0
    %166 = vmatpush1.msra.mxu0 %v111
    %167 = vmatprep.subr.mxu0 0.0
    %168 = vmatpush1.msra.mxu0 %v112
    %169 = vmatprep.subr.mxu0 0.0
    %170 = vmatpush1.msra.mxu0 %v113
    %171 = vmatprep.subr.mxu0 0.0
    %172 = vmatpush1.msra.mxu0 %v114
    %173 = vmatprep.subr.mxu0 0.0
    %174 = vmatpush1.msra.mxu0 %v115
    %175 = vmatprep.subr.mxu0 0.0
    %176 = vmatpush1.msra.mxu0 %v116
    %177 = vmatprep.subr.mxu0 0.0
    %178 = vmatpush1.msra.mxu0 %v117
    %179 = vmatprep.subr.mxu0 0.0
    %180 = vmatpush1.msra.mxu0 %v118
    %181 = vmatprep.subr.mxu0 0.0
    %182 = vmatpush1.msra.mxu0 %v119
    %183 = vmatprep.subr.mxu0 0.0
    %184 = vmatpush1.msra.mxu0 %v120
    %185 = vmatprep.mubr.f32.mxu0 %v58
    %186 = vmatmul.mubr.f32.gmra.mrb[0].mxu0 %v57
    %v187 = vpop.f32.mrb[0].mxu0
    %v188 = vadd.f32 0.0, %v187
    %v189 = vpop.f32.mrb[0].mxu0
    %190 = vmatprep.mubr.f32.mxu0 %v60
    %191 = vmatmul.mubr.f32.gmra.mrb[0].mxu0 %v59
    %v192 = vpop.f32.mrb[0].mxu0
    %v193 = vadd.f32 0.0, %v192
    %v194 = vpop.f32.mrb[0].mxu0
    %195 = vmatprep.mubr.f32.mxu0 %v62
    %196 = vmatmul.mubr.f32.gmra.mrb[0].mxu0 %v61
    %v197 = vpop.f32.mrb[0].mxu0
    %v198 = vadd.f32 0.0, %v197
    %v199 = vpop.f32.mrb[0].mxu0
    %200 = vmatprep.mubr.f32.mxu0 %v64
    %201 = vmatmul.mubr.f32.gmra.mrb[0].mxu0 %v63
    %v202 = vpop.f32.mrb[0].mxu0
    %v203 = vadd.f32 0.0, %v202
    %v204 = vpop.f32.mrb[0].mxu0
    %205 = vmatprep.mubr.f32.mxu0 %v66
    %206 = vmatmul.mubr.f32.gmra.mrb[0].mxu0 %v65
    %v207 = vpop.f32.mrb[0].mxu0
    %v208 = vadd.f32 0.0, %v207
    %v209 = vpop.f32.mrb[0].mxu0
    %210 = vmatprep.mubr.f32.mxu0 %v68
    %211 = vmatmul.mubr.f32.gmra.mrb[0].mxu0 %v67
    %v212 = vpop.f32.mrb[0].mxu0
    %v213 = vadd.f32 0.0, %v212
    %v214 = vpop.f32.mrb[0].mxu0
    %215 = vmatprep.mubr.f32.mxu0 %v70
    %216 = vmatmul.mubr.f32.gmra.mrb[0].mxu0 %v69
    %v217 = vpop.f32.mrb[0].mxu0
    %v218 = vadd.f32 0.0, %v217
    %v219 = vpop.f32.mrb[0].mxu0
    %220 = vmatprep.mubr.f32.mxu0 %v72
    %221 = vmatmul.mubr.f32.gmra.mrb[0].mxu0 %v71
    %v222 = vpop.f32.mrb[0].mxu0
    %v223 = vadd.f32 0.0, %v222
    %v224 = vpop.f32.mrb[0].mxu0
    %225 = vmatprep.mubr.f32.mxu0 %v74
    %226 = vmatmul.mubr.f32.gmra.mrb[0].mxu0 %v73
    %v227 = vpop.f32.mrb[0].mxu0
    %v228 = vadd.f32 0.0, %v227
    %v229 = vpop.f32.mrb[0].mxu0
    %230 = vmatprep.mubr.f32.mxu0 %v76
    %231 = vmatmul.mubr.f32.gmra.mrb[0].mxu0 %v75
    %v232 = vpop.f32.mrb[0].mxu0
    %v233 = vadd.f32 0.0, %v232
    %v234 = vpop.f32.mrb[0].mxu0
    %235 = vmatprep.mubr.f32.mxu0 %v78
    %236 = vmatmul.mubr.f32.gmra.mrb[0].mxu0 %v77
    %v237 = vpop.f32.mrb[0].mxu0
    %v238 = vadd.f32 0.0, %v237
    %v239 = vpop.f32.mrb[0].mxu0
    %240 = vmatprep.mubr.f32.mxu0 %v80
    %241 = vmatmul.mubr.f32.gmra.mrb[0].mxu0 %v79
    %v242 = vpop.f32.mrb[0].mxu0
    %v243 = vadd.f32 0.0, %v242
    %v244 = vpop.f32.mrb[0].mxu0
    %245 = vmatprep.mubr.f32.mxu0 %v82
    %246 = vmatmul.mubr.f32.gmra.mrb[0].mxu0 %v81
    %v247 = vpop.f32.mrb[0].mxu0
    %v248 = vadd.f32 0.0, %v247
    %v249 = vpop.f32.mrb[0].mxu0
    %250 = vmatprep.mubr.f32.mxu0 %v84
    %251 = vmatmul.mubr.f32.gmra.mrb[0].mxu0 %v83
    %v252 = vpop.f32.mrb[0].mxu0
    %v253 = vadd.f32 0.0, %v252
    %v254 = vpop.f32.mrb[0].mxu0
    %255 = vmatprep.mubr.f32.mxu0 %v86
    %256 = vmatmul.mubr.f32.gmra.mrb[0].mxu0 %v85
    %v257 = vpop.f32.mrb[0].mxu0
    %v258 = vadd.f32 0.0, %v257
    %v259 = vpop.f32.mrb[0].mxu0
    %260 = vmatprep.mubr.f32.mxu0 %v88
    %261 = vmatmul.mubr.f32.gmra.mrb[0].mxu0 %v87
    %v262 = vpop.f32.mrb[0].mxu0
    %v263 = vadd.f32 0.0, %v262
    %v264 = vpop.f32.mrb[0].mxu0
    %265 = vdwg.mxu0
    %v266 = vld [vmem:[%s2] sm:$0x1]
    %v267 = vld [vmem:[%s3] sm:$0x1]
    %v268 = vadd.f32 %v188, %v193
    %v269 = vadd.f32 %v268, %v198
    %v270 = vadd.f32 %v269, %v203
    %v271 = vadd.f32 %v270, %v208
    %v272 = vadd.f32 %v271, %v213
    %v273 = vadd.f32 %v272, %v218
    %v274 = vadd.f32 %v273, %v223
    %v275 = vadd.f32 %v274, %v228
    %v276 = vadd.f32 %v275, %v233
    %v277 = vadd.f32 %v276, %v238
    %v278 = vadd.f32 %v277, %v243
    %v279 = vadd.f32 %v278, %v248
    %v280 = vadd.f32 %v279, %v253
    %v281 = vadd.f32 %v280, %v258
    %v282 = vadd.f32 %v281, %v263
    %v283 = vrot.slane %v282, 4
    %v284 = vadd.f32 %v282, %v283
    %v285 = vrot.slane %v284, 2
    %v286 = vadd.f32 %v284, %v285
    %v287 = vrot.slane %v286, 1
    %v288 = vadd.f32 %v286, %v287
    %v289 = vrcp.pop 128.0
    %v290 = vmul.f32 %v288, %v289
    %v291 = vmul.f32 %v188, %v188
    %v292 = vmul.f32 %v193, %v193
    %v293 = vmul.f32 %v198, %v198
    %v294 = vmul.f32 %v203, %v203
    %v295 = vmul.f32 %v208, %v208
    %v296 = vmul.f32 %v213, %v213
    %v297 = vmul.f32 %v218, %v218
    %v298 = vmul.f32 %v223, %v223
    %v299 = vmul.f32 %v228, %v228
    %v300 = vmul.f32 %v233, %v233
    %v301 = vmul.f32 %v238, %v238
    %v302 = vmul.f32 %v243, %v243
    %v303 = vmul.f32 %v248, %v248
    %v304 = vmul.f32 %v253, %v253
    %v305 = vmul.f32 %v258, %v258
    %v306 = vmul.f32 %v263, %v263
    %v307 = vadd.f32 %v291, %v292
    %v308 = vadd.f32 %v307, %v293
    %v309 = vadd.f32 %v308, %v294
    %v310 = vadd.f32 %v309, %v295
    %v311 = vadd.f32 %v310, %v296
    %v312 = vadd.f32 %v311, %v297
    %v313 = vadd.f32 %v312, %v298
    %v314 = vadd.f32 %v313, %v299
    %v315 = vadd.f32 %v314, %v300
    %v316 = vadd.f32 %v315, %v301
    %v317 = vadd.f32 %v316, %v302
    %v318 = vadd.f32 %v317, %v303
    %v319 = vadd.f32 %v318, %v304
    %v320 = vadd.f32 %v319, %v305
    %v321 = vadd.f32 %v320, %v306
    %v322 = vrot.slane %v321, 4
    %v323 = vadd.f32 %v321, %v322
    %v324 = vrot.slane %v323, 2
    %v325 = vadd.f32 %v323, %v324
    %v326 = vrot.slane %v325, 1
    %v327 = vadd.f32 %v325, %v326
    %v328 = vmul.f32 %v327, %v289
    %v329 = vmul.f32 %v290, %v290
    %v330 = vsub.f32 %v328, %v329
    %v331 = vmax.f32 %v330, 0.0
    %v332 = vadd.f32 %v331, 1e-05
    %v333 = vrsqrt.pop %v332
    %v334 = vmul.f32 %v266, %v333
    %v335 = vmul.f32 %v290, %v334
    %v336 = vsub.f32 %v267, %v335
    %v338 = vlaneseq
    %v339 = vshrl.u32 %v338, 7
    %v340 = vsub.s32 0, %v339
    %v341 = vrot.slane %v334, %v340
    %v343 = vmul.f32 %v188, %v341
    %v344 = vmul.f32 %v193, %v341
    %v345 = vmul.f32 %v198, %v341
    %v346 = vmul.f32 %v203, %v341
    %v347 = vmul.f32 %v208, %v341
    %v348 = vmul.f32 %v213, %v341
    %v349 = vmul.f32 %v218, %v341
    %v350 = vmul.f32 %v223, %v341
    %v351 = vmul.f32 %v228, %v341
    %v352 = vmul.f32 %v233, %v341
    %v353 = vmul.f32 %v238, %v341
    %v354 = vmul.f32 %v243, %v341
    %v355 = vmul.f32 %v248, %v341
    %v356 = vmul.f32 %v253, %v341
    %v357 = vmul.f32 %v258, %v341
    %v358 = vmul.f32 %v263, %v341
    %v360 = vlaneseq
    %v361 = vshrl.u32 %v360, 7
    %v362 = vsub.s32 0, %v361
    %v363 = vrot.slane %v336, %v362
    %v365 = vadd.f32 %v343, %v363
    %v366 = vadd.f32 %v344, %v363
    %v367 = vadd.f32 %v345, %v363
    %v368 = vadd.f32 %v346, %v363
    %v369 = vadd.f32 %v347, %v363
    %v370 = vadd.f32 %v348, %v363
    %v371 = vadd.f32 %v349, %v363
    %v372 = vadd.f32 %v350, %v363
    %v373 = vadd.f32 %v351, %v363
    %v374 = vadd.f32 %v352, %v363
    %v375 = vadd.f32 %v353, %v363
    %v376 = vadd.f32 %v354, %v363
    %v377 = vadd.f32 %v355, %v363
    %v378 = vadd.f32 %v356, %v363
    %v379 = vadd.f32 %v357, %v363
    %v380 = vadd.f32 %v358, %v363
    %v381 = vmax.f32 %v365, 0.0
    %v382 = vmax.f32 %v366, 0.0
    %v383 = vmax.f32 %v367, 0.0
    %v384 = vmax.f32 %v368, 0.0
    %v385 = vmax.f32 %v369, 0.0
    %v386 = vmax.f32 %v370, 0.0
    %v387 = vmax.f32 %v371, 0.0
    %v388 = vmax.f32 %v372, 0.0
    %v389 = vmax.f32 %v373, 0.0
    %v390 = vmax.f32 %v374, 0.0
    %v391 = vmax.f32 %v375, 0.0
    %v392 = vmax.f32 %v376, 0.0
    %v393 = vmax.f32 %v377, 0.0
    %v394 = vmax.f32 %v378, 0.0
    %v395 = vmax.f32 %v379, 0.0
    %v396 = vmax.f32 %v380, 0.0
    %v397 = vmax.f32 %v381, %v385
    %v398 = vmax.f32 %v382, %v386
    %v399 = vmax.f32 %v383, %v387
    %v400 = vmax.f32 %v384, %v388
    %v401 = vmax.f32 %v389, %v393
    %v402 = vmax.f32 %v390, %v394
    %v403 = vmax.f32 %v391, %v395
    %v404 = vmax.f32 %v392, %v396
    %v405 = vmax.f32 %v397, %v401
    %v406 = vmax.f32 %v398, %v402
    %v407 = vmax.f32 %v399, %v403
    %v408 = vmax.f32 %v400, %v404
    %409 = vst [vmem:[#allocation2] sm:$0xff] 0.0
    %410 = vst [vmem:[#allocation2 + $0x8] sm:$0xff] 0.0
    %411 = vst [vmem:[#allocation2 + $0x10] sm:$0xff] 0.0
    %412 = vst [vmem:[#allocation2 + $0x18] sm:$0xff] 0.0
    %413 = vst [vmem:[#allocation2 + $0x20] sm:$0xff] 0.0
    %414 = vst [vmem:[#allocation2 + $0x28] sm:$0xff] 0.0
    %415 = vst [vmem:[#allocation2 + $0x30] sm:$0xff] 0.0
    %416 = vst [vmem:[#allocation2 + $0x38] sm:$0xff] 0.0
    %417 = vst [vmem:[#allocation2 + $0x40] sm:$0xff] 0.0
    %418 = vst [vmem:[#allocation2 + $0xe] sm:$0xff] %v405
    %419 = vst [vmem:[#allocation2 + $0x1a] sm:$0xff] %v406
    %420 = vst [vmem:[#allocation2 + $0x26] sm:$0xff] %v407
    %421 = vst [vmem:[#allocation2 + $0x32] sm:$0xff] %v408
    %v422 = vld [vmem:[#allocation2] sm:$0xff]
    %v423 = vld [vmem:[%s4] sm:$0xff]
    %v424 = vld [vmem:[%s4 + $0x8] sm:$0xff]
    %v425 = vld [vmem:[%s4 + $0x10] sm:$0xff]
    %v426 = vld [vmem:[%s4 + $0x18] sm:$0xff]
    %v427 = vld [vmem:[%s4 + $0x20] sm:$0xff]
    %v428 = vld [vmem:[%s4 + $0x28] sm:$0xff]
    %v429 = vld [vmem:[%s4 + $0x30] sm:$0xff]
    %v430 = vld [vmem:[%s4 + $0x38] sm:$0xff]
    %v431 = vld [vmem:[%s4 + $0x40] sm:$0xff]
    %v432 = vld [vmem:[%s4 + $0x48] sm:$0xff]
    %v433 = vld [vmem:[%s4 + $0x50] sm:$0xff]
    %v434 = vld [vmem:[%s4 + $0x58] sm:$0xff]
    %v435 = vld [vmem:[%s4 + $0x60] sm:$0xff]
    %v436 = vld [vmem:[%s4 + $0x68] sm:$0xff]
    %v437 = vld [vmem:[%s4 + $0x70] sm:$0xff]
    %v438 = vld [vmem:[%s4 + $0x78] sm:$0xff]
    %v439 = vld [vmem:[#allocation2 + $0x2] sm:$0xff]
    %s440 = scalar_lea.vmem %s4, 128
    %v441 = vld [vmem:[%s440] sm:$0xff]
    %v442 = vld [vmem:[%s440 + $0x8] sm:$0xff]
    %v443 = vld [vmem:[%s440 + $0x10] sm:$0xff]
    %v444 = vld [vmem:[%s440 + $0x18] sm:$0xff]
    %v445 = vld [vmem:[%s440 + $0x20] sm:$0xff]
    %v446 = vld [vmem:[%s440 + $0x28] sm:$0xff]
    %v447 = vld [vmem:[%s440 + $0x30] sm:$0xff]
    %v448 = vld [vmem:[%s440 + $0x38] sm:$0xff]
    %v449 = vld [vmem:[%s440 + $0x40] sm:$0xff]
    %v450 = vld [vmem:[%s440 + $0x48] sm:$0xff]
    %v451 = vld [vmem:[%s440 + $0x50] sm:$0xff]
    %v452 = vld [vmem:[%s440 + $0x58] sm:$0xff]
    %v453 = vld [vmem:[%s440 + $0x60] sm:$0xff]
    %v454 = vld [vmem:[%s440 + $0x68] sm:$0xff]
    %v455 = vld [vmem:[%s440 + $0x70] sm:$0xff]
    %v456 = vld [vmem:[%s440 + $0x78] sm:$0xff]
    %457 = vmatprep.subr.mxu0 0.0
    %458 = vmatpush1.msra.mxu0 %v441
    %459 = vmatprep.subr.mxu0 0.0
    %460 = vmatpush1.msra.mxu0 %v442
    %461 = vmatprep.subr.mxu0 0.0
    %462 = vmatpush1.msra.mxu0 %v443
    %463 = vmatprep.subr.mxu0 0.0
    %464 = vmatpush1.msra.mxu0 %v444
    %465 = vmatprep.subr.mxu0 0.0
    %466 = vmatpush1.msra.mxu0 %v445
    %467 = vmatprep.subr.mxu0 0.0
    %468 = vmatpush1.msra.mxu0 %v446
    %469 = vmatprep.subr.mxu0 0.0
    %470 = vmatpush1.msra.mxu0 %v447
    %471 = vmatprep.subr.mxu0 0.0
    %472 = vmatpush1.msra.mxu0 %v448
    %473 = vmatprep.subr.mxu0 0.0
    %474 = vmatpush1.msra.mxu0 %v449
    %475 = vmatprep.subr.mxu0 0.0
    %476 = vmatpush1.msra.mxu0 %v450
    %477 = vmatprep.subr.mxu0 0.0
    %478 = vmatpush1.msra.mxu0 %v451
    %479 = vmatprep.subr.mxu0 0.0
    %480 = vmatpush1.msra.mxu0 %v452
    %481 = vmatprep.subr.mxu0 0.0
    %482 = vmatpush1.msra.mxu0 %v453
    %483 = vmatprep.subr.mxu0 0.0
    %484 = vmatpush1.msra.mxu0 %v454
    %485 = vmatprep.subr.mxu0 0.0
    %486 = vmatpush1.msra.mxu0 %v455
    %487 = vmatprep.subr.mxu0 0.0
    %488 = vmatpush1.msra.mxu0 %v456
    %489 = vmatprep.subr.mxu0 0.0
    %490 = vmatpush1.msra.mxu0 0.0
    %491 = vmatprep.subr.mxu0 0.0
    %492 = vmatpush1.msra.mxu0 0.0
    %493 = vmatprep.subr.mxu0 0.0
    %494 = vmatpush1.msra.mxu0 0.0
    %495 = vmatprep.subr.mxu0 0.0
    %496 = vmatpush1.msra.mxu0 0.0
    %497 = vmatprep.subr.mxu0 0.0
    %498 = vmatpush1.msra.mxu0 0.0
    %499 = vmatprep.subr.mxu0 0.0
    %500 = vmatpush1.msra.mxu0 0.0
    %501 = vmatprep.subr.mxu0 0.0
    %502 = vmatpush1.msra.mxu0 0.0
    %503 = vmatprep.subr.mxu0 0.0
    %504 = vmatpush1.msra.mxu0 0.0
    %505 = vmatprep.subr.mxu0 0.0
    %506 = vmatpush1.msra.mxu0 0.0
    %507 = vmatprep.subr.mxu0 0.0
    %508 = vmatpush1.msra.mxu0 0.0
    %509 = vmatprep.subr.mxu0 0.0
    %510 = vmatpush1.msra.mxu0 0.0
    %511 = vmatprep.subr.mxu0 0.0
    %512 = vmatpush1.msra.mxu0 0.0
    %513 = vmatprep.subr.mxu0 0.0
    %514 = vmatpush1.msra.mxu0 0.0
    %515 = vmatprep.subr.mxu0 0.0
    %516 = vmatpush1.msra.mxu0 0.0
    %517 = vmatprep.subr.mxu0 0.0
    %518 = vmatpush1.msra.mxu0 0.0
    %519 = vmatprep.subr.mxu0 0.0
    %520 = vmatpush1.msra.mxu0 0.0
    %521 = vmatprep.mubr.f32.mxu0 0.0
    %522 = vmatmul.mubr.f32.gmra.mrb[0].mxu0 %v439
    %v523 = vpop.f32.mrb[0].mxu0
    %v524 = vadd.f32 0.0, %v523
    %v525 = vpop.f32.mrb[0].mxu0
    %526 = vdwg.mxu0
    %527 = vmatprep.subr.mxu0 0.0
    %528 = vmatpush1.msra.mxu0 %v423
    %529 = vmatprep.subr.mxu0 0.0
    %530 = vmatpush1.msra.mxu0 %v424
    %531 = vmatprep.subr.mxu0 0.0
    %532 = vmatpush1.msra.mxu0 %v425
    %533 = vmatprep.subr.mxu0 0.0
    %534 = vmatpush1.msra.mxu0 %v426
    %535 = vmatprep.subr.mxu0 0.0
    %536 = vmatpush1.msra.mxu0 %v427
    %537 = vmatprep.subr.mxu0 0.0
    %538 = vmatpush1.msra.mxu0 %v428
    %539 = vmatprep.subr.mxu0 0.0
    %540 = vmatpush1.msra.mxu0 %v429
    %541 = vmatprep.subr.mxu0 0.0
    %542 = vmatpush1.msra.mxu0 %v430
    %543 = vmatprep.subr.mxu0 0.0
    %544 = vmatpush1.msra.mxu0 %v431
    %545 = vmatprep.subr.mxu0 0.0
    %546 = vmatpush1.msra.mxu0 %v432
    %547 = vmatprep.subr.mxu0 0.0
    %548 = vmatpush1.msra.mxu0 %v433
    %549 = vmatprep.subr.mxu0 0.0
    %550 = vmatpush1.msra.mxu0 %v434
    %551 = vmatprep.subr.mxu0 0.0
    %552 = vmatpush1.msra.mxu0 %v435
    %553 = vmatprep.subr.mxu0 0.0
    %554 = vmatpush1.msra.mxu0 %v436
    %555 = vmatprep.subr.mxu0 0.0
    %556 = vmatpush1.msra.mxu0 %v437
    %557 = vmatprep.subr.mxu0 0.0
    %558 = vmatpush1.msra.mxu0 %v438
    %559 = vmatprep.subr.mxu0 0.0
    %560 = vmatpush1.msra.mxu0 0.0
    %561 = vmatprep.subr.mxu0 0.0
    %562 = vmatpush1.msra.mxu0 0.0
    %563 = vmatprep.subr.mxu0 0.0
    %564 = vmatpush1.msra.mxu0 0.0
    %565 = vmatprep.subr.mxu0 0.0
    %566 = vmatpush1.msra.mxu0 0.0
    %567 = vmatprep.subr.mxu0 0.0
    %568 = vmatpush1.msra.mxu0 0.0
    %569 = vmatprep.subr.mxu0 0.0
    %570 = vmatpush1.msra.mxu0 0.0
    %571 = vmatprep.subr.mxu0 0.0
    %572 = vmatpush1.msra.mxu0 0.0
    %573 = vmatprep.subr.mxu0 0.0
    %574 = vmatpush1.msra.mxu0 0.0
    %575 = vmatprep.subr.mxu0 0.0
    %576 = vmatpush1.msra.mxu0 0.0
    %577 = vmatprep.subr.mxu0 0.0
    %578 = vmatpush1.msra.mxu0 0.0
    %579 = vmatprep.subr.mxu0 0.0
    %580 = vmatpush1.msra.mxu0 0.0
    %581 = vmatprep.subr.mxu0 0.0
    %582 = vmatpush1.msra.mxu0 0.0
    %583 = vmatprep.subr.mxu0 0.0
    %584 = vmatpush1.msra.mxu0 0.0
    %585 = vmatprep.subr.mxu0 0.0
    %586 = vmatpush1.msra.mxu0 0.0
    %587 = vmatprep.subr.mxu0 0.0
    %588 = vmatpush1.msra.mxu0 0.0
    %589 = vmatprep.subr.mxu0 0.0
    %590 = vmatpush1.msra.mxu0 0.0
    %591 = vmatprep.mubr.f32.mxu0 0.0
    %592 = vmatmul.mubr.f32.gmra.mrb[0].mxu0 %v422
    %v593 = vpop.f32.mrb[0].mxu0
    %v594 = vadd.f32 %v524, %v593
    %v595 = vpop.f32.mrb[0].mxu0
    %596 = vdwg.mxu0
    %v597 = vld [vmem:[#allocation2 + $0x4] sm:$0xff]
    %s598 = scalar_lea.vmem %s4, 256
    %v599 = vld [vmem:[%s598] sm:$0xff]
    %v600 = vld [vmem:[%s598 + $0x8] sm:$0xff]
    %v601 = vld [vmem:[%s598 + $0x10] sm:$0xff]
    %v602 = vld [vmem:[%s598 + $0x18] sm:$0xff]
    %v603 = vld [vmem:[%s598 + $0x20] sm:$0xff]
    %v604 = vld [vmem:[%s598 + $0x28] sm:$0xff]
    %v605 = vld [vmem:[%s598 + $0x30] sm:$0xff]
    %v606 = vld [vmem:[%s598 + $0x38] sm:$0xff]
    %v607 = vld [vmem:[%s598 + $0x40] sm:$0xff]
    %v608 = vld [vmem:[%s598 + $0x48] sm:$0xff]
    %v609 = vld [vmem:[%s598 + $0x50] sm:$0xff]
    %v610 = vld [vmem:[%s598 + $0x58] sm:$0xff]
    %v611 = vld [vmem:[%s598 + $0x60] sm:$0xff]
    %v612 = vld [vmem:[%s598 + $0x68] sm:$0xff]
    %v613 = vld [vmem:[%s598 + $0x70] sm:$0xff]
    %v614 = vld [vmem:[%s598 + $0x78] sm:$0xff]
    %615 = vmatprep.subr.mxu0 0.0
    %616 = vmatpush1.msra.mxu0 %v599
    %617 = vmatprep.subr.mxu0 0.0
    %618 = vmatpush1.msra.mxu0 %v600
    %619 = vmatprep.subr.mxu0 0.0
    %620 = vmatpush1.msra.mxu0 %v601
    %621 = vmatprep.subr.mxu0 0.0
    %622 = vmatpush1.msra.mxu0 %v602
    %623 = vmatprep.subr.mxu0 0.0
    %624 = vmatpush1.msra.mxu0 %v603
    %625 = vmatprep.subr.mxu0 0.0
    %626 = vmatpush1.msra.mxu0 %v604
    %627 = vmatprep.subr.mxu0 0.0
    %628 = vmatpush1.msra.mxu0 %v605
    %629 = vmatprep.subr.mxu0 0.0
    %630 = vmatpush1.msra.mxu0 %v606
    %631 = vmatprep.subr.mxu0 0.0
    %632 = vmatpush1.msra.mxu0 %v607
    %633 = vmatprep.subr.mxu0 0.0
    %634 = vmatpush1.msra.mxu0 %v608
    %635 = vmatprep.subr.mxu0 0.0
    %636 = vmatpush1.msra.mxu0 %v609
    %637 = vmatprep.subr.mxu0 0.0
    %638 = vmatpush1.msra.mxu0 %v610
    %639 = vmatprep.subr.mxu0 0.0
    %640 = vmatpush1.msra.mxu0 %v611
    %641 = vmatprep.subr.mxu0 0.0
    %642 = vmatpush1.msra.mxu0 %v612
    %643 = vmatprep.subr.mxu0 0.0
    %644 = vmatpush1.msra.mxu0 %v613
    %645 = vmatprep.subr.mxu0 0.0
    %646 = vmatpush1.msra.mxu0 %v614
    %647 = vmatprep.subr.mxu0 0.0
    %648 = vmatpush1.msra.mxu0 0.0
    %649 = vmatprep.subr.mxu0 0.0
    %650 = vmatpush1.msra.mxu0 0.0
    %651 = vmatprep.subr.mxu0 0.0
    %652 = vmatpush1.msra.mxu0 0.0
    %653 = vmatprep.subr.mxu0 0.0
    %654 = vmatpush1.msra.mxu0 0.0
    %655 = vmatprep.subr.mxu0 0.0
    %656 = vmatpush1.msra.mxu0 0.0
    %657 = vmatprep.subr.mxu0 0.0
    %658 = vmatpush1.msra.mxu0 0.0
    %659 = vmatprep.subr.mxu0 0.0
    %660 = vmatpush1.msra.mxu0 0.0
    %661 = vmatprep.subr.mxu0 0.0
    %662 = vmatpush1.msra.mxu0 0.0
    %663 = vmatprep.subr.mxu0 0.0
    %664 = vmatpush1.msra.mxu0 0.0
    %665 = vmatprep.subr.mxu0 0.0
    %666 = vmatpush1.msra.mxu0 0.0
    %667 = vmatprep.subr.mxu0 0.0
    %668 = vmatpush1.msra.mxu0 0.0
    %669 = vmatprep.subr.mxu0 0.0
    %670 = vmatpush1.msra.mxu0 0.0
    %671 = vmatprep.subr.mxu0 0.0
    %672 = vmatpush1.msra.mxu0 0.0
    %673 = vmatprep.subr.mxu0 0.0
    %674 = vmatpush1.msra.mxu0 0.0
    %675 = vmatprep.subr.mxu0 0.0
    %676 = vmatpush1.msra.mxu0 0.0
    %677 = vmatprep.subr.mxu0 0.0
    %678 = vmatpush1.msra.mxu0 0.0
    %679 = vmatprep.mubr.f32.mxu0 0.0
    %680 = vmatmul.mubr.f32.gmra.mrb[0].mxu0 %v597
    %v681 = vpop.f32.mrb[0].mxu0
    %v682 = vadd.f32 0.0, %v681
    %v683 = vpop.f32.mrb[0].mxu0
    %684 = vdwg.mxu0
    %v685 = vadd.f32 %v594, %v682
    %v686 = vld [vmem:[#allocation2 + $0xc] sm:$0xff]
    %s687 = scalar_lea.vmem %s4, 384
    %v688 = vld [vmem:[%s687] sm:$0xff]
    %v689 = vld [vmem:[%s687 + $0x8] sm:$0xff]
    %v690 = vld [vmem:[%s687 + $0x10] sm:$0xff]
    %v691 = vld [vmem:[%s687 + $0x18] sm:$0xff]
    %v692 = vld [vmem:[%s687 + $0x20] sm:$0xff]
    %v693 = vld [vmem:[%s687 + $0x28] sm:$0xff]
    %v694 = vld [vmem:[%s687 + $0x30] sm:$0xff]
    %v695 = vld [vmem:[%s687 + $0x38] sm:$0xff]
    %v696 = vld [vmem:[%s687 + $0x40] sm:$0xff]
    %v697 = vld [vmem:[%s687 + $0x48] sm:$0xff]
    %v698 = vld [vmem:[%s687 + $0x50] sm:$0xff]
    %v699 = vld [vmem:[%s687 + $0x58] sm:$0xff]
    %v700 = vld [vmem:[%s687 + $0x60] sm:$0xff]
    %v701 = vld [vmem:[%s687 + $0x68] sm:$0xff]
    %v702 = vld [vmem:[%s687 + $0x70] sm:$0xff]
    %v703 = vld [vmem:[%s687 + $0x78] sm:$0xff]
    %704 = vmatprep.subr.mxu0 0.0
    %705 = vmatpush1.msra.mxu0 %v688
    %706 = vmatprep.subr.mxu0 0.0
    %707 = vmatpush1.msra.mxu0 %v689
    %708 = vmatprep.subr.mxu0 0.0
    %709 = vmatpush1.msra.mxu0 %v690
    %710 = vmatprep.subr.mxu0 0.0
    %711 = vmatpush1.msra.mxu0 %v691
    %712 = vmatprep.subr.mxu0 0.0
    %713 = vmatpush1.msra.mxu0 %v692
    %714 = vmatprep.subr.mxu0 0.0
    %715 = vmatpush1.msra.mxu0 %v693
    %716 = vmatprep.subr.mxu0 0.0
    %717 = vmatpush1.msra.mxu0 %v694
    %718 = vmatprep.subr.mxu0 0.0
    %719 = vmatpush1.msra.mxu0 %v695
    %720 = vmatprep.subr.mxu0 0.0
    %721 = vmatpush1.msra.mxu0 %v696
    %722 = vmatprep.subr.mxu0 0.0
    %723 = vmatpush1.msra.mxu0 %v697
    %724 = vmatprep.subr.mxu0 0.0
    %725 = vmatpush1.msra.mxu0 %v698
    %726 = vmatprep.subr.mxu0 0.0
    %727 = vmatpush1.msra.mxu0 %v699
    %728 = vmatprep.subr.mxu0 0.0
    %729 = vmatpush1.msra.mxu0 %v700
    %730 = vmatprep.subr.mxu0 0.0
    %731 = vmatpush1.msra.mxu0 %v701
    %732 = vmatprep.subr.mxu0 0.0
    %733 = vmatpush1.msra.mxu0 %v702
    %734 = vmatprep.subr.mxu0 0.0
    %735 = vmatpush1.msra.mxu0 %v703
    %736 = vmatprep.subr.mxu0 0.0
    %737 = vmatpush1.msra.mxu0 0.0
    %738 = vmatprep.subr.mxu0 0.0
    %739 = vmatpush1.msra.mxu0 0.0
    %740 = vmatprep.subr.mxu0 0.0
    %741 = vmatpush1.msra.mxu0 0.0
    %742 = vmatprep.subr.mxu0 0.0
    %743 = vmatpush1.msra.mxu0 0.0
    %744 = vmatprep.subr.mxu0 0.0
    %745 = vmatpush1.msra.mxu0 0.0
    %746 = vmatprep.subr.mxu0 0.0
    %747 = vmatpush1.msra.mxu0 0.0
    %748 = vmatprep.subr.mxu0 0.0
    %749 = vmatpush1.msra.mxu0 0.0
    %750 = vmatprep.subr.mxu0 0.0
    %751 = vmatpush1.msra.mxu0 0.0
    %752 = vmatprep.subr.mxu0 0.0
    %753 = vmatpush1.msra.mxu0 0.0
    %754 = vmatprep.subr.mxu0 0.0
    %755 = vmatpush1.msra.mxu0 0.0
    %756 = vmatprep.subr.mxu0 0.0
    %757 = vmatpush1.msra.mxu0 0.0
    %758 = vmatprep.subr.mxu0 0.0
    %759 = vmatpush1.msra.mxu0 0.0
    %760 = vmatprep.subr.mxu0 0.0
    %761 = vmatpush1.msra.mxu0 0.0
    %762 = vmatprep.subr.mxu0 0.0
    %763 = vmatpush1.msra.mxu0 0.0
    %764 = vmatprep.subr.mxu0 0.0
    %765 = vmatpush1.msra.mxu0 0.0
    %766 = vmatprep.subr.mxu0 0.0
    %767 = vmatpush1.msra.mxu0 0.0
    %768 = vmatprep.mubr.f32.mxu0 0.0
    %769 = vmatmul.mubr.f32.gmra.mrb[0].mxu0 %v686
    %v770 = vpop.f32.mrb[0].mxu0
    %v771 = vadd.f32 0.0, %v770
    %v772 = vpop.f32.mrb[0].mxu0
    %773 = vdwg.mxu0
    %v774 = vadd.f32 %v685, %v771
    %v775 = vld [vmem:[#allocation2 + $0xe] sm:$0xff]
    %s776 = scalar_lea.vmem %s4, 512
    %v777 = vld [vmem:[%s776] sm:$0xff]
    %v778 = vld [vmem:[%s776 + $0x8] sm:$0xff]
    %v779 = vld [vmem:[%s776 + $0x10] sm:$0xff]
    %v780 = vld [vmem:[%s776 + $0x18] sm:$0xff]
    %v781 = vld [vmem:[%s776 + $0x20] sm:$0xff]
    %v782 = vld [vmem:[%s776 + $0x28] sm:$0xff]
    %v783 = vld [vmem:[%s776 + $0x30] sm:$0xff]
    %v784 = vld [vmem:[%s776 + $0x38] sm:$0xff]
    %v785 = vld [vmem:[%s776 + $0x40] sm:$0xff]
    %v786 = vld [vmem:[%s776 + $0x48] sm:$0xff]
    %v787 = vld [vmem:[%s776 + $0x50] sm:$0xff]
    %v788 = vld [vmem:[%s776 + $0x58] sm:$0xff]
    %v789 = vld [vmem:[%s776 + $0x60] sm:$0xff]
    %v790 = vld [vmem:[%s776 + $0x68] sm:$0xff]
    %v791 = vld [vmem:[%s776 + $0x70] sm:$0xff]
    %v792 = vld [vmem:[%s776 + $0x78] sm:$0xff]
    %793 = vmatprep.subr.mxu0 0.0
    %794 = vmatpush1.msra.mxu0 %v777
    %795 = vmatprep.subr.mxu0 0.0
    %796 = vmatpush1.msra.mxu0 %v778
    %797 = vmatprep.subr.mxu0 0.0
    %798 = vmatpush1.msra.mxu0 %v779
    %799 = vmatprep.subr.mxu0 0.0
    %800 = vmatpush1.msra.mxu0 %v780
    %801 = vmatprep.subr.mxu0 0.0
    %802 = vmatpush1.msra.mxu0 %v781
    %803 = vmatprep.subr.mxu0 0.0
    %804 = vmatpush1.msra.mxu0 %v782
    %805 = vmatprep.subr.mxu0 0.0
    %806 = vmatpush1.msra.mxu0 %v783
    %807 = vmatprep.subr.mxu0 0.0
    %808 = vmatpush1.msra.mxu0 %v784
    %809 = vmatprep.subr.mxu0 0.0
    %810 = vmatpush1.msra.mxu0 %v785
    %811 = vmatprep.subr.mxu0 0.0
    %812 = vmatpush1.msra.mxu0 %v786
    %813 = vmatprep.subr.mxu0 0.0
    %814 = vmatpush1.msra.mxu0 %v787
    %815 = vmatprep.subr.mxu0 0.0
    %816 = vmatpush1.msra.mxu0 %v788
    %817 = vmatprep.subr.mxu0 0.0
    %818 = vmatpush1.msra.mxu0 %v789
    %819 = vmatprep.subr.mxu0 0.0
    %820 = vmatpush1.msra.mxu0 %v790
    %821 = vmatprep.subr.mxu0 0.0
    %822 = vmatpush1.msra.mxu0 %v791
    %823 = vmatprep.subr.mxu0 0.0
    %824 = vmatpush1.msra.mxu0 %v792
    %825 = vmatprep.subr.mxu0 0.0
    %826 = vmatpush1.msra.mxu0 0.0
    %827 = vmatprep.subr.mxu0 0.0
    %828 = vmatpush1.msra.mxu0 0.0
    %829 = vmatprep.subr.mxu0 0.0
    %830 = vmatpush1.msra.mxu0 0.0
    %831 = vmatprep.subr.mxu0 0.0
    %832 = vmatpush1.msra.mxu0 0.0
    %833 = vmatprep.subr.mxu0 0.0
    %834 = vmatpush1.msra.mxu0 0.0
    %835 = vmatprep.subr.mxu0 0.0
    %836 = vmatpush1.msra.mxu0 0.0
    %837 = vmatprep.subr.mxu0 0.0
    %838 = vmatpush1.msra.mxu0 0.0
    %839 = vmatprep.subr.mxu0 0.0
    %840 = vmatpush1.msra.mxu0 0.0
    %841 = vmatprep.subr.mxu0 0.0
    %842 = vmatpush1.msra.mxu0 0.0
    %843 = vmatprep.subr.mxu0 0.0
    %844 = vmatpush1.msra.mxu0 0.0
    %845 = vmatprep.subr.mxu0 0.0
    %846 = vmatpush1.msra.mxu0 0.0
    %847 = vmatprep.subr.mxu0 0.0
    %848 = vmatpush1.msra.mxu0 0.0
    %849 = vmatprep.subr.mxu0 0.0
    %850 = vmatpush1.msra.mxu0 0.0
    %851 = vmatprep.subr.mxu0 0.0
    %852 = vmatpush1.msra.mxu0 0.0
    %853 = vmatprep.subr.mxu0 0.0
    %854 = vmatpush1.msra.mxu0 0.0
    %855 = vmatprep.subr.mxu0 0.0
    %856 = vmatpush1.msra.mxu0 0.0
    %857 = vmatprep.mubr.f32.mxu0 0.0
    %858 = vmatmul.mubr.f32.gmra.mrb[0].mxu0 %v775
    %v859 = vpop.f32.mrb[0].mxu0
    %v860 = vadd.f32 0.0, %v859
    %v861 = vpop.f32.mrb[0].mxu0
    %862 = vdwg.mxu0
    %v863 = vadd.f32 %v774, %v860
    %v864 = vld [vmem:[#allocation2 + $0x10] sm:$0xff]
    %s865 = scalar_lea.vmem %s4, 640
    %v866 = vld [vmem:[%s865] sm:$0xff]
    %v867 = vld [vmem:[%s865 + $0x8] sm:$0xff]
    %v868 = vld [vmem:[%s865 + $0x10] sm:$0xff]
    %v869 = vld [vmem:[%s865 + $0x18] sm:$0xff]
    %v870 = vld [vmem:[%s865 + $0x20] sm:$0xff]
    %v871 = vld [vmem:[%s865 + $0x28] sm:$0xff]
    %v872 = vld [vmem:[%s865 + $0x30] sm:$0xff]
    %v873 = vld [vmem:[%s865 + $0x38] sm:$0xff]
    %v874 = vld [vmem:[%s865 + $0x40] sm:$0xff]
    %v875 = vld [vmem:[%s865 + $0x48] sm:$0xff]
    %v876 = vld [vmem:[%s865 + $0x50] sm:$0xff]
    %v877 = vld [vmem:[%s865 + $0x58] sm:$0xff]
    %v878 = vld [vmem:[%s865 + $0x60] sm:$0xff]
    %v879 = vld [vmem:[%s865 + $0x68] sm:$0xff]
    %v880 = vld [vmem:[%s865 + $0x70] sm:$0xff]
    %v881 = vld [vmem:[%s865 + $0x78] sm:$0xff]
    %882 = vmatprep.subr.mxu0 0.0
    %883 = vmatpush1.msra.mxu0 %v866
    %884 = vmatprep.subr.mxu0 0.0
    %885 = vmatpush1.msra.mxu0 %v867
    %886 = vmatprep.subr.mxu0 0.0
    %887 = vmatpush1.msra.mxu0 %v868
    %888 = vmatprep.subr.mxu0 0.0
    %889 = vmatpush1.msra.mxu0 %v869
    %890 = vmatprep.subr.mxu0 0.0
    %891 = vmatpush1.msra.mxu0 %v870
    %892 = vmatprep.subr.mxu0 0.0
    %893 = vmatpush1.msra.mxu0 %v871
    %894 = vmatprep.subr.mxu0 0.0
    %895 = vmatpush1.msra.mxu0 %v872
    %896 = vmatprep.subr.mxu0 0.0
    %897 = vmatpush1.msra.mxu0 %v873
    %898 = vmatprep.subr.mxu0 0.0
    %899 = vmatpush1.msra.mxu0 %v874
    %900 = vmatprep.subr.mxu0 0.0
    %901 = vmatpush1.msra.mxu0 %v875
    %902 = vmatprep.subr.mxu0 0.0
    %903 = vmatpush1.msra.mxu0 %v876
    %904 = vmatprep.subr.mxu0 0.0
    %905 = vmatpush1.msra.mxu0 %v877
    %906 = vmatprep.subr.mxu0 0.0
    %907 = vmatpush1.msra.mxu0 %v878
    %908 = vmatprep.subr.mxu0 0.0
    %909 = vmatpush1.msra.mxu0 %v879
    %910 = vmatprep.subr.mxu0 0.0
    %911 = vmatpush1.msra.mxu0 %v880
    %912 = vmatprep.subr.mxu0 0.0
    %913 = vmatpush1.msra.mxu0 %v881
    %914 = vmatprep.subr.mxu0 0.0
    %915 = vmatpush1.msra.mxu0 0.0
    %916 = vmatprep.subr.mxu0 0.0
    %917 = vmatpush1.msra.mxu0 0.0
    %918 = vmatprep.subr.mxu0 0.0
    %919 = vmatpush1.msra.mxu0 0.0
    %920 = vmatprep.subr.mxu0 0.0
    %921 = vmatpush1.msra.mxu0 0.0
    %922 = vmatprep.subr.mxu0 0.0
    %923 = vmatpush1.msra.mxu0 0.0
    %924 = vmatprep.subr.mxu0 0.0
    %925 = vmatpush1.msra.mxu0 0.0
    %926 = vmatprep.subr.mxu0 0.0
    %927 = vmatpush1.msra.mxu0 0.0
    %928 = vmatprep.subr.mxu0 0.0
    %929 = vmatpush1.msra.mxu0 0.0
    %930 = vmatprep.subr.mxu0 0.0
    %931 = vmatpush1.msra.mxu0 0.0
    %932 = vmatprep.subr.mxu0 0.0
    %933 = vmatpush1.msra.mxu0 0.0
    %934 = vmatprep.subr.mxu0 0.0
    %935 = vmatpush1.msra.mxu0 0.0
    %936 = vmatprep.subr.mxu0 0.0
    %937 = vmatpush1.msra.mxu0 0.0
    %938 = vmatprep.subr.mxu0 0.0
    %939 = vmatpush1.msra.mxu0 0.0
    %940 = vmatprep.subr.mxu0 0.0
    %941 = vmatpush1.msra.mxu0 0.0
    %942 = vmatprep.subr.mxu0 0.0
    %943 = vmatpush1.msra.mxu0 0.0
    %944 = vmatprep.subr.mxu0 0.0
    %945 = vmatpush1.msra.mxu0 0.0
    %946 = vmatprep.mubr.f32.mxu0 0.0
    %947 = vmatmul.mubr.f32.gmra.mrb[0].mxu0 %v864
    %v948 = vpop.f32.mrb[0].mxu0
    %v949 = vadd.f32 0.0, %v948
    %v950 = vpop.f32.mrb[0].mxu0
    %951 = vdwg.mxu0
    %v952 = vadd.f32 %v863, %v949
    %v953 = vld [vmem:[#allocation2 + $0x18] sm:$0xff]
    %s954 = scalar_lea.vmem %s4, 768
    %v955 = vld [vmem:[%s954] sm:$0xff]
    %v956 = vld [vmem:[%s954 + $0x8] sm:$0xff]
    %v957 = vld [vmem:[%s954 + $0x10] sm:$0xff]
    %v958 = vld [vmem:[%s954 + $0x18] sm:$0xff]
    %v959 = vld [vmem:[%s954 + $0x20] sm:$0xff]
    %v960 = vld [vmem:[%s954 + $0x28] sm:$0xff]
    %v961 = vld [vmem:[%s954 + $0x30] sm:$0xff]
    %v962 = vld [vmem:[%s954 + $0x38] sm:$0xff]
    %v963 = vld [vmem:[%s954 + $0x40] sm:$0xff]
    %v964 = vld [vmem:[%s954 + $0x48] sm:$0xff]
    %v965 = vld [vmem:[%s954 + $0x50] sm:$0xff]
    %v966 = vld [vmem:[%s954 + $0x58] sm:$0xff]
    %v967 = vld [vmem:[%s954 + $0x60] sm:$0xff]
    %v968 = vld [vmem:[%s954 + $0x68] sm:$0xff]
    %v969 = vld [vmem:[%s954 + $0x70] sm:$0xff]
    %v970 = vld [vmem:[%s954 + $0x78] sm:$0xff]
    %971 = vmatprep.subr.mxu0 0.0
    %972 = vmatpush1.msra.mxu0 %v955
    %973 = vmatprep.subr.mxu0 0.0
    %974 = vmatpush1.msra.mxu0 %v956
    %975 = vmatprep.subr.mxu0 0.0
    %976 = vmatpush1.msra.mxu0 %v957
    %977 = vmatprep.subr.mxu0 0.0
    %978 = vmatpush1.msra.mxu0 %v958
    %979 = vmatprep.subr.mxu0 0.0
    %980 = vmatpush1.msra.mxu0 %v959
    %981 = vmatprep.subr.mxu0 0.0
    %982 = vmatpush1.msra.mxu0 %v960
    %983 = vmatprep.subr.mxu0 0.0
    %984 = vmatpush1.msra.mxu0 %v961
    %985 = vmatprep.subr.mxu0 0.0
    %986 = vmatpush1.msra.mxu0 %v962
    %987 = vmatprep.subr.mxu0 0.0
    %988 = vmatpush1.msra.mxu0 %v963
    %989 = vmatprep.subr.mxu0 0.0
    %990 = vmatpush1.msra.mxu0 %v964
    %991 = vmatprep.subr.mxu0 0.0
    %992 = vmatpush1.msra.mxu0 %v965
    %993 = vmatprep.subr.mxu0 0.0
    %994 = vmatpush1.msra.mxu0 %v966
    %995 = vmatprep.subr.mxu0 0.0
    %996 = vmatpush1.msra.mxu0 %v967
    %997 = vmatprep.subr.mxu0 0.0
    %998 = vmatpush1.msra.mxu0 %v968
    %999 = vmatprep.subr.mxu0 0.0
    %1000 = vmatpush1.msra.mxu0 %v969
    %1001 = vmatprep.subr.mxu0 0.0
    %1002 = vmatpush1.msra.mxu0 %v970
    %1003 = vmatprep.subr.mxu0 0.0
    %1004 = vmatpush1.msra.mxu0 0.0
    %1005 = vmatprep.subr.mxu0 0.0
    %1006 = vmatpush1.msra.mxu0 0.0
    %1007 = vmatprep.subr.mxu0 0.0
    %1008 = vmatpush1.msra.mxu0 0.0
    %1009 = vmatprep.subr.mxu0 0.0
    %1010 = vmatpush1.msra.mxu0 0.0
    %1011 = vmatprep.subr.mxu0 0.0
    %1012 = vmatpush1.msra.mxu0 0.0
    %1013 = vmatprep.subr.mxu0 0.0
    %1014 = vmatpush1.msra.mxu0 0.0
    %1015 = vmatprep.subr.mxu0 0.0
    %1016 = vmatpush1.msra.mxu0 0.0
    %1017 = vmatprep.subr.mxu0 0.0
    %1018 = vmatpush1.msra.mxu0 0.0
    %1019 = vmatprep.subr.mxu0 0.0
    %1020 = vmatpush1.msra.mxu0 0.0
    %1021 = vmatprep.subr.mxu0 0.0
    %1022 = vmatpush1.msra.mxu0 0.0
    %1023 = vmatprep.subr.mxu0 0.0
    %1024 = vmatpush1.msra.mxu0 0.0
    %1025 = vmatprep.subr.mxu0 0.0
    %1026 = vmatpush1.msra.mxu0 0.0
    %1027 = vmatprep.subr.mxu0 0.0
    %1028 = vmatpush1.msra.mxu0 0.0
    %1029 = vmatprep.subr.mxu0 0.0
    %1030 = vmatpush1.msra.mxu0 0.0
    %1031 = vmatprep.subr.mxu0 0.0
    %1032 = vmatpush1.msra.mxu0 0.0
    %1033 = vmatprep.subr.mxu0 0.0
    %1034 = vmatpush1.msra.mxu0 0.0
    %1035 = vmatprep.mubr.f32.mxu0 0.0
    %1036 = vmatmul.mubr.f32.gmra.mrb[0].mxu0 %v953
    %v1037 = vpop.f32.mrb[0].mxu0
    %v1038 = vadd.f32 0.0, %v1037
    %v1039 = vpop.f32.mrb[0].mxu0
    %1040 = vdwg.mxu0
    %v1041 = vadd.f32 %v952, %v1038
    %v1042 = vld [vmem:[#allocation2 + $0x1a] sm:$0xff]
    %s1043 = scalar_lea.vmem %s4, 896
    %v1044 = vld [vmem:[%s1043] sm:$0xff]
    %v1045 = vld [vmem:[%s1043 + $0x8] sm:$0xff]
    %v1046 = vld [vmem:[%s1043 + $0x10] sm:$0xff]
    %v1047 = vld [vmem:[%s1043 + $0x18] sm:$0xff]
    %v1048 = vld [vmem:[%s1043 + $0x20] sm:$0xff]
    %v1049 = vld [vmem:[%s1043 + $0x28] sm:$0xff]
    %v1050 = vld [vmem:[%s1043 + $0x30] sm:$0xff]
    %v1051 = vld [vmem:[%s1043 + $0x38] sm:$0xff]
    %v1052 = vld [vmem:[%s1043 + $0x40] sm:$0xff]
    %v1053 = vld [vmem:[%s1043 + $0x48] sm:$0xff]
    %v1054 = vld [vmem:[%s1043 + $0x50] sm:$0xff]
    %v1055 = vld [vmem:[%s1043 + $0x58] sm:$0xff]
    %v1056 = vld [vmem:[%s1043 + $0x60] sm:$0xff]
    %v1057 = vld [vmem:[%s1043 + $0x68] sm:$0xff]
    %v1058 = vld [vmem:[%s1043 + $0x70] sm:$0xff]
    %v1059 = vld [vmem:[%s1043 + $0x78] sm:$0xff]
    %1060 = vmatprep.subr.mxu0 0.0
    %1061 = vmatpush1.msra.mxu0 %v1044
    %1062 = vmatprep.subr.mxu0 0.0
    %1063 = vmatpush1.msra.mxu0 %v1045
    %1064 = vmatprep.subr.mxu0 0.0
    %1065 = vmatpush1.msra.mxu0 %v1046
    %1066 = vmatprep.subr.mxu0 0.0
    %1067 = vmatpush1.msra.mxu0 %v1047
    %1068 = vmatprep.subr.mxu0 0.0
    %1069 = vmatpush1.msra.mxu0 %v1048
    %1070 = vmatprep.subr.mxu0 0.0
    %1071 = vmatpush1.msra.mxu0 %v1049
    %1072 = vmatprep.subr.mxu0 0.0
    %1073 = vmatpush1.msra.mxu0 %v1050
    %1074 = vmatprep.subr.mxu0 0.0
    %1075 = vmatpush1.msra.mxu0 %v1051
    %1076 = vmatprep.subr.mxu0 0.0
    %1077 = vmatpush1.msra.mxu0 %v1052
    %1078 = vmatprep.subr.mxu0 0.0
    %1079 = vmatpush1.msra.mxu0 %v1053
    %1080 = vmatprep.subr.mxu0 0.0
    %1081 = vmatpush1.msra.mxu0 %v1054
    %1082 = vmatprep.subr.mxu0 0.0
    %1083 = vmatpush1.msra.mxu0 %v1055
    %1084 = vmatprep.subr.mxu0 0.0
    %1085 = vmatpush1.msra.mxu0 %v1056
    %1086 = vmatprep.subr.mxu0 0.0
    %1087 = vmatpush1.msra.mxu0 %v1057
    %1088 = vmatprep.subr.mxu0 0.0
    %1089 = vmatpush1.msra.mxu0 %v1058
    %1090 = vmatprep.subr.mxu0 0.0
    %1091 = vmatpush1.msra.mxu0 %v1059
    %1092 = vmatprep.subr.mxu0 0.0
    %1093 = vmatpush1.msra.mxu0 0.0
    %1094 = vmatprep.subr.mxu0 0.0
    %1095 = vmatpush1.msra.mxu0 0.0
    %1096 = vmatprep.subr.mxu0 0.0
    %1097 = vmatpush1.msra.mxu0 0.0
    %1098 = vmatprep.subr.mxu0 0.0
    %1099 = vmatpush1.msra.mxu0 0.0
    %1100 = vmatprep.subr.mxu0 0.0
    %1101 = vmatpush1.msra.mxu0 0.0
    %1102 = vmatprep.subr.mxu0 0.0
    %1103 = vmatpush1.msra.mxu0 0.0
    %1104 = vmatprep.subr.mxu0 0.0
    %1105 = vmatpush1.msra.mxu0 0.0
    %1106 = vmatprep.subr.mxu0 0.0
    %1107 = vmatpush1.msra.mxu0 0.0
    %1108 = vmatprep.subr.mxu0 0.0
    %1109 = vmatpush1.msra.mxu0 0.0
    %1110 = vmatprep.subr.mxu0 0.0
    %1111 = vmatpush1.msra.mxu0 0.0
    %1112 = vmatprep.subr.mxu0 0.0
    %1113 = vmatpush1.msra.mxu0 0.0
    %1114 = vmatprep.subr.mxu0 0.0
    %1115 = vmatpush1.msra.mxu0 0.0
    %1116 = vmatprep.subr.mxu0 0.0
    %1117 = vmatpush1.msra.mxu0 0.0
    %1118 = vmatprep.subr.mxu0 0.0
    %1119 = vmatpush1.msra.mxu0 0.0
    %1120 = vmatprep.subr.mxu0 0.0
    %1121 = vmatpush1.msra.mxu0 0.0
    %1122 = vmatprep.subr.mxu0 0.0
    %1123 = vmatpush1.msra.mxu0 0.0
    %1124 = vmatprep.mubr.f32.mxu0 0.0
    %1125 = vmatmul.mubr.f32.gmra.mrb[0].mxu0 %v1042
    %v1126 = vpop.f32.mrb[0].mxu0
    %v1127 = vadd.f32 0.0, %v1126
    %v1128 = vpop.f32.mrb[0].mxu0
    %1129 = vdwg.mxu0
    %v1130 = vadd.f32 %v1041, %v1127
    %v1131 = vld [vmem:[#allocation2 + $0x1c] sm:$0xff]
    %s1132 = scalar_lea.vmem %s4, 1024
    %v1133 = vld [vmem:[%s1132] sm:$0xff]
    %v1134 = vld [vmem:[%s1132 + $0x8] sm:$0xff]
    %v1135 = vld [vmem:[%s1132 + $0x10] sm:$0xff]
    %v1136 = vld [vmem:[%s1132 + $0x18] sm:$0xff]
    %v1137 = vld [vmem:[%s1132 + $0x20] sm:$0xff]
    %v1138 = vld [vmem:[%s1132 + $0x28] sm:$0xff]
    %v1139 = vld [vmem:[%s1132 + $0x30] sm:$0xff]
    %v1140 = vld [vmem:[%s1132 + $0x38] sm:$0xff]
    %v1141 = vld [vmem:[%s1132 + $0x40] sm:$0xff]
    %v1142 = vld [vmem:[%s1132 + $0x48] sm:$0xff]
    %v1143 = vld [vmem:[%s1132 + $0x50] sm:$0xff]
    %v1144 = vld [vmem:[%s1132 + $0x58] sm:$0xff]
    %v1145 = vld [vmem:[%s1132 + $0x60] sm:$0xff]
    %v1146 = vld [vmem:[%s1132 + $0x68] sm:$0xff]
    %v1147 = vld [vmem:[%s1132 + $0x70] sm:$0xff]
    %v1148 = vld [vmem:[%s1132 + $0x78] sm:$0xff]
    %1149 = vmatprep.subr.mxu0 0.0
    %1150 = vmatpush1.msra.mxu0 %v1133
    %1151 = vmatprep.subr.mxu0 0.0
    %1152 = vmatpush1.msra.mxu0 %v1134
    %1153 = vmatprep.subr.mxu0 0.0
    %1154 = vmatpush1.msra.mxu0 %v1135
    %1155 = vmatprep.subr.mxu0 0.0
    %1156 = vmatpush1.msra.mxu0 %v1136
    %1157 = vmatprep.subr.mxu0 0.0
    %1158 = vmatpush1.msra.mxu0 %v1137
    %1159 = vmatprep.subr.mxu0 0.0
    %1160 = vmatpush1.msra.mxu0 %v1138
    %1161 = vmatprep.subr.mxu0 0.0
    %1162 = vmatpush1.msra.mxu0 %v1139
    %1163 = vmatprep.subr.mxu0 0.0
    %1164 = vmatpush1.msra.mxu0 %v1140
    %1165 = vmatprep.subr.mxu0 0.0
    %1166 = vmatpush1.msra.mxu0 %v1141
    %1167 = vmatprep.subr.mxu0 0.0
    %1168 = vmatpush1.msra.mxu0 %v1142
    %1169 = vmatprep.subr.mxu0 0.0
    %1170 = vmatpush1.msra.mxu0 %v1143
    %1171 = vmatprep.subr.mxu0 0.0
    %1172 = vmatpush1.msra.mxu0 %v1144
    %1173 = vmatprep.subr.mxu0 0.0
    %1174 = vmatpush1.msra.mxu0 %v1145
    %1175 = vmatprep.subr.mxu0 0.0
    %1176 = vmatpush1.msra.mxu0 %v1146
    %1177 = vmatprep.subr.mxu0 0.0
    %1178 = vmatpush1.msra.mxu0 %v1147
    %1179 = vmatprep.subr.mxu0 0.0
    %1180 = vmatpush1.msra.mxu0 %v1148
    %1181 = vmatprep.subr.mxu0 0.0
    %1182 = vmatpush1.msra.mxu0 0.0
    %1183 = vmatprep.subr.mxu0 0.0
    %1184 = vmatpush1.msra.mxu0 0.0
    %1185 = vmatprep.subr.mxu0 0.0
    %1186 = vmatpush1.msra.mxu0 0.0
    %1187 = vmatprep.subr.mxu0 0.0
    %1188 = vmatpush1.msra.mxu0 0.0
    %1189 = vmatprep.subr.mxu0 0.0
    %1190 = vmatpush1.msra.mxu0 0.0
    %1191 = vmatprep.subr.mxu0 0.0
    %1192 = vmatpush1.msra.mxu0 0.0
    %1193 = vmatprep.subr.mxu0 0.0
    %1194 = vmatpush1.msra.mxu0 0.0
    %1195 = vmatprep.subr.mxu0 0.0
    %1196 = vmatpush1.msra.mxu0 0.0
    %1197 = vmatprep.subr.mxu0 0.0
    %1198 = vmatpush1.msra.mxu0 0.0
    %1199 = vmatprep.subr.mxu0 0.0
    %1200 = vmatpush1.msra.mxu0 0.0
    %1201 = vmatprep.subr.mxu0 0.0
    %1202 = vmatpush1.msra.mxu0 0.0
    %1203 = vmatprep.subr.mxu0 0.0
    %1204 = vmatpush1.msra.mxu0 0.0
    %1205 = vmatprep.subr.mxu0 0.0
    %1206 = vmatpush1.msra.mxu0 0.0
    %1207 = vmatprep.subr.mxu0 0.0
    %1208 = vmatpush1.msra.mxu0 0.0
    %1209 = vmatprep.subr.mxu0 0.0
    %1210 = vmatpush1.msra.mxu0 0.0
    %1211 = vmatprep.subr.mxu0 0.0
    %1212 = vmatpush1.msra.mxu0 0.0
    %1213 = vmatprep.mubr.f32.mxu0 0.0
    %1214 = vmatmul.mubr.f32.gmra.mrb[0].mxu0 %v1131
    %v1215 = vpop.f32.mrb[0].mxu0
    %v1216 = vadd.f32 0.0, %v1215
    %v1217 = vpop.f32.mrb[0].mxu0
    %1218 = vdwg.mxu0
    %v1219 = vadd.f32 %v1130, %v1216
    %1220 = vst [vmem:[#allocation3] sm:$0xff] %v1219
    %v1221 = vld [vmem:[#allocation2 + $0xc] sm:$0xff]
    %v1222 = vld [vmem:[%s4] sm:$0xff]
    %v1223 = vld [vmem:[%s4 + $0x8] sm:$0xff]
    %v1224 = vld [vmem:[%s4 + $0x10] sm:$0xff]
    %v1225 = vld [vmem:[%s4 + $0x18] sm:$0xff]
    %v1226 = vld [vmem:[%s4 + $0x20] sm:$0xff]
    %v1227 = vld [vmem:[%s4 + $0x28] sm:$0xff]
    %v1228 = vld [vmem:[%s4 + $0x30] sm:$0xff]
    %v1229 = vld [vmem:[%s4 + $0x38] sm:$0xff]
    %v1230 = vld [vmem:[%s4 + $0x40] sm:$0xff]
    %v1231 = vld [vmem:[%s4 + $0x48] sm:$0xff]
    %v1232 = vld [vmem:[%s4 + $0x50] sm:$0xff]
    %v1233 = vld [vmem:[%s4 + $0x58] sm:$0xff]
    %v1234 = vld [vmem:[%s4 + $0x60] sm:$0xff]
    %v1235 = vld [vmem:[%s4 + $0x68] sm:$0xff]
    %v1236 = vld [vmem:[%s4 + $0x70] sm:$0xff]
    %v1237 = vld [vmem:[%s4 + $0x78] sm:$0xff]
    %v1238 = vld [vmem:[#allocation2 + $0xe] sm:$0xff]
    %v1239 = vld [vmem:[%s440] sm:$0xff]
    %v1240 = vld [vmem:[%s440 + $0x8] sm:$0xff]
    %v1241 = vld [vmem:[%s440 + $0x10] sm:$0xff]
    %v1242 = vld [vmem:[%s440 + $0x18] sm:$0xff]
    %v1243 = vld [vmem:[%s440 + $0x20] sm:$0xff]
    %v1244 = vld [vmem:[%s440 + $0x28] sm:$0xff]
    %v1245 = vld [vmem:[%s440 + $0x30] sm:$0xff]
    %v1246 = vld [vmem:[%s440 + $0x38] sm:$0xff]
    %v1247 = vld [vmem:[%s440 + $0x40] sm:$0xff]
    %v1248 = vld [vmem:[%s440 + $0x48] sm:$0xff]
    %v1249 = vld [vmem:[%s440 + $0x50] sm:$0xff]
    %v1250 = vld [vmem:[%s440 + $0x58] sm:$0xff]
    %v1251 = vld [vmem:[%s440 + $0x60] sm:$0xff]
    %v1252 = vld [vmem:[%s440 + $0x68] sm:$0xff]
    %v1253 = vld [vmem:[%s440 + $0x70] sm:$0xff]
    %v1254 = vld [vmem:[%s440 + $0x78] sm:$0xff]
    %1255 = vmatprep.subr.mxu0 0.0
    %1256 = vmatpush1.msra.mxu0 %v1239
    %1257 = vmatprep.subr.mxu0 0.0
    %1258 = vmatpush1.msra.mxu0 %v1240
    %1259 = vmatprep.subr.mxu0 0.0
    %1260 = vmatpush1.msra.mxu0 %v1241
    %1261 = vmatprep.subr.mxu0 0.0
    %1262 = vmatpush1.msra.mxu0 %v1242
    %1263 = vmatprep.subr.mxu0 0.0
    %1264 = vmatpush1.msra.mxu0 %v1243
    %1265 = vmatprep.subr.mxu0 0.0
    %1266 = vmatpush1.msra.mxu0 %v1244
    %1267 = vmatprep.subr.mxu0 0.0
    %1268 = vmatpush1.msra.mxu0 %v1245
    %1269 = vmatprep.subr.mxu0 0.0
    %1270 = vmatpush1.msra.mxu0 %v1246
    %1271 = vmatprep.subr.mxu0 0.0
    %1272 = vmatpush1.msra.mxu0 %v1247
    %1273 = vmatprep.subr.mxu0 0.0
    %1274 = vmatpush1.msra.mxu0 %v1248
    %1275 = vmatprep.subr.mxu0 0.0
    %1276 = vmatpush1.msra.mxu0 %v1249
    %1277 = vmatprep.subr.mxu0 0.0
    %1278 = vmatpush1.msra.mxu0 %v1250
    %1279 = vmatprep.subr.mxu0 0.0
    %1280 = vmatpush1.msra.mxu0 %v1251
    %1281 = vmatprep.subr.mxu0 0.0
    %1282 = vmatpush1.msra.mxu0 %v1252
    %1283 = vmatprep.subr.mxu0 0.0
    %1284 = vmatpush1.msra.mxu0 %v1253
    %1285 = vmatprep.subr.mxu0 0.0
    %1286 = vmatpush1.msra.mxu0 %v1254
    %1287 = vmatprep.subr.mxu0 0.0
    %1288 = vmatpush1.msra.mxu0 0.0
    %1289 = vmatprep.subr.mxu0 0.0
    %1290 = vmatpush1.msra.mxu0 0.0
    %1291 = vmatprep.subr.mxu0 0.0
    %1292 = vmatpush1.msra.mxu0 0.0
    %1293 = vmatprep.subr.mxu0 0.0
    %1294 = vmatpush1.msra.mxu0 0.0
    %1295 = vmatprep.subr.mxu0 0.0
    %1296 = vmatpush1.msra.mxu0 0.0
    %1297 = vmatprep.subr.mxu0 0.0
    %1298 = vmatpush1.msra.mxu0 0.0
    %1299 = vmatprep.subr.mxu0 0.0
    %1300 = vmatpush1.msra.mxu0 0.0
    %1301 = vmatprep.subr.mxu0 0.0
    %1302 = vmatpush1.msra.mxu0 0.0
    %1303 = vmatprep.subr.mxu0 0.0
    %1304 = vmatpush1.msra.mxu0 0.0
    %1305 = vmatprep.subr.mxu0 0.0
    %1306 = vmatpush1.msra.mxu0 0.0
    %1307 = vmatprep.subr.mxu0 0.0
    %1308 = vmatpush1.msra.mxu0 0.0
    %1309 = vmatprep.subr.mxu0 0.0
    %1310 = vmatpush1.msra.mxu0 0.0
    %1311 = vmatprep.subr.mxu0 0.0
    %1312 = vmatpush1.msra.mxu0 0.0
    %1313 = vmatprep.subr.mxu0 0.0
    %1314 = vmatpush1.msra.mxu0 0.0
    %1315 = vmatprep.subr.mxu0 0.0
    %1316 = vmatpush1.msra.mxu0 0.0
    %1317 = vmatprep.subr.mxu0 0.0
    %1318 = vmatpush1.msra.mxu0 0.0
    %1319 = vmatprep.mubr.f32.mxu0 0.0
    %1320 = vmatmul.mubr.f32.gmra.mrb[0].mxu0 %v1238
    %v1321 = vpop.f32.mrb[0].mxu0
    %v1322 = vadd.f32 0.0, %v1321
    %v1323 = vpop.f32.mrb[0].mxu0
    %1324 = vdwg.mxu0
    %1325 = vmatprep.subr.mxu0 0.0
    %1326 = vmatpush1.msra.mxu0 %v1222
    %1327 = vmatprep.subr.mxu0 0.0
    %1328 = vmatpush1.msra.mxu0 %v1223
    %1329 = vmatprep.subr.mxu0 0.0
    %1330 = vmatpush1.msra.mxu0 %v1224
    %1331 = vmatprep.subr.mxu0 0.0
    %1332 = vmatpush1.msra.mxu0 %v1225
    %1333 = vmatprep.subr.mxu0 0.0
    %1334 = vmatpush1.msra.mxu0 %v1226
    %1335 = vmatprep.subr.mxu0 0.0
    %1336 = vmatpush1.msra.mxu0 %v1227
    %1337 = vmatprep.subr.mxu0 0.0
    %1338 = vmatpush1.msra.mxu0 %v1228
    %1339 = vmatprep.subr.mxu0 0.0
    %1340 = vmatpush1.msra.mxu0 %v1229
    %1341 = vmatprep.subr.mxu0 0.0
    %1342 = vmatpush1.msra.mxu0 %v1230
    %1343 = vmatprep.subr.mxu0 0.0
    %1344 = vmatpush1.msra.mxu0 %v1231
    %1345 = vmatprep.subr.mxu0 0.0
    %1346 = vmatpush1.msra.mxu0 %v1232
    %1347 = vmatprep.subr.mxu0 0.0
    %1348 = vmatpush1.msra.mxu0 %v1233
    %1349 = vmatprep.subr.mxu0 0.0
    %1350 = vmatpush1.msra.mxu0 %v1234
    %1351 = vmatprep.subr.mxu0 0.0
    %1352 = vmatpush1.msra.mxu0 %v1235
    %1353 = vmatprep.subr.mxu0 0.0
    %1354 = vmatpush1.msra.mxu0 %v1236
    %1355 = vmatprep.subr.mxu0 0.0
    %1356 = vmatpush1.msra.mxu0 %v1237
    %1357 = vmatprep.subr.mxu0 0.0
    %1358 = vmatpush1.msra.mxu0 0.0
    %1359 = vmatprep.subr.mxu0 0.0
    %1360 = vmatpush1.msra.mxu0 0.0
    %1361 = vmatprep.subr.mxu0 0.0
    %1362 = vmatpush1.msra.mxu0 0.0
    %1363 = vmatprep.subr.mxu0 0.0
    %1364 = vmatpush1.msra.mxu0 0.0
    %1365 = vmatprep.subr.mxu0 0.0
    %1366 = vmatpush1.msra.mxu0 0.0
    %1367 = vmatprep.subr.mxu0 0.0
    %1368 = vmatpush1.msra.mxu0 0.0
    %1369 = vmatprep.subr.mxu0 0.0
    %1370 = vmatpush1.msra.mxu0 0.0
    %1371 = vmatprep.subr.mxu0 0.0
    %1372 = vmatpush1.msra.mxu0 0.0
    %1373 = vmatprep.subr.mxu0 0.0
    %1374 = vmatpush1.msra.mxu0 0.0
    %1375 = vmatprep.subr.mxu0 0.0
    %1376 = vmatpush1.msra.mxu0 0.0
    %1377 = vmatprep.subr.mxu0 0.0
    %1378 = vmatpush1.msra.mxu0 0.0
    %1379 = vmatprep.subr.mxu0 0.0
    %1380 = vmatpush1.msra.mxu0 0.0
    %1381 = vmatprep.subr.mxu0 0.0
    %1382 = vmatpush1.msra.mxu0 0.0
    %1383 = vmatprep.subr.mxu0 0.0
    %1384 = vmatpush1.msra.mxu0 0.0
    %1385 = vmatprep.subr.mxu0 0.0
    %1386 = vmatpush1.msra.mxu0 0.0
    %1387 = vmatprep.subr.mxu0 0.0
    %1388 = vmatpush1.msra.mxu0 0.0
    %1389 = vmatprep.mubr.f32.mxu0 0.0
    %1390 = vmatmul.mubr.f32.gmra.mrb[0].mxu0 %v1221
    %v1391 = vpop.f32.mrb[0].mxu0
    %v1392 = vadd.f32 %v1322, %v1391
    %v1393 = vpop.f32.mrb[0].mxu0
    %1394 = vdwg.mxu0
    %v1395 = vld [vmem:[#allocation2 + $0x10] sm:$0xff]
    %v1396 = vld [vmem:[%s598] sm:$0xff]
    %v1397 = vld [vmem:[%s598 + $0x8] sm:$0xff]
    %v1398 = vld [vmem:[%s598 + $0x10] sm:$0xff]
    %v1399 = vld [vmem:[%s598 + $0x18] sm:$0xff]
    %v1400 = vld [vmem:[%s598 + $0x20] sm:$0xff]
    %v1401 = vld [vmem:[%s598 + $0x28] sm:$0xff]
    %v1402 = vld [vmem:[%s598 + $0x30] sm:$0xff]
    %v1403 = vld [vmem:[%s598 + $0x38] sm:$0xff]
    %v1404 = vld [vmem:[%s598 + $0x40] sm:$0xff]
    %v1405 = vld [vmem:[%s598 + $0x48] sm:$0xff]
    %v1406 = vld [vmem:[%s598 + $0x50] sm:$0xff]
    %v1407 = vld [vmem:[%s598 + $0x58] sm:$0xff]
    %v1408 = vld [vmem:[%s598 + $0x60] sm:$0xff]
    %v1409 = vld [vmem:[%s598 + $0x68] sm:$0xff]
    %v1410 = vld [vmem:[%s598 + $0x70] sm:$0xff]
    %v1411 = vld [vmem:[%s598 + $0x78] sm:$0xff]
    %1412 = vmatprep.subr.mxu0 0.0
    %1413 = vmatpush1.msra.mxu0 %v1396
    %1414 = vmatprep.subr.mxu0 0.0
    %1415 = vmatpush1.msra.mxu0 %v1397
    %1416 = vmatprep.subr.mxu0 0.0
    %1417 = vmatpush1.msra.mxu0 %v1398
    %1418 = vmatprep.subr.mxu0 0.0
    %1419 = vmatpush1.msra.mxu0 %v1399
    %1420 = vmatprep.subr.mxu0 0.0
    %1421 = vmatpush1.msra.mxu0 %v1400
    %1422 = vmatprep.subr.mxu0 0.0
    %1423 = vmatpush1.msra.mxu0 %v1401
    %1424 = vmatprep.subr.mxu0 0.0
    %1425 = vmatpush1.msra.mxu0 %v1402
    %1426 = vmatprep.subr.mxu0 0.0
    %1427 = vmatpush1.msra.mxu0 %v1403
    %1428 = vmatprep.subr.mxu0 0.0
    %1429 = vmatpush1.msra.mxu0 %v1404
    %1430 = vmatprep.subr.mxu0 0.0
    %1431 = vmatpush1.msra.mxu0 %v1405
    %1432 = vmatprep.subr.mxu0 0.0
    %1433 = vmatpush1.msra.mxu0 %v1406
    %1434 = vmatprep.subr.mxu0 0.0
    %1435 = vmatpush1.msra.mxu0 %v1407
    %1436 = vmatprep.subr.mxu0 0.0
    %1437 = vmatpush1.msra.mxu0 %v1408
    %1438 = vmatprep.subr.mxu0 0.0
    %1439 = vmatpush1.msra.mxu0 %v1409
    %1440 = vmatprep.subr.mxu0 0.0
    %1441 = vmatpush1.msra.mxu0 %v1410
    %1442 = vmatprep.subr.mxu0 0.0
    %1443 = vmatpush1.msra.mxu0 %v1411
    %1444 = vmatprep.subr.mxu0 0.0
    %1445 = vmatpush1.msra.mxu0 0.0
    %1446 = vmatprep.subr.mxu0 0.0
    %1447 = vmatpush1.msra.mxu0 0.0
    %1448 = vmatprep.subr.mxu0 0.0
    %1449 = vmatpush1.msra.mxu0 0.0
    %1450 = vmatprep.subr.mxu0 0.0
    %1451 = vmatpush1.msra.mxu0 0.0
    %1452 = vmatprep.subr.mxu0 0.0
    %1453 = vmatpush1.msra.mxu0 0.0
    %1454 = vmatprep.subr.mxu0 0.0
    %1455 = vmatpush1.msra.mxu0 0.0
    %1456 = vmatprep.subr.mxu0 0.0
    %1457 = vmatpush1.msra.mxu0 0.0
    %1458 = vmatprep.subr.mxu0 0.0
    %1459 = vmatpush1.msra.mxu0 0.0
    %1460 = vmatprep.subr.mxu0 0.0
    %1461 = vmatpush1.msra.mxu0 0.0
    %1462 = vmatprep.subr.mxu0 0.0
    %1463 = vmatpush1.msra.mxu0 0.0
    %1464 = vmatprep.subr.mxu0 0.0
    %1465 = vmatpush1.msra.mxu0 0.0
    %1466 = vmatprep.subr.mxu0 0.0
    %1467 = vmatpush1.msra.mxu0 0.0
    %1468 = vmatprep.subr.mxu0 0.0
    %1469 = vmatpush1.msra.mxu0 0.0
    %1470 = vmatprep.subr.mxu0 0.0
    %1471 = vmatpush1.msra.mxu0 0.0
    %1472 = vmatprep.subr.mxu0 0.0
    %1473 = vmatpush1.msra.mxu0 0.0
    %1474 = vmatprep.subr.mxu0 0.0
    %1475 = vmatpush1.msra.mxu0 0.0
    %1476 = vmatprep.mubr.f32.mxu0 0.0
    %1477 = vmatmul.mubr.f32.gmra.mrb[0].mxu0 %v1395
    %v1478 = vpop.f32.mrb[0].mxu0
    %v1479 = vadd.f32 0.0, %v1478
    %v1480 = vpop.f32.mrb[0].mxu0
    %1481 = vdwg.mxu0
    %v1482 = vadd.f32 %v1392, %v1479
    %v1483 = vld [vmem:[#allocation2 + $0x18] sm:$0xff]
    %v1484 = vld [vmem:[%s687] sm:$0xff]
    %v1485 = vld [vmem:[%s687 + $0x8] sm:$0xff]
    %v1486 = vld [vmem:[%s687 + $0x10] sm:$0xff]
    %v1487 = vld [vmem:[%s687 + $0x18] sm:$0xff]
    %v1488 = vld [vmem:[%s687 + $0x20] sm:$0xff]
    %v1489 = vld [vmem:[%s687 + $0x28] sm:$0xff]
    %v1490 = vld [vmem:[%s687 + $0x30] sm:$0xff]
    %v1491 = vld [vmem:[%s687 + $0x38] sm:$0xff]
    %v1492 = vld [vmem:[%s687 + $0x40] sm:$0xff]
    %v1493 = vld [vmem:[%s687 + $0x48] sm:$0xff]
    %v1494 = vld [vmem:[%s687 + $0x50] sm:$0xff]
    %v1495 = vld [vmem:[%s687 + $0x58] sm:$0xff]
    %v1496 = vld [vmem:[%s687 + $0x60] sm:$0xff]
    %v1497 = vld [vmem:[%s687 + $0x68] sm:$0xff]
    %v1498 = vld [vmem:[%s687 + $0x70] sm:$0xff]
    %v1499 = vld [vmem:[%s687 + $0x78] sm:$0xff]
    %1500 = vmatprep.subr.mxu0 0.0
    %1501 = vmatpush1.msra.mxu0 %v1484
    %1502 = vmatprep.subr.mxu0 0.0
    %1503 = vmatpush1.msra.mxu0 %v1485
    %1504 = vmatprep.subr.mxu0 0.0
    %1505 = vmatpush1.msra.mxu0 %v1486
    %1506 = vmatprep.subr.mxu0 0.0
    %1507 = vmatpush1.msra.mxu0 %v1487
    %1508 = vmatprep.subr.mxu0 0.0
    %1509 = vmatpush1.msra.mxu0 %v1488
    %1510 = vmatprep.subr.mxu0 0.0
    %1511 = vmatpush1.msra.mxu0 %v1489
    %1512 = vmatprep.subr.mxu0 0.0
    %1513 = vmatpush1.msra.mxu0 %v1490
    %1514 = vmatprep.subr.mxu0 0.0
    %1515 = vmatpush1.msra.mxu0 %v1491
    %1516 = vmatprep.subr.mxu0 0.0
    %1517 = vmatpush1.msra.mxu0 %v1492
    %1518 = vmatprep.subr.mxu0 0.0
    %1519 = vmatpush1.msra.mxu0 %v1493
    %1520 = vmatprep.subr.mxu0 0.0
    %1521 = vmatpush1.msra.mxu0 %v1494
    %1522 = vmatprep.subr.mxu0 0.0
    %1523 = vmatpush1.msra.mxu0 %v1495
    %1524 = vmatprep.subr.mxu0 0.0
    %1525 = vmatpush1.msra.mxu0 %v1496
    %1526 = vmatprep.subr.mxu0 0.0
    %1527 = vmatpush1.msra.mxu0 %v1497
    %1528 = vmatprep.subr.mxu0 0.0
    %1529 = vmatpush1.msra.mxu0 %v1498
    %1530 = vmatprep.subr.mxu0 0.0
    %1531 = vmatpush1.msra.mxu0 %v1499
    %1532 = vmatprep.subr.mxu0 0.0
    %1533 = vmatpush1.msra.mxu0 0.0
    %1534 = vmatprep.subr.mxu0 0.0
    %1535 = vmatpush1.msra.mxu0 0.0
    %1536 = vmatprep.subr.mxu0 0.0
    %1537 = vmatpush1.msra.mxu0 0.0
    %1538 = vmatprep.subr.mxu0 0.0
    %1539 = vmatpush1.msra.mxu0 0.0
    %1540 = vmatprep.subr.mxu0 0.0
    %1541 = vmatpush1.msra.mxu0 0.0
    %1542 = vmatprep.subr.mxu0 0.0
    %1543 = vmatpush1.msra.mxu0 0.0
    %1544 = vmatprep.subr.mxu0 0.0
    %1545 = vmatpush1.msra.mxu0 0.0
    %1546 = vmatprep.subr.mxu0 0.0
    %1547 = vmatpush1.msra.mxu0 0.0
    %1548 = vmatprep.subr.mxu0 0.0
    %1549 = vmatpush1.msra.mxu0 0.0
    %1550 = vmatprep.subr.mxu0 0.0
    %1551 = vmatpush1.msra.mxu0 0.0
    %1552 = vmatprep.subr.mxu0 0.0
    %1553 = vmatpush1.msra.mxu0 0.0
    %1554 = vmatprep.subr.mxu0 0.0
    %1555 = vmatpush1.msra.mxu0 0.0
    %1556 = vmatprep.subr.mxu0 0.0
    %1557 = vmatpush1.msra.mxu0 0.0
    %1558 = vmatprep.subr.mxu0 0.0
    %1559 = vmatpush1.msra.mxu0 0.0
    %1560 = vmatprep.subr.mxu0 0.0
    %1561 = vmatpush1.msra.mxu0 0.0
    %1562 = vmatprep.subr.mxu0 0.0
    %1563 = vmatpush1.msra.mxu0 0.0
    %1564 = vmatprep.mubr.f32.mxu0 0.0
    %1565 = vmatmul.mubr.f32.gmra.mrb[0].mxu0 %v1483
    %v1566 = vpop.f32.mrb[0].mxu0
    %v1567 = vadd.f32 0.0, %v1566
    %v1568 = vpop.f32.mrb[0].mxu0
    %1569 = vdwg.mxu0
    %v1570 = vadd.f32 %v1482, %v1567
    %v1571 = vld [vmem:[#allocation2 + $0x1a] sm:$0xff]
    %v1572 = vld [vmem:[%s776] sm:$0xff]
    %v1573 = vld [vmem:[%s776 + $0x8] sm:$0xff]
    %v1574 = vld [vmem:[%s776 + $0x10] sm:$0xff]
    %v1575 = vld [vmem:[%s776 + $0x18] sm:$0xff]
    %v1576 = vld [vmem:[%s776 + $0x20] sm:$0xff]
    %v1577 = vld [vmem:[%s776 + $0x28] sm:$0xff]
    %v1578 = vld [vmem:[%s776 + $0x30] sm:$0xff]
    %v1579 = vld [vmem:[%s776 + $0x38] sm:$0xff]
    %v1580 = vld [vmem:[%s776 + $0x40] sm:$0xff]
    %v1581 = vld [vmem:[%s776 + $0x48] sm:$0xff]
    %v1582 = vld [vmem:[%s776 + $0x50] sm:$0xff]
    %v1583 = vld [vmem:[%s776 + $0x58] sm:$0xff]
    %v1584 = vld [vmem:[%s776 + $0x60] sm:$0xff]
    %v1585 = vld [vmem:[%s776 + $0x68] sm:$0xff]
    %v1586 = vld [vmem:[%s776 + $0x70] sm:$0xff]
    %v1587 = vld [vmem:[%s776 + $0x78] sm:$0xff]
    %1588 = vmatprep.subr.mxu0 0.0
    %1589 = vmatpush1.msra.mxu0 %v1572
    %1590 = vmatprep.subr.mxu0 0.0
    %1591 = vmatpush1.msra.mxu0 %v1573
    %1592 = vmatprep.subr.mxu0 0.0
    %1593 = vmatpush1.msra.mxu0 %v1574
    %1594 = vmatprep.subr.mxu0 0.0
    %1595 = vmatpush1.msra.mxu0 %v1575
    %1596 = vmatprep.subr.mxu0 0.0
    %1597 = vmatpush1.msra.mxu0 %v1576
    %1598 = vmatprep.subr.mxu0 0.0
    %1599 = vmatpush1.msra.mxu0 %v1577
    %1600 = vmatprep.subr.mxu0 0.0
    %1601 = vmatpush1.msra.mxu0 %v1578
    %1602 = vmatprep.subr.mxu0 0.0
    %1603 = vmatpush1.msra.mxu0 %v1579
    %1604 = vmatprep.subr.mxu0 0.0
    %1605 = vmatpush1.msra.mxu0 %v1580
    %1606 = vmatprep.subr.mxu0 0.0
    %1607 = vmatpush1.msra.mxu0 %v1581
    %1608 = vmatprep.subr.mxu0 0.0
    %1609 = vmatpush1.msra.mxu0 %v1582
    %1610 = vmatprep.subr.mxu0 0.0
    %1611 = vmatpush1.msra.mxu0 %v1583
    %1612 = vmatprep.subr.mxu0 0.0
    %1613 = vmatpush1.msra.mxu0 %v1584
    %1614 = vmatprep.subr.mxu0 0.0
    %1615 = vmatpush1.msra.mxu0 %v1585
    %1616 = vmatprep.subr.mxu0 0.0
    %1617 = vmatpush1.msra.mxu0 %v1586
    %1618 = vmatprep.subr.mxu0 0.0
    %1619 = vmatpush1.msra.mxu0 %v1587
    %1620 = vmatprep.subr.mxu0 0.0
    %1621 = vmatpush1.msra.mxu0 0.0
    %1622 = vmatprep.subr.mxu0 0.0
    %1623 = vmatpush1.msra.mxu0 0.0
    %1624 = vmatprep.subr.mxu0 0.0
    %1625 = vmatpush1.msra.mxu0 0.0
    %1626 = vmatprep.subr.mxu0 0.0
    %1627 = vmatpush1.msra.mxu0 0.0
    %1628 = vmatprep.subr.mxu0 0.0
    %1629 = vmatpush1.msra.mxu0 0.0
    %1630 = vmatprep.subr.mxu0 0.0
    %1631 = vmatpush1.msra.mxu0 0.0
    %1632 = vmatprep.subr.mxu0 0.0
    %1633 = vmatpush1.msra.mxu0 0.0
    %1634 = vmatprep.subr.mxu0 0.0
    %1635 = vmatpush1.msra.mxu0 0.0
    %1636 = vmatprep.subr.mxu0 0.0
    %1637 = vmatpush1.msra.mxu0 0.0
    %1638 = vmatprep.subr.mxu0 0.0
    %1639 = vmatpush1.msra.mxu0 0.0
    %1640 = vmatprep.subr.mxu0 0.0
    %1641 = vmatpush1.msra.mxu0 0.0
    %1642 = vmatprep.subr.mxu0 0.0
    %1643 = vmatpush1.msra.mxu0 0.0
    %1644 = vmatprep.subr.mxu0 0.0
    %1645 = vmatpush1.msra.mxu0 0.0
    %1646 = vmatprep.subr.mxu0 0.0
    %1647 = vmatpush1.msra.mxu0 0.0
    %1648 = vmatprep.subr.mxu0 0.0
    %1649 = vmatpush1.msra.mxu0 0.0
    %1650 = vmatprep.subr.mxu0 0.0
    %1651 = vmatpush1.msra.mxu0 0.0
    %1652 = vmatprep.mubr.f32.mxu0 0.0
    %1653 = vmatmul.mubr.f32.gmra.mrb[0].mxu0 %v1571
    %v1654 = vpop.f32.mrb[0].mxu0
    %v1655 = vadd.f32 0.0, %v1654
    %v1656 = vpop.f32.mrb[0].mxu0
    %1657 = vdwg.mxu0
    %v1658 = vadd.f32 %v1570, %v1655
    %v1659 = vld [vmem:[#allocation2 + $0x1c] sm:$0xff]
    %v1660 = vld [vmem:[%s865] sm:$0xff]
    %v1661 = vld [vmem:[%s865 + $0x8] sm:$0xff]
    %v1662 = vld [vmem:[%s865 + $0x10] sm:$0xff]
    %v1663 = vld [vmem:[%s865 + $0x18] sm:$0xff]
    %v1664 = vld [vmem:[%s865 + $0x20] sm:$0xff]
    %v1665 = vld [vmem:[%s865 + $0x28] sm:$0xff]
    %v1666 = vld [vmem:[%s865 + $0x30] sm:$0xff]
    %v1667 = vld [vmem:[%s865 + $0x38] sm:$0xff]
    %v1668 = vld [vmem:[%s865 + $0x40] sm:$0xff]
    %v1669 = vld [vmem:[%s865 + $0x48] sm:$0xff]
    %v1670 = vld [vmem:[%s865 + $0x50] sm:$0xff]
    %v1671 = vld [vmem:[%s865 + $0x58] sm:$0xff]
    %v1672 = vld [vmem:[%s865 + $0x60] sm:$0xff]
    %v1673 = vld [vmem:[%s865 + $0x68] sm:$0xff]
    %v1674 = vld [vmem:[%s865 + $0x70] sm:$0xff]
    %v1675 = vld [vmem:[%s865 + $0x78] sm:$0xff]
    %1676 = vmatprep.subr.mxu0 0.0
    %1677 = vmatpush1.msra.mxu0 %v1660
    %1678 = vmatprep.subr.mxu0 0.0
    %1679 = vmatpush1.msra.mxu0 %v1661
    %1680 = vmatprep.subr.mxu0 0.0
    %1681 = vmatpush1.msra.mxu0 %v1662
    %1682 = vmatprep.subr.mxu0 0.0
    %1683 = vmatpush1.msra.mxu0 %v1663
    %1684 = vmatprep.subr.mxu0 0.0
    %1685 = vmatpush1.msra.mxu0 %v1664
    %1686 = vmatprep.subr.mxu0 0.0
    %1687 = vmatpush1.msra.mxu0 %v1665
    %1688 = vmatprep.subr.mxu0 0.0
    %1689 = vmatpush1.msra.mxu0 %v1666
    %1690 = vmatprep.subr.mxu0 0.0
    %1691 = vmatpush1.msra.mxu0 %v1667
    %1692 = vmatprep.subr.mxu0 0.0
    %1693 = vmatpush1.msra.mxu0 %v1668
    %1694 = vmatprep.subr.mxu0 0.0
    %1695 = vmatpush1.msra.mxu0 %v1669
    %1696 = vmatprep.subr.mxu0 0.0
    %1697 = vmatpush1.msra.mxu0 %v1670
    %1698 = vmatprep.subr.mxu0 0.0
    %1699 = vmatpush1.msra.mxu0 %v1671
    %1700 = vmatprep.subr.mxu0 0.0
    %1701 = vmatpush1.msra.mxu0 %v1672
    %1702 = vmatprep.subr.mxu0 0.0
    %1703 = vmatpush1.msra.mxu0 %v1673
    %1704 = vmatprep.subr.mxu0 0.0
    %1705 = vmatpush1.msra.mxu0 %v1674
    %1706 = vmatprep.subr.mxu0 0.0
    %1707 = vmatpush1.msra.mxu0 %v1675
    %1708 = vmatprep.subr.mxu0 0.0
    %1709 = vmatpush1.msra.mxu0 0.0
    %1710 = vmatprep.subr.mxu0 0.0
    %1711 = vmatpush1.msra.mxu0 0.0
    %1712 = vmatprep.subr.mxu0 0.0
    %1713 = vmatpush1.msra.mxu0 0.0
    %1714 = vmatprep.subr.mxu0 0.0
    %1715 = vmatpush1.msra.mxu0 0.0
    %1716 = vmatprep.subr.mxu0 0.0
    %1717 = vmatpush1.msra.mxu0 0.0
    %1718 = vmatprep.subr.mxu0 0.0
    %1719 = vmatpush1.msra.mxu0 0.0
    %1720 = vmatprep.subr.mxu0 0.0
    %1721 = vmatpush1.msra.mxu0 0.0
    %1722 = vmatprep.subr.mxu0 0.0
    %1723 = vmatpush1.msra.mxu0 0.0
    %1724 = vmatprep.subr.mxu0 0.0
    %1725 = vmatpush1.msra.mxu0 0.0
    %1726 = vmatprep.subr.mxu0 0.0
    %1727 = vmatpush1.msra.mxu0 0.0
    %1728 = vmatprep.subr.mxu0 0.0
    %1729 = vmatpush1.msra.mxu0 0.0
    %1730 = vmatprep.subr.mxu0 0.0
    %1731 = vmatpush1.msra.mxu0 0.0
    %1732 = vmatprep.subr.mxu0 0.0
    %1733 = vmatpush1.msra.mxu0 0.0
    %1734 = vmatprep.subr.mxu0 0.0
    %1735 = vmatpush1.msra.mxu0 0.0
    %1736 = vmatprep.subr.mxu0 0.0
    %1737 = vmatpush1.msra.mxu0 0.0
    %1738 = vmatprep.subr.mxu0 0.0
    %1739 = vmatpush1.msra.mxu0 0.0
    %1740 = vmatprep.mubr.f32.mxu0 0.0
    %1741 = vmatmul.mubr.f32.gmra.mrb[0].mxu0 %v1659
    %v1742 = vpop.f32.mrb[0].mxu0
    %v1743 = vadd.f32 0.0, %v1742
    %v1744 = vpop.f32.mrb[0].mxu0
    %1745 = vdwg.mxu0
    %v1746 = vadd.f32 %v1658, %v1743
    %v1747 = vld [vmem:[#allocation2 + $0x24] sm:$0xff]
    %v1748 = vld [vmem:[%s954] sm:$0xff]
    %v1749 = vld [vmem:[%s954 + $0x8] sm:$0xff]
    %v1750 = vld [vmem:[%s954 + $0x10] sm:$0xff]
    %v1751 = vld [vmem:[%s954 + $0x18] sm:$0xff]
    %v1752 = vld [vmem:[%s954 + $0x20] sm:$0xff]
    %v1753 = vld [vmem:[%s954 + $0x28] sm:$0xff]
    %v1754 = vld [vmem:[%s954 + $0x30] sm:$0xff]
    %v1755 = vld [vmem:[%s954 + $0x38] sm:$0xff]
    %v1756 = vld [vmem:[%s954 + $0x40] sm:$0xff]
    %v1757 = vld [vmem:[%s954 + $0x48] sm:$0xff]
    %v1758 = vld [vmem:[%s954 + $0x50] sm:$0xff]
    %v1759 = vld [vmem:[%s954 + $0x58] sm:$0xff]
    %v1760 = vld [vmem:[%s954 + $0x60] sm:$0xff]
    %v1761 = vld [vmem:[%s954 + $0x68] sm:$0xff]
    %v1762 = vld [vmem:[%s954 + $0x70] sm:$0xff]
    %v1763 = vld [vmem:[%s954 + $0x78] sm:$0xff]
    %1764 = vmatprep.subr.mxu0 0.0
    %1765 = vmatpush1.msra.mxu0 %v1748
    %1766 = vmatprep.subr.mxu0 0.0
    %1767 = vmatpush1.msra.mxu0 %v1749
    %1768 = vmatprep.subr.mxu0 0.0
    %1769 = vmatpush1.msra.mxu0 %v1750
    %1770 = vmatprep.subr.mxu0 0.0
    %1771 = vmatpush1.msra.mxu0 %v1751
    %1772 = vmatprep.subr.mxu0 0.0
    %1773 = vmatpush1.msra.mxu0 %v1752
    %1774 = vmatprep.subr.mxu0 0.0
    %1775 = vmatpush1.msra.mxu0 %v1753
    %1776 = vmatprep.subr.mxu0 0.0
    %1777 = vmatpush1.msra.mxu0 %v1754
    %1778 = vmatprep.subr.mxu0 0.0
    %1779 = vmatpush1.msra.mxu0 %v1755
    %1780 = vmatprep.subr.mxu0 0.0
    %1781 = vmatpush1.msra.mxu0 %v1756
    %1782 = vmatprep.subr.mxu0 0.0
    %1783 = vmatpush1.msra.mxu0 %v1757
    %1784 = vmatprep.subr.mxu0 0.0
    %1785 = vmatpush1.msra.mxu0 %v1758
    %1786 = vmatprep.subr.mxu0 0.0
    %1787 = vmatpush1.msra.mxu0 %v1759
    %1788 = vmatprep.subr.mxu0 0.0
    %1789 = vmatpush1.msra.mxu0 %v1760
    %1790 = vmatprep.subr.mxu0 0.0
    %1791 = vmatpush1.msra.mxu0 %v1761
    %1792 = vmatprep.subr.mxu0 0.0
    %1793 = vmatpush1.msra.mxu0 %v1762
    %1794 = vmatprep.subr.mxu0 0.0
    %1795 = vmatpush1.msra.mxu0 %v1763
    %1796 = vmatprep.subr.mxu0 0.0
    %1797 = vmatpush1.msra.mxu0 0.0
    %1798 = vmatprep.subr.mxu0 0.0
    %1799 = vmatpush1.msra.mxu0 0.0
    %1800 = vmatprep.subr.mxu0 0.0
    %1801 = vmatpush1.msra.mxu0 0.0
    %1802 = vmatprep.subr.mxu0 0.0
    %1803 = vmatpush1.msra.mxu0 0.0
    %1804 = vmatprep.subr.mxu0 0.0
    %1805 = vmatpush1.msra.mxu0 0.0
    %1806 = vmatprep.subr.mxu0 0.0
    %1807 = vmatpush1.msra.mxu0 0.0
    %1808 = vmatprep.subr.mxu0 0.0
    %1809 = vmatpush1.msra.mxu0 0.0
    %1810 = vmatprep.subr.mxu0 0.0
    %1811 = vmatpush1.msra.mxu0 0.0
    %1812 = vmatprep.subr.mxu0 0.0
    %1813 = vmatpush1.msra.mxu0 0.0
    %1814 = vmatprep.subr.mxu0 0.0
    %1815 = vmatpush1.msra.mxu0 0.0
    %1816 = vmatprep.subr.mxu0 0.0
    %1817 = vmatpush1.msra.mxu0 0.0
    %1818 = vmatprep.subr.mxu0 0.0
    %1819 = vmatpush1.msra.mxu0 0.0
    %1820 = vmatprep.subr.mxu0 0.0
    %1821 = vmatpush1.msra.mxu0 0.0
    %1822 = vmatprep.subr.mxu0 0.0
    %1823 = vmatpush1.msra.mxu0 0.0
    %1824 = vmatprep.subr.mxu0 0.0
    %1825 = vmatpush1.msra.mxu0 0.0
    %1826 = vmatprep.subr.mxu0 0.0
    %1827 = vmatpush1.msra.mxu0 0.0
    %1828 = vmatprep.mubr.f32.mxu0 0.0
    %1829 = vmatmul.mubr.f32.gmra.mrb[0].mxu0 %v1747
    %v1830 = vpop.f32.mrb[0].mxu0
    %v1831 = vadd.f32 0.0, %v1830
    %v1832 = vpop.f32.mrb[0].mxu0
    %1833 = vdwg.mxu0
    %v1834 = vadd.f32 %v1746, %v1831
    %v1835 = vld [vmem:[#allocation2 + $0x26] sm:$0xff]
    %v1836 = vld [vmem:[%s1043] sm:$0xff]
    %v1837 = vld [vmem:[%s1043 + $0x8] sm:$0xff]
    %v1838 = vld [vmem:[%s1043 + $0x10] sm:$0xff]
    %v1839 = vld [vmem:[%s1043 + $0x18] sm:$0xff]
    %v1840 = vld [vmem:[%s1043 + $0x20] sm:$0xff]
    %v1841 = vld [vmem:[%s1043 + $0x28] sm:$0xff]
    %v1842 = vld [vmem:[%s1043 + $0x30] sm:$0xff]
    %v1843 = vld [vmem:[%s1043 + $0x38] sm:$0xff]
    %v1844 = vld [vmem:[%s1043 + $0x40] sm:$0xff]
    %v1845 = vld [vmem:[%s1043 + $0x48] sm:$0xff]
    %v1846 = vld [vmem:[%s1043 + $0x50] sm:$0xff]
    %v1847 = vld [vmem:[%s1043 + $0x58] sm:$0xff]
    %v1848 = vld [vmem:[%s1043 + $0x60] sm:$0xff]
    %v1849 = vld [vmem:[%s1043 + $0x68] sm:$0xff]
    %v1850 = vld [vmem:[%s1043 + $0x70] sm:$0xff]
    %v1851 = vld [vmem:[%s1043 + $0x78] sm:$0xff]
    %1852 = vmatprep.subr.mxu0 0.0
    %1853 = vmatpush1.msra.mxu0 %v1836
    %1854 = vmatprep.subr.mxu0 0.0
    %1855 = vmatpush1.msra.mxu0 %v1837
    %1856 = vmatprep.subr.mxu0 0.0
    %1857 = vmatpush1.msra.mxu0 %v1838
    %1858 = vmatprep.subr.mxu0 0.0
    %1859 = vmatpush1.msra.mxu0 %v1839
    %1860 = vmatprep.subr.mxu0 0.0
    %1861 = vmatpush1.msra.mxu0 %v1840
    %1862 = vmatprep.subr.mxu0 0.0
    %1863 = vmatpush1.msra.mxu0 %v1841
    %1864 = vmatprep.subr.mxu0 0.0
    %1865 = vmatpush1.msra.mxu0 %v1842
    %1866 = vmatprep.subr.mxu0 0.0
    %1867 = vmatpush1.msra.mxu0 %v1843
    %1868 = vmatprep.subr.mxu0 0.0
    %1869 = vmatpush1.msra.mxu0 %v1844
    %1870 = vmatprep.subr.mxu0 0.0
    %1871 = vmatpush1.msra.mxu0 %v1845
    %1872 = vmatprep.subr.mxu0 0.0
    %1873 = vmatpush1.msra.mxu0 %v1846
    %1874 = vmatprep.subr.mxu0 0.0
    %1875 = vmatpush1.msra.mxu0 %v1847
    %1876 = vmatprep.subr.mxu0 0.0
    %1877 = vmatpush1.msra.mxu0 %v1848
    %1878 = vmatprep.subr.mxu0 0.0
    %1879 = vmatpush1.msra.mxu0 %v1849
    %1880 = vmatprep.subr.mxu0 0.0
    %1881 = vmatpush1.msra.mxu0 %v1850
    %1882 = vmatprep.subr.mxu0 0.0
    %1883 = vmatpush1.msra.mxu0 %v1851
    %1884 = vmatprep.subr.mxu0 0.0
    %1885 = vmatpush1.msra.mxu0 0.0
    %1886 = vmatprep.subr.mxu0 0.0
    %1887 = vmatpush1.msra.mxu0 0.0
    %1888 = vmatprep.subr.mxu0 0.0
    %1889 = vmatpush1.msra.mxu0 0.0
    %1890 = vmatprep.subr.mxu0 0.0
    %1891 = vmatpush1.msra.mxu0 0.0
    %1892 = vmatprep.subr.mxu0 0.0
    %1893 = vmatpush1.msra.mxu0 0.0
    %1894 = vmatprep.subr.mxu0 0.0
    %1895 = vmatpush1.msra.mxu0 0.0
    %1896 = vmatprep.subr.mxu0 0.0
    %1897 = vmatpush1.msra.mxu0 0.0
    %1898 = vmatprep.subr.mxu0 0.0
    %1899 = vmatpush1.msra.mxu0 0.0
    %1900 = vmatprep.subr.mxu0 0.0
    %1901 = vmatpush1.msra.mxu0 0.0
    %1902 = vmatprep.subr.mxu0 0.0
    %1903 = vmatpush1.msra.mxu0 0.0
    %1904 = vmatprep.subr.mxu0 0.0
    %1905 = vmatpush1.msra.mxu0 0.0
    %1906 = vmatprep.subr.mxu0 0.0
    %1907 = vmatpush1.msra.mxu0 0.0
    %1908 = vmatprep.subr.mxu0 0.0
    %1909 = vmatpush1.msra.mxu0 0.0
    %1910 = vmatprep.subr.mxu0 0.0
    %1911 = vmatpush1.msra.mxu0 0.0
    %1912 = vmatprep.subr.mxu0 0.0
    %1913 = vmatpush1.msra.mxu0 0.0
    %1914 = vmatprep.subr.mxu0 0.0
    %1915 = vmatpush1.msra.mxu0 0.0
    %1916 = vmatprep.mubr.f32.mxu0 0.0
    %1917 = vmatmul.mubr.f32.gmra.mrb[0].mxu0 %v1835
    %v1918 = vpop.f32.mrb[0].mxu0
    %v1919 = vadd.f32 0.0, %v1918
    %v1920 = vpop.f32.mrb[0].mxu0
    %1921 = vdwg.mxu0
    %v1922 = vadd.f32 %v1834, %v1919
    %v1923 = vld [vmem:[#allocation2 + $0x28] sm:$0xff]
    %v1924 = vld [vmem:[%s1132] sm:$0xff]
    %v1925 = vld [vmem:[%s1132 + $0x8] sm:$0xff]
    %v1926 = vld [vmem:[%s1132 + $0x10] sm:$0xff]
    %v1927 = vld [vmem:[%s1132 + $0x18] sm:$0xff]
    %v1928 = vld [vmem:[%s1132 + $0x20] sm:$0xff]
    %v1929 = vld [vmem:[%s1132 + $0x28] sm:$0xff]
    %v1930 = vld [vmem:[%s1132 + $0x30] sm:$0xff]
    %v1931 = vld [vmem:[%s1132 + $0x38] sm:$0xff]
    %v1932 = vld [vmem:[%s1132 + $0x40] sm:$0xff]
    %v1933 = vld [vmem:[%s1132 + $0x48] sm:$0xff]
    %v1934 = vld [vmem:[%s1132 + $0x50] sm:$0xff]
    %v1935 = vld [vmem:[%s1132 + $0x58] sm:$0xff]
    %v1936 = vld [vmem:[%s1132 + $0x60] sm:$0xff]
    %v1937 = vld [vmem:[%s1132 + $0x68] sm:$0xff]
    %v1938 = vld [vmem:[%s1132 + $0x70] sm:$0xff]
    %v1939 = vld [vmem:[%s1132 + $0x78] sm:$0xff]
    %1940 = vmatprep.subr.mxu0 0.0
    %1941 = vmatpush1.msra.mxu0 %v1924
    %1942 = vmatprep.subr.mxu0 0.0
    %1943 = vmatpush1.msra.mxu0 %v1925
    %1944 = vmatprep.subr.mxu0 0.0
    %1945 = vmatpush1.msra.mxu0 %v1926
    %1946 = vmatprep.subr.mxu0 0.0
    %1947 = vmatpush1.msra.mxu0 %v1927
    %1948 = vmatprep.subr.mxu0 0.0
    %1949 = vmatpush1.msra.mxu0 %v1928
    %1950 = vmatprep.subr.mxu0 0.0
    %1951 = vmatpush1.msra.mxu0 %v1929
    %1952 = vmatprep.subr.mxu0 0.0
    %1953 = vmatpush1.msra.mxu0 %v1930
    %1954 = vmatprep.subr.mxu0 0.0
    %1955 = vmatpush1.msra.mxu0 %v1931
    %1956 = vmatprep.subr.mxu0 0.0
    %1957 = vmatpush1.msra.mxu0 %v1932
    %1958 = vmatprep.subr.mxu0 0.0
    %1959 = vmatpush1.msra.mxu0 %v1933
    %1960 = vmatprep.subr.mxu0 0.0
    %1961 = vmatpush1.msra.mxu0 %v1934
    %1962 = vmatprep.subr.mxu0 0.0
    %1963 = vmatpush1.msra.mxu0 %v1935
    %1964 = vmatprep.subr.mxu0 0.0
    %1965 = vmatpush1.msra.mxu0 %v1936
    %1966 = vmatprep.subr.mxu0 0.0
    %1967 = vmatpush1.msra.mxu0 %v1937
    %1968 = vmatprep.subr.mxu0 0.0
    %1969 = vmatpush1.msra.mxu0 %v1938
    %1970 = vmatprep.subr.mxu0 0.0
    %1971 = vmatpush1.msra.mxu0 %v1939
    %1972 = vmatprep.subr.mxu0 0.0
    %1973 = vmatpush1.msra.mxu0 0.0
    %1974 = vmatprep.subr.mxu0 0.0
    %1975 = vmatpush1.msra.mxu0 0.0
    %1976 = vmatprep.subr.mxu0 0.0
    %1977 = vmatpush1.msra.mxu0 0.0
    %1978 = vmatprep.subr.mxu0 0.0
    %1979 = vmatpush1.msra.mxu0 0.0
    %1980 = vmatprep.subr.mxu0 0.0
    %1981 = vmatpush1.msra.mxu0 0.0
    %1982 = vmatprep.subr.mxu0 0.0
    %1983 = vmatpush1.msra.mxu0 0.0
    %1984 = vmatprep.subr.mxu0 0.0
    %1985 = vmatpush1.msra.mxu0 0.0
    %1986 = vmatprep.subr.mxu0 0.0
    %1987 = vmatpush1.msra.mxu0 0.0
    %1988 = vmatprep.subr.mxu0 0.0
    %1989 = vmatpush1.msra.mxu0 0.0
    %1990 = vmatprep.subr.mxu0 0.0
    %1991 = vmatpush1.msra.mxu0 0.0
    %1992 = vmatprep.subr.mxu0 0.0
    %1993 = vmatpush1.msra.mxu0 0.0
    %1994 = vmatprep.subr.mxu0 0.0
    %1995 = vmatpush1.msra.mxu0 0.0
    %1996 = vmatprep.subr.mxu0 0.0
    %1997 = vmatpush1.msra.mxu0 0.0
    %1998 = vmatprep.subr.mxu0 0.0
    %1999 = vmatpush1.msra.mxu0 0.0
    %2000 = vmatprep.subr.mxu0 0.0
    %2001 = vmatpush1.msra.mxu0 0.0
    %2002 = vmatprep.subr.mxu0 0.0
    %2003 = vmatpush1.msra.mxu0 0.0
    %2004 = vmatprep.mubr.f32.mxu0 0.0
    %2005 = vmatmul.mubr.f32.gmra.mrb[0].mxu0 %v1923
    %v2006 = vpop.f32.mrb[0].mxu0
    %v2007 = vadd.f32 0.0, %v2006
    %v2008 = vpop.f32.mrb[0].mxu0
    %2009 = vdwg.mxu0
    %v2010 = vadd.f32 %v1922, %v2007
    %2011 = vst [vmem:[#allocation3 + $0x8] sm:$0xff] %v2010
    %v2012 = vld [vmem:[#allocation2 + $0x18] sm:$0xff]
    %v2013 = vld [vmem:[%s4] sm:$0xff]
    %v2014 = vld [vmem:[%s4 + $0x8] sm:$0xff]
    %v2015 = vld [vmem:[%s4 + $0x10] sm:$0xff]
    %v2016 = vld [vmem:[%s4 + $0x18] sm:$0xff]
    %v2017 = vld [vmem:[%s4 + $0x20] sm:$0xff]
    %v2018 = vld [vmem:[%s4 + $0x28] sm:$0xff]
    %v2019 = vld [vmem:[%s4 + $0x30] sm:$0xff]
    %v2020 = vld [vmem:[%s4 + $0x38] sm:$0xff]
    %v2021 = vld [vmem:[%s4 + $0x40] sm:$0xff]
    %v2022 = vld [vmem:[%s4 + $0x48] sm:$0xff]
    %v2023 = vld [vmem:[%s4 + $0x50] sm:$0xff]
    %v2024 = vld [vmem:[%s4 + $0x58] sm:$0xff]
    %v2025 = vld [vmem:[%s4 + $0x60] sm:$0xff]
    %v2026 = vld [vmem:[%s4 + $0x68] sm:$0xff]
    %v2027 = vld [vmem:[%s4 + $0x70] sm:$0xff]
    %v2028 = vld [vmem:[%s4 + $0x78] sm:$0xff]
    %v2029 = vld [vmem:[#allocation2 + $0x1a] sm:$0xff]
    %v2030 = vld [vmem:[%s440] sm:$0xff]
    %v2031 = vld [vmem:[%s440 + $0x8] sm:$0xff]
    %v2032 = vld [vmem:[%s440 + $0x10] sm:$0xff]
    %v2033 = vld [vmem:[%s440 + $0x18] sm:$0xff]
    %v2034 = vld [vmem:[%s440 + $0x20] sm:$0xff]
    %v2035 = vld [vmem:[%s440 + $0x28] sm:$0xff]
    %v2036 = vld [vmem:[%s440 + $0x30] sm:$0xff]
    %v2037 = vld [vmem:[%s440 + $0x38] sm:$0xff]
    %v2038 = vld [vmem:[%s440 + $0x40] sm:$0xff]
    %v2039 = vld [vmem:[%s440 + $0x48] sm:$0xff]
    %v2040 = vld [vmem:[%s440 + $0x50] sm:$0xff]
    %v2041 = vld [vmem:[%s440 + $0x58] sm:$0xff]
    %v2042 = vld [vmem:[%s440 + $0x60] sm:$0xff]
    %v2043 = vld [vmem:[%s440 + $0x68] sm:$0xff]
    %v2044 = vld [vmem:[%s440 + $0x70] sm:$0xff]
    %v2045 = vld [vmem:[%s440 + $0x78] sm:$0xff]
    %2046 = vmatprep.subr.mxu0 0.0
    %2047 = vmatpush1.msra.mxu0 %v2030
    %2048 = vmatprep.subr.mxu0 0.0
    %2049 = vmatpush1.msra.mxu0 %v2031
    %2050 = vmatprep.subr.mxu0 0.0
    %2051 = vmatpush1.msra.mxu0 %v2032
    %2052 = vmatprep.subr.mxu0 0.0
    %2053 = vmatpush1.msra.mxu0 %v2033
    %2054 = vmatprep.subr.mxu0 0.0
    %2055 = vmatpush1.msra.mxu0 %v2034
    %2056 = vmatprep.subr.mxu0 0.0
    %2057 = vmatpush1.msra.mxu0 %v2035
    %2058 = vmatprep.subr.mxu0 0.0
    %2059 = vmatpush1.msra.mxu0 %v2036
    %2060 = vmatprep.subr.mxu0 0.0
    %2061 = vmatpush1.msra.mxu0 %v2037
    %2062 = vmatprep.subr.mxu0 0.0
    %2063 = vmatpush1.msra.mxu0 %v2038
    %2064 = vmatprep.subr.mxu0 0.0
    %2065 = vmatpush1.msra.mxu0 %v2039
    %2066 = vmatprep.subr.mxu0 0.0
    %2067 = vmatpush1.msra.mxu0 %v2040
    %2068 = vmatprep.subr.mxu0 0.0
    %2069 = vmatpush1.msra.mxu0 %v2041
    %2070 = vmatprep.subr.mxu0 0.0
    %2071 = vmatpush1.msra.mxu0 %v2042
    %2072 = vmatprep.subr.mxu0 0.0
    %2073 = vmatpush1.msra.mxu0 %v2043
    %2074 = vmatprep.subr.mxu0 0.0
    %2075 = vmatpush1.msra.mxu0 %v2044
    %2076 = vmatprep.subr.mxu0 0.0
    %2077 = vmatpush1.msra.mxu0 %v2045
    %2078 = vmatprep.subr.mxu0 0.0
    %2079 = vmatpush1.msra.mxu0 0.0
    %2080 = vmatprep.subr.mxu0 0.0
    %2081 = vmatpush1.msra.mxu0 0.0
    %2082 = vmatprep.subr.mxu0 0.0
    %2083 = vmatpush1.msra.mxu0 0.0
    %2084 = vmatprep.subr.mxu0 0.0
    %2085 = vmatpush1.msra.mxu0 0.0
    %2086 = vmatprep.subr.mxu0 0.0
    %2087 = vmatpush1.msra.mxu0 0.0
    %2088 = vmatprep.subr.mxu0 0.0
    %2089 = vmatpush1.msra.mxu0 0.0
    %2090 = vmatprep.subr.mxu0 0.0
    %2091 = vmatpush1.msra.mxu0 0.0
    %2092 = vmatprep.subr.mxu0 0.0
    %2093 = vmatpush1.msra.mxu0 0.0
    %2094 = vmatprep.subr.mxu0 0.0
    %2095 = vmatpush1.msra.mxu0 0.0
    %2096 = vmatprep.subr.mxu0 0.0
    %2097 = vmatpush1.msra.mxu0 0.0
    %2098 = vmatprep.subr.mxu0 0.0
    %2099 = vmatpush1.msra.mxu0 0.0
    %2100 = vmatprep.subr.mxu0 0.0
    %2101 = vmatpush1.msra.mxu0 0.0
    %2102 = vmatprep.subr.mxu0 0.0
    %2103 = vmatpush1.msra.mxu0 0.0
    %2104 = vmatprep.subr.mxu0 0.0
    %2105 = vmatpush1.msra.mxu0 0.0
    %2106 = vmatprep.subr.mxu0 0.0
    %2107 = vmatpush1.msra.mxu0 0.0
    %2108 = vmatprep.subr.mxu0 0.0
    %2109 = vmatpush1.msra.mxu0 0.0
    %2110 = vmatprep.mubr.f32.mxu0 0.0
    %2111 = vmatmul.mubr.f32.gmra.mrb[0].mxu0 %v2029
    %v2112 = vpop.f32.mrb[0].mxu0
    %v2113 = vadd.f32 0.0, %v2112
    %v2114 = vpop.f32.mrb[0].mxu0
    %2115 = vdwg.mxu0
    %2116 = vmatprep.subr.mxu0 0.0
    %2117 = vmatpush1.msra.mxu0 %v2013
    %2118 = vmatprep.subr.mxu0 0.0
    %2119 = vmatpush1.msra.mxu0 %v2014
    %2120 = vmatprep.subr.mxu0 0.0
    %2121 = vmatpush1.msra.mxu0 %v2015
    %2122 = vmatprep.subr.mxu0 0.0
    %2123 = vmatpush1.msra.mxu0 %v2016
    %2124 = vmatprep.subr.mxu0 0.0
    %2125 = vmatpush1.msra.mxu0 %v2017
    %2126 = vmatprep.subr.mxu0 0.0
    %2127 = vmatpush1.msra.mxu0 %v2018
    %2128 = vmatprep.subr.mxu0 0.0
    %2129 = vmatpush1.msra.mxu0 %v2019
    %2130 = vmatprep.subr.mxu0 0.0
    %2131 = vmatpush1.msra.mxu0 %v2020
    %2132 = vmatprep.subr.mxu0 0.0
    %2133 = vmatpush1.msra.mxu0 %v2021
    %2134 = vmatprep.subr.mxu0 0.0
    %2135 = vmatpush1.msra.mxu0 %v2022
    %2136 = vmatprep.subr.mxu0 0.0
    %2137 = vmatpush1.msra.mxu0 %v2023
    %2138 = vmatprep.subr.mxu0 0.0
    %2139 = vmatpush1.msra.mxu0 %v2024
    %2140 = vmatprep.subr.mxu0 0.0
    %2141 = vmatpush1.msra.mxu0 %v2025
    %2142 = vmatprep.subr.mxu0 0.0
    %2143 = vmatpush1.msra.mxu0 %v2026
    %2144 = vmatprep.subr.mxu0 0.0
    %2145 = vmatpush1.msra.mxu0 %v2027
    %2146 = vmatprep.subr.mxu0 0.0
    %2147 = vmatpush1.msra.mxu0 %v2028
    %2148 = vmatprep.subr.mxu0 0.0
    %2149 = vmatpush1.msra.mxu0 0.0
    %2150 = vmatprep.subr.mxu0 0.0
    %2151 = vmatpush1.msra.mxu0 0.0
    %2152 = vmatprep.subr.mxu0 0.0
    %2153 = vmatpush1.msra.mxu0 0.0
    %2154 = vmatprep.subr.mxu0 0.0
    %2155 = vmatpush1.msra.mxu0 0.0
    %2156 = vmatprep.subr.mxu0 0.0
    %2157 = vmatpush1.msra.mxu0 0.0
    %2158 = vmatprep.subr.mxu0 0.0
    %2159 = vmatpush1.msra.mxu0 0.0
    %2160 = vmatprep.subr.mxu0 0.0
    %2161 = vmatpush1.msra.mxu0 0.0
    %2162 = vmatprep.subr.mxu0 0.0
    %2163 = vmatpush1.msra.mxu0 0.0
    %2164 = vmatprep.subr.mxu0 0.0
    %2165 = vmatpush1.msra.mxu0 0.0
    %2166 = vmatprep.subr.mxu0 0.0
    %2167 = vmatpush1.msra.mxu0 0.0
    %2168 = vmatprep.subr.mxu0 0.0
    %2169 = vmatpush1.msra.mxu0 0.0
    %2170 = vmatprep.subr.mxu0 0.0
    %2171 = vmatpush1.msra.mxu0 0.0
    %2172 = vmatprep.subr.mxu0 0.0
    %2173 = vmatpush1.msra.mxu0 0.0
    %2174 = vmatprep.subr.mxu0 0.0
    %2175 = vmatpush1.msra.mxu0 0.0
    %2176 = vmatprep.subr.mxu0 0.0
    %2177 = vmatpush1.msra.mxu0 0.0
    %2178 = vmatprep.subr.mxu0 0.0
    %2179 = vmatpush1.msra.mxu0 0.0
    %2180 = vmatprep.mubr.f32.mxu0 0.0
    %2181 = vmatmul.mubr.f32.gmra.mrb[0].mxu0 %v2012
    %v2182 = vpop.f32.mrb[0].mxu0
    %v2183 = vadd.f32 %v2113, %v2182
    %v2184 = vpop.f32.mrb[0].mxu0
    %2185 = vdwg.mxu0
    %v2186 = vld [vmem:[#allocation2 + $0x1c] sm:$0xff]
    %v2187 = vld [vmem:[%s598] sm:$0xff]
    %v2188 = vld [vmem:[%s598 + $0x8] sm:$0xff]
    %v2189 = vld [vmem:[%s598 + $0x10] sm:$0xff]
    %v2190 = vld [vmem:[%s598 + $0x18] sm:$0xff]
    %v2191 = vld [vmem:[%s598 + $0x20] sm:$0xff]
    %v2192 = vld [vmem:[%s598 + $0x28] sm:$0xff]
    %v2193 = vld [vmem:[%s598 + $0x30] sm:$0xff]
    %v2194 = vld [vmem:[%s598 + $0x38] sm:$0xff]
    %v2195 = vld [vmem:[%s598 + $0x40] sm:$0xff]
    %v2196 = vld [vmem:[%s598 + $0x48] sm:$0xff]
    %v2197 = vld [vmem:[%s598 + $0x50] sm:$0xff]
    %v2198 = vld [vmem:[%s598 + $0x58] sm:$0xff]
    %v2199 = vld [vmem:[%s598 + $0x60] sm:$0xff]
    %v2200 = vld [vmem:[%s598 + $0x68] sm:$0xff]
    %v2201 = vld [vmem:[%s598 + $0x70] sm:$0xff]
    %v2202 = vld [vmem:[%s598 + $0x78] sm:$0xff]
    %2203 = vmatprep.subr.mxu0 0.0
    %2204 = vmatpush1.msra.mxu0 %v2187
    %2205 = vmatprep.subr.mxu0 0.0
    %2206 = vmatpush1.msra.mxu0 %v2188
    %2207 = vmatprep.subr.mxu0 0.0
    %2208 = vmatpush1.msra.mxu0 %v2189
    %2209 = vmatprep.subr.mxu0 0.0
    %2210 = vmatpush1.msra.mxu0 %v2190
    %2211 = vmatprep.subr.mxu0 0.0
    %2212 = vmatpush1.msra.mxu0 %v2191
    %2213 = vmatprep.subr.mxu0 0.0
    %2214 = vmatpush1.msra.mxu0 %v2192
    %2215 = vmatprep.subr.mxu0 0.0
    %2216 = vmatpush1.msra.mxu0 %v2193
    %2217 = vmatprep.subr.mxu0 0.0
    %2218 = vmatpush1.msra.mxu0 %v2194
    %2219 = vmatprep.subr.mxu0 0.0
    %2220 = vmatpush1.msra.mxu0 %v2195
    %2221 = vmatprep.subr.mxu0 0.0
    %2222 = vmatpush1.msra.mxu0 %v2196
    %2223 = vmatprep.subr.mxu0 0.0
    %2224 = vmatpush1.msra.mxu0 %v2197
    %2225 = vmatprep.subr.mxu0 0.0
    %2226 = vmatpush1.msra.mxu0 %v2198
    %2227 = vmatprep.subr.mxu0 0.0
    %2228 = vmatpush1.msra.mxu0 %v2199
    %2229 = vmatprep.subr.mxu0 0.0
    %2230 = vmatpush1.msra.mxu0 %v2200
    %2231 = vmatprep.subr.mxu0 0.0
    %2232 = vmatpush1.msra.mxu0 %v2201
    %2233 = vmatprep.subr.mxu0 0.0
    %2234 = vmatpush1.msra.mxu0 %v2202
    %2235 = vmatprep.subr.mxu0 0.0
    %2236 = vmatpush1.msra.mxu0 0.0
    %2237 = vmatprep.subr.mxu0 0.0
    %2238 = vmatpush1.msra.mxu0 0.0
    %2239 = vmatprep.subr.mxu0 0.0
    %2240 = vmatpush1.msra.mxu0 0.0
    %2241 = vmatprep.subr.mxu0 0.0
    %2242 = vmatpush1.msra.mxu0 0.0
    %2243 = vmatprep.subr.mxu0 0.0
    %2244 = vmatpush1.msra.mxu0 0.0
    %2245 = vmatprep.subr.mxu0 0.0
    %2246 = vmatpush1.msra.mxu0 0.0
    %2247 = vmatprep.subr.mxu0 0.0
    %2248 = vmatpush1.msra.mxu0 0.0
    %2249 = vmatprep.subr.mxu0 0.0
    %2250 = vmatpush1.msra.mxu0 0.0
    %2251 = vmatprep.subr.mxu0 0.0
    %2252 = vmatpush1.msra.mxu0 0.0
    %2253 = vmatprep.subr.mxu0 0.0
    %2254 = vmatpush1.msra.mxu0 0.0
    %2255 = vmatprep.subr.mxu0 0.0
    %2256 = vmatpush1.msra.mxu0 0.0
    %2257 = vmatprep.subr.mxu0 0.0
    %2258 = vmatpush1.msra.mxu0 0.0
    %2259 = vmatprep.subr.mxu0 0.0
    %2260 = vmatpush1.msra.mxu0 0.0
    %2261 = vmatprep.subr.mxu0 0.0
    %2262 = vmatpush1.msra.mxu0 0.0
    %2263 = vmatprep.subr.mxu0 0.0
    %2264 = vmatpush1.msra.mxu0 0.0
    %2265 = vmatprep.subr.mxu0 0.0
    %2266 = vmatpush1.msra.mxu0 0.0
    %2267 = vmatprep.mubr.f32.mxu0 0.0
    %2268 = vmatmul.mubr.f32.gmra.mrb[0].mxu0 %v2186
    %v2269 = vpop.f32.mrb[0].mxu0
    %v2270 = vadd.f32 0.0, %v2269
    %v2271 = vpop.f32.mrb[0].mxu0
    %2272 = vdwg.mxu0
    %v2273 = vadd.f32 %v2183, %v2270
    %v2274 = vld [vmem:[#allocation2 + $0x24] sm:$0xff]
    %v2275 = vld [vmem:[%s687] sm:$0xff]
    %v2276 = vld [vmem:[%s687 + $0x8] sm:$0xff]
    %v2277 = vld [vmem:[%s687 + $0x10] sm:$0xff]
    %v2278 = vld [vmem:[%s687 + $0x18] sm:$0xff]
    %v2279 = vld [vmem:[%s687 + $0x20] sm:$0xff]
    %v2280 = vld [vmem:[%s687 + $0x28] sm:$0xff]
    %v2281 = vld [vmem:[%s687 + $0x30] sm:$0xff]
    %v2282 = vld [vmem:[%s687 + $0x38] sm:$0xff]
    %v2283 = vld [vmem:[%s687 + $0x40] sm:$0xff]
    %v2284 = vld [vmem:[%s687 + $0x48] sm:$0xff]
    %v2285 = vld [vmem:[%s687 + $0x50] sm:$0xff]
    %v2286 = vld [vmem:[%s687 + $0x58] sm:$0xff]
    %v2287 = vld [vmem:[%s687 + $0x60] sm:$0xff]
    %v2288 = vld [vmem:[%s687 + $0x68] sm:$0xff]
    %v2289 = vld [vmem:[%s687 + $0x70] sm:$0xff]
    %v2290 = vld [vmem:[%s687 + $0x78] sm:$0xff]
    %2291 = vmatprep.subr.mxu0 0.0
    %2292 = vmatpush1.msra.mxu0 %v2275
    %2293 = vmatprep.subr.mxu0 0.0
    %2294 = vmatpush1.msra.mxu0 %v2276
    %2295 = vmatprep.subr.mxu0 0.0
    %2296 = vmatpush1.msra.mxu0 %v2277
    %2297 = vmatprep.subr.mxu0 0.0
    %2298 = vmatpush1.msra.mxu0 %v2278
    %2299 = vmatprep.subr.mxu0 0.0
    %2300 = vmatpush1.msra.mxu0 %v2279
    %2301 = vmatprep.subr.mxu0 0.0
    %2302 = vmatpush1.msra.mxu0 %v2280
    %2303 = vmatprep.subr.mxu0 0.0
    %2304 = vmatpush1.msra.mxu0 %v2281
    %2305 = vmatprep.subr.mxu0 0.0
    %2306 = vmatpush1.msra.mxu0 %v2282
    %2307 = vmatprep.subr.mxu0 0.0
    %2308 = vmatpush1.msra.mxu0 %v2283
    %2309 = vmatprep.subr.mxu0 0.0
    %2310 = vmatpush1.msra.mxu0 %v2284
    %2311 = vmatprep.subr.mxu0 0.0
    %2312 = vmatpush1.msra.mxu0 %v2285
    %2313 = vmatprep.subr.mxu0 0.0
    %2314 = vmatpush1.msra.mxu0 %v2286
    %2315 = vmatprep.subr.mxu0 0.0
    %2316 = vmatpush1.msra.mxu0 %v2287
    %2317 = vmatprep.subr.mxu0 0.0
    %2318 = vmatpush1.msra.mxu0 %v2288
    %2319 = vmatprep.subr.mxu0 0.0
    %2320 = vmatpush1.msra.mxu0 %v2289
    %2321 = vmatprep.subr.mxu0 0.0
    %2322 = vmatpush1.msra.mxu0 %v2290
    %2323 = vmatprep.subr.mxu0 0.0
    %2324 = vmatpush1.msra.mxu0 0.0
    %2325 = vmatprep.subr.mxu0 0.0
    %2326 = vmatpush1.msra.mxu0 0.0
    %2327 = vmatprep.subr.mxu0 0.0
    %2328 = vmatpush1.msra.mxu0 0.0
    %2329 = vmatprep.subr.mxu0 0.0
    %2330 = vmatpush1.msra.mxu0 0.0
    %2331 = vmatprep.subr.mxu0 0.0
    %2332 = vmatpush1.msra.mxu0 0.0
    %2333 = vmatprep.subr.mxu0 0.0
    %2334 = vmatpush1.msra.mxu0 0.0
    %2335 = vmatprep.subr.mxu0 0.0
    %2336 = vmatpush1.msra.mxu0 0.0
    %2337 = vmatprep.subr.mxu0 0.0
    %2338 = vmatpush1.msra.mxu0 0.0
    %2339 = vmatprep.subr.mxu0 0.0
    %2340 = vmatpush1.msra.mxu0 0.0
    %2341 = vmatprep.subr.mxu0 0.0
    %2342 = vmatpush1.msra.mxu0 0.0
    %2343 = vmatprep.subr.mxu0 0.0
    %2344 = vmatpush1.msra.mxu0 0.0
    %2345 = vmatprep.subr.mxu0 0.0
    %2346 = vmatpush1.msra.mxu0 0.0
    %2347 = vmatprep.subr.mxu0 0.0
    %2348 = vmatpush1.msra.mxu0 0.0
    %2349 = vmatprep.subr.mxu0 0.0
    %2350 = vmatpush1.msra.mxu0 0.0
    %2351 = vmatprep.subr.mxu0 0.0
    %2352 = vmatpush1.msra.mxu0 0.0
    %2353 = vmatprep.subr.mxu0 0.0
    %2354 = vmatpush1.msra.mxu0 0.0
    %2355 = vmatprep.mubr.f32.mxu0 0.0
    %2356 = vmatmul.mubr.f32.gmra.mrb[0].mxu0 %v2274
    %v2357 = vpop.f32.mrb[0].mxu0
    %v2358 = vadd.f32 0.0, %v2357
    %v2359 = vpop.f32.mrb[0].mxu0
    %2360 = vdwg.mxu0
    %v2361 = vadd.f32 %v2273, %v2358
    %v2362 = vld [vmem:[#allocation2 + $0x26] sm:$0xff]
    %v2363 = vld [vmem:[%s776] sm:$0xff]
    %v2364 = vld [vmem:[%s776 + $0x8] sm:$0xff]
    %v2365 = vld [vmem:[%s776 + $0x10] sm:$0xff]
    %v2366 = vld [vmem:[%s776 + $0x18] sm:$0xff]
    %v2367 = vld [vmem:[%s776 + $0x20] sm:$0xff]
    %v2368 = vld [vmem:[%s776 + $0x28] sm:$0xff]
    %v2369 = vld [vmem:[%s776 + $0x30] sm:$0xff]
    %v2370 = vld [vmem:[%s776 + $0x38] sm:$0xff]
    %v2371 = vld [vmem:[%s776 + $0x40] sm:$0xff]
    %v2372 = vld [vmem:[%s776 + $0x48] sm:$0xff]
    %v2373 = vld [vmem:[%s776 + $0x50] sm:$0xff]
    %v2374 = vld [vmem:[%s776 + $0x58] sm:$0xff]
    %v2375 = vld [vmem:[%s776 + $0x60] sm:$0xff]
    %v2376 = vld [vmem:[%s776 + $0x68] sm:$0xff]
    %v2377 = vld [vmem:[%s776 + $0x70] sm:$0xff]
    %v2378 = vld [vmem:[%s776 + $0x78] sm:$0xff]
    %2379 = vmatprep.subr.mxu0 0.0
    %2380 = vmatpush1.msra.mxu0 %v2363
    %2381 = vmatprep.subr.mxu0 0.0
    %2382 = vmatpush1.msra.mxu0 %v2364
    %2383 = vmatprep.subr.mxu0 0.0
    %2384 = vmatpush1.msra.mxu0 %v2365
    %2385 = vmatprep.subr.mxu0 0.0
    %2386 = vmatpush1.msra.mxu0 %v2366
    %2387 = vmatprep.subr.mxu0 0.0
    %2388 = vmatpush1.msra.mxu0 %v2367
    %2389 = vmatprep.subr.mxu0 0.0
    %2390 = vmatpush1.msra.mxu0 %v2368
    %2391 = vmatprep.subr.mxu0 0.0
    %2392 = vmatpush1.msra.mxu0 %v2369
    %2393 = vmatprep.subr.mxu0 0.0
    %2394 = vmatpush1.msra.mxu0 %v2370
    %2395 = vmatprep.subr.mxu0 0.0
    %2396 = vmatpush1.msra.mxu0 %v2371
    %2397 = vmatprep.subr.mxu0 0.0
    %2398 = vmatpush1.msra.mxu0 %v2372
    %2399 = vmatprep.subr.mxu0 0.0
    %2400 = vmatpush1.msra.mxu0 %v2373
    %2401 = vmatprep.subr.mxu0 0.0
    %2402 = vmatpush1.msra.mxu0 %v2374
    %2403 = vmatprep.subr.mxu0 0.0
    %2404 = vmatpush1.msra.mxu0 %v2375
    %2405 = vmatprep.subr.mxu0 0.0
    %2406 = vmatpush1.msra.mxu0 %v2376
    %2407 = vmatprep.subr.mxu0 0.0
    %2408 = vmatpush1.msra.mxu0 %v2377
    %2409 = vmatprep.subr.mxu0 0.0
    %2410 = vmatpush1.msra.mxu0 %v2378
    %2411 = vmatprep.subr.mxu0 0.0
    %2412 = vmatpush1.msra.mxu0 0.0
    %2413 = vmatprep.subr.mxu0 0.0
    %2414 = vmatpush1.msra.mxu0 0.0
    %2415 = vmatprep.subr.mxu0 0.0
    %2416 = vmatpush1.msra.mxu0 0.0
    %2417 = vmatprep.subr.mxu0 0.0
    %2418 = vmatpush1.msra.mxu0 0.0
    %2419 = vmatprep.subr.mxu0 0.0
    %2420 = vmatpush1.msra.mxu0 0.0
    %2421 = vmatprep.subr.mxu0 0.0
    %2422 = vmatpush1.msra.mxu0 0.0
    %2423 = vmatprep.subr.mxu0 0.0
    %2424 = vmatpush1.msra.mxu0 0.0
    %2425 = vmatprep.subr.mxu0 0.0
    %2426 = vmatpush1.msra.mxu0 0.0
    %2427 = vmatprep.subr.mxu0 0.0
    %2428 = vmatpush1.msra.mxu0 0.0
    %2429 = vmatprep.subr.mxu0 0.0
    %2430 = vmatpush1.msra.mxu0 0.0
    %2431 = vmatprep.subr.mxu0 0.0
    %2432 = vmatpush1.msra.mxu0 0.0
    %2433 = vmatprep.subr.mxu0 0.0
    %2434 = vmatpush1.msra.mxu0 0.0
    %2435 = vmatprep.subr.mxu0 0.0
    %2436 = vmatpush1.msra.mxu0 0.0
    %2437 = vmatprep.subr.mxu0 0.0
    %2438 = vmatpush1.msra.mxu0 0.0
    %2439 = vmatprep.subr.mxu0 0.0
    %2440 = vmatpush1.msra.mxu0 0.0
    %2441 = vmatprep.subr.mxu0 0.0
    %2442 = vmatpush1.msra.mxu0 0.0
    %2443 = vmatprep.mubr.f32.mxu0 0.0
    %2444 = vmatmul.mubr.f32.gmra.mrb[0].mxu0 %v2362
    %v2445 = vpop.f32.mrb[0].mxu0
    %v2446 = vadd.f32 0.0, %v2445
    %v2447 = vpop.f32.mrb[0].mxu0
    %2448 = vdwg.mxu0
    %v2449 = vadd.f32 %v2361, %v2446
    %v2450 = vld [vmem:[#allocation2 + $0x28] sm:$0xff]
    %v2451 = vld [vmem:[%s865] sm:$0xff]
    %v2452 = vld [vmem:[%s865 + $0x8] sm:$0xff]
    %v2453 = vld [vmem:[%s865 + $0x10] sm:$0xff]
    %v2454 = vld [vmem:[%s865 + $0x18] sm:$0xff]
    %v2455 = vld [vmem:[%s865 + $0x20] sm:$0xff]
    %v2456 = vld [vmem:[%s865 + $0x28] sm:$0xff]
    %v2457 = vld [vmem:[%s865 + $0x30] sm:$0xff]
    %v2458 = vld [vmem:[%s865 + $0x38] sm:$0xff]
    %v2459 = vld [vmem:[%s865 + $0x40] sm:$0xff]
    %v2460 = vld [vmem:[%s865 + $0x48] sm:$0xff]
    %v2461 = vld [vmem:[%s865 + $0x50] sm:$0xff]
    %v2462 = vld [vmem:[%s865 + $0x58] sm:$0xff]
    %v2463 = vld [vmem:[%s865 + $0x60] sm:$0xff]
    %v2464 = vld [vmem:[%s865 + $0x68] sm:$0xff]
    %v2465 = vld [vmem:[%s865 + $0x70] sm:$0xff]
    %v2466 = vld [vmem:[%s865 + $0x78] sm:$0xff]
    %2467 = vmatprep.subr.mxu0 0.0
    %2468 = vmatpush1.msra.mxu0 %v2451
    %2469 = vmatprep.subr.mxu0 0.0
    %2470 = vmatpush1.msra.mxu0 %v2452
    %2471 = vmatprep.subr.mxu0 0.0
    %2472 = vmatpush1.msra.mxu0 %v2453
    %2473 = vmatprep.subr.mxu0 0.0
    %2474 = vmatpush1.msra.mxu0 %v2454
    %2475 = vmatprep.subr.mxu0 0.0
    %2476 = vmatpush1.msra.mxu0 %v2455
    %2477 = vmatprep.subr.mxu0 0.0
    %2478 = vmatpush1.msra.mxu0 %v2456
    %2479 = vmatprep.subr.mxu0 0.0
    %2480 = vmatpush1.msra.mxu0 %v2457
    %2481 = vmatprep.subr.mxu0 0.0
    %2482 = vmatpush1.msra.mxu0 %v2458
    %2483 = vmatprep.subr.mxu0 0.0
    %2484 = vmatpush1.msra.mxu0 %v2459
    %2485 = vmatprep.subr.mxu0 0.0
    %2486 = vmatpush1.msra.mxu0 %v2460
    %2487 = vmatprep.subr.mxu0 0.0
    %2488 = vmatpush1.msra.mxu0 %v2461
    %2489 = vmatprep.subr.mxu0 0.0
    %2490 = vmatpush1.msra.mxu0 %v2462
    %2491 = vmatprep.subr.mxu0 0.0
    %2492 = vmatpush1.msra.mxu0 %v2463
    %2493 = vmatprep.subr.mxu0 0.0
    %2494 = vmatpush1.msra.mxu0 %v2464
    %2495 = vmatprep.subr.mxu0 0.0
    %2496 = vmatpush1.msra.mxu0 %v2465
    %2497 = vmatprep.subr.mxu0 0.0
    %2498 = vmatpush1.msra.mxu0 %v2466
    %2499 = vmatprep.subr.mxu0 0.0
    %2500 = vmatpush1.msra.mxu0 0.0
    %2501 = vmatprep.subr.mxu0 0.0
    %2502 = vmatpush1.msra.mxu0 0.0
    %2503 = vmatprep.subr.mxu0 0.0
    %2504 = vmatpush1.msra.mxu0 0.0
    %2505 = vmatprep.subr.mxu0 0.0
    %2506 = vmatpush1.msra.mxu0 0.0
    %2507 = vmatprep.subr.mxu0 0.0
    %2508 = vmatpush1.msra.mxu0 0.0
    %2509 = vmatprep.subr.mxu0 0.0
    %2510 = vmatpush1.msra.mxu0 0.0
    %2511 = vmatprep.subr.mxu0 0.0
    %2512 = vmatpush1.msra.mxu0 0.0
    %2513 = vmatprep.subr.mxu0 0.0
    %2514 = vmatpush1.msra.mxu0 0.0
    %2515 = vmatprep.subr.mxu0 0.0
    %2516 = vmatpush1.msra.mxu0 0.0
    %2517 = vmatprep.subr.mxu0 0.0
    %2518 = vmatpush1.msra.mxu0 0.0
    %2519 = vmatprep.subr.mxu0 0.0
    %2520 = vmatpush1.msra.mxu0 0.0
    %2521 = vmatprep.subr.mxu0 0.0
    %2522 = vmatpush1.msra.mxu0 0.0
    %2523 = vmatprep.subr.mxu0 0.0
    %2524 = vmatpush1.msra.mxu0 0.0
    %2525 = vmatprep.subr.mxu0 0.0
    %2526 = vmatpush1.msra.mxu0 0.0
    %2527 = vmatprep.subr.mxu0 0.0
    %2528 = vmatpush1.msra.mxu0 0.0
    %2529 = vmatprep.subr.mxu0 0.0
    %2530 = vmatpush1.msra.mxu0 0.0
    %2531 = vmatprep.mubr.f32.mxu0 0.0
    %2532 = vmatmul.mubr.f32.gmra.mrb[0].mxu0 %v2450
    %v2533 = vpop.f32.mrb[0].mxu0
    %v2534 = vadd.f32 0.0, %v2533
    %v2535 = vpop.f32.mrb[0].mxu0
    %2536 = vdwg.mxu0
    %v2537 = vadd.f32 %v2449, %v2534
    %v2538 = vld [vmem:[#allocation2 + $0x30] sm:$0xff]
    %v2539 = vld [vmem:[%s954] sm:$0xff]
    %v2540 = vld [vmem:[%s954 + $0x8] sm:$0xff]
    %v2541 = vld [vmem:[%s954 + $0x10] sm:$0xff]
    %v2542 = vld [vmem:[%s954 + $0x18] sm:$0xff]
    %v2543 = vld [vmem:[%s954 + $0x20] sm:$0xff]
    %v2544 = vld [vmem:[%s954 + $0x28] sm:$0xff]
    %v2545 = vld [vmem:[%s954 + $0x30] sm:$0xff]
    %v2546 = vld [vmem:[%s954 + $0x38] sm:$0xff]
    %v2547 = vld [vmem:[%s954 + $0x40] sm:$0xff]
    %v2548 = vld [vmem:[%s954 + $0x48] sm:$0xff]
    %v2549 = vld [vmem:[%s954 + $0x50] sm:$0xff]
    %v2550 = vld [vmem:[%s954 + $0x58] sm:$0xff]
    %v2551 = vld [vmem:[%s954 + $0x60] sm:$0xff]
    %v2552 = vld [vmem:[%s954 + $0x68] sm:$0xff]
    %v2553 = vld [vmem:[%s954 + $0x70] sm:$0xff]
    %v2554 = vld [vmem:[%s954 + $0x78] sm:$0xff]
    %2555 = vmatprep.subr.mxu0 0.0
    %2556 = vmatpush1.msra.mxu0 %v2539
    %2557 = vmatprep.subr.mxu0 0.0
    %2558 = vmatpush1.msra.mxu0 %v2540
    %2559 = vmatprep.subr.mxu0 0.0
    %2560 = vmatpush1.msra.mxu0 %v2541
    %2561 = vmatprep.subr.mxu0 0.0
    %2562 = vmatpush1.msra.mxu0 %v2542
    %2563 = vmatprep.subr.mxu0 0.0
    %2564 = vmatpush1.msra.mxu0 %v2543
    %2565 = vmatprep.subr.mxu0 0.0
    %2566 = vmatpush1.msra.mxu0 %v2544
    %2567 = vmatprep.subr.mxu0 0.0
    %2568 = vmatpush1.msra.mxu0 %v2545
    %2569 = vmatprep.subr.mxu0 0.0
    %2570 = vmatpush1.msra.mxu0 %v2546
    %2571 = vmatprep.subr.mxu0 0.0
    %2572 = vmatpush1.msra.mxu0 %v2547
    %2573 = vmatprep.subr.mxu0 0.0
    %2574 = vmatpush1.msra.mxu0 %v2548
    %2575 = vmatprep.subr.mxu0 0.0
    %2576 = vmatpush1.msra.mxu0 %v2549
    %2577 = vmatprep.subr.mxu0 0.0
    %2578 = vmatpush1.msra.mxu0 %v2550
    %2579 = vmatprep.subr.mxu0 0.0
    %2580 = vmatpush1.msra.mxu0 %v2551
    %2581 = vmatprep.subr.mxu0 0.0
    %2582 = vmatpush1.msra.mxu0 %v2552
    %2583 = vmatprep.subr.mxu0 0.0
    %2584 = vmatpush1.msra.mxu0 %v2553
    %2585 = vmatprep.subr.mxu0 0.0
    %2586 = vmatpush1.msra.mxu0 %v2554
    %2587 = vmatprep.subr.mxu0 0.0
    %2588 = vmatpush1.msra.mxu0 0.0
    %2589 = vmatprep.subr.mxu0 0.0
    %2590 = vmatpush1.msra.mxu0 0.0
    %2591 = vmatprep.subr.mxu0 0.0
    %2592 = vmatpush1.msra.mxu0 0.0
    %2593 = vmatprep.subr.mxu0 0.0
    %2594 = vmatpush1.msra.mxu0 0.0
    %2595 = vmatprep.subr.mxu0 0.0
    %2596 = vmatpush1.msra.mxu0 0.0
    %2597 = vmatprep.subr.mxu0 0.0
    %2598 = vmatpush1.msra.mxu0 0.0
    %2599 = vmatprep.subr.mxu0 0.0
    %2600 = vmatpush1.msra.mxu0 0.0
    %2601 = vmatprep.subr.mxu0 0.0
    %2602 = vmatpush1.msra.mxu0 0.0
    %2603 = vmatprep.subr.mxu0 0.0
    %2604 = vmatpush1.msra.mxu0 0.0
    %2605 = vmatprep.subr.mxu0 0.0
    %2606 = vmatpush1.msra.mxu0 0.0
    %2607 = vmatprep.subr.mxu0 0.0
    %2608 = vmatpush1.msra.mxu0 0.0
    %2609 = vmatprep.subr.mxu0 0.0
    %2610 = vmatpush1.msra.mxu0 0.0
    %2611 = vmatprep.subr.mxu0 0.0
    %2612 = vmatpush1.msra.mxu0 0.0
    %2613 = vmatprep.subr.mxu0 0.0
    %2614 = vmatpush1.msra.mxu0 0.0
    %2615 = vmatprep.subr.mxu0 0.0
    %2616 = vmatpush1.msra.mxu0 0.0
    %2617 = vmatprep.subr.mxu0 0.0
    %2618 = vmatpush1.msra.mxu0 0.0
    %2619 = vmatprep.mubr.f32.mxu0 0.0
    %2620 = vmatmul.mubr.f32.gmra.mrb[0].mxu0 %v2538
    %v2621 = vpop.f32.mrb[0].mxu0
    %v2622 = vadd.f32 0.0, %v2621
    %v2623 = vpop.f32.mrb[0].mxu0
    %2624 = vdwg.mxu0
    %v2625 = vadd.f32 %v2537, %v2622
    %v2626 = vld [vmem:[#allocation2 + $0x32] sm:$0xff]
    %v2627 = vld [vmem:[%s1043] sm:$0xff]
    %v2628 = vld [vmem:[%s1043 + $0x8] sm:$0xff]
    %v2629 = vld [vmem:[%s1043 + $0x10] sm:$0xff]
    %v2630 = vld [vmem:[%s1043 + $0x18] sm:$0xff]
    %v2631 = vld [vmem:[%s1043 + $0x20] sm:$0xff]
    %v2632 = vld [vmem:[%s1043 + $0x28] sm:$0xff]
    %v2633 = vld [vmem:[%s1043 + $0x30] sm:$0xff]
    %v2634 = vld [vmem:[%s1043 + $0x38] sm:$0xff]
    %v2635 = vld [vmem:[%s1043 + $0x40] sm:$0xff]
    %v2636 = vld [vmem:[%s1043 + $0x48] sm:$0xff]
    %v2637 = vld [vmem:[%s1043 + $0x50] sm:$0xff]
    %v2638 = vld [vmem:[%s1043 + $0x58] sm:$0xff]
    %v2639 = vld [vmem:[%s1043 + $0x60] sm:$0xff]
    %v2640 = vld [vmem:[%s1043 + $0x68] sm:$0xff]
    %v2641 = vld [vmem:[%s1043 + $0x70] sm:$0xff]
    %v2642 = vld [vmem:[%s1043 + $0x78] sm:$0xff]
    %2643 = vmatprep.subr.mxu0 0.0
    %2644 = vmatpush1.msra.mxu0 %v2627
    %2645 = vmatprep.subr.mxu0 0.0
    %2646 = vmatpush1.msra.mxu0 %v2628
    %2647 = vmatprep.subr.mxu0 0.0
    %2648 = vmatpush1.msra.mxu0 %v2629
    %2649 = vmatprep.subr.mxu0 0.0
    %2650 = vmatpush1.msra.mxu0 %v2630
    %2651 = vmatprep.subr.mxu0 0.0
    %2652 = vmatpush1.msra.mxu0 %v2631
    %2653 = vmatprep.subr.mxu0 0.0
    %2654 = vmatpush1.msra.mxu0 %v2632
    %2655 = vmatprep.subr.mxu0 0.0
    %2656 = vmatpush1.msra.mxu0 %v2633
    %2657 = vmatprep.subr.mxu0 0.0
    %2658 = vmatpush1.msra.mxu0 %v2634
    %2659 = vmatprep.subr.mxu0 0.0
    %2660 = vmatpush1.msra.mxu0 %v2635
    %2661 = vmatprep.subr.mxu0 0.0
    %2662 = vmatpush1.msra.mxu0 %v2636
    %2663 = vmatprep.subr.mxu0 0.0
    %2664 = vmatpush1.msra.mxu0 %v2637
    %2665 = vmatprep.subr.mxu0 0.0
    %2666 = vmatpush1.msra.mxu0 %v2638
    %2667 = vmatprep.subr.mxu0 0.0
    %2668 = vmatpush1.msra.mxu0 %v2639
    %2669 = vmatprep.subr.mxu0 0.0
    %2670 = vmatpush1.msra.mxu0 %v2640
    %2671 = vmatprep.subr.mxu0 0.0
    %2672 = vmatpush1.msra.mxu0 %v2641
    %2673 = vmatprep.subr.mxu0 0.0
    %2674 = vmatpush1.msra.mxu0 %v2642
    %2675 = vmatprep.subr.mxu0 0.0
    %2676 = vmatpush1.msra.mxu0 0.0
    %2677 = vmatprep.subr.mxu0 0.0
    %2678 = vmatpush1.msra.mxu0 0.0
    %2679 = vmatprep.subr.mxu0 0.0
    %2680 = vmatpush1.msra.mxu0 0.0
    %2681 = vmatprep.subr.mxu0 0.0
    %2682 = vmatpush1.msra.mxu0 0.0
    %2683 = vmatprep.subr.mxu0 0.0
    %2684 = vmatpush1.msra.mxu0 0.0
    %2685 = vmatprep.subr.mxu0 0.0
    %2686 = vmatpush1.msra.mxu0 0.0
    %2687 = vmatprep.subr.mxu0 0.0
    %2688 = vmatpush1.msra.mxu0 0.0
    %2689 = vmatprep.subr.mxu0 0.0
    %2690 = vmatpush1.msra.mxu0 0.0
    %2691 = vmatprep.subr.mxu0 0.0
    %2692 = vmatpush1.msra.mxu0 0.0
    %2693 = vmatprep.subr.mxu0 0.0
    %2694 = vmatpush1.msra.mxu0 0.0
    %2695 = vmatprep.subr.mxu0 0.0
    %2696 = vmatpush1.msra.mxu0 0.0
    %2697 = vmatprep.subr.mxu0 0.0
    %2698 = vmatpush1.msra.mxu0 0.0
    %2699 = vmatprep.subr.mxu0 0.0
    %2700 = vmatpush1.msra.mxu0 0.0
    %2701 = vmatprep.subr.mxu0 0.0
    %2702 = vmatpush1.msra.mxu0 0.0
    %2703 = vmatprep.subr.mxu0 0.0
    %2704 = vmatpush1.msra.mxu0 0.0
    %2705 = vmatprep.subr.mxu0 0.0
    %2706 = vmatpush1.msra.mxu0 0.0
    %2707 = vmatprep.mubr.f32.mxu0 0.0
    %2708 = vmatmul.mubr.f32.gmra.mrb[0].mxu0 %v2626
    %v2709 = vpop.f32.mrb[0].mxu0
    %v2710 = vadd.f32 0.0, %v2709
    %v2711 = vpop.f32.mrb[0].mxu0
    %2712 = vdwg.mxu0
    %v2713 = vadd.f32 %v2625, %v2710
    %v2714 = vld [vmem:[#allocation2 + $0x34] sm:$0xff]
    %v2715 = vld [vmem:[%s1132] sm:$0xff]
    %v2716 = vld [vmem:[%s1132 + $0x8] sm:$0xff]
    %v2717 = vld [vmem:[%s1132 + $0x10] sm:$0xff]
    %v2718 = vld [vmem:[%s1132 + $0x18] sm:$0xff]
    %v2719 = vld [vmem:[%s1132 + $0x20] sm:$0xff]
    %v2720 = vld [vmem:[%s1132 + $0x28] sm:$0xff]
    %v2721 = vld [vmem:[%s1132 + $0x30] sm:$0xff]
    %v2722 = vld [vmem:[%s1132 + $0x38] sm:$0xff]
    %v2723 = vld [vmem:[%s1132 + $0x40] sm:$0xff]
    %v2724 = vld [vmem:[%s1132 + $0x48] sm:$0xff]
    %v2725 = vld [vmem:[%s1132 + $0x50] sm:$0xff]
    %v2726 = vld [vmem:[%s1132 + $0x58] sm:$0xff]
    %v2727 = vld [vmem:[%s1132 + $0x60] sm:$0xff]
    %v2728 = vld [vmem:[%s1132 + $0x68] sm:$0xff]
    %v2729 = vld [vmem:[%s1132 + $0x70] sm:$0xff]
    %v2730 = vld [vmem:[%s1132 + $0x78] sm:$0xff]
    %2731 = vmatprep.subr.mxu0 0.0
    %2732 = vmatpush1.msra.mxu0 %v2715
    %2733 = vmatprep.subr.mxu0 0.0
    %2734 = vmatpush1.msra.mxu0 %v2716
    %2735 = vmatprep.subr.mxu0 0.0
    %2736 = vmatpush1.msra.mxu0 %v2717
    %2737 = vmatprep.subr.mxu0 0.0
    %2738 = vmatpush1.msra.mxu0 %v2718
    %2739 = vmatprep.subr.mxu0 0.0
    %2740 = vmatpush1.msra.mxu0 %v2719
    %2741 = vmatprep.subr.mxu0 0.0
    %2742 = vmatpush1.msra.mxu0 %v2720
    %2743 = vmatprep.subr.mxu0 0.0
    %2744 = vmatpush1.msra.mxu0 %v2721
    %2745 = vmatprep.subr.mxu0 0.0
    %2746 = vmatpush1.msra.mxu0 %v2722
    %2747 = vmatprep.subr.mxu0 0.0
    %2748 = vmatpush1.msra.mxu0 %v2723
    %2749 = vmatprep.subr.mxu0 0.0
    %2750 = vmatpush1.msra.mxu0 %v2724
    %2751 = vmatprep.subr.mxu0 0.0
    %2752 = vmatpush1.msra.mxu0 %v2725
    %2753 = vmatprep.subr.mxu0 0.0
    %2754 = vmatpush1.msra.mxu0 %v2726
    %2755 = vmatprep.subr.mxu0 0.0
    %2756 = vmatpush1.msra.mxu0 %v2727
    %2757 = vmatprep.subr.mxu0 0.0
    %2758 = vmatpush1.msra.mxu0 %v2728
    %2759 = vmatprep.subr.mxu0 0.0
    %2760 = vmatpush1.msra.mxu0 %v2729
    %2761 = vmatprep.subr.mxu0 0.0
    %2762 = vmatpush1.msra.mxu0 %v2730
    %2763 = vmatprep.subr.mxu0 0.0
    %2764 = vmatpush1.msra.mxu0 0.0
    %2765 = vmatprep.subr.mxu0 0.0
    %2766 = vmatpush1.msra.mxu0 0.0
    %2767 = vmatprep.subr.mxu0 0.0
    %2768 = vmatpush1.msra.mxu0 0.0
    %2769 = vmatprep.subr.mxu0 0.0
    %2770 = vmatpush1.msra.mxu0 0.0
    %2771 = vmatprep.subr.mxu0 0.0
    %2772 = vmatpush1.msra.mxu0 0.0
    %2773 = vmatprep.subr.mxu0 0.0
    %2774 = vmatpush1.msra.mxu0 0.0
    %2775 = vmatprep.subr.mxu0 0.0
    %2776 = vmatpush1.msra.mxu0 0.0
    %2777 = vmatprep.subr.mxu0 0.0
    %2778 = vmatpush1.msra.mxu0 0.0
    %2779 = vmatprep.subr.mxu0 0.0
    %2780 = vmatpush1.msra.mxu0 0.0
    %2781 = vmatprep.subr.mxu0 0.0
    %2782 = vmatpush1.msra.mxu0 0.0
    %2783 = vmatprep.subr.mxu0 0.0
    %2784 = vmatpush1.msra.mxu0 0.0
    %2785 = vmatprep.subr.mxu0 0.0
    %2786 = vmatpush1.msra.mxu0 0.0
    %2787 = vmatprep.subr.mxu0 0.0
    %2788 = vmatpush1.msra.mxu0 0.0
    %2789 = vmatprep.subr.mxu0 0.0
    %2790 = vmatpush1.msra.mxu0 0.0
    %2791 = vmatprep.subr.mxu0 0.0
    %2792 = vmatpush1.msra.mxu0 0.0
    %2793 = vmatprep.subr.mxu0 0.0
    %2794 = vmatpush1.msra.mxu0 0.0
    %2795 = vmatprep.mubr.f32.mxu0 0.0
    %2796 = vmatmul.mubr.f32.gmra.mrb[0].mxu0 %v2714
    %v2797 = vpop.f32.mrb[0].mxu0
    %v2798 = vadd.f32 0.0, %v2797
    %v2799 = vpop.f32.mrb[0].mxu0
    %2800 = vdwg.mxu0
    %v2801 = vadd.f32 %v2713, %v2798
    %2802 = vst [vmem:[#allocation3 + $0x10] sm:$0xff] %v2801
    %v2803 = vld [vmem:[#allocation2 + $0x24] sm:$0xff]
    %v2804 = vld [vmem:[%s4] sm:$0xff]
    %v2805 = vld [vmem:[%s4 + $0x8] sm:$0xff]
    %v2806 = vld [vmem:[%s4 + $0x10] sm:$0xff]
    %v2807 = vld [vmem:[%s4 + $0x18] sm:$0xff]
    %v2808 = vld [vmem:[%s4 + $0x20] sm:$0xff]
    %v2809 = vld [vmem:[%s4 + $0x28] sm:$0xff]
    %v2810 = vld [vmem:[%s4 + $0x30] sm:$0xff]
    %v2811 = vld [vmem:[%s4 + $0x38] sm:$0xff]
    %v2812 = vld [vmem:[%s4 + $0x40] sm:$0xff]
    %v2813 = vld [vmem:[%s4 + $0x48] sm:$0xff]
    %v2814 = vld [vmem:[%s4 + $0x50] sm:$0xff]
    %v2815 = vld [vmem:[%s4 + $0x58] sm:$0xff]
    %v2816 = vld [vmem:[%s4 + $0x60] sm:$0xff]
    %v2817 = vld [vmem:[%s4 + $0x68] sm:$0xff]
    %v2818 = vld [vmem:[%s4 + $0x70] sm:$0xff]
    %v2819 = vld [vmem:[%s4 + $0x78] sm:$0xff]
    %v2820 = vld [vmem:[#allocation2 + $0x26] sm:$0xff]
    %v2821 = vld [vmem:[%s440] sm:$0xff]
    %v2822 = vld [vmem:[%s440 + $0x8] sm:$0xff]
    %v2823 = vld [vmem:[%s440 + $0x10] sm:$0xff]
    %v2824 = vld [vmem:[%s440 + $0x18] sm:$0xff]
    %v2825 = vld [vmem:[%s440 + $0x20] sm:$0xff]
    %v2826 = vld [vmem:[%s440 + $0x28] sm:$0xff]
    %v2827 = vld [vmem:[%s440 + $0x30] sm:$0xff]
    %v2828 = vld [vmem:[%s440 + $0x38] sm:$0xff]
    %v2829 = vld [vmem:[%s440 + $0x40] sm:$0xff]
    %v2830 = vld [vmem:[%s440 + $0x48] sm:$0xff]
    %v2831 = vld [vmem:[%s440 + $0x50] sm:$0xff]
    %v2832 = vld [vmem:[%s440 + $0x58] sm:$0xff]
    %v2833 = vld [vmem:[%s440 + $0x60] sm:$0xff]
    %v2834 = vld [vmem:[%s440 + $0x68] sm:$0xff]
    %v2835 = vld [vmem:[%s440 + $0x70] sm:$0xff]
    %v2836 = vld [vmem:[%s440 + $0x78] sm:$0xff]
    %2837 = vmatprep.subr.mxu0 0.0
    %2838 = vmatpush1.msra.mxu0 %v2821
    %2839 = vmatprep.subr.mxu0 0.0
    %2840 = vmatpush1.msra.mxu0 %v2822
    %2841 = vmatprep.subr.mxu0 0.0
    %2842 = vmatpush1.msra.mxu0 %v2823
    %2843 = vmatprep.subr.mxu0 0.0
    %2844 = vmatpush1.msra.mxu0 %v2824
    %2845 = vmatprep.subr.mxu0 0.0
    %2846 = vmatpush1.msra.mxu0 %v2825
    %2847 = vmatprep.subr.mxu0 0.0
    %2848 = vmatpush1.msra.mxu0 %v2826
    %2849 = vmatprep.subr.mxu0 0.0
    %2850 = vmatpush1.msra.mxu0 %v2827
    %2851 = vmatprep.subr.mxu0 0.0
    %2852 = vmatpush1.msra.mxu0 %v2828
    %2853 = vmatprep.subr.mxu0 0.0
    %2854 = vmatpush1.msra.mxu0 %v2829
    %2855 = vmatprep.subr.mxu0 0.0
    %2856 = vmatpush1.msra.mxu0 %v2830
    %2857 = vmatprep.subr.mxu0 0.0
    %2858 = vmatpush1.msra.mxu0 %v2831
    %2859 = vmatprep.subr.mxu0 0.0
    %2860 = vmatpush1.msra.mxu0 %v2832
    %2861 = vmatprep.subr.mxu0 0.0
    %2862 = vmatpush1.msra.mxu0 %v2833
    %2863 = vmatprep.subr.mxu0 0.0
    %2864 = vmatpush1.msra.mxu0 %v2834
    %2865 = vmatprep.subr.mxu0 0.0
    %2866 = vmatpush1.msra.mxu0 %v2835
    %2867 = vmatprep.subr.mxu0 0.0
    %2868 = vmatpush1.msra.mxu0 %v2836
    %2869 = vmatprep.subr.mxu0 0.0
    %2870 = vmatpush1.msra.mxu0 0.0
    %2871 = vmatprep.subr.mxu0 0.0
    %2872 = vmatpush1.msra.mxu0 0.0
    %2873 = vmatprep.subr.mxu0 0.0
    %2874 = vmatpush1.msra.mxu0 0.0
    %2875 = vmatprep.subr.mxu0 0.0
    %2876 = vmatpush1.msra.mxu0 0.0
    %2877 = vmatprep.subr.mxu0 0.0
    %2878 = vmatpush1.msra.mxu0 0.0
    %2879 = vmatprep.subr.mxu0 0.0
    %2880 = vmatpush1.msra.mxu0 0.0
    %2881 = vmatprep.subr.mxu0 0.0
    %2882 = vmatpush1.msra.mxu0 0.0
    %2883 = vmatprep.subr.mxu0 0.0
    %2884 = vmatpush1.msra.mxu0 0.0
    %2885 = vmatprep.subr.mxu0 0.0
    %2886 = vmatpush1.msra.mxu0 0.0
    %2887 = vmatprep.subr.mxu0 0.0
    %2888 = vmatpush1.msra.mxu0 0.0
    %2889 = vmatprep.subr.mxu0 0.0
    %2890 = vmatpush1.msra.mxu0 0.0
    %2891 = vmatprep.subr.mxu0 0.0
    %2892 = vmatpush1.msra.mxu0 0.0
    %2893 = vmatprep.subr.mxu0 0.0
    %2894 = vmatpush1.msra.mxu0 0.0
    %2895 = vmatprep.subr.mxu0 0.0
    %2896 = vmatpush1.msra.mxu0 0.0
    %2897 = vmatprep.subr.mxu0 0.0
    %2898 = vmatpush1.msra.mxu0 0.0
    %2899 = vmatprep.subr.mxu0 0.0
    %2900 = vmatpush1.msra.mxu0 0.0
    %2901 = vmatprep.mubr.f32.mxu0 0.0
    %2902 = vmatmul.mubr.f32.gmra.mrb[0].mxu0 %v2820
    %v2903 = vpop.f32.mrb[0].mxu0
    %v2904 = vadd.f32 0.0, %v2903
    %v2905 = vpop.f32.mrb[0].mxu0
    %2906 = vdwg.mxu0
    %2907 = vmatprep.subr.mxu0 0.0
    %2908 = vmatpush1.msra.mxu0 %v2804
    %2909 = vmatprep.subr.mxu0 0.0
    %2910 = vmatpush1.msra.mxu0 %v2805
    %2911 = vmatprep.subr.mxu0 0.0
    %2912 = vmatpush1.msra.mxu0 %v2806
    %2913 = vmatprep.subr.mxu0 0.0
    %2914 = vmatpush1.msra.mxu0 %v2807
    %2915 = vmatprep.subr.mxu0 0.0
    %2916 = vmatpush1.msra.mxu0 %v2808
    %2917 = vmatprep.subr.mxu0 0.0
    %2918 = vmatpush1.msra.mxu0 %v2809
    %2919 = vmatprep.subr.mxu0 0.0
    %2920 = vmatpush1.msra.mxu0 %v2810
    %2921 = vmatprep.subr.mxu0 0.0
    %2922 = vmatpush1.msra.mxu0 %v2811
    %2923 = vmatprep.subr.mxu0 0.0
    %2924 = vmatpush1.msra.mxu0 %v2812
    %2925 = vmatprep.subr.mxu0 0.0
    %2926 = vmatpush1.msra.mxu0 %v2813
    %2927 = vmatprep.subr.mxu0 0.0
    %2928 = vmatpush1.msra.mxu0 %v2814
    %2929 = vmatprep.subr.mxu0 0.0
    %2930 = vmatpush1.msra.mxu0 %v2815
    %2931 = vmatprep.subr.mxu0 0.0
    %2932 = vmatpush1.msra.mxu0 %v2816
    %2933 = vmatprep.subr.mxu0 0.0
    %2934 = vmatpush1.msra.mxu0 %v2817
    %2935 = vmatprep.subr.mxu0 0.0
    %2936 = vmatpush1.msra.mxu0 %v2818
    %2937 = vmatprep.subr.mxu0 0.0
    %2938 = vmatpush1.msra.mxu0 %v2819
    %2939 = vmatprep.subr.mxu0 0.0
    %2940 = vmatpush1.msra.mxu0 0.0
    %2941 = vmatprep.subr.mxu0 0.0
    %2942 = vmatpush1.msra.mxu0 0.0
    %2943 = vmatprep.subr.mxu0 0.0
    %2944 = vmatpush1.msra.mxu0 0.0
    %2945 = vmatprep.subr.mxu0 0.0
    %2946 = vmatpush1.msra.mxu0 0.0
    %2947 = vmatprep.subr.mxu0 0.0
    %2948 = vmatpush1.msra.mxu0 0.0
    %2949 = vmatprep.subr.mxu0 0.0
    %2950 = vmatpush1.msra.mxu0 0.0
    %2951 = vmatprep.subr.mxu0 0.0
    %2952 = vmatpush1.msra.mxu0 0.0
    %2953 = vmatprep.subr.mxu0 0.0
    %2954 = vmatpush1.msra.mxu0 0.0
    %2955 = vmatprep.subr.mxu0 0.0
    %2956 = vmatpush1.msra.mxu0 0.0
    %2957 = vmatprep.subr.mxu0 0.0
    %2958 = vmatpush1.msra.mxu0 0.0
    %2959 = vmatprep.subr.mxu0 0.0
    %2960 = vmatpush1.msra.mxu0 0.0
    %2961 = vmatprep.subr.mxu0 0.0
    %2962 = vmatpush1.msra.mxu0 0.0
    %2963 = vmatprep.subr.mxu0 0.0
    %2964 = vmatpush1.msra.mxu0 0.0
    %2965 = vmatprep.subr.mxu0 0.0
    %2966 = vmatpush1.msra.mxu0 0.0
    %2967 = vmatprep.subr.mxu0 0.0
    %2968 = vmatpush1.msra.mxu0 0.0
    %2969 = vmatprep.subr.mxu0 0.0
    %2970 = vmatpush1.msra.mxu0 0.0
    %2971 = vmatprep.mubr.f32.mxu0 0.0
    %2972 = vmatmul.mubr.f32.gmra.mrb[0].mxu0 %v2803
    %v2973 = vpop.f32.mrb[0].mxu0
    %v2974 = vadd.f32 %v2904, %v2973
    %v2975 = vpop.f32.mrb[0].mxu0
    %2976 = vdwg.mxu0
    %v2977 = vld [vmem:[#allocation2 + $0x28] sm:$0xff]
    %v2978 = vld [vmem:[%s598] sm:$0xff]
    %v2979 = vld [vmem:[%s598 + $0x8] sm:$0xff]
    %v2980 = vld [vmem:[%s598 + $0x10] sm:$0xff]
    %v2981 = vld [vmem:[%s598 + $0x18] sm:$0xff]
    %v2982 = vld [vmem:[%s598 + $0x20] sm:$0xff]
    %v2983 = vld [vmem:[%s598 + $0x28] sm:$0xff]
    %v2984 = vld [vmem:[%s598 + $0x30] sm:$0xff]
    %v2985 = vld [vmem:[%s598 + $0x38] sm:$0xff]
    %v2986 = vld [vmem:[%s598 + $0x40] sm:$0xff]
    %v2987 = vld [vmem:[%s598 + $0x48] sm:$0xff]
    %v2988 = vld [vmem:[%s598 + $0x50] sm:$0xff]
    %v2989 = vld [vmem:[%s598 + $0x58] sm:$0xff]
    %v2990 = vld [vmem:[%s598 + $0x60] sm:$0xff]
    %v2991 = vld [vmem:[%s598 + $0x68] sm:$0xff]
    %v2992 = vld [vmem:[%s598 + $0x70] sm:$0xff]
    %v2993 = vld [vmem:[%s598 + $0x78] sm:$0xff]
    %2994 = vmatprep.subr.mxu0 0.0
    %2995 = vmatpush1.msra.mxu0 %v2978
    %2996 = vmatprep.subr.mxu0 0.0
    %2997 = vmatpush1.msra.mxu0 %v2979
    %2998 = vmatprep.subr.mxu0 0.0
    %2999 = vmatpush1.msra.mxu0 %v2980
    %3000 = vmatprep.subr.mxu0 0.0
    %3001 = vmatpush1.msra.mxu0 %v2981
    %3002 = vmatprep.subr.mxu0 0.0
    %3003 = vmatpush1.msra.mxu0 %v2982
    %3004 = vmatprep.subr.mxu0 0.0
    %3005 = vmatpush1.msra.mxu0 %v2983
    %3006 = vmatprep.subr.mxu0 0.0
    %3007 = vmatpush1.msra.mxu0 %v2984
    %3008 = vmatprep.subr.mxu0 0.0
    %3009 = vmatpush1.msra.mxu0 %v2985
    %3010 = vmatprep.subr.mxu0 0.0
    %3011 = vmatpush1.msra.mxu0 %v2986
    %3012 = vmatprep.subr.mxu0 0.0
    %3013 = vmatpush1.msra.mxu0 %v2987
    %3014 = vmatprep.subr.mxu0 0.0
    %3015 = vmatpush1.msra.mxu0 %v2988
    %3016 = vmatprep.subr.mxu0 0.0
    %3017 = vmatpush1.msra.mxu0 %v2989
    %3018 = vmatprep.subr.mxu0 0.0
    %3019 = vmatpush1.msra.mxu0 %v2990
    %3020 = vmatprep.subr.mxu0 0.0
    %3021 = vmatpush1.msra.mxu0 %v2991
    %3022 = vmatprep.subr.mxu0 0.0
    %3023 = vmatpush1.msra.mxu0 %v2992
    %3024 = vmatprep.subr.mxu0 0.0
    %3025 = vmatpush1.msra.mxu0 %v2993
    %3026 = vmatprep.subr.mxu0 0.0
    %3027 = vmatpush1.msra.mxu0 0.0
    %3028 = vmatprep.subr.mxu0 0.0
    %3029 = vmatpush1.msra.mxu0 0.0
    %3030 = vmatprep.subr.mxu0 0.0
    %3031 = vmatpush1.msra.mxu0 0.0
    %3032 = vmatprep.subr.mxu0 0.0
    %3033 = vmatpush1.msra.mxu0 0.0
    %3034 = vmatprep.subr.mxu0 0.0
    %3035 = vmatpush1.msra.mxu0 0.0
    %3036 = vmatprep.subr.mxu0 0.0
    %3037 = vmatpush1.msra.mxu0 0.0
    %3038 = vmatprep.subr.mxu0 0.0
    %3039 = vmatpush1.msra.mxu0 0.0
    %3040 = vmatprep.subr.mxu0 0.0
    %3041 = vmatpush1.msra.mxu0 0.0
    %3042 = vmatprep.subr.mxu0 0.0
    %3043 = vmatpush1.msra.mxu0 0.0
    %3044 = vmatprep.subr.mxu0 0.0
    %3045 = vmatpush1.msra.mxu0 0.0
    %3046 = vmatprep.subr.mxu0 0.0
    %3047 = vmatpush1.msra.mxu0 0.0
    %3048 = vmatprep.subr.mxu0 0.0
    %3049 = vmatpush1.msra.mxu0 0.0
    %3050 = vmatprep.subr.mxu0 0.0
    %3051 = vmatpush1.msra.mxu0 0.0
    %3052 = vmatprep.subr.mxu0 0.0
    %3053 = vmatpush1.msra.mxu0 0.0
    %3054 = vmatprep.subr.mxu0 0.0
    %3055 = vmatpush1.msra.mxu0 0.0
    %3056 = vmatprep.subr.mxu0 0.0
    %3057 = vmatpush1.msra.mxu0 0.0
    %3058 = vmatprep.mubr.f32.mxu0 0.0
    %3059 = vmatmul.mubr.f32.gmra.mrb[0].mxu0 %v2977
    %v3060 = vpop.f32.mrb[0].mxu0
    %v3061 = vadd.f32 0.0, %v3060
    %v3062 = vpop.f32.mrb[0].mxu0
    %3063 = vdwg.mxu0
    %v3064 = vadd.f32 %v2974, %v3061
    %v3065 = vld [vmem:[#allocation2 + $0x30] sm:$0xff]
    %v3066 = vld [vmem:[%s687] sm:$0xff]
    %v3067 = vld [vmem:[%s687 + $0x8] sm:$0xff]
    %v3068 = vld [vmem:[%s687 + $0x10] sm:$0xff]
    %v3069 = vld [vmem:[%s687 + $0x18] sm:$0xff]
    %v3070 = vld [vmem:[%s687 + $0x20] sm:$0xff]
    %v3071 = vld [vmem:[%s687 + $0x28] sm:$0xff]
    %v3072 = vld [vmem:[%s687 + $0x30] sm:$0xff]
    %v3073 = vld [vmem:[%s687 + $0x38] sm:$0xff]
    %v3074 = vld [vmem:[%s687 + $0x40] sm:$0xff]
    %v3075 = vld [vmem:[%s687 + $0x48] sm:$0xff]
    %v3076 = vld [vmem:[%s687 + $0x50] sm:$0xff]
    %v3077 = vld [vmem:[%s687 + $0x58] sm:$0xff]
    %v3078 = vld [vmem:[%s687 + $0x60] sm:$0xff]
    %v3079 = vld [vmem:[%s687 + $0x68] sm:$0xff]
    %v3080 = vld [vmem:[%s687 + $0x70] sm:$0xff]
    %v3081 = vld [vmem:[%s687 + $0x78] sm:$0xff]
    %3082 = vmatprep.subr.mxu0 0.0
    %3083 = vmatpush1.msra.mxu0 %v3066
    %3084 = vmatprep.subr.mxu0 0.0
    %3085 = vmatpush1.msra.mxu0 %v3067
    %3086 = vmatprep.subr.mxu0 0.0
    %3087 = vmatpush1.msra.mxu0 %v3068
    %3088 = vmatprep.subr.mxu0 0.0
    %3089 = vmatpush1.msra.mxu0 %v3069
    %3090 = vmatprep.subr.mxu0 0.0
    %3091 = vmatpush1.msra.mxu0 %v3070
    %3092 = vmatprep.subr.mxu0 0.0
    %3093 = vmatpush1.msra.mxu0 %v3071
    %3094 = vmatprep.subr.mxu0 0.0
    %3095 = vmatpush1.msra.mxu0 %v3072
    %3096 = vmatprep.subr.mxu0 0.0
    %3097 = vmatpush1.msra.mxu0 %v3073
    %3098 = vmatprep.subr.mxu0 0.0
    %3099 = vmatpush1.msra.mxu0 %v3074
    %3100 = vmatprep.subr.mxu0 0.0
    %3101 = vmatpush1.msra.mxu0 %v3075
    %3102 = vmatprep.subr.mxu0 0.0
    %3103 = vmatpush1.msra.mxu0 %v3076
    %3104 = vmatprep.subr.mxu0 0.0
    %3105 = vmatpush1.msra.mxu0 %v3077
    %3106 = vmatprep.subr.mxu0 0.0
    %3107 = vmatpush1.msra.mxu0 %v3078
    %3108 = vmatprep.subr.mxu0 0.0
    %3109 = vmatpush1.msra.mxu0 %v3079
    %3110 = vmatprep.subr.mxu0 0.0
    %3111 = vmatpush1.msra.mxu0 %v3080
    %3112 = vmatprep.subr.mxu0 0.0
    %3113 = vmatpush1.msra.mxu0 %v3081
    %3114 = vmatprep.subr.mxu0 0.0
    %3115 = vmatpush1.msra.mxu0 0.0
    %3116 = vmatprep.subr.mxu0 0.0
    %3117 = vmatpush1.msra.mxu0 0.0
    %3118 = vmatprep.subr.mxu0 0.0
    %3119 = vmatpush1.msra.mxu0 0.0
    %3120 = vmatprep.subr.mxu0 0.0
    %3121 = vmatpush1.msra.mxu0 0.0
    %3122 = vmatprep.subr.mxu0 0.0
    %3123 = vmatpush1.msra.mxu0 0.0
    %3124 = vmatprep.subr.mxu0 0.0
    %3125 = vmatpush1.msra.mxu0 0.0
    %3126 = vmatprep.subr.mxu0 0.0
    %3127 = vmatpush1.msra.mxu0 0.0
    %3128 = vmatprep.subr.mxu0 0.0
    %3129 = vmatpush1.msra.mxu0 0.0
    %3130 = vmatprep.subr.mxu0 0.0
    %3131 = vmatpush1.msra.mxu0 0.0
    %3132 = vmatprep.subr.mxu0 0.0
    %3133 = vmatpush1.msra.mxu0 0.0
    %3134 = vmatprep.subr.mxu0 0.0
    %3135 = vmatpush1.msra.mxu0 0.0
    %3136 = vmatprep.subr.mxu0 0.0
    %3137 = vmatpush1.msra.mxu0 0.0
    %3138 = vmatprep.subr.mxu0 0.0
    %3139 = vmatpush1.msra.mxu0 0.0
    %3140 = vmatprep.subr.mxu0 0.0
    %3141 = vmatpush1.msra.mxu0 0.0
    %3142 = vmatprep.subr.mxu0 0.0
    %3143 = vmatpush1.msra.mxu0 0.0
    %3144 = vmatprep.subr.mxu0 0.0
    %3145 = vmatpush1.msra.mxu0 0.0
    %3146 = vmatprep.mubr.f32.mxu0 0.0
    %3147 = vmatmul.mubr.f32.gmra.mrb[0].mxu0 %v3065
    %v3148 = vpop.f32.mrb[0].mxu0
    %v3149 = vadd.f32 0.0, %v3148
    %v3150 = vpop.f32.mrb[0].mxu0
    %3151 = vdwg.mxu0
    %v3152 = vadd.f32 %v3064, %v3149
    %v3153 = vld [vmem:[#allocation2 + $0x32] sm:$0xff]
    %v3154 = vld [vmem:[%s776] sm:$0xff]
    %v3155 = vld [vmem:[%s776 + $0x8] sm:$0xff]
    %v3156 = vld [vmem:[%s776 + $0x10] sm:$0xff]
    %v3157 = vld [vmem:[%s776 + $0x18] sm:$0xff]
    %v3158 = vld [vmem:[%s776 + $0x20] sm:$0xff]
    %v3159 = vld [vmem:[%s776 + $0x28] sm:$0xff]
    %v3160 = vld [vmem:[%s776 + $0x30] sm:$0xff]
    %v3161 = vld [vmem:[%s776 + $0x38] sm:$0xff]
    %v3162 = vld [vmem:[%s776 + $0x40] sm:$0xff]
    %v3163 = vld [vmem:[%s776 + $0x48] sm:$0xff]
    %v3164 = vld [vmem:[%s776 + $0x50] sm:$0xff]
    %v3165 = vld [vmem:[%s776 + $0x58] sm:$0xff]
    %v3166 = vld [vmem:[%s776 + $0x60] sm:$0xff]
    %v3167 = vld [vmem:[%s776 + $0x68] sm:$0xff]
    %v3168 = vld [vmem:[%s776 + $0x70] sm:$0xff]
    %v3169 = vld [vmem:[%s776 + $0x78] sm:$0xff]
    %3170 = vmatprep.subr.mxu0 0.0
    %3171 = vmatpush1.msra.mxu0 %v3154
    %3172 = vmatprep.subr.mxu0 0.0
    %3173 = vmatpush1.msra.mxu0 %v3155
    %3174 = vmatprep.subr.mxu0 0.0
    %3175 = vmatpush1.msra.mxu0 %v3156
    %3176 = vmatprep.subr.mxu0 0.0
    %3177 = vmatpush1.msra.mxu0 %v3157
    %3178 = vmatprep.subr.mxu0 0.0
    %3179 = vmatpush1.msra.mxu0 %v3158
    %3180 = vmatprep.subr.mxu0 0.0
    %3181 = vmatpush1.msra.mxu0 %v3159
    %3182 = vmatprep.subr.mxu0 0.0
    %3183 = vmatpush1.msra.mxu0 %v3160
    %3184 = vmatprep.subr.mxu0 0.0
    %3185 = vmatpush1.msra.mxu0 %v3161
    %3186 = vmatprep.subr.mxu0 0.0
    %3187 = vmatpush1.msra.mxu0 %v3162
    %3188 = vmatprep.subr.mxu0 0.0
    %3189 = vmatpush1.msra.mxu0 %v3163
    %3190 = vmatprep.subr.mxu0 0.0
    %3191 = vmatpush1.msra.mxu0 %v3164
    %3192 = vmatprep.subr.mxu0 0.0
    %3193 = vmatpush1.msra.mxu0 %v3165
    %3194 = vmatprep.subr.mxu0 0.0
    %3195 = vmatpush1.msra.mxu0 %v3166
    %3196 = vmatprep.subr.mxu0 0.0
    %3197 = vmatpush1.msra.mxu0 %v3167
    %3198 = vmatprep.subr.mxu0 0.0
    %3199 = vmatpush1.msra.mxu0 %v3168
    %3200 = vmatprep.subr.mxu0 0.0
    %3201 = vmatpush1.msra.mxu0 %v3169
    %3202 = vmatprep.subr.mxu0 0.0
    %3203 = vmatpush1.msra.mxu0 0.0
    %3204 = vmatprep.subr.mxu0 0.0
    %3205 = vmatpush1.msra.mxu0 0.0
    %3206 = vmatprep.subr.mxu0 0.0
    %3207 = vmatpush1.msra.mxu0 0.0
    %3208 = vmatprep.subr.mxu0 0.0
    %3209 = vmatpush1.msra.mxu0 0.0
    %3210 = vmatprep.subr.mxu0 0.0
    %3211 = vmatpush1.msra.mxu0 0.0
    %3212 = vmatprep.subr.mxu0 0.0
    %3213 = vmatpush1.msra.mxu0 0.0
    %3214 = vmatprep.subr.mxu0 0.0
    %3215 = vmatpush1.msra.mxu0 0.0
    %3216 = vmatprep.subr.mxu0 0.0
    %3217 = vmatpush1.msra.mxu0 0.0
    %3218 = vmatprep.subr.mxu0 0.0
    %3219 = vmatpush1.msra.mxu0 0.0
    %3220 = vmatprep.subr.mxu0 0.0
    %3221 = vmatpush1.msra.mxu0 0.0
    %3222 = vmatprep.subr.mxu0 0.0
    %3223 = vmatpush1.msra.mxu0 0.0
    %3224 = vmatprep.subr.mxu0 0.0
    %3225 = vmatpush1.msra.mxu0 0.0
    %3226 = vmatprep.subr.mxu0 0.0
    %3227 = vmatpush1.msra.mxu0 0.0
    %3228 = vmatprep.subr.mxu0 0.0
    %3229 = vmatpush1.msra.mxu0 0.0
    %3230 = vmatprep.subr.mxu0 0.0
    %3231 = vmatpush1.msra.mxu0 0.0
    %3232 = vmatprep.subr.mxu0 0.0
    %3233 = vmatpush1.msra.mxu0 0.0
    %3234 = vmatprep.mubr.f32.mxu0 0.0
    %3235 = vmatmul.mubr.f32.gmra.mrb[0].mxu0 %v3153
    %v3236 = vpop.f32.mrb[0].mxu0
    %v3237 = vadd.f32 0.0, %v3236
    %v3238 = vpop.f32.mrb[0].mxu0
    %3239 = vdwg.mxu0
    %v3240 = vadd.f32 %v3152, %v3237
    %v3241 = vld [vmem:[#allocation2 + $0x34] sm:$0xff]
    %v3242 = vld [vmem:[%s865] sm:$0xff]
    %v3243 = vld [vmem:[%s865 + $0x8] sm:$0xff]
    %v3244 = vld [vmem:[%s865 + $0x10] sm:$0xff]
    %v3245 = vld [vmem:[%s865 + $0x18] sm:$0xff]
    %v3246 = vld [vmem:[%s865 + $0x20] sm:$0xff]
    %v3247 = vld [vmem:[%s865 + $0x28] sm:$0xff]
    %v3248 = vld [vmem:[%s865 + $0x30] sm:$0xff]
    %v3249 = vld [vmem:[%s865 + $0x38] sm:$0xff]
    %v3250 = vld [vmem:[%s865 + $0x40] sm:$0xff]
    %v3251 = vld [vmem:[%s865 + $0x48] sm:$0xff]
    %v3252 = vld [vmem:[%s865 + $0x50] sm:$0xff]
    %v3253 = vld [vmem:[%s865 + $0x58] sm:$0xff]
    %v3254 = vld [vmem:[%s865 + $0x60] sm:$0xff]
    %v3255 = vld [vmem:[%s865 + $0x68] sm:$0xff]
    %v3256 = vld [vmem:[%s865 + $0x70] sm:$0xff]
    %v3257 = vld [vmem:[%s865 + $0x78] sm:$0xff]
    %3258 = vmatprep.subr.mxu0 0.0
    %3259 = vmatpush1.msra.mxu0 %v3242
    %3260 = vmatprep.subr.mxu0 0.0
    %3261 = vmatpush1.msra.mxu0 %v3243
    %3262 = vmatprep.subr.mxu0 0.0
    %3263 = vmatpush1.msra.mxu0 %v3244
    %3264 = vmatprep.subr.mxu0 0.0
    %3265 = vmatpush1.msra.mxu0 %v3245
    %3266 = vmatprep.subr.mxu0 0.0
    %3267 = vmatpush1.msra.mxu0 %v3246
    %3268 = vmatprep.subr.mxu0 0.0
    %3269 = vmatpush1.msra.mxu0 %v3247
    %3270 = vmatprep.subr.mxu0 0.0
    %3271 = vmatpush1.msra.mxu0 %v3248
    %3272 = vmatprep.subr.mxu0 0.0
    %3273 = vmatpush1.msra.mxu0 %v3249
    %3274 = vmatprep.subr.mxu0 0.0
    %3275 = vmatpush1.msra.mxu0 %v3250
    %3276 = vmatprep.subr.mxu0 0.0
    %3277 = vmatpush1.msra.mxu0 %v3251
    %3278 = vmatprep.subr.mxu0 0.0
    %3279 = vmatpush1.msra.mxu0 %v3252
    %3280 = vmatprep.subr.mxu0 0.0
    %3281 = vmatpush1.msra.mxu0 %v3253
    %3282 = vmatprep.subr.mxu0 0.0
    %3283 = vmatpush1.msra.mxu0 %v3254
    %3284 = vmatprep.subr.mxu0 0.0
    %3285 = vmatpush1.msra.mxu0 %v3255
    %3286 = vmatprep.subr.mxu0 0.0
    %3287 = vmatpush1.msra.mxu0 %v3256
    %3288 = vmatprep.subr.mxu0 0.0
    %3289 = vmatpush1.msra.mxu0 %v3257
    %3290 = vmatprep.subr.mxu0 0.0
    %3291 = vmatpush1.msra.mxu0 0.0
    %3292 = vmatprep.subr.mxu0 0.0
    %3293 = vmatpush1.msra.mxu0 0.0
    %3294 = vmatprep.subr.mxu0 0.0
    %3295 = vmatpush1.msra.mxu0 0.0
    %3296 = vmatprep.subr.mxu0 0.0
    %3297 = vmatpush1.msra.mxu0 0.0
    %3298 = vmatprep.subr.mxu0 0.0
    %3299 = vmatpush1.msra.mxu0 0.0
    %3300 = vmatprep.subr.mxu0 0.0
    %3301 = vmatpush1.msra.mxu0 0.0
    %3302 = vmatprep.subr.mxu0 0.0
    %3303 = vmatpush1.msra.mxu0 0.0
    %3304 = vmatprep.subr.mxu0 0.0
    %3305 = vmatpush1.msra.mxu0 0.0
    %3306 = vmatprep.subr.mxu0 0.0
    %3307 = vmatpush1.msra.mxu0 0.0
    %3308 = vmatprep.subr.mxu0 0.0
    %3309 = vmatpush1.msra.mxu0 0.0
    %3310 = vmatprep.subr.mxu0 0.0
    %3311 = vmatpush1.msra.mxu0 0.0
    %3312 = vmatprep.subr.mxu0 0.0
    %3313 = vmatpush1.msra.mxu0 0.0
    %3314 = vmatprep.subr.mxu0 0.0
    %3315 = vmatpush1.msra.mxu0 0.0
    %3316 = vmatprep.subr.mxu0 0.0
    %3317 = vmatpush1.msra.mxu0 0.0
    %3318 = vmatprep.subr.mxu0 0.0
    %3319 = vmatpush1.msra.mxu0 0.0
    %3320 = vmatprep.subr.mxu0 0.0
    %3321 = vmatpush1.msra.mxu0 0.0
    %3322 = vmatprep.mubr.f32.mxu0 0.0
    %3323 = vmatmul.mubr.f32.gmra.mrb[0].mxu0 %v3241
    %v3324 = vpop.f32.mrb[0].mxu0
    %v3325 = vadd.f32 0.0, %v3324
    %v3326 = vpop.f32.mrb[0].mxu0
    %3327 = vdwg.mxu0
    %v3328 = vadd.f32 %v3240, %v3325
    %v3329 = vld [vmem:[#allocation2 + $0x3c] sm:$0xff]
    %v3330 = vld [vmem:[%s954] sm:$0xff]
    %v3331 = vld [vmem:[%s954 + $0x8] sm:$0xff]
    %v3332 = vld [vmem:[%s954 + $0x10] sm:$0xff]
    %v3333 = vld [vmem:[%s954 + $0x18] sm:$0xff]
    %v3334 = vld [vmem:[%s954 + $0x20] sm:$0xff]
    %v3335 = vld [vmem:[%s954 + $0x28] sm:$0xff]
    %v3336 = vld [vmem:[%s954 + $0x30] sm:$0xff]
    %v3337 = vld [vmem:[%s954 + $0x38] sm:$0xff]
    %v3338 = vld [vmem:[%s954 + $0x40] sm:$0xff]
    %v3339 = vld [vmem:[%s954 + $0x48] sm:$0xff]
    %v3340 = vld [vmem:[%s954 + $0x50] sm:$0xff]
    %v3341 = vld [vmem:[%s954 + $0x58] sm:$0xff]
    %v3342 = vld [vmem:[%s954 + $0x60] sm:$0xff]
    %v3343 = vld [vmem:[%s954 + $0x68] sm:$0xff]
    %v3344 = vld [vmem:[%s954 + $0x70] sm:$0xff]
    %v3345 = vld [vmem:[%s954 + $0x78] sm:$0xff]
    %3346 = vmatprep.subr.mxu0 0.0
    %3347 = vmatpush1.msra.mxu0 %v3330
    %3348 = vmatprep.subr.mxu0 0.0
    %3349 = vmatpush1.msra.mxu0 %v3331
    %3350 = vmatprep.subr.mxu0 0.0
    %3351 = vmatpush1.msra.mxu0 %v3332
    %3352 = vmatprep.subr.mxu0 0.0
    %3353 = vmatpush1.msra.mxu0 %v3333
    %3354 = vmatprep.subr.mxu0 0.0
    %3355 = vmatpush1.msra.mxu0 %v3334
    %3356 = vmatprep.subr.mxu0 0.0
    %3357 = vmatpush1.msra.mxu0 %v3335
    %3358 = vmatprep.subr.mxu0 0.0
    %3359 = vmatpush1.msra.mxu0 %v3336
    %3360 = vmatprep.subr.mxu0 0.0
    %3361 = vmatpush1.msra.mxu0 %v3337
    %3362 = vmatprep.subr.mxu0 0.0
    %3363 = vmatpush1.msra.mxu0 %v3338
    %3364 = vmatprep.subr.mxu0 0.0
    %3365 = vmatpush1.msra.mxu0 %v3339
    %3366 = vmatprep.subr.mxu0 0.0
    %3367 = vmatpush1.msra.mxu0 %v3340
    %3368 = vmatprep.subr.mxu0 0.0
    %3369 = vmatpush1.msra.mxu0 %v3341
    %3370 = vmatprep.subr.mxu0 0.0
    %3371 = vmatpush1.msra.mxu0 %v3342
    %3372 = vmatprep.subr.mxu0 0.0
    %3373 = vmatpush1.msra.mxu0 %v3343
    %3374 = vmatprep.subr.mxu0 0.0
    %3375 = vmatpush1.msra.mxu0 %v3344
    %3376 = vmatprep.subr.mxu0 0.0
    %3377 = vmatpush1.msra.mxu0 %v3345
    %3378 = vmatprep.subr.mxu0 0.0
    %3379 = vmatpush1.msra.mxu0 0.0
    %3380 = vmatprep.subr.mxu0 0.0
    %3381 = vmatpush1.msra.mxu0 0.0
    %3382 = vmatprep.subr.mxu0 0.0
    %3383 = vmatpush1.msra.mxu0 0.0
    %3384 = vmatprep.subr.mxu0 0.0
    %3385 = vmatpush1.msra.mxu0 0.0
    %3386 = vmatprep.subr.mxu0 0.0
    %3387 = vmatpush1.msra.mxu0 0.0
    %3388 = vmatprep.subr.mxu0 0.0
    %3389 = vmatpush1.msra.mxu0 0.0
    %3390 = vmatprep.subr.mxu0 0.0
    %3391 = vmatpush1.msra.mxu0 0.0
    %3392 = vmatprep.subr.mxu0 0.0
    %3393 = vmatpush1.msra.mxu0 0.0
    %3394 = vmatprep.subr.mxu0 0.0
    %3395 = vmatpush1.msra.mxu0 0.0
    %3396 = vmatprep.subr.mxu0 0.0
    %3397 = vmatpush1.msra.mxu0 0.0
    %3398 = vmatprep.subr.mxu0 0.0
    %3399 = vmatpush1.msra.mxu0 0.0
    %3400 = vmatprep.subr.mxu0 0.0
    %3401 = vmatpush1.msra.mxu0 0.0
    %3402 = vmatprep.subr.mxu0 0.0
    %3403 = vmatpush1.msra.mxu0 0.0
    %3404 = vmatprep.subr.mxu0 0.0
    %3405 = vmatpush1.msra.mxu0 0.0
    %3406 = vmatprep.subr.mxu0 0.0
    %3407 = vmatpush1.msra.mxu0 0.0
    %3408 = vmatprep.subr.mxu0 0.0
    %3409 = vmatpush1.msra.mxu0 0.0
    %3410 = vmatprep.mubr.f32.mxu0 0.0
    %3411 = vmatmul.mubr.f32.gmra.mrb[0].mxu0 %v3329
    %v3412 = vpop.f32.mrb[0].mxu0
    %v3413 = vadd.f32 0.0, %v3412
    %v3414 = vpop.f32.mrb[0].mxu0
    %3415 = vdwg.mxu0
    %v3416 = vadd.f32 %v3328, %v3413
    %v3417 = vld [vmem:[#allocation2 + $0x3e] sm:$0xff]
    %v3418 = vld [vmem:[%s1043] sm:$0xff]
    %v3419 = vld [vmem:[%s1043 + $0x8] sm:$0xff]
    %v3420 = vld [vmem:[%s1043 + $0x10] sm:$0xff]
    %v3421 = vld [vmem:[%s1043 + $0x18] sm:$0xff]
    %v3422 = vld [vmem:[%s1043 + $0x20] sm:$0xff]
    %v3423 = vld [vmem:[%s1043 + $0x28] sm:$0xff]
    %v3424 = vld [vmem:[%s1043 + $0x30] sm:$0xff]
    %v3425 = vld [vmem:[%s1043 + $0x38] sm:$0xff]
    %v3426 = vld [vmem:[%s1043 + $0x40] sm:$0xff]
    %v3427 = vld [vmem:[%s1043 + $0x48] sm:$0xff]
    %v3428 = vld [vmem:[%s1043 + $0x50] sm:$0xff]
    %v3429 = vld [vmem:[%s1043 + $0x58] sm:$0xff]
    %v3430 = vld [vmem:[%s1043 + $0x60] sm:$0xff]
    %v3431 = vld [vmem:[%s1043 + $0x68] sm:$0xff]
    %v3432 = vld [vmem:[%s1043 + $0x70] sm:$0xff]
    %v3433 = vld [vmem:[%s1043 + $0x78] sm:$0xff]
    %3434 = vmatprep.subr.mxu0 0.0
    %3435 = vmatpush1.msra.mxu0 %v3418
    %3436 = vmatprep.subr.mxu0 0.0
    %3437 = vmatpush1.msra.mxu0 %v3419
    %3438 = vmatprep.subr.mxu0 0.0
    %3439 = vmatpush1.msra.mxu0 %v3420
    %3440 = vmatprep.subr.mxu0 0.0
    %3441 = vmatpush1.msra.mxu0 %v3421
    %3442 = vmatprep.subr.mxu0 0.0
    %3443 = vmatpush1.msra.mxu0 %v3422
    %3444 = vmatprep.subr.mxu0 0.0
    %3445 = vmatpush1.msra.mxu0 %v3423
    %3446 = vmatprep.subr.mxu0 0.0
    %3447 = vmatpush1.msra.mxu0 %v3424
    %3448 = vmatprep.subr.mxu0 0.0
    %3449 = vmatpush1.msra.mxu0 %v3425
    %3450 = vmatprep.subr.mxu0 0.0
    %3451 = vmatpush1.msra.mxu0 %v3426
    %3452 = vmatprep.subr.mxu0 0.0
    %3453 = vmatpush1.msra.mxu0 %v3427
    %3454 = vmatprep.subr.mxu0 0.0
    %3455 = vmatpush1.msra.mxu0 %v3428
    %3456 = vmatprep.subr.mxu0 0.0
    %3457 = vmatpush1.msra.mxu0 %v3429
    %3458 = vmatprep.subr.mxu0 0.0
    %3459 = vmatpush1.msra.mxu0 %v3430
    %3460 = vmatprep.subr.mxu0 0.0
    %3461 = vmatpush1.msra.mxu0 %v3431
    %3462 = vmatprep.subr.mxu0 0.0
    %3463 = vmatpush1.msra.mxu0 %v3432
    %3464 = vmatprep.subr.mxu0 0.0
    %3465 = vmatpush1.msra.mxu0 %v3433
    %3466 = vmatprep.subr.mxu0 0.0
    %3467 = vmatpush1.msra.mxu0 0.0
    %3468 = vmatprep.subr.mxu0 0.0
    %3469 = vmatpush1.msra.mxu0 0.0
    %3470 = vmatprep.subr.mxu0 0.0
    %3471 = vmatpush1.msra.mxu0 0.0
    %3472 = vmatprep.subr.mxu0 0.0
    %3473 = vmatpush1.msra.mxu0 0.0
    %3474 = vmatprep.subr.mxu0 0.0
    %3475 = vmatpush1.msra.mxu0 0.0
    %3476 = vmatprep.subr.mxu0 0.0
    %3477 = vmatpush1.msra.mxu0 0.0
    %3478 = vmatprep.subr.mxu0 0.0
    %3479 = vmatpush1.msra.mxu0 0.0
    %3480 = vmatprep.subr.mxu0 0.0
    %3481 = vmatpush1.msra.mxu0 0.0
    %3482 = vmatprep.subr.mxu0 0.0
    %3483 = vmatpush1.msra.mxu0 0.0
    %3484 = vmatprep.subr.mxu0 0.0
    %3485 = vmatpush1.msra.mxu0 0.0
    %3486 = vmatprep.subr.mxu0 0.0
    %3487 = vmatpush1.msra.mxu0 0.0
    %3488 = vmatprep.subr.mxu0 0.0
    %3489 = vmatpush1.msra.mxu0 0.0
    %3490 = vmatprep.subr.mxu0 0.0
    %3491 = vmatpush1.msra.mxu0 0.0
    %3492 = vmatprep.subr.mxu0 0.0
    %3493 = vmatpush1.msra.mxu0 0.0
    %3494 = vmatprep.subr.mxu0 0.0
    %3495 = vmatpush1.msra.mxu0 0.0
    %3496 = vmatprep.subr.mxu0 0.0
    %3497 = vmatpush1.msra.mxu0 0.0
    %3498 = vmatprep.mubr.f32.mxu0 0.0
    %3499 = vmatmul.mubr.f32.gmra.mrb[0].mxu0 %v3417
    %v3500 = vpop.f32.mrb[0].mxu0
    %v3501 = vadd.f32 0.0, %v3500
    %v3502 = vpop.f32.mrb[0].mxu0
    %3503 = vdwg.mxu0
    %v3504 = vadd.f32 %v3416, %v3501
    %v3505 = vld [vmem:[#allocation2 + $0x40] sm:$0xff]
    %v3506 = vld [vmem:[%s1132] sm:$0xff]
    %v3507 = vld [vmem:[%s1132 + $0x8] sm:$0xff]
    %v3508 = vld [vmem:[%s1132 + $0x10] sm:$0xff]
    %v3509 = vld [vmem:[%s1132 + $0x18] sm:$0xff]
    %v3510 = vld [vmem:[%s1132 + $0x20] sm:$0xff]
    %v3511 = vld [vmem:[%s1132 + $0x28] sm:$0xff]
    %v3512 = vld [vmem:[%s1132 + $0x30] sm:$0xff]
    %v3513 = vld [vmem:[%s1132 + $0x38] sm:$0xff]
    %v3514 = vld [vmem:[%s1132 + $0x40] sm:$0xff]
    %v3515 = vld [vmem:[%s1132 + $0x48] sm:$0xff]
    %v3516 = vld [vmem:[%s1132 + $0x50] sm:$0xff]
    %v3517 = vld [vmem:[%s1132 + $0x58] sm:$0xff]
    %v3518 = vld [vmem:[%s1132 + $0x60] sm:$0xff]
    %v3519 = vld [vmem:[%s1132 + $0x68] sm:$0xff]
    %v3520 = vld [vmem:[%s1132 + $0x70] sm:$0xff]
    %v3521 = vld [vmem:[%s1132 + $0x78] sm:$0xff]
    %3522 = vmatprep.subr.mxu0 0.0
    %3523 = vmatpush1.msra.mxu0 %v3506
    %3524 = vmatprep.subr.mxu0 0.0
    %3525 = vmatpush1.msra.mxu0 %v3507
    %3526 = vmatprep.subr.mxu0 0.0
    %3527 = vmatpush1.msra.mxu0 %v3508
    %3528 = vmatprep.subr.mxu0 0.0
    %3529 = vmatpush1.msra.mxu0 %v3509
    %3530 = vmatprep.subr.mxu0 0.0
    %3531 = vmatpush1.msra.mxu0 %v3510
    %3532 = vmatprep.subr.mxu0 0.0
    %3533 = vmatpush1.msra.mxu0 %v3511
    %3534 = vmatprep.subr.mxu0 0.0
    %3535 = vmatpush1.msra.mxu0 %v3512
    %3536 = vmatprep.subr.mxu0 0.0
    %3537 = vmatpush1.msra.mxu0 %v3513
    %3538 = vmatprep.subr.mxu0 0.0
    %3539 = vmatpush1.msra.mxu0 %v3514
    %3540 = vmatprep.subr.mxu0 0.0
    %3541 = vmatpush1.msra.mxu0 %v3515
    %3542 = vmatprep.subr.mxu0 0.0
    %3543 = vmatpush1.msra.mxu0 %v3516
    %3544 = vmatprep.subr.mxu0 0.0
    %3545 = vmatpush1.msra.mxu0 %v3517
    %3546 = vmatprep.subr.mxu0 0.0
    %3547 = vmatpush1.msra.mxu0 %v3518
    %3548 = vmatprep.subr.mxu0 0.0
    %3549 = vmatpush1.msra.mxu0 %v3519
    %3550 = vmatprep.subr.mxu0 0.0
    %3551 = vmatpush1.msra.mxu0 %v3520
    %3552 = vmatprep.subr.mxu0 0.0
    %3553 = vmatpush1.msra.mxu0 %v3521
    %3554 = vmatprep.subr.mxu0 0.0
    %3555 = vmatpush1.msra.mxu0 0.0
    %3556 = vmatprep.subr.mxu0 0.0
    %3557 = vmatpush1.msra.mxu0 0.0
    %3558 = vmatprep.subr.mxu0 0.0
    %3559 = vmatpush1.msra.mxu0 0.0
    %3560 = vmatprep.subr.mxu0 0.0
    %3561 = vmatpush1.msra.mxu0 0.0
    %3562 = vmatprep.subr.mxu0 0.0
    %3563 = vmatpush1.msra.mxu0 0.0
    %3564 = vmatprep.subr.mxu0 0.0
    %3565 = vmatpush1.msra.mxu0 0.0
    %3566 = vmatprep.subr.mxu0 0.0
    %3567 = vmatpush1.msra.mxu0 0.0
    %3568 = vmatprep.subr.mxu0 0.0
    %3569 = vmatpush1.msra.mxu0 0.0
    %3570 = vmatprep.subr.mxu0 0.0
    %3571 = vmatpush1.msra.mxu0 0.0
    %3572 = vmatprep.subr.mxu0 0.0
    %3573 = vmatpush1.msra.mxu0 0.0
    %3574 = vmatprep.subr.mxu0 0.0
    %3575 = vmatpush1.msra.mxu0 0.0
    %3576 = vmatprep.subr.mxu0 0.0
    %3577 = vmatpush1.msra.mxu0 0.0
    %3578 = vmatprep.subr.mxu0 0.0
    %3579 = vmatpush1.msra.mxu0 0.0
    %3580 = vmatprep.subr.mxu0 0.0
    %3581 = vmatpush1.msra.mxu0 0.0
    %3582 = vmatprep.subr.mxu0 0.0
    %3583 = vmatpush1.msra.mxu0 0.0
    %3584 = vmatprep.subr.mxu0 0.0
    %3585 = vmatpush1.msra.mxu0 0.0
    %3586 = vmatprep.mubr.f32.mxu0 0.0
    %3587 = vmatmul.mubr.f32.gmra.mrb[0].mxu0 %v3505
    %v3588 = vpop.f32.mrb[0].mxu0
    %v3589 = vadd.f32 0.0, %v3588
    %v3590 = vpop.f32.mrb[0].mxu0
    %3591 = vdwg.mxu0
    %v3592 = vadd.f32 %v3504, %v3589
    %3593 = vst [vmem:[#allocation3 + $0x18] sm:$0xff] %v3592
    %v3594 = vld [vmem:[#allocation3] sm:$0xff]
    %v3595 = vld [vmem:[#allocation3 + $0x8] sm:$0xff]
    %v3596 = vld [vmem:[#allocation3 + $0x10] sm:$0xff]
    %v3597 = vld [vmem:[#allocation3 + $0x18] sm:$0xff]
    %v3598 = vld [vmem:[%s5] sm:$0x1]
    %v3599 = vld [vmem:[%s6] sm:$0x1]
    %v3600 = vadd.f32 %v3594, %v3595
    %v3601 = vadd.f32 %v3600, %v3596
    %v3602 = vadd.f32 %v3601, %v3597
    %v3603 = vrot.slane %v3602, 4
    %v3604 = vadd.f32 %v3602, %v3603
    %v3605 = vrot.slane %v3604, 2
    %v3606 = vadd.f32 %v3604, %v3605
    %v3607 = vrot.slane %v3606, 1
    %v3608 = vadd.f32 %v3606, %v3607
    %v3609 = vrcp.pop 32.0
    %v3610 = vmul.f32 %v3608, %v3609
    %v3611 = vmul.f32 %v3594, %v3594
    %v3612 = vmul.f32 %v3595, %v3595
    %v3613 = vmul.f32 %v3596, %v3596
    %v3614 = vmul.f32 %v3597, %v3597
    %v3615 = vadd.f32 %v3611, %v3612
    %v3616 = vadd.f32 %v3615, %v3613
    %v3617 = vadd.f32 %v3616, %v3614
    %v3618 = vrot.slane %v3617, 4
    %v3619 = vadd.f32 %v3617, %v3618
    %v3620 = vrot.slane %v3619, 2
    %v3621 = vadd.f32 %v3619, %v3620
    %v3622 = vrot.slane %v3621, 1
    %v3623 = vadd.f32 %v3621, %v3622
    %v3624 = vmul.f32 %v3623, %v3609
    %v3625 = vmul.f32 %v3610, %v3610
    %v3626 = vsub.f32 %v3624, %v3625
    %v3627 = vmax.f32 %v3626, 0.0
    %v3628 = vadd.f32 %v3627, 1e-05
    %v3629 = vrsqrt.pop %v3628
    %v3630 = vmul.f32 %v3598, %v3629
    %v3631 = vmul.f32 %v3610, %v3630
    %v3632 = vsub.f32 %v3599, %v3631
    %v3634 = vlaneseq
    %v3635 = vshrl.u32 %v3634, 7
    %v3636 = vsub.s32 0, %v3635
    %v3637 = vrot.slane %v3630, %v3636
    %v3639 = vmul.f32 %v3594, %v3637
    %v3640 = vmul.f32 %v3595, %v3637
    %v3641 = vmul.f32 %v3596, %v3637
    %v3642 = vmul.f32 %v3597, %v3637
    %v3644 = vlaneseq
    %v3645 = vshrl.u32 %v3644, 7
    %v3646 = vsub.s32 0, %v3645
    %v3647 = vrot.slane %v3632, %v3646
    %v3649 = vadd.f32 %v3639, %v3647
    %v3650 = vadd.f32 %v3640, %v3647
    %v3651 = vadd.f32 %v3641, %v3647
    %v3652 = vadd.f32 %v3642, %v3647
    %v3653 = vmax.f32 %v3649, 0.0
    %v3654 = vmax.f32 %v3650, 0.0
    %v3655 = vmax.f32 %v3651, 0.0
    %v3656 = vmax.f32 %v3652, 0.0
    %3657 = vst [vmem:[#allocation4] sm:$0xff] 0.0
    %3658 = vst [vmem:[#allocation4 + $0x8] sm:$0xff] 0.0
    %3659 = vst [vmem:[#allocation4 + $0x10] sm:$0xff] 0.0
    %3660 = vst [vmem:[#allocation4 + $0x18] sm:$0xff] 0.0
    %v3662 = vrot.slane %v3653, 2
    %v3664 = vmax.f32 %v3653, %v3662
    %v3666 = vrot.slane %v3654, 2
    %v3668 = vmax.f32 %v3654, %v3666
    %v3669 = vmax.f32 %v3664, %v3668
    %3670 = vst [vmem:[#allocation4 + $0xa] sm:$0x3] %v3669
    %3671 = vst [vmem:[#allocation4 + $0x8] sm:$0x30] %v3669
    %v3673 = vrot.slane %v3655, 2
    %v3675 = vmax.f32 %v3655, %v3673
    %v3677 = vrot.slane %v3656, 2
    %v3679 = vmax.f32 %v3656, %v3677
    %v3680 = vmax.f32 %v3675, %v3679
    %3681 = vst [vmem:[#allocation4 + $0x12] sm:$0x3] %v3680
    %3682 = vst [vmem:[#allocation4 + $0x10] sm:$0x30] %v3680
    %v3683 = vld [vmem:[#allocation4] sm:$0xf]
    %v3684 = vld [vmem:[%s7] sm:$0xff]
    %v3685 = vld [vmem:[%s7 + $0x8] sm:$0xff]
    %v3686 = vld [vmem:[%s7 + $0x10] sm:$0xff]
    %v3687 = vld [vmem:[%s7 + $0x18] sm:$0xff]
    %v3688 = vld [vmem:[%s7 + $0x20] sm:$0xff]
    %v3689 = vld [vmem:[%s7 + $0x28] sm:$0xff]
    %v3690 = vld [vmem:[%s7 + $0x30] sm:$0xff]
    %v3691 = vld [vmem:[%s7 + $0x38] sm:$0xff]
    %v3692 = vld [vmem:[%s7 + $0x40] sm:$0xff]
    %v3693 = vld [vmem:[%s7 + $0x48] sm:$0xff]
    %v3694 = vld [vmem:[%s7 + $0x50] sm:$0xff]
    %v3695 = vld [vmem:[%s7 + $0x58] sm:$0xff]
    %v3696 = vld [vmem:[%s7 + $0x60] sm:$0xff]
    %v3697 = vld [vmem:[%s7 + $0x68] sm:$0xff]
    %v3698 = vld [vmem:[%s7 + $0x70] sm:$0xff]
    %v3699 = vld [vmem:[%s7 + $0x78] sm:$0xff]
    %v3700 = vld [vmem:[%s7 + $0x80] sm:$0xff]
    %v3701 = vld [vmem:[%s7 + $0x88] sm:$0xff]
    %v3702 = vld [vmem:[%s7 + $0x90] sm:$0xff]
    %v3703 = vld [vmem:[%s7 + $0x98] sm:$0xff]
    %v3704 = vld [vmem:[%s7 + $0xa0] sm:$0xff]
    %v3705 = vld [vmem:[%s7 + $0xa8] sm:$0xff]
    %v3706 = vld [vmem:[%s7 + $0xb0] sm:$0xff]
    %v3707 = vld [vmem:[%s7 + $0xb8] sm:$0xff]
    %v3708 = vld [vmem:[%s7 + $0xc0] sm:$0xff]
    %v3709 = vld [vmem:[%s7 + $0xc8] sm:$0xff]
    %v3710 = vld [vmem:[%s7 + $0xd0] sm:$0xff]
    %v3711 = vld [vmem:[%s7 + $0xd8] sm:$0xff]
    %v3712 = vld [vmem:[%s7 + $0xe0] sm:$0xff]
    %v3713 = vld [vmem:[%s7 + $0xe8] sm:$0xff]
    %v3714 = vld [vmem:[%s7 + $0xf0] sm:$0xff]
    %v3715 = vld [vmem:[%s7 + $0xf8] sm:$0xff]
    %v3716 = vld [vmem:[#allocation4 + $0x2] sm:$0xf]
    %s3717 = scalar_lea.vmem %s7, 256
    %v3718 = vld [vmem:[%s3717] sm:$0xff]
    %v3719 = vld [vmem:[%s3717 + $0x8] sm:$0xff]
    %v3720 = vld [vmem:[%s3717 + $0x10] sm:$0xff]
    %v3721 = vld [vmem:[%s3717 + $0x18] sm:$0xff]
    %v3722 = vld [vmem:[%s3717 + $0x20] sm:$0xff]
    %v3723 = vld [vmem:[%s3717 + $0x28] sm:$0xff]
    %v3724 = vld [vmem:[%s3717 + $0x30] sm:$0xff]
    %v3725 = vld [vmem:[%s3717 + $0x38] sm:$0xff]
    %v3726 = vld [vmem:[%s3717 + $0x40] sm:$0xff]
    %v3727 = vld [vmem:[%s3717 + $0x48] sm:$0xff]
    %v3728 = vld [vmem:[%s3717 + $0x50] sm:$0xff]
    %v3729 = vld [vmem:[%s3717 + $0x58] sm:$0xff]
    %v3730 = vld [vmem:[%s3717 + $0x60] sm:$0xff]
    %v3731 = vld [vmem:[%s3717 + $0x68] sm:$0xff]
    %v3732 = vld [vmem:[%s3717 + $0x70] sm:$0xff]
    %v3733 = vld [vmem:[%s3717 + $0x78] sm:$0xff]
    %v3734 = vld [vmem:[%s3717 + $0x80] sm:$0xff]
    %v3735 = vld [vmem:[%s3717 + $0x88] sm:$0xff]
    %v3736 = vld [vmem:[%s3717 + $0x90] sm:$0xff]
    %v3737 = vld [vmem:[%s3717 + $0x98] sm:$0xff]
    %v3738 = vld [vmem:[%s3717 + $0xa0] sm:$0xff]
    %v3739 = vld [vmem:[%s3717 + $0xa8] sm:$0xff]
    %v3740 = vld [vmem:[%s3717 + $0xb0] sm:$0xff]
    %v3741 = vld [vmem:[%s3717 + $0xb8] sm:$0xff]
    %v3742 = vld [vmem:[%s3717 + $0xc0] sm:$0xff]
    %v3743 = vld [vmem:[%s3717 + $0xc8] sm:$0xff]
    %v3744 = vld [vmem:[%s3717 + $0xd0] sm:$0xff]
    %v3745 = vld [vmem:[%s3717 + $0xd8] sm:$0xff]
    %v3746 = vld [vmem:[%s3717 + $0xe0] sm:$0xff]
    %v3747 = vld [vmem:[%s3717 + $0xe8] sm:$0xff]
    %v3748 = vld [vmem:[%s3717 + $0xf0] sm:$0xff]
    %v3749 = vld [vmem:[%s3717 + $0xf8] sm:$0xff]
    %3750 = vmatprep.subr.mxu0 %v3719
    %3751 = vmatpush1.msra.mxu0 %v3718
    %3752 = vmatprep.subr.mxu0 %v3721
    %3753 = vmatpush1.msra.mxu0 %v3720
    %3754 = vmatprep.subr.mxu0 %v3723
    %3755 = vmatpush1.msra.mxu0 %v3722
    %3756 = vmatprep.subr.mxu0 %v3725
    %3757 = vmatpush1.msra.mxu0 %v3724
    %3758 = vmatprep.subr.mxu0 %v3727
    %3759 = vmatpush1.msra.mxu0 %v3726
    %3760 = vmatprep.subr.mxu0 %v3729
    %3761 = vmatpush1.msra.mxu0 %v3728
    %3762 = vmatprep.subr.mxu0 %v3731
    %3763 = vmatpush1.msra.mxu0 %v3730
    %3764 = vmatprep.subr.mxu0 %v3733
    %3765 = vmatpush1.msra.mxu0 %v3732
    %3766 = vmatprep.subr.mxu0 %v3735
    %3767 = vmatpush1.msra.mxu0 %v3734
    %3768 = vmatprep.subr.mxu0 %v3737
    %3769 = vmatpush1.msra.mxu0 %v3736
    %3770 = vmatprep.subr.mxu0 %v3739
    %3771 = vmatpush1.msra.mxu0 %v3738
    %3772 = vmatprep.subr.mxu0 %v3741
    %3773 = vmatpush1.msra.mxu0 %v3740
    %3774 = vmatprep.subr.mxu0 %v3743
    %3775 = vmatpush1.msra.mxu0 %v3742
    %3776 = vmatprep.subr.mxu0 %v3745
    %3777 = vmatpush1.msra.mxu0 %v3744
    %3778 = vmatprep.subr.mxu0 %v3747
    %3779 = vmatpush1.msra.mxu0 %v3746
    %3780 = vmatprep.subr.mxu0 %v3749
    %3781 = vmatpush1.msra.mxu0 %v3748
    %3782 = vmatprep.subr.mxu0 0.0
    %3783 = vmatpush1.msra.mxu0 0.0
    %3784 = vmatprep.subr.mxu0 0.0
    %3785 = vmatpush1.msra.mxu0 0.0
    %3786 = vmatprep.subr.mxu0 0.0
    %3787 = vmatpush1.msra.mxu0 0.0
    %3788 = vmatprep.subr.mxu0 0.0
    %3789 = vmatpush1.msra.mxu0 0.0
    %3790 = vmatprep.subr.mxu0 0.0
    %3791 = vmatpush1.msra.mxu0 0.0
    %3792 = vmatprep.subr.mxu0 0.0
    %3793 = vmatpush1.msra.mxu0 0.0
    %3794 = vmatprep.subr.mxu0 0.0
    %3795 = vmatpush1.msra.mxu0 0.0
    %3796 = vmatprep.subr.mxu0 0.0
    %3797 = vmatpush1.msra.mxu0 0.0
    %3798 = vmatprep.subr.mxu0 0.0
    %3799 = vmatpush1.msra.mxu0 0.0
    %3800 = vmatprep.subr.mxu0 0.0
    %3801 = vmatpush1.msra.mxu0 0.0
    %3802 = vmatprep.subr.mxu0 0.0
    %3803 = vmatpush1.msra.mxu0 0.0
    %3804 = vmatprep.subr.mxu0 0.0
    %3805 = vmatpush1.msra.mxu0 0.0
    %3806 = vmatprep.subr.mxu0 0.0
    %3807 = vmatpush1.msra.mxu0 0.0
    %3808 = vmatprep.subr.mxu0 0.0
    %3809 = vmatpush1.msra.mxu0 0.0
    %3810 = vmatprep.subr.mxu0 0.0
    %3811 = vmatpush1.msra.mxu0 0.0
    %3812 = vmatprep.subr.mxu0 0.0
    %3813 = vmatpush1.msra.mxu0 0.0
    %3814 = vmatprep.mubr.f32.mxu0 0.0
    %3815 = vmatmul.mubr.f32.gmra.mrb[0].mxu0 %v3716
    %v3816 = vpop.f32.mrb[0].mxu0
    %v3817 = vadd.f32 0.0, %v3816
    %v3818 = vpop.f32.mrb[0].mxu0
    %v3819 = vadd.f32 0.0, %v3818
    %3820 = vdwg.mxu0
    %3821 = vmatprep.subr.mxu0 %v3685
    %3822 = vmatpush1.msra.mxu0 %v3684
    %3823 = vmatprep.subr.mxu0 %v3687
    %3824 = vmatpush1.msra.mxu0 %v3686
    %3825 = vmatprep.subr.mxu0 %v3689
    %3826 = vmatpush1.msra.mxu0 %v3688
    %3827 = vmatprep.subr.mxu0 %v3691
    %3828 = vmatpush1.msra.mxu0 %v3690
    %3829 = vmatprep.subr.mxu0 %v3693
    %3830 = vmatpush1.msra.mxu0 %v3692
    %3831 = vmatprep.subr.mxu0 %v3695
    %3832 = vmatpush1.msra.mxu0 %v3694
    %3833 = vmatprep.subr.mxu0 %v3697
    %3834 = vmatpush1.msra.mxu0 %v3696
    %3835 = vmatprep.subr.mxu0 %v3699
    %3836 = vmatpush1.msra.mxu0 %v3698
    %3837 = vmatprep.subr.mxu0 %v3701
    %3838 = vmatpush1.msra.mxu0 %v3700
    %3839 = vmatprep.subr.mxu0 %v3703
    %3840 = vmatpush1.msra.mxu0 %v3702
    %3841 = vmatprep.subr.mxu0 %v3705
    %3842 = vmatpush1.msra.mxu0 %v3704
    %3843 = vmatprep.subr.mxu0 %v3707
    %3844 = vmatpush1.msra.mxu0 %v3706
    %3845 = vmatprep.subr.mxu0 %v3709
    %3846 = vmatpush1.msra.mxu0 %v3708
    %3847 = vmatprep.subr.mxu0 %v3711
    %3848 = vmatpush1.msra.mxu0 %v3710
    %3849 = vmatprep.subr.mxu0 %v3713
    %3850 = vmatpush1.msra.mxu0 %v3712
    %3851 = vmatprep.subr.mxu0 %v3715
    %3852 = vmatpush1.msra.mxu0 %v3714
    %3853 = vmatprep.subr.mxu0 0.0
    %3854 = vmatpush1.msra.mxu0 0.0
    %3855 = vmatprep.subr.mxu0 0.0
    %3856 = vmatpush1.msra.mxu0 0.0
    %3857 = vmatprep.subr.mxu0 0.0
    %3858 = vmatpush1.msra.mxu0 0.0
    %3859 = vmatprep.subr.mxu0 0.0
    %3860 = vmatpush1.msra.mxu0 0.0
    %3861 = vmatprep.subr.mxu0 0.0
    %3862 = vmatpush1.msra.mxu0 0.0
    %3863 = vmatprep.subr.mxu0 0.0
    %3864 = vmatpush1.msra.mxu0 0.0
    %3865 = vmatprep.subr.mxu0 0.0
    %3866 = vmatpush1.msra.mxu0 0.0
    %3867 = vmatprep.subr.mxu0 0.0
    %3868 = vmatpush1.msra.mxu0 0.0
    %3869 = vmatprep.subr.mxu0 0.0
    %3870 = vmatpush1.msra.mxu0 0.0
    %3871 = vmatprep.subr.mxu0 0.0
    %3872 = vmatpush1.msra.mxu0 0.0
    %3873 = vmatprep.subr.mxu0 0.0
    %3874 = vmatpush1.msra.mxu0 0.0
    %3875 = vmatprep.subr.mxu0 0.0
    %3876 = vmatpush1.msra.mxu0 0.0
    %3877 = vmatprep.subr.mxu0 0.0
    %3878 = vmatpush1.msra.mxu0 0.0
    %3879 = vmatprep.subr.mxu0 0.0
    %3880 = vmatpush1.msra.mxu0 0.0
    %3881 = vmatprep.subr.mxu0 0.0
    %3882 = vmatpush1.msra.mxu0 0.0
    %3883 = vmatprep.subr.mxu0 0.0
    %3884 = vmatpush1.msra.mxu0 0.0
    %3885 = vmatprep.mubr.f32.mxu0 0.0
    %3886 = vmatmul.mubr.f32.gmra.mrb[0].mxu0 %v3683
    %v3887 = vpop.f32.mrb[0].mxu0
    %v3888 = vadd.f32 %v3817, %v3887
    %v3889 = vpop.f32.mrb[0].mxu0
    %v3890 = vadd.f32 %v3819, %v3889
    %3891 = vdwg.mxu0
    %v3892 = vld [vmem:[#allocation4 + $0x4] sm:$0xf]
    %s3893 = scalar_lea.vmem %s7, 512
    %v3894 = vld [vmem:[%s3893] sm:$0xff]
    %v3895 = vld [vmem:[%s3893 + $0x8] sm:$0xff]
    %v3896 = vld [vmem:[%s3893 + $0x10] sm:$0xff]
    %v3897 = vld [vmem:[%s3893 + $0x18] sm:$0xff]
    %v3898 = vld [vmem:[%s3893 + $0x20] sm:$0xff]
    %v3899 = vld [vmem:[%s3893 + $0x28] sm:$0xff]
    %v3900 = vld [vmem:[%s3893 + $0x30] sm:$0xff]
    %v3901 = vld [vmem:[%s3893 + $0x38] sm:$0xff]
    %v3902 = vld [vmem:[%s3893 + $0x40] sm:$0xff]
    %v3903 = vld [vmem:[%s3893 + $0x48] sm:$0xff]
    %v3904 = vld [vmem:[%s3893 + $0x50] sm:$0xff]
    %v3905 = vld [vmem:[%s3893 + $0x58] sm:$0xff]
    %v3906 = vld [vmem:[%s3893 + $0x60] sm:$0xff]
    %v3907 = vld [vmem:[%s3893 + $0x68] sm:$0xff]
    %v3908 = vld [vmem:[%s3893 + $0x70] sm:$0xff]
    %v3909 = vld [vmem:[%s3893 + $0x78] sm:$0xff]
    %v3910 = vld [vmem:[%s3893 + $0x80] sm:$0xff]
    %v3911 = vld [vmem:[%s3893 + $0x88] sm:$0xff]
    %v3912 = vld [vmem:[%s3893 + $0x90] sm:$0xff]
    %v3913 = vld [vmem:[%s3893 + $0x98] sm:$0xff]
    %v3914 = vld [vmem:[%s3893 + $0xa0] sm:$0xff]
    %v3915 = vld [vmem:[%s3893 + $0xa8] sm:$0xff]
    %v3916 = vld [vmem:[%s3893 + $0xb0] sm:$0xff]
    %v3917 = vld [vmem:[%s3893 + $0xb8] sm:$0xff]
    %v3918 = vld [vmem:[%s3893 + $0xc0] sm:$0xff]
    %v3919 = vld [vmem:[%s3893 + $0xc8] sm:$0xff]
    %v3920 = vld [vmem:[%s3893 + $0xd0] sm:$0xff]
    %v3921 = vld [vmem:[%s3893 + $0xd8] sm:$0xff]
    %v3922 = vld [vmem:[%s3893 + $0xe0] sm:$0xff]
    %v3923 = vld [vmem:[%s3893 + $0xe8] sm:$0xff]
    %v3924 = vld [vmem:[%s3893 + $0xf0] sm:$0xff]
    %v3925 = vld [vmem:[%s3893 + $0xf8] sm:$0xff]
    %3926 = vmatprep.subr.mxu0 %v3895
    %3927 = vmatpush1.msra.mxu0 %v3894
    %3928 = vmatprep.subr.mxu0 %v3897
    %3929 = vmatpush1.msra.mxu0 %v3896
    %3930 = vmatprep.subr.mxu0 %v3899
    %3931 = vmatpush1.msra.mxu0 %v3898
    %3932 = vmatprep.subr.mxu0 %v3901
    %3933 = vmatpush1.msra.mxu0 %v3900
    %3934 = vmatprep.subr.mxu0 %v3903
    %3935 = vmatpush1.msra.mxu0 %v3902
    %3936 = vmatprep.subr.mxu0 %v3905
    %3937 = vmatpush1.msra.mxu0 %v3904
    %3938 = vmatprep.subr.mxu0 %v3907
    %3939 = vmatpush1.msra.mxu0 %v3906
    %3940 = vmatprep.subr.mxu0 %v3909
    %3941 = vmatpush1.msra.mxu0 %v3908
    %3942 = vmatprep.subr.mxu0 %v3911
    %3943 = vmatpush1.msra.mxu0 %v3910
    %3944 = vmatprep.subr.mxu0 %v3913
    %3945 = vmatpush1.msra.mxu0 %v3912
    %3946 = vmatprep.subr.mxu0 %v3915
    %3947 = vmatpush1.msra.mxu0 %v3914
    %3948 = vmatprep.subr.mxu0 %v3917
    %3949 = vmatpush1.msra.mxu0 %v3916
    %3950 = vmatprep.subr.mxu0 %v3919
    %3951 = vmatpush1.msra.mxu0 %v3918
    %3952 = vmatprep.subr.mxu0 %v3921
    %3953 = vmatpush1.msra.mxu0 %v3920
    %3954 = vmatprep.subr.mxu0 %v3923
    %3955 = vmatpush1.msra.mxu0 %v3922
    %3956 = vmatprep.subr.mxu0 %v3925
    %3957 = vmatpush1.msra.mxu0 %v3924
    %3958 = vmatprep.subr.mxu0 0.0
    %3959 = vmatpush1.msra.mxu0 0.0
    %3960 = vmatprep.subr.mxu0 0.0
    %3961 = vmatpush1.msra.mxu0 0.0
    %3962 = vmatprep.subr.mxu0 0.0
    %3963 = vmatpush1.msra.mxu0 0.0
    %3964 = vmatprep.subr.mxu0 0.0
    %3965 = vmatpush1.msra.mxu0 0.0
    %3966 = vmatprep.subr.mxu0 0.0
    %3967 = vmatpush1.msra.mxu0 0.0
    %3968 = vmatprep.subr.mxu0 0.0
    %3969 = vmatpush1.msra.mxu0 0.0
    %3970 = vmatprep.subr.mxu0 0.0
    %3971 = vmatpush1.msra.mxu0 0.0
    %3972 = vmatprep.subr.mxu0 0.0
    %3973 = vmatpush1.msra.mxu0 0.0
    %3974 = vmatprep.subr.mxu0 0.0
    %3975 = vmatpush1.msra.mxu0 0.0
    %3976 = vmatprep.subr.mxu0 0.0
    %3977 = vmatpush1.msra.mxu0 0.0
    %3978 = vmatprep.subr.mxu0 0.0
    %3979 = vmatpush1.msra.mxu0 0.0
    %3980 = vmatprep.subr.mxu0 0.0
    %3981 = vmatpush1.msra.mxu0 0.0
    %3982 = vmatprep.subr.mxu0 0.0
    %3983 = vmatpush1.msra.mxu0 0.0
    %3984 = vmatprep.subr.mxu0 0.0
    %3985 = vmatpush1.msra.mxu0 0.0
    %3986 = vmatprep.subr.mxu0 0.0
    %3987 = vmatpush1.msra.mxu0 0.0
    %3988 = vmatprep.subr.mxu0 0.0
    %3989 = vmatpush1.msra.mxu0 0.0
    %3990 = vmatprep.mubr.f32.mxu0 0.0
    %3991 = vmatmul.mubr.f32.gmra.mrb[0].mxu0 %v3892
    %v3992 = vpop.f32.mrb[0].mxu0
    %v3993 = vadd.f32 0.0, %v3992
    %v3994 = vpop.f32.mrb[0].mxu0
    %v3995 = vadd.f32 0.0, %v3994
    %3996 = vdwg.mxu0
    %v3997 = vadd.f32 %v3888, %v3993
    %v3998 = vadd.f32 %v3890, %v3995
    %v3999 = vld [vmem:[#allocation4 + $0x8] sm:$0xf]
    %s4000 = scalar_lea.vmem %s7, 768
    %v4001 = vld [vmem:[%s4000] sm:$0xff]
    %v4002 = vld [vmem:[%s4000 + $0x8] sm:$0xff]
    %v4003 = vld [vmem:[%s4000 + $0x10] sm:$0xff]
    %v4004 = vld [vmem:[%s4000 + $0x18] sm:$0xff]
    %v4005 = vld [vmem:[%s4000 + $0x20] sm:$0xff]
    %v4006 = vld [vmem:[%s4000 + $0x28] sm:$0xff]
    %v4007 = vld [vmem:[%s4000 + $0x30] sm:$0xff]
    %v4008 = vld [vmem:[%s4000 + $0x38] sm:$0xff]
    %v4009 = vld [vmem:[%s4000 + $0x40] sm:$0xff]
    %v4010 = vld [vmem:[%s4000 + $0x48] sm:$0xff]
    %v4011 = vld [vmem:[%s4000 + $0x50] sm:$0xff]
    %v4012 = vld [vmem:[%s4000 + $0x58] sm:$0xff]
    %v4013 = vld [vmem:[%s4000 + $0x60] sm:$0xff]
    %v4014 = vld [vmem:[%s4000 + $0x68] sm:$0xff]
    %v4015 = vld [vmem:[%s4000 + $0x70] sm:$0xff]
    %v4016 = vld [vmem:[%s4000 + $0x78] sm:$0xff]
    %v4017 = vld [vmem:[%s4000 + $0x80] sm:$0xff]
    %v4018 = vld [vmem:[%s4000 + $0x88] sm:$0xff]
    %v4019 = vld [vmem:[%s4000 + $0x90] sm:$0xff]
    %v4020 = vld [vmem:[%s4000 + $0x98] sm:$0xff]
    %v4021 = vld [vmem:[%s4000 + $0xa0] sm:$0xff]
    %v4022 = vld [vmem:[%s4000 + $0xa8] sm:$0xff]
    %v4023 = vld [vmem:[%s4000 + $0xb0] sm:$0xff]
    %v4024 = vld [vmem:[%s4000 + $0xb8] sm:$0xff]
    %v4025 = vld [vmem:[%s4000 + $0xc0] sm:$0xff]
    %v4026 = vld [vmem:[%s4000 + $0xc8] sm:$0xff]
    %v4027 = vld [vmem:[%s4000 + $0xd0] sm:$0xff]
    %v4028 = vld [vmem:[%s4000 + $0xd8] sm:$0xff]
    %v4029 = vld [vmem:[%s4000 + $0xe0] sm:$0xff]
    %v4030 = vld [vmem:[%s4000 + $0xe8] sm:$0xff]
    %v4031 = vld [vmem:[%s4000 + $0xf0] sm:$0xff]
    %v4032 = vld [vmem:[%s4000 + $0xf8] sm:$0xff]
    %4033 = vmatprep.subr.mxu0 %v4002
    %4034 = vmatpush1.msra.mxu0 %v4001
    %4035 = vmatprep.subr.mxu0 %v4004
    %4036 = vmatpush1.msra.mxu0 %v4003
    %4037 = vmatprep.subr.mxu0 %v4006
    %4038 = vmatpush1.msra.mxu0 %v4005
    %4039 = vmatprep.subr.mxu0 %v4008
    %4040 = vmatpush1.msra.mxu0 %v4007
    %4041 = vmatprep.subr.mxu0 %v4010
    %4042 = vmatpush1.msra.mxu0 %v4009
    %4043 = vmatprep.subr.mxu0 %v4012
    %4044 = vmatpush1.msra.mxu0 %v4011
    %4045 = vmatprep.subr.mxu0 %v4014
    %4046 = vmatpush1.msra.mxu0 %v4013
    %4047 = vmatprep.subr.mxu0 %v4016
    %4048 = vmatpush1.msra.mxu0 %v4015
    %4049 = vmatprep.subr.mxu0 %v4018
    %4050 = vmatpush1.msra.mxu0 %v4017
    %4051 = vmatprep.subr.mxu0 %v4020
    %4052 = vmatpush1.msra.mxu0 %v4019
    %4053 = vmatprep.subr.mxu0 %v4022
    %4054 = vmatpush1.msra.mxu0 %v4021
    %4055 = vmatprep.subr.mxu0 %v4024
    %4056 = vmatpush1.msra.mxu0 %v4023
    %4057 = vmatprep.subr.mxu0 %v4026
    %4058 = vmatpush1.msra.mxu0 %v4025
    %4059 = vmatprep.subr.mxu0 %v4028
    %4060 = vmatpush1.msra.mxu0 %v4027
    %4061 = vmatprep.subr.mxu0 %v4030
    %4062 = vmatpush1.msra.mxu0 %v4029
    %4063 = vmatprep.subr.mxu0 %v4032
    %4064 = vmatpush1.msra.mxu0 %v4031
    %4065 = vmatprep.subr.mxu0 0.0
    %4066 = vmatpush1.msra.mxu0 0.0
    %4067 = vmatprep.subr.mxu0 0.0
    %4068 = vmatpush1.msra.mxu0 0.0
    %4069 = vmatprep.subr.mxu0 0.0
    %4070 = vmatpush1.msra.mxu0 0.0
    %4071 = vmatprep.subr.mxu0 0.0
    %4072 = vmatpush1.msra.mxu0 0.0
    %4073 = vmatprep.subr.mxu0 0.0
    %4074 = vmatpush1.msra.mxu0 0.0
    %4075 = vmatprep.subr.mxu0 0.0
    %4076 = vmatpush1.msra.mxu0 0.0
    %4077 = vmatprep.subr.mxu0 0.0
    %4078 = vmatpush1.msra.mxu0 0.0
    %4079 = vmatprep.subr.mxu0 0.0
    %4080 = vmatpush1.msra.mxu0 0.0
    %4081 = vmatprep.subr.mxu0 0.0
    %4082 = vmatpush1.msra.mxu0 0.0
    %4083 = vmatprep.subr.mxu0 0.0
    %4084 = vmatpush1.msra.mxu0 0.0
    %4085 = vmatprep.subr.mxu0 0.0
    %4086 = vmatpush1.msra.mxu0 0.0
    %4087 = vmatprep.subr.mxu0 0.0
    %4088 = vmatpush1.msra.mxu0 0.0
    %4089 = vmatprep.subr.mxu0 0.0
    %4090 = vmatpush1.msra.mxu0 0.0
    %4091 = vmatprep.subr.mxu0 0.0
    %4092 = vmatpush1.msra.mxu0 0.0
    %4093 = vmatprep.subr.mxu0 0.0
    %4094 = vmatpush1.msra.mxu0 0.0
    %4095 = vmatprep.subr.mxu0 0.0
    %4096 = vmatpush1.msra.mxu0 0.0
    %4097 = vmatprep.mubr.f32.mxu0 0.0
    %4098 = vmatmul.mubr.f32.gmra.mrb[0].mxu0 %v3999
    %v4099 = vpop.f32.mrb[0].mxu0
    %v4100 = vadd.f32 0.0, %v4099
    %v4101 = vpop.f32.mrb[0].mxu0
    %v4102 = vadd.f32 0.0, %v4101
    %4103 = vdwg.mxu0
    %v4104 = vadd.f32 %v3997, %v4100
    %v4105 = vadd.f32 %v3998, %v4102
    %v4106 = vld [vmem:[#allocation4 + $0xa] sm:$0xf]
    %s4107 = scalar_lea.vmem %s7, 1024
    %v4108 = vld [vmem:[%s4107] sm:$0xff]
    %v4109 = vld [vmem:[%s4107 + $0x8] sm:$0xff]
    %v4110 = vld [vmem:[%s4107 + $0x10] sm:$0xff]
    %v4111 = vld [vmem:[%s4107 + $0x18] sm:$0xff]
    %v4112 = vld [vmem:[%s4107 + $0x20] sm:$0xff]
    %v4113 = vld [vmem:[%s4107 + $0x28] sm:$0xff]
    %v4114 = vld [vmem:[%s4107 + $0x30] sm:$0xff]
    %v4115 = vld [vmem:[%s4107 + $0x38] sm:$0xff]
    %v4116 = vld [vmem:[%s4107 + $0x40] sm:$0xff]
    %v4117 = vld [vmem:[%s4107 + $0x48] sm:$0xff]
    %v4118 = vld [vmem:[%s4107 + $0x50] sm:$0xff]
    %v4119 = vld [vmem:[%s4107 + $0x58] sm:$0xff]
    %v4120 = vld [vmem:[%s4107 + $0x60] sm:$0xff]
    %v4121 = vld [vmem:[%s4107 + $0x68] sm:$0xff]
    %v4122 = vld [vmem:[%s4107 + $0x70] sm:$0xff]
    %v4123 = vld [vmem:[%s4107 + $0x78] sm:$0xff]
    %v4124 = vld [vmem:[%s4107 + $0x80] sm:$0xff]
    %v4125 = vld [vmem:[%s4107 + $0x88] sm:$0xff]
    %v4126 = vld [vmem:[%s4107 + $0x90] sm:$0xff]
    %v4127 = vld [vmem:[%s4107 + $0x98] sm:$0xff]
    %v4128 = vld [vmem:[%s4107 + $0xa0] sm:$0xff]
    %v4129 = vld [vmem:[%s4107 + $0xa8] sm:$0xff]
    %v4130 = vld [vmem:[%s4107 + $0xb0] sm:$0xff]
    %v4131 = vld [vmem:[%s4107 + $0xb8] sm:$0xff]
    %v4132 = vld [vmem:[%s4107 + $0xc0] sm:$0xff]
    %v4133 = vld [vmem:[%s4107 + $0xc8] sm:$0xff]
    %v4134 = vld [vmem:[%s4107 + $0xd0] sm:$0xff]
    %v4135 = vld [vmem:[%s4107 + $0xd8] sm:$0xff]
    %v4136 = vld [vmem:[%s4107 + $0xe0] sm:$0xff]
    %v4137 = vld [vmem:[%s4107 + $0xe8] sm:$0xff]
    %v4138 = vld [vmem:[%s4107 + $0xf0] sm:$0xff]
    %v4139 = vld [vmem:[%s4107 + $0xf8] sm:$0xff]
    %4140 = vmatprep.subr.mxu0 %v4109
    %4141 = vmatpush1.msra.mxu0 %v4108
    %4142 = vmatprep.subr.mxu0 %v4111
    %4143 = vmatpush1.msra.mxu0 %v4110
    %4144 = vmatprep.subr.mxu0 %v4113
    %4145 = vmatpush1.msra.mxu0 %v4112
    %4146 = vmatprep.subr.mxu0 %v4115
    %4147 = vmatpush1.msra.mxu0 %v4114
    %4148 = vmatprep.subr.mxu0 %v4117
    %4149 = vmatpush1.msra.mxu0 %v4116
    %4150 = vmatprep.subr.mxu0 %v4119
    %4151 = vmatpush1.msra.mxu0 %v4118
    %4152 = vmatprep.subr.mxu0 %v4121
    %4153 = vmatpush1.msra.mxu0 %v4120
    %4154 = vmatprep.subr.mxu0 %v4123
    %4155 = vmatpush1.msra.mxu0 %v4122
    %4156 = vmatprep.subr.mxu0 %v4125
    %4157 = vmatpush1.msra.mxu0 %v4124
    %4158 = vmatprep.subr.mxu0 %v4127
    %4159 = vmatpush1.msra.mxu0 %v4126
    %4160 = vmatprep.subr.mxu0 %v4129
    %4161 = vmatpush1.msra.mxu0 %v4128
    %4162 = vmatprep.subr.mxu0 %v4131
    %4163 = vmatpush1.msra.mxu0 %v4130
    %4164 = vmatprep.subr.mxu0 %v4133
    %4165 = vmatpush1.msra.mxu0 %v4132
    %4166 = vmatprep.subr.mxu0 %v4135
    %4167 = vmatpush1.msra.mxu0 %v4134
    %4168 = vmatprep.subr.mxu0 %v4137
    %4169 = vmatpush1.msra.mxu0 %v4136
    %4170 = vmatprep.subr.mxu0 %v4139
    %4171 = vmatpush1.msra.mxu0 %v4138
    %4172 = vmatprep.subr.mxu0 0.0
    %4173 = vmatpush1.msra.mxu0 0.0
    %4174 = vmatprep.subr.mxu0 0.0
    %4175 = vmatpush1.msra.mxu0 0.0
    %4176 = vmatprep.subr.mxu0 0.0
    %4177 = vmatpush1.msra.mxu0 0.0
    %4178 = vmatprep.subr.mxu0 0.0
    %4179 = vmatpush1.msra.mxu0 0.0
    %4180 = vmatprep.subr.mxu0 0.0
    %4181 = vmatpush1.msra.mxu0 0.0
    %4182 = vmatprep.subr.mxu0 0.0
    %4183 = vmatpush1.msra.mxu0 0.0
    %4184 = vmatprep.subr.mxu0 0.0
    %4185 = vmatpush1.msra.mxu0 0.0
    %4186 = vmatprep.subr.mxu0 0.0
    %4187 = vmatpush1.msra.mxu0 0.0
    %4188 = vmatprep.subr.mxu0 0.0
    %4189 = vmatpush1.msra.mxu0 0.0
    %4190 = vmatprep.subr.mxu0 0.0
    %4191 = vmatpush1.msra.mxu0 0.0
    %4192 = vmatprep.subr.mxu0 0.0
    %4193 = vmatpush1.msra.mxu0 0.0
    %4194 = vmatprep.subr.mxu0 0.0
    %4195 = vmatpush1.msra.mxu0 0.0
    %4196 = vmatprep.subr.mxu0 0.0
    %4197 = vmatpush1.msra.mxu0 0.0
    %4198 = vmatprep.subr.mxu0 0.0
    %4199 = vmatpush1.msra.mxu0 0.0
    %4200 = vmatprep.subr.mxu0 0.0
    %4201 = vmatpush1.msra.mxu0 0.0
    %4202 = vmatprep.subr.mxu0 0.0
    %4203 = vmatpush1.msra.mxu0 0.0
    %4204 = vmatprep.mubr.f32.mxu0 0.0
    %4205 = vmatmul.mubr.f32.gmra.mrb[0].mxu0 %v4106
    %v4206 = vpop.f32.mrb[0].mxu0
    %v4207 = vadd.f32 0.0, %v4206
    %v4208 = vpop.f32.mrb[0].mxu0
    %v4209 = vadd.f32 0.0, %v4208
    %4210 = vdwg.mxu0
    %v4211 = vadd.f32 %v4104, %v4207
    %v4212 = vadd.f32 %v4105, %v4209
    %v4213 = vld [vmem:[#allocation4 + $0xc] sm:$0xf]
    %s4214 = scalar_lea.vmem %s7, 1280
    %v4215 = vld [vmem:[%s4214] sm:$0xff]
    %v4216 = vld [vmem:[%s4214 + $0x8] sm:$0xff]
    %v4217 = vld [vmem:[%s4214 + $0x10] sm:$0xff]
    %v4218 = vld [vmem:[%s4214 + $0x18] sm:$0xff]
    %v4219 = vld [vmem:[%s4214 + $0x20] sm:$0xff]
    %v4220 = vld [vmem:[%s4214 + $0x28] sm:$0xff]
    %v4221 = vld [vmem:[%s4214 + $0x30] sm:$0xff]
    %v4222 = vld [vmem:[%s4214 + $0x38] sm:$0xff]
    %v4223 = vld [vmem:[%s4214 + $0x40] sm:$0xff]
    %v4224 = vld [vmem:[%s4214 + $0x48] sm:$0xff]
    %v4225 = vld [vmem:[%s4214 + $0x50] sm:$0xff]
    %v4226 = vld [vmem:[%s4214 + $0x58] sm:$0xff]
    %v4227 = vld [vmem:[%s4214 + $0x60] sm:$0xff]
    %v4228 = vld [vmem:[%s4214 + $0x68] sm:$0xff]
    %v4229 = vld [vmem:[%s4214 + $0x70] sm:$0xff]
    %v4230 = vld [vmem:[%s4214 + $0x78] sm:$0xff]
    %v4231 = vld [vmem:[%s4214 + $0x80] sm:$0xff]
    %v4232 = vld [vmem:[%s4214 + $0x88] sm:$0xff]
    %v4233 = vld [vmem:[%s4214 + $0x90] sm:$0xff]
    %v4234 = vld [vmem:[%s4214 + $0x98] sm:$0xff]
    %v4235 = vld [vmem:[%s4214 + $0xa0] sm:$0xff]
    %v4236 = vld [vmem:[%s4214 + $0xa8] sm:$0xff]
    %v4237 = vld [vmem:[%s4214 + $0xb0] sm:$0xff]
    %v4238 = vld [vmem:[%s4214 + $0xb8] sm:$0xff]
    %v4239 = vld [vmem:[%s4214 + $0xc0] sm:$0xff]
    %v4240 = vld [vmem:[%s4214 + $0xc8] sm:$0xff]
    %v4241 = vld [vmem:[%s4214 + $0xd0] sm:$0xff]
    %v4242 = vld [vmem:[%s4214 + $0xd8] sm:$0xff]
    %v4243 = vld [vmem:[%s4214 + $0xe0] sm:$0xff]
    %v4244 = vld [vmem:[%s4214 + $0xe8] sm:$0xff]
    %v4245 = vld [vmem:[%s4214 + $0xf0] sm:$0xff]
    %v4246 = vld [vmem:[%s4214 + $0xf8] sm:$0xff]
    %4247 = vmatprep.subr.mxu0 %v4216
    %4248 = vmatpush1.msra.mxu0 %v4215
    %4249 = vmatprep.subr.mxu0 %v4218
    %4250 = vmatpush1.msra.mxu0 %v4217
    %4251 = vmatprep.subr.mxu0 %v4220
    %4252 = vmatpush1.msra.mxu0 %v4219
    %4253 = vmatprep.subr.mxu0 %v4222
    %4254 = vmatpush1.msra.mxu0 %v4221
    %4255 = vmatprep.subr.mxu0 %v4224
    %4256 = vmatpush1.msra.mxu0 %v4223
    %4257 = vmatprep.subr.mxu0 %v4226
    %4258 = vmatpush1.msra.mxu0 %v4225
    %4259 = vmatprep.subr.mxu0 %v4228
    %4260 = vmatpush1.msra.mxu0 %v4227
    %4261 = vmatprep.subr.mxu0 %v4230
    %4262 = vmatpush1.msra.mxu0 %v4229
    %4263 = vmatprep.subr.mxu0 %v4232
    %4264 = vmatpush1.msra.mxu0 %v4231
    %4265 = vmatprep.subr.mxu0 %v4234
    %4266 = vmatpush1.msra.mxu0 %v4233
    %4267 = vmatprep.subr.mxu0 %v4236
    %4268 = vmatpush1.msra.mxu0 %v4235
    %4269 = vmatprep.subr.mxu0 %v4238
    %4270 = vmatpush1.msra.mxu0 %v4237
    %4271 = vmatprep.subr.mxu0 %v4240
    %4272 = vmatpush1.msra.mxu0 %v4239
    %4273 = vmatprep.subr.mxu0 %v4242
    %4274 = vmatpush1.msra.mxu0 %v4241
    %4275 = vmatprep.subr.mxu0 %v4244
    %4276 = vmatpush1.msra.mxu0 %v4243
    %4277 = vmatprep.subr.mxu0 %v4246
    %4278 = vmatpush1.msra.mxu0 %v4245
    %4279 = vmatprep.subr.mxu0 0.0
    %4280 = vmatpush1.msra.mxu0 0.0
    %4281 = vmatprep.subr.mxu0 0.0
    %4282 = vmatpush1.msra.mxu0 0.0
    %4283 = vmatprep.subr.mxu0 0.0
    %4284 = vmatpush1.msra.mxu0 0.0
    %4285 = vmatprep.subr.mxu0 0.0
    %4286 = vmatpush1.msra.mxu0 0.0
    %4287 = vmatprep.subr.mxu0 0.0
    %4288 = vmatpush1.msra.mxu0 0.0
    %4289 = vmatprep.subr.mxu0 0.0
    %4290 = vmatpush1.msra.mxu0 0.0
    %4291 = vmatprep.subr.mxu0 0.0
    %4292 = vmatpush1.msra.mxu0 0.0
    %4293 = vmatprep.subr.mxu0 0.0
    %4294 = vmatpush1.msra.mxu0 0.0
    %4295 = vmatprep.subr.mxu0 0.0
    %4296 = vmatpush1.msra.mxu0 0.0
    %4297 = vmatprep.subr.mxu0 0.0
    %4298 = vmatpush1.msra.mxu0 0.0
    %4299 = vmatprep.subr.mxu0 0.0
    %4300 = vmatpush1.msra.mxu0 0.0
    %4301 = vmatprep.subr.mxu0 0.0
    %4302 = vmatpush1.msra.mxu0 0.0
    %4303 = vmatprep.subr.mxu0 0.0
    %4304 = vmatpush1.msra.mxu0 0.0
    %4305 = vmatprep.subr.mxu0 0.0
    %4306 = vmatpush1.msra.mxu0 0.0
    %4307 = vmatprep.subr.mxu0 0.0
    %4308 = vmatpush1.msra.mxu0 0.0
    %4309 = vmatprep.subr.mxu0 0.0
    %4310 = vmatpush1.msra.mxu0 0.0
    %4311 = vmatprep.mubr.f32.mxu0 0.0
    %4312 = vmatmul.mubr.f32.gmra.mrb[0].mxu0 %v4213
    %v4313 = vpop.f32.mrb[0].mxu0
    %v4314 = vadd.f32 0.0, %v4313
    %v4315 = vpop.f32.mrb[0].mxu0
    %v4316 = vadd.f32 0.0, %v4315
    %4317 = vdwg.mxu0
    %v4318 = vadd.f32 %v4211, %v4314
    %v4319 = vadd.f32 %v4212, %v4316
    %v4320 = vld [vmem:[#allocation4 + $0x10] sm:$0xf]
    %s4321 = scalar_lea.vmem %s7, 1536
    %v4322 = vld [vmem:[%s4321] sm:$0xff]
    %v4323 = vld [vmem:[%s4321 + $0x8] sm:$0xff]
    %v4324 = vld [vmem:[%s4321 + $0x10] sm:$0xff]
    %v4325 = vld [vmem:[%s4321 + $0x18] sm:$0xff]
    %v4326 = vld [vmem:[%s4321 + $0x20] sm:$0xff]
    %v4327 = vld [vmem:[%s4321 + $0x28] sm:$0xff]
    %v4328 = vld [vmem:[%s4321 + $0x30] sm:$0xff]
    %v4329 = vld [vmem:[%s4321 + $0x38] sm:$0xff]
    %v4330 = vld [vmem:[%s4321 + $0x40] sm:$0xff]
    %v4331 = vld [vmem:[%s4321 + $0x48] sm:$0xff]
    %v4332 = vld [vmem:[%s4321 + $0x50] sm:$0xff]
    %v4333 = vld [vmem:[%s4321 + $0x58] sm:$0xff]
    %v4334 = vld [vmem:[%s4321 + $0x60] sm:$0xff]
    %v4335 = vld [vmem:[%s4321 + $0x68] sm:$0xff]
    %v4336 = vld [vmem:[%s4321 + $0x70] sm:$0xff]
    %v4337 = vld [vmem:[%s4321 + $0x78] sm:$0xff]
    %v4338 = vld [vmem:[%s4321 + $0x80] sm:$0xff]
    %v4339 = vld [vmem:[%s4321 + $0x88] sm:$0xff]
    %v4340 = vld [vmem:[%s4321 + $0x90] sm:$0xff]
    %v4341 = vld [vmem:[%s4321 + $0x98] sm:$0xff]
    %v4342 = vld [vmem:[%s4321 + $0xa0] sm:$0xff]
    %v4343 = vld [vmem:[%s4321 + $0xa8] sm:$0xff]
    %v4344 = vld [vmem:[%s4321 + $0xb0] sm:$0xff]
    %v4345 = vld [vmem:[%s4321 + $0xb8] sm:$0xff]
    %v4346 = vld [vmem:[%s4321 + $0xc0] sm:$0xff]
    %v4347 = vld [vmem:[%s4321 + $0xc8] sm:$0xff]
    %v4348 = vld [vmem:[%s4321 + $0xd0] sm:$0xff]
    %v4349 = vld [vmem:[%s4321 + $0xd8] sm:$0xff]
    %v4350 = vld [vmem:[%s4321 + $0xe0] sm:$0xff]
    %v4351 = vld [vmem:[%s4321 + $0xe8] sm:$0xff]
    %v4352 = vld [vmem:[%s4321 + $0xf0] sm:$0xff]
    %v4353 = vld [vmem:[%s4321 + $0xf8] sm:$0xff]
    %4354 = vmatprep.subr.mxu0 %v4323
    %4355 = vmatpush1.msra.mxu0 %v4322
    %4356 = vmatprep.subr.mxu0 %v4325
    %4357 = vmatpush1.msra.mxu0 %v4324
    %4358 = vmatprep.subr.mxu0 %v4327
    %4359 = vmatpush1.msra.mxu0 %v4326
    %4360 = vmatprep.subr.mxu0 %v4329
    %4361 = vmatpush1.msra.mxu0 %v4328
    %4362 = vmatprep.subr.mxu0 %v4331
    %4363 = vmatpush1.msra.mxu0 %v4330
    %4364 = vmatprep.subr.mxu0 %v4333
    %4365 = vmatpush1.msra.mxu0 %v4332
    %4366 = vmatprep.subr.mxu0 %v4335
    %4367 = vmatpush1.msra.mxu0 %v4334
    %4368 = vmatprep.subr.mxu0 %v4337
    %4369 = vmatpush1.msra.mxu0 %v4336
    %4370 = vmatprep.subr.mxu0 %v4339
    %4371 = vmatpush1.msra.mxu0 %v4338
    %4372 = vmatprep.subr.mxu0 %v4341
    %4373 = vmatpush1.msra.mxu0 %v4340
    %4374 = vmatprep.subr.mxu0 %v4343
    %4375 = vmatpush1.msra.mxu0 %v4342
    %4376 = vmatprep.subr.mxu0 %v4345
    %4377 = vmatpush1.msra.mxu0 %v4344
    %4378 = vmatprep.subr.mxu0 %v4347
    %4379 = vmatpush1.msra.mxu0 %v4346
    %4380 = vmatprep.subr.mxu0 %v4349
    %4381 = vmatpush1.msra.mxu0 %v4348
    %4382 = vmatprep.subr.mxu0 %v4351
    %4383 = vmatpush1.msra.mxu0 %v4350
    %4384 = vmatprep.subr.mxu0 %v4353
    %4385 = vmatpush1.msra.mxu0 %v4352
    %4386 = vmatprep.subr.mxu0 0.0
    %4387 = vmatpush1.msra.mxu0 0.0
    %4388 = vmatprep.subr.mxu0 0.0
    %4389 = vmatpush1.msra.mxu0 0.0
    %4390 = vmatprep.subr.mxu0 0.0
    %4391 = vmatpush1.msra.mxu0 0.0
    %4392 = vmatprep.subr.mxu0 0.0
    %4393 = vmatpush1.msra.mxu0 0.0
    %4394 = vmatprep.subr.mxu0 0.0
    %4395 = vmatpush1.msra.mxu0 0.0
    %4396 = vmatprep.subr.mxu0 0.0
    %4397 = vmatpush1.msra.mxu0 0.0
    %4398 = vmatprep.subr.mxu0 0.0
    %4399 = vmatpush1.msra.mxu0 0.0
    %4400 = vmatprep.subr.mxu0 0.0
    %4401 = vmatpush1.msra.mxu0 0.0
    %4402 = vmatprep.subr.mxu0 0.0
    %4403 = vmatpush1.msra.mxu0 0.0
    %4404 = vmatprep.subr.mxu0 0.0
    %4405 = vmatpush1.msra.mxu0 0.0
    %4406 = vmatprep.subr.mxu0 0.0
    %4407 = vmatpush1.msra.mxu0 0.0
    %4408 = vmatprep.subr.mxu0 0.0
    %4409 = vmatpush1.msra.mxu0 0.0
    %4410 = vmatprep.subr.mxu0 0.0
    %4411 = vmatpush1.msra.mxu0 0.0
    %4412 = vmatprep.subr.mxu0 0.0
    %4413 = vmatpush1.msra.mxu0 0.0
    %4414 = vmatprep.subr.mxu0 0.0
    %4415 = vmatpush1.msra.mxu0 0.0
    %4416 = vmatprep.subr.mxu0 0.0
    %4417 = vmatpush1.msra.mxu0 0.0
    %4418 = vmatprep.mubr.f32.mxu0 0.0
    %4419 = vmatmul.mubr.f32.gmra.mrb[0].mxu0 %v4320
    %v4420 = vpop.f32.mrb[0].mxu0
    %v4421 = vadd.f32 0.0, %v4420
    %v4422 = vpop.f32.mrb[0].mxu0
    %v4423 = vadd.f32 0.0, %v4422
    %4424 = vdwg.mxu0
    %v4425 = vadd.f32 %v4318, %v4421
    %v4426 = vadd.f32 %v4319, %v4423
    %v4427 = vld [vmem:[#allocation4 + $0x12] sm:$0xf]
    %s4428 = scalar_lea.vmem %s7, 1792
    %v4429 = vld [vmem:[%s4428] sm:$0xff]
    %v4430 = vld [vmem:[%s4428 + $0x8] sm:$0xff]
    %v4431 = vld [vmem:[%s4428 + $0x10] sm:$0xff]
    %v4432 = vld [vmem:[%s4428 + $0x18] sm:$0xff]
    %v4433 = vld [vmem:[%s4428 + $0x20] sm:$0xff]
    %v4434 = vld [vmem:[%s4428 + $0x28] sm:$0xff]
    %v4435 = vld [vmem:[%s4428 + $0x30] sm:$0xff]
    %v4436 = vld [vmem:[%s4428 + $0x38] sm:$0xff]
    %v4437 = vld [vmem:[%s4428 + $0x40] sm:$0xff]
    %v4438 = vld [vmem:[%s4428 + $0x48] sm:$0xff]
    %v4439 = vld [vmem:[%s4428 + $0x50] sm:$0xff]
    %v4440 = vld [vmem:[%s4428 + $0x58] sm:$0xff]
    %v4441 = vld [vmem:[%s4428 + $0x60] sm:$0xff]
    %v4442 = vld [vmem:[%s4428 + $0x68] sm:$0xff]
    %v4443 = vld [vmem:[%s4428 + $0x70] sm:$0xff]
    %v4444 = vld [vmem:[%s4428 + $0x78] sm:$0xff]
    %v4445 = vld [vmem:[%s4428 + $0x80] sm:$0xff]
    %v4446 = vld [vmem:[%s4428 + $0x88] sm:$0xff]
    %v4447 = vld [vmem:[%s4428 + $0x90] sm:$0xff]
    %v4448 = vld [vmem:[%s4428 + $0x98] sm:$0xff]
    %v4449 = vld [vmem:[%s4428 + $0xa0] sm:$0xff]
    %v4450 = vld [vmem:[%s4428 + $0xa8] sm:$0xff]
    %v4451 = vld [vmem:[%s4428 + $0xb0] sm:$0xff]
    %v4452 = vld [vmem:[%s4428 + $0xb8] sm:$0xff]
    %v4453 = vld [vmem:[%s4428 + $0xc0] sm:$0xff]
    %v4454 = vld [vmem:[%s4428 + $0xc8] sm:$0xff]
    %v4455 = vld [vmem:[%s4428 + $0xd0] sm:$0xff]
    %v4456 = vld [vmem:[%s4428 + $0xd8] sm:$0xff]
    %v4457 = vld [vmem:[%s4428 + $0xe0] sm:$0xff]
    %v4458 = vld [vmem:[%s4428 + $0xe8] sm:$0xff]
    %v4459 = vld [vmem:[%s4428 + $0xf0] sm:$0xff]
    %v4460 = vld [vmem:[%s4428 + $0xf8] sm:$0xff]
    %4461 = vmatprep.subr.mxu0 %v4430
    %4462 = vmatpush1.msra.mxu0 %v4429
    %4463 = vmatprep.subr.mxu0 %v4432
    %4464 = vmatpush1.msra.mxu0 %v4431
    %4465 = vmatprep.subr.mxu0 %v4434
    %4466 = vmatpush1.msra.mxu0 %v4433
    %4467 = vmatprep.subr.mxu0 %v4436
    %4468 = vmatpush1.msra.mxu0 %v4435
    %4469 = vmatprep.subr.mxu0 %v4438
    %4470 = vmatpush1.msra.mxu0 %v4437
    %4471 = vmatprep.subr.mxu0 %v4440
    %4472 = vmatpush1.msra.mxu0 %v4439
    %4473 = vmatprep.subr.mxu0 %v4442
    %4474 = vmatpush1.msra.mxu0 %v4441
    %4475 = vmatprep.subr.mxu0 %v4444
    %4476 = vmatpush1.msra.mxu0 %v4443
    %4477 = vmatprep.subr.mxu0 %v4446
    %4478 = vmatpush1.msra.mxu0 %v4445
    %4479 = vmatprep.subr.mxu0 %v4448
    %4480 = vmatpush1.msra.mxu0 %v4447
    %4481 = vmatprep.subr.mxu0 %v4450
    %4482 = vmatpush1.msra.mxu0 %v4449
    %4483 = vmatprep.subr.mxu0 %v4452
    %4484 = vmatpush1.msra.mxu0 %v4451
    %4485 = vmatprep.subr.mxu0 %v4454
    %4486 = vmatpush1.msra.mxu0 %v4453
    %4487 = vmatprep.subr.mxu0 %v4456
    %4488 = vmatpush1.msra.mxu0 %v4455
    %4489 = vmatprep.subr.mxu0 %v4458
    %4490 = vmatpush1.msra.mxu0 %v4457
    %4491 = vmatprep.subr.mxu0 %v4460
    %4492 = vmatpush1.msra.mxu0 %v4459
    %4493 = vmatprep.subr.mxu0 0.0
    %4494 = vmatpush1.msra.mxu0 0.0
    %4495 = vmatprep.subr.mxu0 0.0
    %4496 = vmatpush1.msra.mxu0 0.0
    %4497 = vmatprep.subr.mxu0 0.0
    %4498 = vmatpush1.msra.mxu0 0.0
    %4499 = vmatprep.subr.mxu0 0.0
    %4500 = vmatpush1.msra.mxu0 0.0
    %4501 = vmatprep.subr.mxu0 0.0
    %4502 = vmatpush1.msra.mxu0 0.0
    %4503 = vmatprep.subr.mxu0 0.0
    %4504 = vmatpush1.msra.mxu0 0.0
    %4505 = vmatprep.subr.mxu0 0.0
    %4506 = vmatpush1.msra.mxu0 0.0
    %4507 = vmatprep.subr.mxu0 0.0
    %4508 = vmatpush1.msra.mxu0 0.0
    %4509 = vmatprep.subr.mxu0 0.0
    %4510 = vmatpush1.msra.mxu0 0.0
    %4511 = vmatprep.subr.mxu0 0.0
    %4512 = vmatpush1.msra.mxu0 0.0
    %4513 = vmatprep.subr.mxu0 0.0
    %4514 = vmatpush1.msra.mxu0 0.0
    %4515 = vmatprep.subr.mxu0 0.0
    %4516 = vmatpush1.msra.mxu0 0.0
    %4517 = vmatprep.subr.mxu0 0.0
    %4518 = vmatpush1.msra.mxu0 0.0
    %4519 = vmatprep.subr.mxu0 0.0
    %4520 = vmatpush1.msra.mxu0 0.0
    %4521 = vmatprep.subr.mxu0 0.0
    %4522 = vmatpush1.msra.mxu0 0.0
    %4523 = vmatprep.subr.mxu0 0.0
    %4524 = vmatpush1.msra.mxu0 0.0
    %4525 = vmatprep.mubr.f32.mxu0 0.0
    %4526 = vmatmul.mubr.f32.gmra.mrb[0].mxu0 %v4427
    %v4527 = vpop.f32.mrb[0].mxu0
    %v4528 = vadd.f32 0.0, %v4527
    %v4529 = vpop.f32.mrb[0].mxu0
    %v4530 = vadd.f32 0.0, %v4529
    %4531 = vdwg.mxu0
    %v4532 = vadd.f32 %v4425, %v4528
    %v4533 = vadd.f32 %v4426, %v4530
    %v4534 = vld [vmem:[#allocation4 + $0x14] sm:$0xf]
    %s4535 = scalar_lea.vmem %s7, 2048
    %v4536 = vld [vmem:[%s4535] sm:$0xff]
    %v4537 = vld [vmem:[%s4535 + $0x8] sm:$0xff]
    %v4538 = vld [vmem:[%s4535 + $0x10] sm:$0xff]
    %v4539 = vld [vmem:[%s4535 + $0x18] sm:$0xff]
    %v4540 = vld [vmem:[%s4535 + $0x20] sm:$0xff]
    %v4541 = vld [vmem:[%s4535 + $0x28] sm:$0xff]
    %v4542 = vld [vmem:[%s4535 + $0x30] sm:$0xff]
    %v4543 = vld [vmem:[%s4535 + $0x38] sm:$0xff]
    %v4544 = vld [vmem:[%s4535 + $0x40] sm:$0xff]
    %v4545 = vld [vmem:[%s4535 + $0x48] sm:$0xff]
    %v4546 = vld [vmem:[%s4535 + $0x50] sm:$0xff]
    %v4547 = vld [vmem:[%s4535 + $0x58] sm:$0xff]
    %v4548 = vld [vmem:[%s4535 + $0x60] sm:$0xff]
    %v4549 = vld [vmem:[%s4535 + $0x68] sm:$0xff]
    %v4550 = vld [vmem:[%s4535 + $0x70] sm:$0xff]
    %v4551 = vld [vmem:[%s4535 + $0x78] sm:$0xff]
    %v4552 = vld [vmem:[%s4535 + $0x80] sm:$0xff]
    %v4553 = vld [vmem:[%s4535 + $0x88] sm:$0xff]
    %v4554 = vld [vmem:[%s4535 + $0x90] sm:$0xff]
    %v4555 = vld [vmem:[%s4535 + $0x98] sm:$0xff]
    %v4556 = vld [vmem:[%s4535 + $0xa0] sm:$0xff]
    %v4557 = vld [vmem:[%s4535 + $0xa8] sm:$0xff]
    %v4558 = vld [vmem:[%s4535 + $0xb0] sm:$0xff]
    %v4559 = vld [vmem:[%s4535 + $0xb8] sm:$0xff]
    %v4560 = vld [vmem:[%s4535 + $0xc0] sm:$0xff]
    %v4561 = vld [vmem:[%s4535 + $0xc8] sm:$0xff]
    %v4562 = vld [vmem:[%s4535 + $0xd0] sm:$0xff]
    %v4563 = vld [vmem:[%s4535 + $0xd8] sm:$0xff]
    %v4564 = vld [vmem:[%s4535 + $0xe0] sm:$0xff]
    %v4565 = vld [vmem:[%s4535 + $0xe8] sm:$0xff]
    %v4566 = vld [vmem:[%s4535 + $0xf0] sm:$0xff]
    %v4567 = vld [vmem:[%s4535 + $0xf8] sm:$0xff]
    %4568 = vmatprep.subr.mxu0 %v4537
    %4569 = vmatpush1.msra.mxu0 %v4536
    %4570 = vmatprep.subr.mxu0 %v4539
    %4571 = vmatpush1.msra.mxu0 %v4538
    %4572 = vmatprep.subr.mxu0 %v4541
    %4573 = vmatpush1.msra.mxu0 %v4540
    %4574 = vmatprep.subr.mxu0 %v4543
    %4575 = vmatpush1.msra.mxu0 %v4542
    %4576 = vmatprep.subr.mxu0 %v4545
    %4577 = vmatpush1.msra.mxu0 %v4544
    %4578 = vmatprep.subr.mxu0 %v4547
    %4579 = vmatpush1.msra.mxu0 %v4546
    %4580 = vmatprep.subr.mxu0 %v4549
    %4581 = vmatpush1.msra.mxu0 %v4548
    %4582 = vmatprep.subr.mxu0 %v4551
    %4583 = vmatpush1.msra.mxu0 %v4550
    %4584 = vmatprep.subr.mxu0 %v4553
    %4585 = vmatpush1.msra.mxu0 %v4552
    %4586 = vmatprep.subr.mxu0 %v4555
    %4587 = vmatpush1.msra.mxu0 %v4554
    %4588 = vmatprep.subr.mxu0 %v4557
    %4589 = vmatpush1.msra.mxu0 %v4556
    %4590 = vmatprep.subr.mxu0 %v4559
    %4591 = vmatpush1.msra.mxu0 %v4558
    %4592 = vmatprep.subr.mxu0 %v4561
    %4593 = vmatpush1.msra.mxu0 %v4560
    %4594 = vmatprep.subr.mxu0 %v4563
    %4595 = vmatpush1.msra.mxu0 %v4562
    %4596 = vmatprep.subr.mxu0 %v4565
    %4597 = vmatpush1.msra.mxu0 %v4564
    %4598 = vmatprep.subr.mxu0 %v4567
    %4599 = vmatpush1.msra.mxu0 %v4566
    %4600 = vmatprep.subr.mxu0 0.0
    %4601 = vmatpush1.msra.mxu0 0.0
    %4602 = vmatprep.subr.mxu0 0.0
    %4603 = vmatpush1.msra.mxu0 0.0
    %4604 = vmatprep.subr.mxu0 0.0
    %4605 = vmatpush1.msra.mxu0 0.0
    %4606 = vmatprep.subr.mxu0 0.0
    %4607 = vmatpush1.msra.mxu0 0.0
    %4608 = vmatprep.subr.mxu0 0.0
    %4609 = vmatpush1.msra.mxu0 0.0
    %4610 = vmatprep.subr.mxu0 0.0
    %4611 = vmatpush1.msra.mxu0 0.0
    %4612 = vmatprep.subr.mxu0 0.0
    %4613 = vmatpush1.msra.mxu0 0.0
    %4614 = vmatprep.subr.mxu0 0.0
    %4615 = vmatpush1.msra.mxu0 0.0
    %4616 = vmatprep.subr.mxu0 0.0
    %4617 = vmatpush1.msra.mxu0 0.0
    %4618 = vmatprep.subr.mxu0 0.0
    %4619 = vmatpush1.msra.mxu0 0.0
    %4620 = vmatprep.subr.mxu0 0.0
    %4621 = vmatpush1.msra.mxu0 0.0
    %4622 = vmatprep.subr.mxu0 0.0
    %4623 = vmatpush1.msra.mxu0 0.0
    %4624 = vmatprep.subr.mxu0 0.0
    %4625 = vmatpush1.msra.mxu0 0.0
    %4626 = vmatprep.subr.mxu0 0.0
    %4627 = vmatpush1.msra.mxu0 0.0
    %4628 = vmatprep.subr.mxu0 0.0
    %4629 = vmatpush1.msra.mxu0 0.0
    %4630 = vmatprep.subr.mxu0 0.0
    %4631 = vmatpush1.msra.mxu0 0.0
    %4632 = vmatprep.mubr.f32.mxu0 0.0
    %4633 = vmatmul.mubr.f32.gmra.mrb[0].mxu0 %v4534
    %v4634 = vpop.f32.mrb[0].mxu0
    %v4635 = vadd.f32 0.0, %v4634
    %v4636 = vpop.f32.mrb[0].mxu0
    %v4637 = vadd.f32 0.0, %v4636
    %4638 = vdwg.mxu0
    %v4639 = vadd.f32 %v4532, %v4635
    %v4640 = vadd.f32 %v4533, %v4637
    %v4641 = vld [vmem:[%s8] sm:$0x3]
    %v4643 = vlaneseq
    %v4644 = vshrl.u32 %v4643, 7
    %v4645 = vsub.s32 0, %v4644
    %v4646 = vrot.slane %v4641, %v4645
    %v4647 = vlaneseq
    %v4648 = vshrl.u32 %v4647, 7
    %v4649 = vsub.s32 1, %v4648
    %v4650 = vrot.slane %v4641, %v4649
    %v4653 = vadd.f32 %v4639, %v4646
    %v4654 = vadd.f32 %v4640, %v4650
    %v4657 = vrot.slane %v4653, 2
    %v4658 = vrot.slane %v4654, 2
    %v4661 = vmax.f32 %v4653, %v4657
    %v4662 = vmax.f32 %v4654, %v4658
    %4663 = vmatprep.subr.mxu0 %v3719
    %4664 = vmatpush1.msra.mxu0 %v3718
    %4665 = vmatprep.subr.mxu0 %v3721
    %4666 = vmatpush1.msra.mxu0 %v3720
    %4667 = vmatprep.subr.mxu0 %v3723
    %4668 = vmatpush1.msra.mxu0 %v3722
    %4669 = vmatprep.subr.mxu0 %v3725
    %4670 = vmatpush1.msra.mxu0 %v3724
    %4671 = vmatprep.subr.mxu0 %v3727
    %4672 = vmatpush1.msra.mxu0 %v3726
    %4673 = vmatprep.subr.mxu0 %v3729
    %4674 = vmatpush1.msra.mxu0 %v3728
    %4675 = vmatprep.subr.mxu0 %v3731
    %4676 = vmatpush1.msra.mxu0 %v3730
    %4677 = vmatprep.subr.mxu0 %v3733
    %4678 = vmatpush1.msra.mxu0 %v3732
    %4679 = vmatprep.subr.mxu0 %v3735
    %4680 = vmatpush1.msra.mxu0 %v3734
    %4681 = vmatprep.subr.mxu0 %v3737
    %4682 = vmatpush1.msra.mxu0 %v3736
    %4683 = vmatprep.subr.mxu0 %v3739
    %4684 = vmatpush1.msra.mxu0 %v3738
    %4685 = vmatprep.subr.mxu0 %v3741
    %4686 = vmatpush1.msra.mxu0 %v3740
    %4687 = vmatprep.subr.mxu0 %v3743
    %4688 = vmatpush1.msra.mxu0 %v3742
    %4689 = vmatprep.subr.mxu0 %v3745
    %4690 = vmatpush1.msra.mxu0 %v3744
    %4691 = vmatprep.subr.mxu0 %v3747
    %4692 = vmatpush1.msra.mxu0 %v3746
    %4693 = vmatprep.subr.mxu0 %v3749
    %4694 = vmatpush1.msra.mxu0 %v3748
    %4695 = vmatprep.subr.mxu0 0.0
    %4696 = vmatpush1.msra.mxu0 0.0
    %4697 = vmatprep.subr.mxu0 0.0
    %4698 = vmatpush1.msra.mxu0 0.0
    %4699 = vmatprep.subr.mxu0 0.0
    %4700 = vmatpush1.msra.mxu0 0.0
    %4701 = vmatprep.subr.mxu0 0.0
    %4702 = vmatpush1.msra.mxu0 0.0
    %4703 = vmatprep.subr.mxu0 0.0
    %4704 = vmatpush1.msra.mxu0 0.0
    %4705 = vmatprep.subr.mxu0 0.0
    %4706 = vmatpush1.msra.mxu0 0.0
    %4707 = vmatprep.subr.mxu0 0.0
    %4708 = vmatpush1.msra.mxu0 0.0
    %4709 = vmatprep.subr.mxu0 0.0
    %4710 = vmatpush1.msra.mxu0 0.0
    %4711 = vmatprep.subr.mxu0 0.0
    %4712 = vmatpush1.msra.mxu0 0.0
    %4713 = vmatprep.subr.mxu0 0.0
    %4714 = vmatpush1.msra.mxu0 0.0
    %4715 = vmatprep.subr.mxu0 0.0
    %4716 = vmatpush1.msra.mxu0 0.0
    %4717 = vmatprep.subr.mxu0 0.0
    %4718 = vmatpush1.msra.mxu0 0.0
    %4719 = vmatprep.subr.mxu0 0.0
    %4720 = vmatpush1.msra.mxu0 0.0
    %4721 = vmatprep.subr.mxu0 0.0
    %4722 = vmatpush1.msra.mxu0 0.0
    %4723 = vmatprep.subr.mxu0 0.0
    %4724 = vmatpush1.msra.mxu0 0.0
    %4725 = vmatprep.subr.mxu0 0.0
    %4726 = vmatpush1.msra.mxu0 0.0
    %4727 = vmatprep.mubr.f32.mxu0 0.0
    %4728 = vmatmul.mubr.f32.gmra.mrb[0].mxu0 %v4106
    %v4729 = vpop.f32.mrb[0].mxu0
    %v4730 = vadd.f32 0.0, %v4729
    %v4731 = vpop.f32.mrb[0].mxu0
    %v4732 = vadd.f32 0.0, %v4731
    %4733 = vdwg.mxu0
    %4734 = vmatprep.subr.mxu0 %v3685
    %4735 = vmatpush1.msra.mxu0 %v3684
    %4736 = vmatprep.subr.mxu0 %v3687
    %4737 = vmatpush1.msra.mxu0 %v3686
    %4738 = vmatprep.subr.mxu0 %v3689
    %4739 = vmatpush1.msra.mxu0 %v3688
    %4740 = vmatprep.subr.mxu0 %v3691
    %4741 = vmatpush1.msra.mxu0 %v3690
    %4742 = vmatprep.subr.mxu0 %v3693
    %4743 = vmatpush1.msra.mxu0 %v3692
    %4744 = vmatprep.subr.mxu0 %v3695
    %4745 = vmatpush1.msra.mxu0 %v3694
    %4746 = vmatprep.subr.mxu0 %v3697
    %4747 = vmatpush1.msra.mxu0 %v3696
    %4748 = vmatprep.subr.mxu0 %v3699
    %4749 = vmatpush1.msra.mxu0 %v3698
    %4750 = vmatprep.subr.mxu0 %v3701
    %4751 = vmatpush1.msra.mxu0 %v3700
    %4752 = vmatprep.subr.mxu0 %v3703
    %4753 = vmatpush1.msra.mxu0 %v3702
    %4754 = vmatprep.subr.mxu0 %v3705
    %4755 = vmatpush1.msra.mxu0 %v3704
    %4756 = vmatprep.subr.mxu0 %v3707
    %4757 = vmatpush1.msra.mxu0 %v3706
    %4758 = vmatprep.subr.mxu0 %v3709
    %4759 = vmatpush1.msra.mxu0 %v3708
    %4760 = vmatprep.subr.mxu0 %v3711
    %4761 = vmatpush1.msra.mxu0 %v3710
    %4762 = vmatprep.subr.mxu0 %v3713
    %4763 = vmatpush1.msra.mxu0 %v3712
    %4764 = vmatprep.subr.mxu0 %v3715
    %4765 = vmatpush1.msra.mxu0 %v3714
    %4766 = vmatprep.subr.mxu0 0.0
    %4767 = vmatpush1.msra.mxu0 0.0
    %4768 = vmatprep.subr.mxu0 0.0
    %4769 = vmatpush1.msra.mxu0 0.0
    %4770 = vmatprep.subr.mxu0 0.0
    %4771 = vmatpush1.msra.mxu0 0.0
    %4772 = vmatprep.subr.mxu0 0.0
    %4773 = vmatpush1.msra.mxu0 0.0
    %4774 = vmatprep.subr.mxu0 0.0
    %4775 = vmatpush1.msra.mxu0 0.0
    %4776 = vmatprep.subr.mxu0 0.0
    %4777 = vmatpush1.msra.mxu0 0.0
    %4778 = vmatprep.subr.mxu0 0.0
    %4779 = vmatpush1.msra.mxu0 0.0
    %4780 = vmatprep.subr.mxu0 0.0
    %4781 = vmatpush1.msra.mxu0 0.0
    %4782 = vmatprep.subr.mxu0 0.0
    %4783 = vmatpush1.msra.mxu0 0.0
    %4784 = vmatprep.subr.mxu0 0.0
    %4785 = vmatpush1.msra.mxu0 0.0
    %4786 = vmatprep.subr.mxu0 0.0
    %4787 = vmatpush1.msra.mxu0 0.0
    %4788 = vmatprep.subr.mxu0 0.0
    %4789 = vmatpush1.msra.mxu0 0.0
    %4790 = vmatprep.subr.mxu0 0.0
    %4791 = vmatpush1.msra.mxu0 0.0
    %4792 = vmatprep.subr.mxu0 0.0
    %4793 = vmatpush1.msra.mxu0 0.0
    %4794 = vmatprep.subr.mxu0 0.0
    %4795 = vmatpush1.msra.mxu0 0.0
    %4796 = vmatprep.subr.mxu0 0.0
    %4797 = vmatpush1.msra.mxu0 0.0
    %4798 = vmatprep.mubr.f32.mxu0 0.0
    %4799 = vmatmul.mubr.f32.gmra.mrb[0].mxu0 %v3999
    %v4800 = vpop.f32.mrb[0].mxu0
    %v4801 = vadd.f32 %v4730, %v4800
    %v4802 = vpop.f32.mrb[0].mxu0
    %v4803 = vadd.f32 %v4732, %v4802
    %4804 = vdwg.mxu0
    %4805 = vmatprep.subr.mxu0 %v3895
    %4806 = vmatpush1.msra.mxu0 %v3894
    %4807 = vmatprep.subr.mxu0 %v3897
    %4808 = vmatpush1.msra.mxu0 %v3896
    %4809 = vmatprep.subr.mxu0 %v3899
    %4810 = vmatpush1.msra.mxu0 %v3898
    %4811 = vmatprep.subr.mxu0 %v3901
    %4812 = vmatpush1.msra.mxu0 %v3900
    %4813 = vmatprep.subr.mxu0 %v3903
    %4814 = vmatpush1.msra.mxu0 %v3902
    %4815 = vmatprep.subr.mxu0 %v3905
    %4816 = vmatpush1.msra.mxu0 %v3904
    %4817 = vmatprep.subr.mxu0 %v3907
    %4818 = vmatpush1.msra.mxu0 %v3906
    %4819 = vmatprep.subr.mxu0 %v3909
    %4820 = vmatpush1.msra.mxu0 %v3908
    %4821 = vmatprep.subr.mxu0 %v3911
    %4822 = vmatpush1.msra.mxu0 %v3910
    %4823 = vmatprep.subr.mxu0 %v3913
    %4824 = vmatpush1.msra.mxu0 %v3912
    %4825 = vmatprep.subr.mxu0 %v3915
    %4826 = vmatpush1.msra.mxu0 %v3914
    %4827 = vmatprep.subr.mxu0 %v3917
    %4828 = vmatpush1.msra.mxu0 %v3916
    %4829 = vmatprep.subr.mxu0 %v3919
    %4830 = vmatpush1.msra.mxu0 %v3918
    %4831 = vmatprep.subr.mxu0 %v3921
    %4832 = vmatpush1.msra.mxu0 %v3920
    %4833 = vmatprep.subr.mxu0 %v3923
    %4834 = vmatpush1.msra.mxu0 %v3922
    %4835 = vmatprep.subr.mxu0 %v3925
    %4836 = vmatpush1.msra.mxu0 %v3924
    %4837 = vmatprep.subr.mxu0 0.0
    %4838 = vmatpush1.msra.mxu0 0.0
    %4839 = vmatprep.subr.mxu0 0.0
    %4840 = vmatpush1.msra.mxu0 0.0
    %4841 = vmatprep.subr.mxu0 0.0
    %4842 = vmatpush1.msra.mxu0 0.0
    %4843 = vmatprep.subr.mxu0 0.0
    %4844 = vmatpush1.msra.mxu0 0.0
    %4845 = vmatprep.subr.mxu0 0.0
    %4846 = vmatpush1.msra.mxu0 0.0
    %4847 = vmatprep.subr.mxu0 0.0
    %4848 = vmatpush1.msra.mxu0 0.0
    %4849 = vmatprep.subr.mxu0 0.0
    %4850 = vmatpush1.msra.mxu0 0.0
    %4851 = vmatprep.subr.mxu0 0.0
    %4852 = vmatpush1.msra.mxu0 0.0
    %4853 = vmatprep.subr.mxu0 0.0
    %4854 = vmatpush1.msra.mxu0 0.0
    %4855 = vmatprep.subr.mxu0 0.0
    %4856 = vmatpush1.msra.mxu0 0.0
    %4857 = vmatprep.subr.mxu0 0.0
    %4858 = vmatpush1.msra.mxu0 0.0
    %4859 = vmatprep.subr.mxu0 0.0
    %4860 = vmatpush1.msra.mxu0 0.0
    %4861 = vmatprep.subr.mxu0 0.0
    %4862 = vmatpush1.msra.mxu0 0.0
    %4863 = vmatprep.subr.mxu0 0.0
    %4864 = vmatpush1.msra.mxu0 0.0
    %4865 = vmatprep.subr.mxu0 0.0
    %4866 = vmatpush1.msra.mxu0 0.0
    %4867 = vmatprep.subr.mxu0 0.0
    %4868 = vmatpush1.msra.mxu0 0.0
    %4869 = vmatprep.mubr.f32.mxu0 0.0
    %4870 = vmatmul.mubr.f32.gmra.mrb[0].mxu0 %v4213
    %v4871 = vpop.f32.mrb[0].mxu0
    %v4872 = vadd.f32 0.0, %v4871
    %v4873 = vpop.f32.mrb[0].mxu0
    %v4874 = vadd.f32 0.0, %v4873
    %4875 = vdwg.mxu0
    %v4876 = vadd.f32 %v4801, %v4872
    %v4877 = vadd.f32 %v4803, %v4874
    %4878 = vmatprep.subr.mxu0 %v4002
    %4879 = vmatpush1.msra.mxu0 %v4001
    %4880 = vmatprep.subr.mxu0 %v4004
    %4881 = vmatpush1.msra.mxu0 %v4003
    %4882 = vmatprep.subr.mxu0 %v4006
    %4883 = vmatpush1.msra.mxu0 %v4005
    %4884 = vmatprep.subr.mxu0 %v4008
    %4885 = vmatpush1.msra.mxu0 %v4007
    %4886 = vmatprep.subr.mxu0 %v4010
    %4887 = vmatpush1.msra.mxu0 %v4009
    %4888 = vmatprep.subr.mxu0 %v4012
    %4889 = vmatpush1.msra.mxu0 %v4011
    %4890 = vmatprep.subr.mxu0 %v4014
    %4891 = vmatpush1.msra.mxu0 %v4013
    %4892 = vmatprep.subr.mxu0 %v4016
    %4893 = vmatpush1.msra.mxu0 %v4015
    %4894 = vmatprep.subr.mxu0 %v4018
    %4895 = vmatpush1.msra.mxu0 %v4017
    %4896 = vmatprep.subr.mxu0 %v4020
    %4897 = vmatpush1.msra.mxu0 %v4019
    %4898 = vmatprep.subr.mxu0 %v4022
    %4899 = vmatpush1.msra.mxu0 %v4021
    %4900 = vmatprep.subr.mxu0 %v4024
    %4901 = vmatpush1.msra.mxu0 %v4023
    %4902 = vmatprep.subr.mxu0 %v4026
    %4903 = vmatpush1.msra.mxu0 %v4025
    %4904 = vmatprep.subr.mxu0 %v4028
    %4905 = vmatpush1.msra.mxu0 %v4027
    %4906 = vmatprep.subr.mxu0 %v4030
    %4907 = vmatpush1.msra.mxu0 %v4029
    %4908 = vmatprep.subr.mxu0 %v4032
    %4909 = vmatpush1.msra.mxu0 %v4031
    %4910 = vmatprep.subr.mxu0 0.0
    %4911 = vmatpush1.msra.mxu0 0.0
    %4912 = vmatprep.subr.mxu0 0.0
    %4913 = vmatpush1.msra.mxu0 0.0
    %4914 = vmatprep.subr.mxu0 0.0
    %4915 = vmatpush1.msra.mxu0 0.0
    %4916 = vmatprep.subr.mxu0 0.0
    %4917 = vmatpush1.msra.mxu0 0.0
    %4918 = vmatprep.subr.mxu0 0.0
    %4919 = vmatpush1.msra.mxu0 0.0
    %4920 = vmatprep.subr.mxu0 0.0
    %4921 = vmatpush1.msra.mxu0 0.0
    %4922 = vmatprep.subr.mxu0 0.0
    %4923 = vmatpush1.msra.mxu0 0.0
    %4924 = vmatprep.subr.mxu0 0.0
    %4925 = vmatpush1.msra.mxu0 0.0
    %4926 = vmatprep.subr.mxu0 0.0
    %4927 = vmatpush1.msra.mxu0 0.0
    %4928 = vmatprep.subr.mxu0 0.0
    %4929 = vmatpush1.msra.mxu0 0.0
    %4930 = vmatprep.subr.mxu0 0.0
    %4931 = vmatpush1.msra.mxu0 0.0
    %4932 = vmatprep.subr.mxu0 0.0
    %4933 = vmatpush1.msra.mxu0 0.0
    %4934 = vmatprep.subr.mxu0 0.0
    %4935 = vmatpush1.msra.mxu0 0.0
    %4936 = vmatprep.subr.mxu0 0.0
    %4937 = vmatpush1.msra.mxu0 0.0
    %4938 = vmatprep.subr.mxu0 0.0
    %4939 = vmatpush1.msra.mxu0 0.0
    %4940 = vmatprep.subr.mxu0 0.0
    %4941 = vmatpush1.msra.mxu0 0.0
    %4942 = vmatprep.mubr.f32.mxu0 0.0
    %4943 = vmatmul.mubr.f32.gmra.mrb[0].mxu0 %v4320
    %v4944 = vpop.f32.mrb[0].mxu0
    %v4945 = vadd.f32 0.0, %v4944
    %v4946 = vpop.f32.mrb[0].mxu0
    %v4947 = vadd.f32 0.0, %v4946
    %4948 = vdwg.mxu0
    %v4949 = vadd.f32 %v4876, %v4945
    %v4950 = vadd.f32 %v4877, %v4947
    %4951 = vmatprep.subr.mxu0 %v4109
    %4952 = vmatpush1.msra.mxu0 %v4108
    %4953 = vmatprep.subr.mxu0 %v4111
    %4954 = vmatpush1.msra.mxu0 %v4110
    %4955 = vmatprep.subr.mxu0 %v4113
    %4956 = vmatpush1.msra.mxu0 %v4112
    %4957 = vmatprep.subr.mxu0 %v4115
    %4958 = vmatpush1.msra.mxu0 %v4114
    %4959 = vmatprep.subr.mxu0 %v4117
    %4960 = vmatpush1.msra.mxu0 %v4116
    %4961 = vmatprep.subr.mxu0 %v4119
    %4962 = vmatpush1.msra.mxu0 %v4118
    %4963 = vmatprep.subr.mxu0 %v4121
    %4964 = vmatpush1.msra.mxu0 %v4120
    %4965 = vmatprep.subr.mxu0 %v4123
    %4966 = vmatpush1.msra.mxu0 %v4122
    %4967 = vmatprep.subr.mxu0 %v4125
    %4968 = vmatpush1.msra.mxu0 %v4124
    %4969 = vmatprep.subr.mxu0 %v4127
    %4970 = vmatpush1.msra.mxu0 %v4126
    %4971 = vmatprep.subr.mxu0 %v4129
    %4972 = vmatpush1.msra.mxu0 %v4128
    %4973 = vmatprep.subr.mxu0 %v4131
    %4974 = vmatpush1.msra.mxu0 %v4130
    %4975 = vmatprep.subr.mxu0 %v4133
    %4976 = vmatpush1.msra.mxu0 %v4132
    %4977 = vmatprep.subr.mxu0 %v4135
    %4978 = vmatpush1.msra.mxu0 %v4134
    %4979 = vmatprep.subr.mxu0 %v4137
    %4980 = vmatpush1.msra.mxu0 %v4136
    %4981 = vmatprep.subr.mxu0 %v4139
    %4982 = vmatpush1.msra.mxu0 %v4138
    %4983 = vmatprep.subr.mxu0 0.0
    %4984 = vmatpush1.msra.mxu0 0.0
    %4985 = vmatprep.subr.mxu0 0.0
    %4986 = vmatpush1.msra.mxu0 0.0
    %4987 = vmatprep.subr.mxu0 0.0
    %4988 = vmatpush1.msra.mxu0 0.0
    %4989 = vmatprep.subr.mxu0 0.0
    %4990 = vmatpush1.msra.mxu0 0.0
    %4991 = vmatprep.subr.mxu0 0.0
    %4992 = vmatpush1.msra.mxu0 0.0
    %4993 = vmatprep.subr.mxu0 0.0
    %4994 = vmatpush1.msra.mxu0 0.0
    %4995 = vmatprep.subr.mxu0 0.0
    %4996 = vmatpush1.msra.mxu0 0.0
    %4997 = vmatprep.subr.mxu0 0.0
    %4998 = vmatpush1.msra.mxu0 0.0
    %4999 = vmatprep.subr.mxu0 0.0
    %5000 = vmatpush1.msra.mxu0 0.0
    %5001 = vmatprep.subr.mxu0 0.0
    %5002 = vmatpush1.msra.mxu0 0.0
    %5003 = vmatprep.subr.mxu0 0.0
    %5004 = vmatpush1.msra.mxu0 0.0
    %5005 = vmatprep.subr.mxu0 0.0
    %5006 = vmatpush1.msra.mxu0 0.0
    %5007 = vmatprep.subr.mxu0 0.0
    %5008 = vmatpush1.msra.mxu0 0.0
    %5009 = vmatprep.subr.mxu0 0.0
    %5010 = vmatpush1.msra.mxu0 0.0
    %5011 = vmatprep.subr.mxu0 0.0
    %5012 = vmatpush1.msra.mxu0 0.0
    %5013 = vmatprep.subr.mxu0 0.0
    %5014 = vmatpush1.msra.mxu0 0.0
    %5015 = vmatprep.mubr.f32.mxu0 0.0
    %5016 = vmatmul.mubr.f32.gmra.mrb[0].mxu0 %v4427
    %v5017 = vpop.f32.mrb[0].mxu0
    %v5018 = vadd.f32 0.0, %v5017
    %v5019 = vpop.f32.mrb[0].mxu0
    %v5020 = vadd.f32 0.0, %v5019
    %5021 = vdwg.mxu0
    %v5022 = vadd.f32 %v4949, %v5018
    %v5023 = vadd.f32 %v4950, %v5020
    %5024 = vmatprep.subr.mxu0 %v4216
    %5025 = vmatpush1.msra.mxu0 %v4215
    %5026 = vmatprep.subr.mxu0 %v4218
    %5027 = vmatpush1.msra.mxu0 %v4217
    %5028 = vmatprep.subr.mxu0 %v4220
    %5029 = vmatpush1.msra.mxu0 %v4219
    %5030 = vmatprep.subr.mxu0 %v4222
    %5031 = vmatpush1.msra.mxu0 %v4221
    %5032 = vmatprep.subr.mxu0 %v4224
    %5033 = vmatpush1.msra.mxu0 %v4223
    %5034 = vmatprep.subr.mxu0 %v4226
    %5035 = vmatpush1.msra.mxu0 %v4225
    %5036 = vmatprep.subr.mxu0 %v4228
    %5037 = vmatpush1.msra.mxu0 %v4227
    %5038 = vmatprep.subr.mxu0 %v4230
    %5039 = vmatpush1.msra.mxu0 %v4229
    %5040 = vmatprep.subr.mxu0 %v4232
    %5041 = vmatpush1.msra.mxu0 %v4231
    %5042 = vmatprep.subr.mxu0 %v4234
    %5043 = vmatpush1.msra.mxu0 %v4233
    %5044 = vmatprep.subr.mxu0 %v4236
    %5045 = vmatpush1.msra.mxu0 %v4235
    %5046 = vmatprep.subr.mxu0 %v4238
    %5047 = vmatpush1.msra.mxu0 %v4237
    %5048 = vmatprep.subr.mxu0 %v4240
    %5049 = vmatpush1.msra.mxu0 %v4239
    %5050 = vmatprep.subr.mxu0 %v4242
    %5051 = vmatpush1.msra.mxu0 %v4241
    %5052 = vmatprep.subr.mxu0 %v4244
    %5053 = vmatpush1.msra.mxu0 %v4243
    %5054 = vmatprep.subr.mxu0 %v4246
    %5055 = vmatpush1.msra.mxu0 %v4245
    %5056 = vmatprep.subr.mxu0 0.0
    %5057 = vmatpush1.msra.mxu0 0.0
    %5058 = vmatprep.subr.mxu0 0.0
    %5059 = vmatpush1.msra.mxu0 0.0
    %5060 = vmatprep.subr.mxu0 0.0
    %5061 = vmatpush1.msra.mxu0 0.0
    %5062 = vmatprep.subr.mxu0 0.0
    %5063 = vmatpush1.msra.mxu0 0.0
    %5064 = vmatprep.subr.mxu0 0.0
    %5065 = vmatpush1.msra.mxu0 0.0
    %5066 = vmatprep.subr.mxu0 0.0
    %5067 = vmatpush1.msra.mxu0 0.0
    %5068 = vmatprep.subr.mxu0 0.0
    %5069 = vmatpush1.msra.mxu0 0.0
    %5070 = vmatprep.subr.mxu0 0.0
    %5071 = vmatpush1.msra.mxu0 0.0
    %5072 = vmatprep.subr.mxu0 0.0
    %5073 = vmatpush1.msra.mxu0 0.0
    %5074 = vmatprep.subr.mxu0 0.0
    %5075 = vmatpush1.msra.mxu0 0.0
    %5076 = vmatprep.subr.mxu0 0.0
    %5077 = vmatpush1.msra.mxu0 0.0
    %5078 = vmatprep.subr.mxu0 0.0
    %5079 = vmatpush1.msra.mxu0 0.0
    %5080 = vmatprep.subr.mxu0 0.0
    %5081 = vmatpush1.msra.mxu0 0.0
    %5082 = vmatprep.subr.mxu0 0.0
    %5083 = vmatpush1.msra.mxu0 0.0
    %5084 = vmatprep.subr.mxu0 0.0
    %5085 = vmatpush1.msra.mxu0 0.0
    %5086 = vmatprep.subr.mxu0 0.0
    %5087 = vmatpush1.msra.mxu0 0.0
    %5088 = vmatprep.mubr.f32.mxu0 0.0
    %5089 = vmatmul.mubr.f32.gmra.mrb[0].mxu0 %v4534
    %v5090 = vpop.f32.mrb[0].mxu0
    %v5091 = vadd.f32 0.0, %v5090
    %v5092 = vpop.f32.mrb[0].mxu0
    %v5093 = vadd.f32 0.0, %v5092
    %5094 = vdwg.mxu0
    %v5095 = vadd.f32 %v5022, %v5091
    %v5096 = vadd.f32 %v5023, %v5093
    %v5097 = vld [vmem:[#allocation4 + $0x18] sm:$0xf]
    %5098 = vmatprep.subr.mxu0 %v4323
    %5099 = vmatpush1.msra.mxu0 %v4322
    %5100 = vmatprep.subr.mxu0 %v4325
    %5101 = vmatpush1.msra.mxu0 %v4324
    %5102 = vmatprep.subr.mxu0 %v4327
    %5103 = vmatpush1.msra.mxu0 %v4326
    %5104 = vmatprep.subr.mxu0 %v4329
    %5105 = vmatpush1.msra.mxu0 %v4328
    %5106 = vmatprep.subr.mxu0 %v4331
    %5107 = vmatpush1.msra.mxu0 %v4330
    %5108 = vmatprep.subr.mxu0 %v4333
    %5109 = vmatpush1.msra.mxu0 %v4332
    %5110 = vmatprep.subr.mxu0 %v4335
    %5111 = vmatpush1.msra.mxu0 %v4334
    %5112 = vmatprep.subr.mxu0 %v4337
    %5113 = vmatpush1.msra.mxu0 %v4336
    %5114 = vmatprep.subr.mxu0 %v4339
    %5115 = vmatpush1.msra.mxu0 %v4338
    %5116 = vmatprep.subr.mxu0 %v4341
    %5117 = vmatpush1.msra.mxu0 %v4340
    %5118 = vmatprep.subr.mxu0 %v4343
    %5119 = vmatpush1.msra.mxu0 %v4342
    %5120 = vmatprep.subr.mxu0 %v4345
    %5121 = vmatpush1.msra.mxu0 %v4344
    %5122 = vmatprep.subr.mxu0 %v4347
    %5123 = vmatpush1.msra.mxu0 %v4346
    %5124 = vmatprep.subr.mxu0 %v4349
    %5125 = vmatpush1.msra.mxu0 %v4348
    %5126 = vmatprep.subr.mxu0 %v4351
    %5127 = vmatpush1.msra.mxu0 %v4350
    %5128 = vmatprep.subr.mxu0 %v4353
    %5129 = vmatpush1.msra.mxu0 %v4352
    %5130 = vmatprep.subr.mxu0 0.0
    %5131 = vmatpush1.msra.mxu0 0.0
    %5132 = vmatprep.subr.mxu0 0.0
    %5133 = vmatpush1.msra.mxu0 0.0
    %5134 = vmatprep.subr.mxu0 0.0
    %5135 = vmatpush1.msra.mxu0 0.0
    %5136 = vmatprep.subr.mxu0 0.0
    %5137 = vmatpush1.msra.mxu0 0.0
    %5138 = vmatprep.subr.mxu0 0.0
    %5139 = vmatpush1.msra.mxu0 0.0
    %5140 = vmatprep.subr.mxu0 0.0
    %5141 = vmatpush1.msra.mxu0 0.0
    %5142 = vmatprep.subr.mxu0 0.0
    %5143 = vmatpush1.msra.mxu0 0.0
    %5144 = vmatprep.subr.mxu0 0.0
    %5145 = vmatpush1.msra.mxu0 0.0
    %5146 = vmatprep.subr.mxu0 0.0
    %5147 = vmatpush1.msra.mxu0 0.0
    %5148 = vmatprep.subr.mxu0 0.0
    %5149 = vmatpush1.msra.mxu0 0.0
    %5150 = vmatprep.subr.mxu0 0.0
    %5151 = vmatpush1.msra.mxu0 0.0
    %5152 = vmatprep.subr.mxu0 0.0
    %5153 = vmatpush1.msra.mxu0 0.0
    %5154 = vmatprep.subr.mxu0 0.0
    %5155 = vmatpush1.msra.mxu0 0.0
    %5156 = vmatprep.subr.mxu0 0.0
    %5157 = vmatpush1.msra.mxu0 0.0
    %5158 = vmatprep.subr.mxu0 0.0
    %5159 = vmatpush1.msra.mxu0 0.0
    %5160 = vmatprep.subr.mxu0 0.0
    %5161 = vmatpush1.msra.mxu0 0.0
    %5162 = vmatprep.mubr.f32.mxu0 0.0
    %5163 = vmatmul.mubr.f32.gmra.mrb[0].mxu0 %v5097
    %v5164 = vpop.f32.mrb[0].mxu0
    %v5165 = vadd.f32 0.0, %v5164
    %v5166 = vpop.f32.mrb[0].mxu0
    %v5167 = vadd.f32 0.0, %v5166
    %5168 = vdwg.mxu0
    %v5169 = vadd.f32 %v5095, %v5165
    %v5170 = vadd.f32 %v5096, %v5167
    %v5171 = vld [vmem:[#allocation4 + $0x1a] sm:$0xf]
    %5172 = vmatprep.subr.mxu0 %v4430
    %5173 = vmatpush1.msra.mxu0 %v4429
    %5174 = vmatprep.subr.mxu0 %v4432
    %5175 = vmatpush1.msra.mxu0 %v4431
    %5176 = vmatprep.subr.mxu0 %v4434
    %5177 = vmatpush1.msra.mxu0 %v4433
    %5178 = vmatprep.subr.mxu0 %v4436
    %5179 = vmatpush1.msra.mxu0 %v4435
    %5180 = vmatprep.subr.mxu0 %v4438
    %5181 = vmatpush1.msra.mxu0 %v4437
    %5182 = vmatprep.subr.mxu0 %v4440
    %5183 = vmatpush1.msra.mxu0 %v4439
    %5184 = vmatprep.subr.mxu0 %v4442
    %5185 = vmatpush1.msra.mxu0 %v4441
    %5186 = vmatprep.subr.mxu0 %v4444
    %5187 = vmatpush1.msra.mxu0 %v4443
    %5188 = vmatprep.subr.mxu0 %v4446
    %5189 = vmatpush1.msra.mxu0 %v4445
    %5190 = vmatprep.subr.mxu0 %v4448
    %5191 = vmatpush1.msra.mxu0 %v4447
    %5192 = vmatprep.subr.mxu0 %v4450
    %5193 = vmatpush1.msra.mxu0 %v4449
    %5194 = vmatprep.subr.mxu0 %v4452
    %5195 = vmatpush1.msra.mxu0 %v4451
    %5196 = vmatprep.subr.mxu0 %v4454
    %5197 = vmatpush1.msra.mxu0 %v4453
    %5198 = vmatprep.subr.mxu0 %v4456
    %5199 = vmatpush1.msra.mxu0 %v4455
    %5200 = vmatprep.subr.mxu0 %v4458
    %5201 = vmatpush1.msra.mxu0 %v4457
    %5202 = vmatprep.subr.mxu0 %v4460
    %5203 = vmatpush1.msra.mxu0 %v4459
    %5204 = vmatprep.subr.mxu0 0.0
    %5205 = vmatpush1.msra.mxu0 0.0
    %5206 = vmatprep.subr.mxu0 0.0
    %5207 = vmatpush1.msra.mxu0 0.0
    %5208 = vmatprep.subr.mxu0 0.0
    %5209 = vmatpush1.msra.mxu0 0.0
    %5210 = vmatprep.subr.mxu0 0.0
    %5211 = vmatpush1.msra.mxu0 0.0
    %5212 = vmatprep.subr.mxu0 0.0
    %5213 = vmatpush1.msra.mxu0 0.0
    %5214 = vmatprep.subr.mxu0 0.0
    %5215 = vmatpush1.msra.mxu0 0.0
    %5216 = vmatprep.subr.mxu0 0.0
    %5217 = vmatpush1.msra.mxu0 0.0
    %5218 = vmatprep.subr.mxu0 0.0
    %5219 = vmatpush1.msra.mxu0 0.0
    %5220 = vmatprep.subr.mxu0 0.0
    %5221 = vmatpush1.msra.mxu0 0.0
    %5222 = vmatprep.subr.mxu0 0.0
    %5223 = vmatpush1.msra.mxu0 0.0
    %5224 = vmatprep.subr.mxu0 0.0
    %5225 = vmatpush1.msra.mxu0 0.0
    %5226 = vmatprep.subr.mxu0 0.0
    %5227 = vmatpush1.msra.mxu0 0.0
    %5228 = vmatprep.subr.mxu0 0.0
    %5229 = vmatpush1.msra.mxu0 0.0
    %5230 = vmatprep.subr.mxu0 0.0
    %5231 = vmatpush1.msra.mxu0 0.0
    %5232 = vmatprep.subr.mxu0 0.0
    %5233 = vmatpush1.msra.mxu0 0.0
    %5234 = vmatprep.subr.mxu0 0.0
    %5235 = vmatpush1.msra.mxu0 0.0
    %5236 = vmatprep.mubr.f32.mxu0 0.0
    %5237 = vmatmul.mubr.f32.gmra.mrb[0].mxu0 %v5171
    %v5238 = vpop.f32.mrb[0].mxu0
    %v5239 = vadd.f32 0.0, %v5238
    %v5240 = vpop.f32.mrb[0].mxu0
    %v5241 = vadd.f32 0.0, %v5240
    %5242 = vdwg.mxu0
    %v5243 = vadd.f32 %v5169, %v5239
    %v5244 = vadd.f32 %v5170, %v5241
    %v5245 = vld [vmem:[#allocation4 + $0x1c] sm:$0xf]
    %5246 = vmatprep.subr.mxu0 %v4537
    %5247 = vmatpush1.msra.mxu0 %v4536
    %5248 = vmatprep.subr.mxu0 %v4539
    %5249 = vmatpush1.msra.mxu0 %v4538
    %5250 = vmatprep.subr.mxu0 %v4541
    %5251 = vmatpush1.msra.mxu0 %v4540
    %5252 = vmatprep.subr.mxu0 %v4543
    %5253 = vmatpush1.msra.mxu0 %v4542
    %5254 = vmatprep.subr.mxu0 %v4545
    %5255 = vmatpush1.msra.mxu0 %v4544
    %5256 = vmatprep.subr.mxu0 %v4547
    %5257 = vmatpush1.msra.mxu0 %v4546
    %5258 = vmatprep.subr.mxu0 %v4549
    %5259 = vmatpush1.msra.mxu0 %v4548
    %5260 = vmatprep.subr.mxu0 %v4551
    %5261 = vmatpush1.msra.mxu0 %v4550
    %5262 = vmatprep.subr.mxu0 %v4553
    %5263 = vmatpush1.msra.mxu0 %v4552
    %5264 = vmatprep.subr.mxu0 %v4555
    %5265 = vmatpush1.msra.mxu0 %v4554
    %5266 = vmatprep.subr.mxu0 %v4557
    %5267 = vmatpush1.msra.mxu0 %v4556
    %5268 = vmatprep.subr.mxu0 %v4559
    %5269 = vmatpush1.msra.mxu0 %v4558
    %5270 = vmatprep.subr.mxu0 %v4561
    %5271 = vmatpush1.msra.mxu0 %v4560
    %5272 = vmatprep.subr.mxu0 %v4563
    %5273 = vmatpush1.msra.mxu0 %v4562
    %5274 = vmatprep.subr.mxu0 %v4565
    %5275 = vmatpush1.msra.mxu0 %v4564
    %5276 = vmatprep.subr.mxu0 %v4567
    %5277 = vmatpush1.msra.mxu0 %v4566
    %5278 = vmatprep.subr.mxu0 0.0
    %5279 = vmatpush1.msra.mxu0 0.0
    %5280 = vmatprep.subr.mxu0 0.0
    %5281 = vmatpush1.msra.mxu0 0.0
    %5282 = vmatprep.subr.mxu0 0.0
    %5283 = vmatpush1.msra.mxu0 0.0
    %5284 = vmatprep.subr.mxu0 0.0
    %5285 = vmatpush1.msra.mxu0 0.0
    %5286 = vmatprep.subr.mxu0 0.0
    %5287 = vmatpush1.msra.mxu0 0.0
    %5288 = vmatprep.subr.mxu0 0.0
    %5289 = vmatpush1.msra.mxu0 0.0
    %5290 = vmatprep.subr.mxu0 0.0
    %5291 = vmatpush1.msra.mxu0 0.0
    %5292 = vmatprep.subr.mxu0 0.0
    %5293 = vmatpush1.msra.mxu0 0.0
    %5294 = vmatprep.subr.mxu0 0.0
    %5295 = vmatpush1.msra.mxu0 0.0
    %5296 = vmatprep.subr.mxu0 0.0
    %5297 = vmatpush1.msra.mxu0 0.0
    %5298 = vmatprep.subr.mxu0 0.0
    %5299 = vmatpush1.msra.mxu0 0.0
    %5300 = vmatprep.subr.mxu0 0.0
    %5301 = vmatpush1.msra.mxu0 0.0
    %5302 = vmatprep.subr.mxu0 0.0
    %5303 = vmatpush1.msra.mxu0 0.0
    %5304 = vmatprep.subr.mxu0 0.0
    %5305 = vmatpush1.msra.mxu0 0.0
    %5306 = vmatprep.subr.mxu0 0.0
    %5307 = vmatpush1.msra.mxu0 0.0
    %5308 = vmatprep.subr.mxu0 0.0
    %5309 = vmatpush1.msra.mxu0 0.0
    %5310 = vmatprep.mubr.f32.mxu0 0.0
    %5311 = vmatmul.mubr.f32.gmra.mrb[0].mxu0 %v5245
    %v5312 = vpop.f32.mrb[0].mxu0
    %v5313 = vadd.f32 0.0, %v5312
    %v5314 = vpop.f32.mrb[0].mxu0
    %v5315 = vadd.f32 0.0, %v5314
    %5316 = vdwg.mxu0
    %v5317 = vadd.f32 %v5243, %v5313
    %v5318 = vadd.f32 %v5244, %v5315
    %v5319 = vadd.f32 %v5317, %v4646
    %v5320 = vadd.f32 %v5318, %v4650
    %v5323 = vrot.slane %v5319, 2
    %v5324 = vrot.slane %v5320, 2
    %v5327 = vmax.f32 %v5319, %v5323
    %v5328 = vmax.f32 %v5320, %v5324
    %v5329 = vmax.f32 %v4661, %v5327
    %v5330 = vmax.f32 %v4662, %v5328
    %v5333 = vcombine.low %v5329, %v5330
    %v5335 = vunpack.c.l.s4 1983009808
    %v5336 = vunpack.c.0.s8 %v5335
    %v5337 = vlaneseq
    %v5338 = vshrl.u32 %v5337, 7
    %v5339 = vsub.s32 %v5336, %v5338
    %v5340 = vrot.slane %v5333, %v5339
    %5342 = vst [vmem:[#allocation5] sm:$0xf] %v5340
    %v5343 = vld [vmem:[%s9] sm:$0x3]
    %v5344 = vld [vmem:[%s10] sm:$0x3]
    %vm5345 = vcmask 1041408
    %v5346 = vsel %vm5345, %v5329, 0.0
    %v5347 = vrot.slane %v5346, 4
    %v5348 = vadd.f32 %v5346, %v5347
    %v5349 = vrot.slane %v5348, 2
    %v5350 = vadd.f32 %v5348, %v5349
    %v5351 = vrot.slane %v5350, 1
    %v5352 = vadd.f32 %v5350, %v5351
    %v5353 = vsel %vm5345, %v5330, 0.0
    %v5354 = vrot.slane %v5353, 4
    %v5355 = vadd.f32 %v5353, %v5354
    %v5356 = vrot.slane %v5355, 2
    %v5357 = vadd.f32 %v5355, %v5356
    %v5358 = vrot.slane %v5357, 1
    %v5359 = vadd.f32 %v5357, %v5358
    %v5360 = vrcp.pop 2.0
    %v5361 = vmul.f32 %v5352, %v5360
    %v5362 = vmul.f32 %v5359, %v5360
    %v5363 = vmul.f32 %v5329, %v5329
    %v5364 = vmul.f32 %v5330, %v5330
    %v5365 = vsel %vm5345, %v5363, 0.0
    %v5366 = vrot.slane %v5365, 4
    %v5367 = vadd.f32 %v5365, %v5366
    %v5368 = vrot.slane %v5367, 2
    %v5369 = vadd.f32 %v5367, %v5368
    %v5370 = vrot.slane %v5369, 1
    %v5371 = vadd.f32 %v5369, %v5370
    %v5372 = vsel %vm5345, %v5364, 0.0
    %v5373 = vrot.slane %v5372, 4
    %v5374 = vadd.f32 %v5372, %v5373
    %v5375 = vrot.slane %v5374, 2
    %v5376 = vadd.f32 %v5374, %v5375
    %v5377 = vrot.slane %v5376, 1
    %v5378 = vadd.f32 %v5376, %v5377
    %v5379 = vmul.f32 %v5371, %v5360
    %v5380 = vmul.f32 %v5378, %v5360
    %v5381 = vmul.f32 %v5361, %v5361
    %v5382 = vmul.f32 %v5362, %v5362
    %v5383 = vsub.f32 %v5379, %v5381
    %v5384 = vsub.f32 %v5380, %v5382
    %v5385 = vmax.f32 %v5383, 0.0
    %v5386 = vmax.f32 %v5384, 0.0
    %v5387 = vadd.f32 %v5385, 1e-05
    %v5388 = vadd.f32 %v5386, 1e-05
    %v5389 = vrsqrt.pop %v5387
    %v5390 = vrsqrt.pop %v5388
    %v5393 = vcombine.low %v5389, %v5390
    %v5395 = vunpack.c.l.s4 1966171168
    %v5396 = vunpack.c.0.s8 %v5395
    %v5397 = vlaneseq
    %v5398 = vshrl.u32 %v5397, 7
    %v5399 = vsub.s32 %v5396, %v5398
    %v5400 = vrot.slane %v5393, %v5399
    %v5402 = vunpack.c.l.s4 1966171168
    %v5403 = vunpack.c.0.s8 %v5402
    %v5404 = vlaneseq
    %v5405 = vshrl.u32 %v5404, 7
    %v5406 = vsub.s32 %v5403, %v5405
    %v5407 = vrot.slane %v5400, %v5406
    %v5409 = vmul.f32 %v5343, %v5407
    %v5411 = vlaneseq
    %v5412 = vshrl.u32 %v5411, 7
    %v5413 = vsub.s32 0, %v5412
    %v5414 = vrot.slane %v5409, %v5413
    %v5415 = vlaneseq
    %v5416 = vshrl.u32 %v5415, 7
    %v5417 = vsub.s32 1, %v5416
    %v5418 = vrot.slane %v5409, %v5417
    %v5421 = vmul.f32 %v5361, %v5414
    %v5422 = vmul.f32 %v5362, %v5418
    %v5425 = vcombine.low %v5421, %v5422
    %v5427 = vunpack.c.l.s4 1966171168
    %v5428 = vunpack.c.0.s8 %v5427
    %v5429 = vlaneseq
    %v5430 = vshrl.u32 %v5429, 7
    %v5431 = vsub.s32 %v5428, %v5430
    %v5432 = vrot.slane %v5425, %v5431
    %v5434 = vunpack.c.l.s4 1966171168
    %v5435 = vunpack.c.0.s8 %v5434
    %v5436 = vlaneseq
    %v5437 = vshrl.u32 %v5436, 7
    %v5438 = vsub.s32 %v5435, %v5437
    %v5439 = vrot.slane %v5432, %v5438
    %v5441 = vsub.f32 %v5344, %v5439
    %v5442 = vmul.f32 %v5329, %v5414
    %v5443 = vmul.f32 %v5330, %v5418
    %v5445 = vlaneseq
    %v5446 = vshrl.u32 %v5445, 7
    %v5447 = vsub.s32 0, %v5446
    %v5448 = vrot.slane %v5441, %v5447
    %v5449 = vlaneseq
    %v5450 = vshrl.u32 %v5449, 7
    %v5451 = vsub.s32 1, %v5450
    %v5452 = vrot.slane %v5441, %v5451
    %v5455 = vadd.f32 %v5442, %v5448
    %v5456 = vadd.f32 %v5443, %v5452
    %v5457 = vmax.f32 %v5455, 0.0
    %v5458 = vmax.f32 %v5456, 0.0
    %v5459 = vld [vmem:[%s11] sm:$0xff]
    %v5460 = vld [vmem:[%s11 + $0x8] sm:$0xff]
    %v5461 = vld [vmem:[%s11 + $0x10] sm:$0xff]
    %v5462 = vld [vmem:[%s11 + $0x18] sm:$0xff]
    %v5463 = vld [vmem:[%s11 + $0x20] sm:$0xff]
    %v5464 = vld [vmem:[%s11 + $0x28] sm:$0xff]
    %v5465 = vld [vmem:[%s11 + $0x30] sm:$0xff]
    %v5466 = vld [vmem:[%s11 + $0x38] sm:$0xff]
    %v5467 = vld [vmem:[%s11 + $0x40] sm:$0xff]
    %v5468 = vld [vmem:[%s11 + $0x48] sm:$0xff]
    %v5469 = vld [vmem:[%s11 + $0x50] sm:$0xff]
    %v5470 = vld [vmem:[%s11 + $0x58] sm:$0xff]
    %v5471 = vld [vmem:[%s11 + $0x60] sm:$0xff]
    %v5472 = vld [vmem:[%s11 + $0x68] sm:$0xff]
    %v5473 = vld [vmem:[%s11 + $0x70] sm:$0xff]
    %v5474 = vld [vmem:[%s11 + $0x78] sm:$0xff]
    %v5475 = vld [vmem:[%s11 + $0x80] sm:$0xff]
    %v5476 = vld [vmem:[%s11 + $0x88] sm:$0xff]
    %v5477 = vld [vmem:[%s11 + $0x90] sm:$0xff]
    %v5478 = vld [vmem:[%s11 + $0x98] sm:$0xff]
    %v5479 = vld [vmem:[%s11 + $0xa0] sm:$0xff]
    %v5480 = vld [vmem:[%s11 + $0xa8] sm:$0xff]
    %v5481 = vld [vmem:[%s11 + $0xb0] sm:$0xff]
    %v5482 = vld [vmem:[%s11 + $0xb8] sm:$0xff]
    %v5483 = vld [vmem:[%s11 + $0xc0] sm:$0xff]
    %v5484 = vld [vmem:[%s11 + $0xc8] sm:$0xff]
    %v5485 = vld [vmem:[%s11 + $0xd0] sm:$0xff]
    %v5486 = vld [vmem:[%s11 + $0xd8] sm:$0xff]
    %v5487 = vld [vmem:[%s11 + $0xe0] sm:$0xff]
    %v5488 = vld [vmem:[%s11 + $0xe8] sm:$0xff]
    %v5489 = vld [vmem:[%s11 + $0xf0] sm:$0xff]
    %v5490 = vld [vmem:[%s11 + $0xf8] sm:$0xff]
    %5491 = vmatprep.subr.mxu0 0.0
    %5492 = vmatpush1.msra.mxu0 %v5459
    %5493 = vmatprep.subr.mxu0 0.0
    %5494 = vmatpush1.msra.mxu0 %v5460
    %5495 = vmatprep.subr.mxu0 0.0
    %5496 = vmatpush1.msra.mxu0 %v5461
    %5497 = vmatprep.subr.mxu0 0.0
    %5498 = vmatpush1.msra.mxu0 %v5462
    %5499 = vmatprep.subr.mxu0 0.0
    %5500 = vmatpush1.msra.mxu0 %v5463
    %5501 = vmatprep.subr.mxu0 0.0
    %5502 = vmatpush1.msra.mxu0 %v5464
    %5503 = vmatprep.subr.mxu0 0.0
    %5504 = vmatpush1.msra.mxu0 %v5465
    %5505 = vmatprep.subr.mxu0 0.0
    %5506 = vmatpush1.msra.mxu0 %v5466
    %5507 = vmatprep.subr.mxu0 0.0
    %5508 = vmatpush1.msra.mxu0 %v5467
    %5509 = vmatprep.subr.mxu0 0.0
    %5510 = vmatpush1.msra.mxu0 %v5468
    %5511 = vmatprep.subr.mxu0 0.0
    %5512 = vmatpush1.msra.mxu0 %v5469
    %5513 = vmatprep.subr.mxu0 0.0
    %5514 = vmatpush1.msra.mxu0 %v5470
    %5515 = vmatprep.subr.mxu0 0.0
    %5516 = vmatpush1.msra.mxu0 %v5471
    %5517 = vmatprep.subr.mxu0 0.0
    %5518 = vmatpush1.msra.mxu0 %v5472
    %5519 = vmatprep.subr.mxu0 0.0
    %5520 = vmatpush1.msra.mxu0 %v5473
    %5521 = vmatprep.subr.mxu0 0.0
    %5522 = vmatpush1.msra.mxu0 %v5474
    %5523 = vmatprep.subr.mxu0 0.0
    %5524 = vmatpush1.msra.mxu0 %v5475
    %5525 = vmatprep.subr.mxu0 0.0
    %5526 = vmatpush1.msra.mxu0 %v5476
    %5527 = vmatprep.subr.mxu0 0.0
    %5528 = vmatpush1.msra.mxu0 %v5477
    %5529 = vmatprep.subr.mxu0 0.0
    %5530 = vmatpush1.msra.mxu0 %v5478
    %5531 = vmatprep.subr.mxu0 0.0
    %5532 = vmatpush1.msra.mxu0 %v5479
    %5533 = vmatprep.subr.mxu0 0.0
    %5534 = vmatpush1.msra.mxu0 %v5480
    %5535 = vmatprep.subr.mxu0 0.0
    %5536 = vmatpush1.msra.mxu0 %v5481
    %5537 = vmatprep.subr.mxu0 0.0
    %5538 = vmatpush1.msra.mxu0 %v5482
    %5539 = vmatprep.subr.mxu0 0.0
    %5540 = vmatpush1.msra.mxu0 %v5483
    %5541 = vmatprep.subr.mxu0 0.0
    %5542 = vmatpush1.msra.mxu0 %v5484
    %5543 = vmatprep.subr.mxu0 0.0
    %5544 = vmatpush1.msra.mxu0 %v5485
    %5545 = vmatprep.subr.mxu0 0.0
    %5546 = vmatpush1.msra.mxu0 %v5486
    %5547 = vmatprep.subr.mxu0 0.0
    %5548 = vmatpush1.msra.mxu0 %v5487
    %5549 = vmatprep.subr.mxu0 0.0
    %5550 = vmatpush1.msra.mxu0 %v5488
    %5551 = vmatprep.subr.mxu0 0.0
    %5552 = vmatpush1.msra.mxu0 %v5489
    %5553 = vmatprep.subr.mxu0 0.0
    %5554 = vmatpush1.msra.mxu0 %v5490
    %5555 = vmatprep.mubr.f32.mxu0 %v5458
    %5556 = vmatmul.mubr.f32.gmra.mrb[0].mxu0 %v5457
    %v5557 = vpop.f32.mrb[0].mxu0
    %v5558 = vadd.f32 0.0, %v5557
    %v5559 = vpop.f32.mrb[0].mxu0
    %5560 = vdwg.mxu0
    %v5561 = vld [vmem:[%s12] sm:$0x1]
    %v5562 = vld [vmem:[%s13] sm:$0x1]
    %vm5563 = vcmask 517120
    %v5564 = vsel %vm5563, %v5558, 0.0
    %v5565 = vrot.slane %v5564, 4
    %v5566 = vadd.f32 %v5564, %v5565
    %v5567 = vrot.slane %v5566, 2
    %v5568 = vadd.f32 %v5566, %v5567
    %v5569 = vrot.slane %v5568, 1
    %v5570 = vadd.f32 %v5568, %v5569
    %v5571 = vmul.f32 %v5570, %v5360
    %v5572 = vmul.f32 %v5558, %v5558
    %v5573 = vsel %vm5563, %v5572, 0.0
    %v5574 = vrot.slane %v5573, 4
    %v5575 = vadd.f32 %v5573, %v5574
    %v5576 = vrot.slane %v5575, 2
    %v5577 = vadd.f32 %v5575, %v5576
    %v5578 = vrot.slane %v5577, 1
    %v5579 = vadd.f32 %v5577, %v5578
    %v5580 = vmul.f32 %v5579, %v5360
    %v5581 = vmul.f32 %v5571, %v5571
    %v5582 = vsub.f32 %v5580, %v5581
    %v5583 = vmax.f32 %v5582, 0.0
    %v5584 = vadd.f32 %v5583, 1e-05
    %v5585 = vrsqrt.pop %v5584
    %v5586 = vmul.f32 %v5561, %v5585
    %v5587 = vmul.f32 %v5571, %v5586
    %v5588 = vsub.f32 %v5562, %v5587
    %v5590 = vlaneseq
    %v5591 = vshrl.u32 %v5590, 7
    %v5592 = vsub.s32 0, %v5591
    %v5593 = vrot.slane %v5586, %v5592
    %v5595 = vmul.f32 %v5558, %v5593
    %v5597 = vlaneseq
    %v5598 = vshrl.u32 %v5597, 7
    %v5599 = vsub.s32 0, %v5598
    %v5600 = vrot.slane %v5588, %v5599
    %v5602 = vadd.f32 %v5595, %v5600
    %v5603 = vmax.f32 %v5602, 0.0
    %v5604 = vld [vmem:[%s14] sm:$0xff]
    %v5605 = vld [vmem:[%s14 + $0x8] sm:$0xff]
    %v5606 = vld [vmem:[%s14 + $0x10] sm:$0xff]
    %v5607 = vld [vmem:[%s14 + $0x18] sm:$0xff]
    %v5608 = vld [vmem:[%s14 + $0x20] sm:$0xff]
    %v5609 = vld [vmem:[%s14 + $0x28] sm:$0xff]
    %v5610 = vld [vmem:[%s14 + $0x30] sm:$0xff]
    %v5611 = vld [vmem:[%s14 + $0x38] sm:$0xff]
    %v5612 = vld [vmem:[%s15] sm:$0x1]
    %v5614 = vlaneseq
    %v5615 = vshrl.u32 %v5614, 7
    %v5616 = vsub.s32 0, %v5615
    %v5617 = vrot.slane %v5612, %v5616
    %vm5619 = vcmask 523264
    %v5621 = vsel %vm5619, %v5603, 0
    %5623 = vmatprep.subr.mxu0 0.0
    %5624 = vmatpush1.msra.mxu0 %v5604
    %5625 = vmatprep.subr.mxu0 0.0
    %5626 = vmatpush1.msra.mxu0 %v5605
    %5627 = vmatprep.subr.mxu0 0.0
    %5628 = vmatpush1.msra.mxu0 %v5606
    %5629 = vmatprep.subr.mxu0 0.0
    %5630 = vmatpush1.msra.mxu0 %v5607
    %5631 = vmatprep.subr.mxu0 0.0
    %5632 = vmatpush1.msra.mxu0 %v5608
    %5633 = vmatprep.subr.mxu0 0.0
    %5634 = vmatpush1.msra.mxu0 %v5609
    %5635 = vmatprep.subr.mxu0 0.0
    %5636 = vmatpush1.msra.mxu0 %v5610
    %5637 = vmatprep.subr.mxu0 0.0
    %5638 = vmatpush1.msra.mxu0 %v5611
    %5639 = vmatprep.subr.mxu0 0.0
    %5640 = vmatpush1.msra.mxu0 0.0
    %5641 = vmatprep.subr.mxu0 0.0
    %5642 = vmatpush1.msra.mxu0 0.0
    %5643 = vmatprep.subr.mxu0 0.0
    %5644 = vmatpush1.msra.mxu0 0.0
    %5645 = vmatprep.subr.mxu0 0.0
    %5646 = vmatpush1.msra.mxu0 0.0
    %5647 = vmatprep.subr.mxu0 0.0
    %5648 = vmatpush1.msra.mxu0 0.0
    %5649 = vmatprep.subr.mxu0 0.0
    %5650 = vmatpush1.msra.mxu0 0.0
    %5651 = vmatprep.subr.mxu0 0.0
    %5652 = vmatpush1.msra.mxu0 0.0
    %5653 = vmatprep.subr.mxu0 0.0
    %5654 = vmatpush1.msra.mxu0 0.0
    %5655 = vmatprep.subr.mxu0 0.0
    %5656 = vmatpush1.msra.mxu0 0.0
    %5657 = vmatprep.subr.mxu0 0.0
    %5658 = vmatpush1.msra.mxu0 0.0
    %5659 = vmatprep.subr.mxu0 0.0
    %5660 = vmatpush1.msra.mxu0 0.0
    %5661 = vmatprep.subr.mxu0 0.0
    %5662 = vmatpush1.msra.mxu0 0.0
    %5663 = vmatprep.subr.mxu0 0.0
    %5664 = vmatpush1.msra.mxu0 0.0
    %5665 = vmatprep.subr.mxu0 0.0
    %5666 = vmatpush1.msra.mxu0 0.0
    %5667 = vmatprep.subr.mxu0 0.0
    %5668 = vmatpush1.msra.mxu0 0.0
    %5669 = vmatprep.subr.mxu0 0.0
    %5670 = vmatpush1.msra.mxu0 0.0
    %5671 = vmatprep.subr.mxu0 0.0
    %5672 = vmatpush1.msra.mxu0 0.0
    %5673 = vmatprep.subr.mxu0 0.0
    %5674 = vmatpush1.msra.mxu0 0.0
    %5675 = vmatprep.subr.mxu0 0.0
    %5676 = vmatpush1.msra.mxu0 0.0
    %5677 = vmatprep.subr.mxu0 0.0
    %5678 = vmatpush1.msra.mxu0 0.0
    %5679 = vmatprep.subr.mxu0 0.0
    %5680 = vmatpush1.msra.mxu0 0.0
    %5681 = vmatprep.subr.mxu0 0.0
    %5682 = vmatpush1.msra.mxu0 0.0
    %5683 = vmatprep.subr.mxu0 0.0
    %5684 = vmatpush1.msra.mxu0 0.0
    %5685 = vmatprep.subr.mxu0 0.0
    %5686 = vmatpush1.msra.mxu0 0.0
    %5687 = vmatprep.mubr.f32.mxu0 0.0
    %5688 = vmatmul.mubr.f32.gmra.mrb[0].mxu0 %v5621
    %v5689 = vpop.f32.mrb[0].mxu0
    %v5690 = vadd.f32 %v5617, %v5689
    %v5691 = vpop.f32.mrb[0].mxu0
    %5692 = vdwg.mxu0
    %5693 = vst [vmem:[#allocation7] sm:$0x3] %v5690
    // Predicated region
    $region66: #{base_model_forward.1} parent=1 // pred_check
      _
    $region67: #{base_model_forward.1} parent=1 // pred_check_branch
      %5695 = sbr.rel (0) target = $region69
    $region68: #{base_model_forward.1} parent=1 // pred_region
      %s5697 = ssub.s32 64, 64
      %5698 = vsyncadd [#allocation6], %s5697
      %s5700 = sshll.u32 [#allocation5], 4
      %s5701 = int_to_ptr.vmem [resolvable:$true] %s5700
      %5703 = dma.vmem_to_hbm [thread:$0]  %s5701, 64, %s16, [#allocation6]
    $region69: #{base_model_forward.1} parent=1 // pred_fallthru
      _
    // Predicated region
    $region70: #{base_model_forward.1} parent=1 // pred_check
      _
    $region71: #{base_model_forward.1} parent=1 // pred_check_branch
      %5705 = sbr.rel (0) target = $region73
    $region72: #{base_model_forward.1} parent=1 // pred_region
      %s5707 = ssub.s32 32, 32
      %5708 = vsyncadd [#allocation8], %s5707
      %s5710 = sshll.u32 [#allocation7], 4
      %s5711 = int_to_ptr.vmem [resolvable:$true] %s5710
      %5713 = dma.vmem_to_hbm [thread:$0]  %s5711, 32, %s17, [#allocation8]
    $region73: #{base_model_forward.1} parent=1 // pred_fallthru
      _
    // Predicated region
    $region74: #{base_model_forward.1} parent=1 // pred_check
      _
    $region75: #{base_model_forward.1} parent=1 // pred_check_branch
      %5715 = sbr.rel (0) target = $region77
    $region76: #{base_model_forward.1} parent=1 // pred_region
      %5716 = dma.done [#allocation6], 64
    $region77: #{base_model_forward.1} parent=1 // pred_fallthru
      _
    // Predicated region
    $region78: #{base_model_forward.1} parent=1 // pred_check
      _
    $region79: #{base_model_forward.1} parent=1 // pred_check_branch
      %5718 = sbr.rel (0) target = $region81
    $region80: #{base_model_forward.1} parent=1 // pred_region
      %5719 = dma.done [#allocation8], 32
    $region81: #{base_model_forward.1} parent=1 // pred_fallthru
      _
    %5720 = vsyncpa [#allocation6], 1
    %5721 = vsyncpa [#allocation8], 1

</llo_original>
